<compile_context>
chip_gen: v7x
topology: tpu7x:2x2x1
jax: 0.10.0
libtpu: 0.0.40
codegen_flags: <defaults>
</compile_context>

<pallas_src>
import functools
import math

import jax
import jax.numpy as jnp
from jax import lax
from jax.experimental import pallas as pl
from jax.experimental.pallas import tpu as pltpu

DIM = 32          # transformer dim (== channels c)
HEADS = 8
DIM_HEAD = 64
INNER = HEADS * DIM_HEAD   # 512
MLP_DIM = 32
LN_EPS = 1e-5
SCALE = DIM ** -0.5        # BIT uses dim**-0.5, not dim_head**-0.5
_INV_SQRT2 = 1.0 / math.sqrt(2.0)


def _layernorm(t, g, b):
    mu = jnp.mean(t, axis=-1, keepdims=True)
    var = jnp.mean((t - mu) ** 2, axis=-1, keepdims=True)
    return (t - mu) * lax.rsqrt(var + LN_EPS) * g + b


def decoder_kernel(x_ref, m_ref,
                   g1_ref, b1_ref,
                   wq_ref, wkv_ref, wo_ref, bo_ref,
                   g2_ref, b2_ref,
                   w1_ref, bf1_ref, w2_ref, bf2_ref,
                   rsel_ref, bmask_ref, seg_ref,
                   o_ref):
    bt, c, n = x_ref.shape          # channel-major block: (Bt, C, N)
    m = m_ref.shape[1]
    hm = HEADS * m                  # packed score lanes (heads x memory tokens)

    # --- channel-major -> token-major (per-slice 2-D transposes; see header) ---
    x2d = jnp.concatenate(
        [x_ref[i].astype(jnp.float32).T for i in range(bt)], axis=0)     # (Bt*N, C)
    mem = m_ref[...].astype(jnp.float32).reshape(bt * m, c)              # (Bt*M, C)

    g1 = g1_ref[...]
    b1 = b1_ref[...]

    # --- PreNorm2: shared LayerNorm on query and memory tokens (f32) ---
    xn = _layernorm(x2d, g1, b1).astype(jnp.bfloat16)
    mn = _layernorm(mem, g1, b1).astype(jnp.bfloat16)

    # --- projections: wq pre-scaled by SCALE; K|V fused into one matmul ---
    q = jnp.dot(xn, wq_ref[...], preferred_element_type=jnp.float32)     # (Bt*N, 512)
    kv = jnp.dot(mn, wkv_ref[...], preferred_element_type=jnp.float32)   # (Bt*M, 1024)

    q3 = q.reshape(bt, n, INNER).astype(jnp.bfloat16)                    # (Bt, N, 512)
    k3 = kv[:, :INNER].reshape(bt, m, INNER)                             # (Bt, M, 512) f32
    v3 = kv[:, INNER:].reshape(bt, m, INNER)                             # (Bt, M, 512) f32

    # --- all heads at once via block-diagonal K / V ---------------------------
    #   Kb/Vb[b, c=h*m+j, D] = {k,v}[b, j, D]  iff  D // DIM_HEAD == h  else 0
    # so   dots[b,n,h*m+j] = q_h . k_{h,j}   and   attn @ Vb gives the
    # head-concatenated (Bt, N, 512) output directly (no per-head slices,
    # no relayout transposes).
    rsel = jnp.broadcast_to(rsel_ref[...][None], (bt, hm, m))            # (Bt, hm, M)
    bmask = bmask_ref[...]                                               # (hm, 512)
    kb = (jnp.einsum("bcj,bjd->bcd", rsel, k3,
                     preferred_element_type=jnp.float32) * bmask).astype(jnp.bfloat16)
    vb = (jnp.einsum("bcj,bjd->bcd", rsel, v3,
                     preferred_element_type=jnp.float32) * bmask).astype(jnp.bfloat16)

    dots = jnp.einsum("bnd,bcd->bnc", q3, kb,
                      preferred_element_type=jnp.float32)                # (Bt, N, hm)
    dots2 = dots.reshape(bt * n, hm)
    # One shared row max across all heads: softmax is shift-invariant per head,
    # so this is exact and keeps exp() on full 64-wide lanes.
    dots2 = dots2 - jnp.max(dots2, axis=-1, keepdims=True)
    e = jnp.exp(dots2)                                                   # (Bt*N, hm)
    # Per-head denominator, broadcast back to every lane of its head, via a
    # tiny (hm, hm) segment-sum matmul (MXU is otherwise idle here).
    denom = jnp.dot(e, seg_ref[...], preferred_element_type=jnp.float32)
    attn = e * pl.reciprocal(denom, approx=True)
    attn3 = attn.reshape(bt, n, hm).astype(jnp.bfloat16)

    av = jnp.einsum("bnc,bcd->bnd", attn3, vb,
                    preferred_element_type=jnp.float32)                  # (Bt, N, 512)

    # --- to_out: ONE full-depth (K=512) matmul + bias + Residual2 ---
    x2d = x2d + jnp.dot(av.reshape(bt * n, INNER).astype(jnp.bfloat16),
                        wo_ref[...], preferred_element_type=jnp.float32) + bo_ref[...]

    # --- FeedForward (PreNorm + Residual), exact erf-GELU as in torch.nn.GELU ---
    xn2 = _layernorm(x2d, g2_ref[...], b2_ref[...]).astype(jnp.bfloat16)
    h1 = jnp.dot(xn2, w1_ref[...], preferred_element_type=jnp.float32) + bf1_ref[...]
    h1 = 0.5 * h1 * (1.0 + lax.erf(h1 * jnp.float32(_INV_SQRT2)))
    h2 = jnp.dot(h1.astype(jnp.bfloat16), w2_ref[...],
                 preferred_element_type=jnp.float32) + bf2_ref[...]
    x2d = x2d + h2

    # --- token-major -> channel-major store: (C, N) slabs, lane-dense along N ---
    y3 = x2d.reshape(bt, n, c)
    for i in range(bt):
        o_ref[i] = y3[i].T.astype(o_ref.dtype)


def _default_num_blocks(batch):
    """1 grid step on single-TC chips (v5e/v6e); 2 parallel steps on v7x (2 TCs)."""
    try:
        kind = jax.devices()[0].device_kind.lower()
    except Exception:
        kind = ""
    n_tc = 2 if "v7" in kind else 1
    return max(1, min(batch, n_tc))


def de_model_forward(x1, x2, params, num_blocks=None):
    """x1: (b, 32, h, w) NCHW, x2: (b, M, 32) memory tokens -> (b, 32, h, w)."""
    b, c, h, w = x1.shape
    assert c == DIM
    n = h * w
    m = x2.shape[1]
    hm = HEADS * m

    if num_blocks is None:
        num_blocks = _default_num_blocks(b)
    nblk = max(1, min(int(num_blocks), b))
    bt = -(-b // nblk)
    b_pad = nblk * bt

    # NCHW -> (b, C, N) is a pure reshape (no HBM transpose); the kernel stores
    # (C, N) slabs back, so the output is also just a reshape.
    x1_cn = x1.reshape(b, c, n)
    x2_p = x2
    if b_pad != b:
        # Zero padding is LN-safe (0 * rsqrt(eps) stays finite); padded batch
        # rows are computed on zeros and sliced off below.
        x1_cn = jnp.pad(x1_cn, ((0, b_pad - b), (0, 0), (0, 0)))
        x2_p = jnp.pad(x2_p, ((0, b_pad - b), (0, 0), (0, 0)))

    # One-time weight prep: fold SCALE into wq, pack K|V, bf16 MXU operands.
    wq = (params["wq"] * SCALE).astype(jnp.bfloat16)
    wkv = jnp.concatenate([params["wk"], params["wv"]], axis=1).astype(jnp.bfloat16)
    wo = params["wo"].astype(jnp.bfloat16)
    w1 = params["w1"].astype(jnp.bfloat16)
    w2 = params["w2"].astype(jnp.bfloat16)

    # Constant matrices for the fused all-heads attention:
    #   rsel[c, j]  = 1 iff c %  m == j               (replicate k/v rows per head)
    #   bmask[c, D] = 1 iff c // m == D // DIM_HEAD   (block-diagonal head mask)
    #   seg[c, d]   = 1 iff c // m == d // m          (per-head denominator sums)
    ci = jnp.arange(hm)
    rsel = (ci[:, None] % m == jnp.arange(m)[None, :]).astype(jnp.float32)
    bmask = (ci[:, None] // m ==
             (jnp.arange(INNER)[None, :] // DIM_HEAD)).astype(jnp.float32)
    seg = (ci[:, None] // m == ci[None, :] // m).astype(jnp.float32)

    weight_args = (
        params["g1"], params["b1"],
        wq, wkv, wo, params["bo"],
        params["g2"], params["b2"],
        w1, params["bf1"], w2, params["bf2"],
        rsel, bmask, seg,
    )

    def const_spec(arr):
        zeros = (0,) * arr.ndim
        return pl.BlockSpec(arr.shape, lambda i, _z=zeros: _z)

    # Advisory cost estimate: the kernel is latency/overhead-bound.
    flops = 2 * b_pad * (
        n * DIM * INNER + m * DIM * 2 * INNER       # q / fused kv projections
        + 2 * hm * m * INNER                        # block-diag K/V construction
        + n * INNER * hm + n * hm * hm + n * hm * INNER   # dots, seg-sum, AV
        + n * INNER * DIM                           # to_out
        + n * (DIM * MLP_DIM + MLP_DIM * DIM))      # MLP
    transcendentals = b_pad * n * (hm + MLP_DIM + 4)
    bytes_accessed = sum(int(a.size) * a.dtype.itemsize
                         for a in (x1_cn, x2_p) + weight_args)
    bytes_accessed += b_pad * c * n * x1.dtype.itemsize   # output

    out = pl.pallas_call(
        decoder_kernel,
        out_shape=jax.ShapeDtypeStruct((b_pad, c, n), x1.dtype),
        grid_spec=pltpu.PrefetchScalarGridSpec(
            num_scalar_prefetch=0,
            grid=(nblk,),
            in_specs=[
                pl.BlockSpec((bt, c, n), lambda i: (i, 0, 0)),
                pl.BlockSpec((bt, m, c), lambda i: (i, 0, 0)),
            ] + [const_spec(a) for a in weight_args],
            out_specs=pl.BlockSpec((bt, c, n), lambda i: (i, 0, 0)),
        ),
        compiler_params=pltpu.CompilerParams(
            dimension_semantics=("parallel",)),
        cost_estimate=pl.CostEstimate(
            flops=int(flops),
            transcendentals=int(transcendentals),
            bytes_accessed=int(bytes_accessed)),
    )(x1_cn, x2_p, *weight_args)

    return out[:b].reshape(b, c, h, w)


def de_model_reference(x1, x2, p):
    """Pure-JAX f32 reference for correctness checking."""
    b, c, h, w = x1.shape
    t = jnp.transpose(x1, (0, 2, 3, 1)).reshape(b, h * w, c).astype(jnp.float32)
    mem = x2.astype(jnp.float32)

    xn = _layernorm(t, p["g1"], p["b1"])
    mn = _layernorm(mem, p["g1"], p["b1"])
    q = xn @ p["wq"]
    k = mn @ p["wk"]
    v = mn @ p["wv"]
    q = q.reshape(b, -1, HEADS, DIM_HEAD).transpose(0, 2, 1, 3)
    k = k.reshape(b, -1, HEADS, DIM_HEAD).transpose(0, 2, 1, 3)
    v = v.reshape(b, -1, HEADS, DIM_HEAD).transpose(0, 2, 1, 3)
    dots = jnp.einsum("bhid,bhjd->bhij", q, k) * SCALE
    attn = jax.nn.softmax(dots, axis=-1)
    o = jnp.einsum("bhij,bhjd->bhid", attn, v)
    o = o.transpose(0, 2, 1, 3).reshape(b, -1, INNER)
    t = t + (o @ p["wo"] + p["bo"])

    xn2 = _layernorm(t, p["g2"], p["b2"])
    h1 = xn2 @ p["w1"] + p["bf1"]
    h1 = 0.5 * h1 * (1.0 + lax.erf(h1 / math.sqrt(2.0)))
    t = t + (h1 @ p["w2"] + p["bf2"])
    return jnp.transpose(t.reshape(b, h, w, c), (0, 3, 1, 2))


def init_params(key):
    ks = jax.random.split(key, 8)

    def lin_w(k, fan_in, fan_out):
        bound = 1.0 / math.sqrt(fan_in)
        return jax.random.uniform(k, (fan_in, fan_out), jnp.float32, -bound, bound)

    def lin_b(k, fan_in, fan_out):
        bound = 1.0 / math.sqrt(fan_in)
        return jax.random.uniform(k, (1, fan_out), jnp.float32, -bound, bound)

    return {
        # shared LayerNorm of PreNorm2
        "g1": jnp.ones((1, DIM), jnp.float32),
        "b1": jnp.zeros((1, DIM), jnp.float32),
        # attention projections (no bias on q/k/v, bias on to_out)
        "wq": lin_w(ks[0], DIM, INNER),
        "wk": lin_w(ks[1], DIM, INNER),
        "wv": lin_w(ks[2], DIM, INNER),
        "wo": lin_w(ks[3], INNER, DIM),
        "bo": lin_b(ks[4], INNER, DIM),
        # FeedForward PreNorm + MLP
        "g2": jnp.ones((1, DIM), jnp.float32),
        "b2": jnp.zeros((1, DIM), jnp.float32),
        "w1": lin_w(ks[5], DIM, MLP_DIM),
        "bf1": lin_b(ks[6], DIM, MLP_DIM),
        "w2": lin_w(ks[7], MLP_DIM, DIM),
        "bf2": jnp.zeros((1, DIM), jnp.float32),
    }


if __name__ == "__main__":
    key = jax.random.PRNGKey(0)
    k_p, k_x1, k_x2 = jax.random.split(key, 3)

    B, H, W = 4, 8, 16     # 128 query tokens -> lane-dense (C, N=128) output slabs
    M_TOKENS = 8           # memory (semantic) tokens, dim 32

    params = init_params(k_p)
    x1 = jax.random.normal(k_x1, (B, DIM, H, W), jnp.float32)   # NCHW
    x2 = jax.random.normal(k_x2, (B, M_TOKENS, DIM), jnp.float32)

    # num_blocks=None -> 1 grid step on v5e/v6e (1 TC), 2 parallel steps on v7x.
    fwd = jax.jit(functools.partial(de_model_forward, num_blocks=None))
    out = jax.block_until_ready(fwd(x1, x2, params))
    assert out.shape == (B, DIM, H, W), out.shape

    ref = de_model_reference(x1, x2, params)
    err = float(jnp.max(jnp.abs(out - ref)))
    # bf16 MXU operands + approx reciprocal -> slightly loose tolerance.
    assert jnp.allclose(out, ref, rtol=3e-2, atol=3e-2), err

    print("KERNEL_OK")
</pallas_src>

<mosaic_0001>
module attributes {stable_mosaic.version = 11 : i64} {
  func.func @decoder_kernel(%arg0: i32, %arg1: memref<4x32x128xf32, #tpu.memory_space<vmem>>, %arg2: memref<4x8x32xf32, #tpu.memory_space<vmem>>, %arg3: memref<1x32xf32, #tpu.memory_space<vmem>>, %arg4: memref<1x32xf32, #tpu.memory_space<vmem>>, %arg5: memref<32x512xbf16, #tpu.memory_space<vmem>>, %arg6: memref<32x1024xbf16, #tpu.memory_space<vmem>>, %arg7: memref<512x32xbf16, #tpu.memory_space<vmem>>, %arg8: memref<1x32xf32, #tpu.memory_space<vmem>>, %arg9: memref<1x32xf32, #tpu.memory_space<vmem>>, %arg10: memref<1x32xf32, #tpu.memory_space<vmem>>, %arg11: memref<32x32xbf16, #tpu.memory_space<vmem>>, %arg12: memref<1x32xf32, #tpu.memory_space<vmem>>, %arg13: memref<32x32xbf16, #tpu.memory_space<vmem>>, %arg14: memref<1x32xf32, #tpu.memory_space<vmem>>, %arg15: memref<64x8xf32, #tpu.memory_space<vmem>>, %arg16: memref<64x512xf32, #tpu.memory_space<vmem>>, %arg17: memref<64x64xf32, #tpu.memory_space<vmem>>, %arg18: memref<4x32x128xf32, #tpu.memory_space<vmem>>) attributes {dimension_semantics = [#tpu.dimension_semantics<parallel>], iteration_bounds = array<i64: 1>, scalar_prefetch = 0 : i64, scratch_operands = 0 : i64, tpu.core_type = #tpu.core_type<tc>, window_params = [{transform_indices = @transform_0, window_bounds = array<i64: 4, 32, 128>}, {transform_indices = @transform_1, window_bounds = array<i64: 4, 8, 32>}, {pipeline_mode = #tpu.pipeline_mode<synchronous>, transform_indices = @transform_2, window_bounds = array<i64: 1, 32>}, {pipeline_mode = #tpu.pipeline_mode<synchronous>, transform_indices = @transform_3, window_bounds = array<i64: 1, 32>}, {pipeline_mode = #tpu.pipeline_mode<synchronous>, transform_indices = @transform_4, window_bounds = array<i64: 32, 512>}, {pipeline_mode = #tpu.pipeline_mode<synchronous>, transform_indices = @transform_5, window_bounds = array<i64: 32, 1024>}, {pipeline_mode = #tpu.pipeline_mode<synchronous>, transform_indices = @transform_6, window_bounds = array<i64: 512, 32>}, {pipeline_mode = #tpu.pipeline_mode<synchronous>, transform_indices = @transform_7, window_bounds = array<i64: 1, 32>}, {pipeline_mode = #tpu.pipeline_mode<synchronous>, transform_indices = @transform_8, window_bounds = array<i64: 1, 32>}, {pipeline_mode = #tpu.pipeline_mode<synchronous>, transform_indices = @transform_9, window_bounds = array<i64: 1, 32>}, {pipeline_mode = #tpu.pipeline_mode<synchronous>, transform_indices = @transform_10, window_bounds = array<i64: 32, 32>}, {pipeline_mode = #tpu.pipeline_mode<synchronous>, transform_indices = @transform_11, window_bounds = array<i64: 1, 32>}, {pipeline_mode = #tpu.pipeline_mode<synchronous>, transform_indices = @transform_12, window_bounds = array<i64: 32, 32>}, {pipeline_mode = #tpu.pipeline_mode<synchronous>, transform_indices = @transform_13, window_bounds = array<i64: 1, 32>}, {pipeline_mode = #tpu.pipeline_mode<synchronous>, transform_indices = @transform_14, window_bounds = array<i64: 64, 8>}, {pipeline_mode = #tpu.pipeline_mode<synchronous>, transform_indices = @transform_15, window_bounds = array<i64: 64, 512>}, {pipeline_mode = #tpu.pipeline_mode<synchronous>, transform_indices = @transform_16, window_bounds = array<i64: 64, 64>}, {transform_indices = @transform_17, window_bounds = array<i64: 4, 32, 128>}]} {
    %c0 = arith.constant 0 : index
    %c0_0 = arith.constant 0 : index
    %c0_1 = arith.constant 0 : index
    %0 = vector.load %arg1[%c0, %c0_0, %c0_1] : memref<4x32x128xf32, #tpu.memory_space<vmem>>, vector<1x32x128xf32>
    %1 = vector.shape_cast %0 : vector<1x32x128xf32> to vector<32x128xf32>
    %2 = tpu.transpose %1, [1, 0] : vector<32x128xf32> -> vector<128x32xf32>
    %c1 = arith.constant 1 : index
    %c0_2 = arith.constant 0 : index
    %c0_3 = arith.constant 0 : index
    %3 = vector.load %arg1[%c1, %c0_2, %c0_3] : memref<4x32x128xf32, #tpu.memory_space<vmem>>, vector<1x32x128xf32>
    %4 = vector.shape_cast %3 : vector<1x32x128xf32> to vector<32x128xf32>
    %5 = tpu.transpose %4, [1, 0] : vector<32x128xf32> -> vector<128x32xf32>
    %c2 = arith.constant 2 : index
    %c0_4 = arith.constant 0 : index
    %c0_5 = arith.constant 0 : index
    %6 = vector.load %arg1[%c2, %c0_4, %c0_5] : memref<4x32x128xf32, #tpu.memory_space<vmem>>, vector<1x32x128xf32>
    %7 = vector.shape_cast %6 : vector<1x32x128xf32> to vector<32x128xf32>
    %8 = tpu.transpose %7, [1, 0] : vector<32x128xf32> -> vector<128x32xf32>
    %c3 = arith.constant 3 : index
    %c0_6 = arith.constant 0 : index
    %c0_7 = arith.constant 0 : index
    %9 = vector.load %arg1[%c3, %c0_6, %c0_7] : memref<4x32x128xf32, #tpu.memory_space<vmem>>, vector<1x32x128xf32>
    %10 = vector.shape_cast %9 : vector<1x32x128xf32> to vector<32x128xf32>
    %11 = tpu.transpose %10, [1, 0] : vector<32x128xf32> -> vector<128x32xf32>
    %12 = tpu.concatenate %2, %5, %8, %11 in 0 : vector<128x32xf32>, vector<128x32xf32>, vector<128x32xf32>, vector<128x32xf32> -> vector<512x32xf32>
    %c0_8 = arith.constant 0 : index
    %c0_9 = arith.constant 0 : index
    %c0_10 = arith.constant 0 : index
    %13 = vector.load %arg2[%c0_8, %c0_9, %c0_10] : memref<4x8x32xf32, #tpu.memory_space<vmem>>, vector<4x8x32xf32>
    %14 = vector.shape_cast %13 : vector<4x8x32xf32> to vector<32x32xf32>
    %c0_11 = arith.constant 0 : index
    %c0_12 = arith.constant 0 : index
    %15 = vector.load %arg3[%c0_11, %c0_12] : memref<1x32xf32, #tpu.memory_space<vmem>>, vector<1x32xf32>
    %c0_13 = arith.constant 0 : index
    %c0_14 = arith.constant 0 : index
    %16 = vector.load %arg4[%c0_13, %c0_14] : memref<1x32xf32, #tpu.memory_space<vmem>>, vector<1x32xf32>
    %cst = arith.constant dense<0.000000e+00> : vector<512xf32>
    %17 = vector.multi_reduction <add>, %12, %cst [1] : vector<512x32xf32> to vector<512xf32>
    %18 = vector.shape_cast %17 : vector<512xf32> to vector<512x1xf32>
    %cst_15 = arith.constant 3.200000e+01 : f32
    %19 = vector.broadcast %cst_15 : f32 to vector<512x1xf32>
    %20 = arith.divf %18, %19 : vector<512x1xf32>
    %21 = vector.broadcast %20 : vector<512x1xf32> to vector<512x32xf32>
    %22 = arith.subf %12, %21 : vector<512x32xf32>
    %23 = arith.mulf %22, %22 : vector<512x32xf32>
    %cst_16 = arith.constant dense<0.000000e+00> : vector<512xf32>
    %24 = vector.multi_reduction <add>, %23, %cst_16 [1] : vector<512x32xf32> to vector<512xf32>
    %25 = vector.shape_cast %24 : vector<512xf32> to vector<512x1xf32>
    %cst_17 = arith.constant 3.200000e+01 : f32
    %26 = vector.broadcast %cst_17 : f32 to vector<512x1xf32>
    %27 = arith.divf %25, %26 : vector<512x1xf32>
    %28 = vector.broadcast %20 : vector<512x1xf32> to vector<512x32xf32>
    %29 = arith.subf %12, %28 : vector<512x32xf32>
    %cst_18 = arith.constant 9.99999974E-6 : f32
    %30 = vector.broadcast %cst_18 : f32 to vector<512x1xf32>
    %31 = arith.addf %27, %30 : vector<512x1xf32>
    %32 = math.rsqrt %31 : vector<512x1xf32>
    %33 = vector.broadcast %32 : vector<512x1xf32> to vector<512x32xf32>
    %34 = arith.mulf %29, %33 : vector<512x32xf32>
    %35 = vector.broadcast %15 : vector<1x32xf32> to vector<512x32xf32>
    %36 = arith.mulf %34, %35 : vector<512x32xf32>
    %37 = vector.broadcast %16 : vector<1x32xf32> to vector<512x32xf32>
    %38 = arith.addf %36, %37 : vector<512x32xf32>
    %39 = arith.truncf %38 : vector<512x32xf32> to vector<512x32xbf16>
    %cst_19 = arith.constant dense<0.000000e+00> : vector<32xf32>
    %40 = vector.multi_reduction <add>, %14, %cst_19 [1] : vector<32x32xf32> to vector<32xf32>
    %41 = vector.shape_cast %40 : vector<32xf32> to vector<32x1xf32>
    %cst_20 = arith.constant 3.200000e+01 : f32
    %42 = vector.broadcast %cst_20 : f32 to vector<32x1xf32>
    %43 = arith.divf %41, %42 : vector<32x1xf32>
    %44 = vector.broadcast %43 : vector<32x1xf32> to vector<32x32xf32>
    %45 = arith.subf %14, %44 : vector<32x32xf32>
    %46 = arith.mulf %45, %45 : vector<32x32xf32>
    %cst_21 = arith.constant dense<0.000000e+00> : vector<32xf32>
    %47 = vector.multi_reduction <add>, %46, %cst_21 [1] : vector<32x32xf32> to vector<32xf32>
    %48 = vector.shape_cast %47 : vector<32xf32> to vector<32x1xf32>
    %cst_22 = arith.constant 3.200000e+01 : f32
    %49 = vector.broadcast %cst_22 : f32 to vector<32x1xf32>
    %50 = arith.divf %48, %49 : vector<32x1xf32>
    %51 = vector.broadcast %43 : vector<32x1xf32> to vector<32x32xf32>
    %52 = arith.subf %14, %51 : vector<32x32xf32>
    %cst_23 = arith.constant 9.99999974E-6 : f32
    %53 = vector.broadcast %cst_23 : f32 to vector<32x1xf32>
    %54 = arith.addf %50, %53 : vector<32x1xf32>
    %55 = math.rsqrt %54 : vector<32x1xf32>
    %56 = vector.broadcast %55 : vector<32x1xf32> to vector<32x32xf32>
    %57 = arith.mulf %52, %56 : vector<32x32xf32>
    %58 = vector.broadcast %15 : vector<1x32xf32> to vector<32x32xf32>
    %59 = arith.mulf %57, %58 : vector<32x32xf32>
    %60 = vector.broadcast %16 : vector<1x32xf32> to vector<32x32xf32>
    %61 = arith.addf %59, %60 : vector<32x32xf32>
    %62 = arith.truncf %61 : vector<32x32xf32> to vector<32x32xbf16>
    %c0_24 = arith.constant 0 : index
    %c0_25 = arith.constant 0 : index
    %63 = vector.load %arg5[%c0_24, %c0_25] : memref<32x512xbf16, #tpu.memory_space<vmem>>, vector<32x512xbf16>
    %cst_26 = arith.constant dense<0.000000e+00> : vector<512x512xf32>
    %64 = tpu.matmul %39, %63, %cst_26 {dimension_numbers = #tpu.dot_dimension_numbers<[1], [0], [0], [1], [0, 0, 1, 1], [], []>} : vector<512x32xbf16>, vector<32x512xbf16>, vector<512x512xf32> -> vector<512x512xf32>
    %c0_27 = arith.constant 0 : index
    %c0_28 = arith.constant 0 : index
    %65 = vector.load %arg6[%c0_27, %c0_28] : memref<32x1024xbf16, #tpu.memory_space<vmem>>, vector<32x1024xbf16>
    %cst_29 = arith.constant dense<0.000000e+00> : vector<32x1024xf32>
    %66 = tpu.matmul %62, %65, %cst_29 {dimension_numbers = #tpu.dot_dimension_numbers<[1], [0], [0], [1], [0, 0, 1, 1], [], []>} : vector<32x32xbf16>, vector<32x1024xbf16>, vector<32x1024xf32> -> vector<32x1024xf32>
    %67 = vector.shape_cast %64 : vector<512x512xf32> to vector<4x128x512xf32>
    %68 = arith.truncf %67 : vector<4x128x512xf32> to vector<4x128x512xbf16>
    %69 = vector.extract_strided_slice %66 {offsets = [0, 0], sizes = [32, 512], strides = [1, 1]} : vector<32x1024xf32> to vector<32x512xf32>
    %70 = vector.shape_cast %69 : vector<32x512xf32> to vector<4x8x512xf32>
    %71 = vector.extract_strided_slice %66 {offsets = [0, 512], sizes = [32, 512], strides = [1, 1]} : vector<32x1024xf32> to vector<32x512xf32>
    %72 = vector.shape_cast %71 : vector<32x512xf32> to vector<4x8x512xf32>
    %c0_30 = arith.constant 0 : index
    %c0_31 = arith.constant 0 : index
    %73 = vector.load %arg15[%c0_30, %c0_31] : memref<64x8xf32, #tpu.memory_space<vmem>>, vector<64x8xf32>
    %74 = vector.shape_cast %73 : vector<64x8xf32> to vector<1x64x8xf32>
    %75 = vector.shape_cast %74 : vector<1x64x8xf32> to vector<1x64x8xf32>
    %76 = vector.broadcast %75 : vector<1x64x8xf32> to vector<4x64x8xf32>
    %c0_32 = arith.constant 0 : index
    %c0_33 = arith.constant 0 : index
    %77 = vector.load %arg16[%c0_32, %c0_33] : memref<64x512xf32, #tpu.memory_space<vmem>>, vector<64x512xf32>
    "tpu.trace_start"() <{level = 10 : i32, message = "bcj,bjd->bcd"}> : () -> ()
    %cst_34 = arith.constant dense<0.000000e+00> : vector<4x64x512xf32>
    %78 = tpu.matmul %76, %70, %cst_34 {dimension_numbers = #tpu.dot_dimension_numbers<[2], [1], [1], [2], [0, 0, 0, 1, 1, 2], [0], [0]>} : vector<4x64x8xf32>, vector<4x8x512xf32>, vector<4x64x512xf32> -> vector<4x64x512xf32>
    "tpu.trace_stop"() : () -> ()
    %79 = vector.shape_cast %77 : vector<64x512xf32> to vector<1x64x512xf32>
    %80 = vector.broadcast %79 : vector<1x64x512xf32> to vector<4x64x512xf32>
    %81 = arith.mulf %78, %80 : vector<4x64x512xf32>
    %82 = arith.truncf %81 : vector<4x64x512xf32> to vector<4x64x512xbf16>
    "tpu.trace_start"() <{level = 10 : i32, message = "bcj,bjd->bcd"}> : () -> ()
    %cst_35 = arith.constant dense<0.000000e+00> : vector<4x64x512xf32>
    %83 = tpu.matmul %76, %72, %cst_35 {dimension_numbers = #tpu.dot_dimension_numbers<[2], [1], [1], [2], [0, 0, 0, 1, 1, 2], [0], [0]>} : vector<4x64x8xf32>, vector<4x8x512xf32>, vector<4x64x512xf32> -> vector<4x64x512xf32>
    "tpu.trace_stop"() : () -> ()
    %84 = vector.shape_cast %77 : vector<64x512xf32> to vector<1x64x512xf32>
    %85 = vector.broadcast %84 : vector<1x64x512xf32> to vector<4x64x512xf32>
    %86 = arith.mulf %83, %85 : vector<4x64x512xf32>
    %87 = arith.truncf %86 : vector<4x64x512xf32> to vector<4x64x512xbf16>
    "tpu.trace_start"() <{level = 10 : i32, message = "bnd,bcd->bnc"}> : () -> ()
    %cst_36 = arith.constant dense<0.000000e+00> : vector<4x128x64xf32>
    %88 = tpu.matmul %68, %82, %cst_36 {dimension_numbers = #tpu.dot_dimension_numbers<[2], [2], [1], [1], [0, 0, 0, 1, 1, 1], [0], [0]>} : vector<4x128x512xbf16>, vector<4x64x512xbf16>, vector<4x128x64xf32> -> vector<4x128x64xf32>
    "tpu.trace_stop"() : () -> ()
    %89 = vector.shape_cast %88 : vector<4x128x64xf32> to vector<512x64xf32>
    %cst_37 = arith.constant dense<0xFF800000> : vector<512xf32>
    %90 = vector.multi_reduction <maximumf>, %89, %cst_37 [1] : vector<512x64xf32> to vector<512xf32>
    %91 = vector.shape_cast %90 : vector<512xf32> to vector<512x1xf32>
    %92 = vector.broadcast %91 : vector<512x1xf32> to vector<512x64xf32>
    %93 = arith.subf %89, %92 : vector<512x64xf32>
    %94 = math.exp %93 : vector<512x64xf32>
    %c0_38 = arith.constant 0 : index
    %c0_39 = arith.constant 0 : index
    %95 = vector.load %arg17[%c0_38, %c0_39] : memref<64x64xf32, #tpu.memory_space<vmem>>, vector<64x64xf32>
    %cst_40 = arith.constant dense<0.000000e+00> : vector<512x64xf32>
    %96 = tpu.matmul %94, %95, %cst_40 {dimension_numbers = #tpu.dot_dimension_numbers<[1], [0], [0], [1], [0, 0, 1, 1], [], []>} : vector<512x64xf32>, vector<64x64xf32>, vector<512x64xf32> -> vector<512x64xf32>
    %97 = tpu.reciprocal %96 {approx = true} : vector<512x64xf32> -> vector<512x64xf32>
    %98 = arith.mulf %94, %97 : vector<512x64xf32>
    %99 = vector.shape_cast %98 : vector<512x64xf32> to vector<4x128x64xf32>
    %100 = arith.truncf %99 : vector<4x128x64xf32> to vector<4x128x64xbf16>
    "tpu.trace_start"() <{level = 10 : i32, message = "bnc,bcd->bnd"}> : () -> ()
    %cst_41 = arith.constant dense<0.000000e+00> : vector<4x128x512xf32>
    %101 = tpu.matmul %100, %87, %cst_41 {dimension_numbers = #tpu.dot_dimension_numbers<[2], [1], [1], [2], [0, 0, 0, 1, 1, 2], [0], [0]>} : vector<4x128x64xbf16>, vector<4x64x512xbf16>, vector<4x128x512xf32> -> vector<4x128x512xf32>
    "tpu.trace_stop"() : () -> ()
    %102 = vector.shape_cast %101 : vector<4x128x512xf32> to vector<512x512xf32>
    %103 = arith.truncf %102 : vector<512x512xf32> to vector<512x512xbf16>
    %c0_42 = arith.constant 0 : index
    %c0_43 = arith.constant 0 : index
    %104 = vector.load %arg7[%c0_42, %c0_43] : memref<512x32xbf16, #tpu.memory_space<vmem>>, vector<512x32xbf16>
    %cst_44 = arith.constant dense<0.000000e+00> : vector<512x32xf32>
    %105 = tpu.matmul %103, %104, %cst_44 {dimension_numbers = #tpu.dot_dimension_numbers<[1], [0], [0], [1], [0, 0, 1, 1], [], []>} : vector<512x512xbf16>, vector<512x32xbf16>, vector<512x32xf32> -> vector<512x32xf32>
    %106 = arith.addf %12, %105 : vector<512x32xf32>
    %c0_45 = arith.constant 0 : index
    %c0_46 = arith.constant 0 : index
    %107 = vector.load %arg8[%c0_45, %c0_46] : memref<1x32xf32, #tpu.memory_space<vmem>>, vector<1x32xf32>
    %108 = vector.broadcast %107 : vector<1x32xf32> to vector<512x32xf32>
    %109 = arith.addf %106, %108 : vector<512x32xf32>
    %c0_47 = arith.constant 0 : index
    %c0_48 = arith.constant 0 : index
    %110 = vector.load %arg9[%c0_47, %c0_48] : memref<1x32xf32, #tpu.memory_space<vmem>>, vector<1x32xf32>
    %c0_49 = arith.constant 0 : index
    %c0_50 = arith.constant 0 : index
    %111 = vector.load %arg10[%c0_49, %c0_50] : memref<1x32xf32, #tpu.memory_space<vmem>>, vector<1x32xf32>
    %cst_51 = arith.constant dense<0.000000e+00> : vector<512xf32>
    %112 = vector.multi_reduction <add>, %109, %cst_51 [1] : vector<512x32xf32> to vector<512xf32>
    %113 = vector.shape_cast %112 : vector<512xf32> to vector<512x1xf32>
    %cst_52 = arith.constant 3.200000e+01 : f32
    %114 = vector.broadcast %cst_52 : f32 to vector<512x1xf32>
    %115 = arith.divf %113, %114 : vector<512x1xf32>
    %116 = vector.broadcast %115 : vector<512x1xf32> to vector<512x32xf32>
    %117 = arith.subf %109, %116 : vector<512x32xf32>
    %118 = arith.mulf %117, %117 : vector<512x32xf32>
    %cst_53 = arith.constant dense<0.000000e+00> : vector<512xf32>
    %119 = vector.multi_reduction <add>, %118, %cst_53 [1] : vector<512x32xf32> to vector<512xf32>
    %120 = vector.shape_cast %119 : vector<512xf32> to vector<512x1xf32>
    %cst_54 = arith.constant 3.200000e+01 : f32
    %121 = vector.broadcast %cst_54 : f32 to vector<512x1xf32>
    %122 = arith.divf %120, %121 : vector<512x1xf32>
    %123 = vector.broadcast %115 : vector<512x1xf32> to vector<512x32xf32>
    %124 = arith.subf %109, %123 : vector<512x32xf32>
    %cst_55 = arith.constant 9.99999974E-6 : f32
    %125 = vector.broadcast %cst_55 : f32 to vector<512x1xf32>
    %126 = arith.addf %122, %125 : vector<512x1xf32>
    %127 = math.rsqrt %126 : vector<512x1xf32>
    %128 = vector.broadcast %127 : vector<512x1xf32> to vector<512x32xf32>
    %129 = arith.mulf %124, %128 : vector<512x32xf32>
    %130 = vector.broadcast %110 : vector<1x32xf32> to vector<512x32xf32>
    %131 = arith.mulf %129, %130 : vector<512x32xf32>
    %132 = vector.broadcast %111 : vector<1x32xf32> to vector<512x32xf32>
    %133 = arith.addf %131, %132 : vector<512x32xf32>
    %134 = arith.truncf %133 : vector<512x32xf32> to vector<512x32xbf16>
    %c0_56 = arith.constant 0 : index
    %c0_57 = arith.constant 0 : index
    %135 = vector.load %arg11[%c0_56, %c0_57] : memref<32x32xbf16, #tpu.memory_space<vmem>>, vector<32x32xbf16>
    %cst_58 = arith.constant dense<0.000000e+00> : vector<512x32xf32>
    %136 = tpu.matmul %134, %135, %cst_58 {dimension_numbers = #tpu.dot_dimension_numbers<[1], [0], [0], [1], [0, 0, 1, 1], [], []>} : vector<512x32xbf16>, vector<32x32xbf16>, vector<512x32xf32> -> vector<512x32xf32>
    %c0_59 = arith.constant 0 : index
    %c0_60 = arith.constant 0 : index
    %137 = vector.load %arg12[%c0_59, %c0_60] : memref<1x32xf32, #tpu.memory_space<vmem>>, vector<1x32xf32>
    %138 = vector.broadcast %137 : vector<1x32xf32> to vector<512x32xf32>
    %139 = arith.addf %136, %138 : vector<512x32xf32>
    %cst_61 = arith.constant 5.000000e-01 : f32
    %140 = vector.broadcast %cst_61 : f32 to vector<512x32xf32>
    %141 = arith.mulf %140, %139 : vector<512x32xf32>
    %cst_62 = arith.constant 0.707106769 : f32
    %142 = vector.broadcast %cst_62 : f32 to vector<512x32xf32>
    %143 = arith.mulf %139, %142 : vector<512x32xf32>
    %144 = math.erf %143 : vector<512x32xf32>
    %cst_63 = arith.constant 1.000000e+00 : f32
    %145 = vector.broadcast %cst_63 : f32 to vector<512x32xf32>
    %146 = arith.addf %145, %144 : vector<512x32xf32>
    %147 = arith.mulf %141, %146 : vector<512x32xf32>
    %148 = arith.truncf %147 : vector<512x32xf32> to vector<512x32xbf16>
    %c0_64 = arith.constant 0 : index
    %c0_65 = arith.constant 0 : index
    %149 = vector.load %arg13[%c0_64, %c0_65] : memref<32x32xbf16, #tpu.memory_space<vmem>>, vector<32x32xbf16>
    %cst_66 = arith.constant dense<0.000000e+00> : vector<512x32xf32>
    %150 = tpu.matmul %148, %149, %cst_66 {dimension_numbers = #tpu.dot_dimension_numbers<[1], [0], [0], [1], [0, 0, 1, 1], [], []>} : vector<512x32xbf16>, vector<32x32xbf16>, vector<512x32xf32> -> vector<512x32xf32>
    %c0_67 = arith.constant 0 : index
    %c0_68 = arith.constant 0 : index
    %151 = vector.load %arg14[%c0_67, %c0_68] : memref<1x32xf32, #tpu.memory_space<vmem>>, vector<1x32xf32>
    %152 = vector.broadcast %151 : vector<1x32xf32> to vector<512x32xf32>
    %153 = arith.addf %150, %152 : vector<512x32xf32>
    %154 = arith.addf %109, %153 : vector<512x32xf32>
    %155 = vector.shape_cast %154 : vector<512x32xf32> to vector<4x128x32xf32>
    %156 = vector.extract_strided_slice %155 {offsets = [0, 0, 0], sizes = [1, 128, 32], strides = [1, 1, 1]} : vector<4x128x32xf32> to vector<1x128x32xf32>
    %157 = vector.shape_cast %156 : vector<1x128x32xf32> to vector<128x32xf32>
    %158 = tpu.transpose %157, [1, 0] : vector<128x32xf32> -> vector<32x128xf32>
    %c0_69 = arith.constant 0 : index
    %c0_70 = arith.constant 0 : index
    %c0_71 = arith.constant 0 : index
    %159 = vector.load %arg18[%c0_69, %c0_70, %c0_71] : memref<4x32x128xf32, #tpu.memory_space<vmem>>, vector<1x32x128xf32>
    %160 = vector.shape_cast %159 : vector<1x32x128xf32> to vector<32x128xf32>
    %161 = vector.shape_cast %158 : vector<32x128xf32> to vector<1x32x128xf32>
    tpu.vector_store %arg18[%c0_69, %c0_70, %c0_71], %161 {strides = array<i32>} : memref<4x32x128xf32, #tpu.memory_space<vmem>>, vector<1x32x128xf32>,
    %162 = vector.extract_strided_slice %155 {offsets = [1, 0, 0], sizes = [1, 128, 32], strides = [1, 1, 1]} : vector<4x128x32xf32> to vector<1x128x32xf32>
    %163 = vector.shape_cast %162 : vector<1x128x32xf32> to vector<128x32xf32>
    %164 = tpu.transpose %163, [1, 0] : vector<128x32xf32> -> vector<32x128xf32>
    %c1_72 = arith.constant 1 : index
    %c0_73 = arith.constant 0 : index
    %c0_74 = arith.constant 0 : index
    %165 = vector.load %arg18[%c1_72, %c0_73, %c0_74] : memref<4x32x128xf32, #tpu.memory_space<vmem>>, vector<1x32x128xf32>
    %166 = vector.shape_cast %165 : vector<1x32x128xf32> to vector<32x128xf32>
    %167 = vector.shape_cast %164 : vector<32x128xf32> to vector<1x32x128xf32>
    tpu.vector_store %arg18[%c1_72, %c0_73, %c0_74], %167 {strides = array<i32>} : memref<4x32x128xf32, #tpu.memory_space<vmem>>, vector<1x32x128xf32>,
    %168 = vector.extract_strided_slice %155 {offsets = [2, 0, 0], sizes = [1, 128, 32], strides = [1, 1, 1]} : vector<4x128x32xf32> to vector<1x128x32xf32>
    %169 = vector.shape_cast %168 : vector<1x128x32xf32> to vector<128x32xf32>
    %170 = tpu.transpose %169, [1, 0] : vector<128x32xf32> -> vector<32x128xf32>
    %c2_75 = arith.constant 2 : index
    %c0_76 = arith.constant 0 : index
    %c0_77 = arith.constant 0 : index
    %171 = vector.load %arg18[%c2_75, %c0_76, %c0_77] : memref<4x32x128xf32, #tpu.memory_space<vmem>>, vector<1x32x128xf32>
    %172 = vector.shape_cast %171 : vector<1x32x128xf32> to vector<32x128xf32>
    %173 = vector.shape_cast %170 : vector<32x128xf32> to vector<1x32x128xf32>
    tpu.vector_store %arg18[%c2_75, %c0_76, %c0_77], %173 {strides = array<i32>} : memref<4x32x128xf32, #tpu.memory_space<vmem>>, vector<1x32x128xf32>,
    %174 = vector.extract_strided_slice %155 {offsets = [3, 0, 0], sizes = [1, 128, 32], strides = [1, 1, 1]} : vector<4x128x32xf32> to vector<1x128x32xf32>
    %175 = vector.shape_cast %174 : vector<1x128x32xf32> to vector<128x32xf32>
    %176 = tpu.transpose %175, [1, 0] : vector<128x32xf32> -> vector<32x128xf32>
    %c3_78 = arith.constant 3 : index
    %c0_79 = arith.constant 0 : index
    %c0_80 = arith.constant 0 : index
    %177 = vector.load %arg18[%c3_78, %c0_79, %c0_80] : memref<4x32x128xf32, #tpu.memory_space<vmem>>, vector<1x32x128xf32>
    %178 = vector.shape_cast %177 : vector<1x32x128xf32> to vector<32x128xf32>
    %179 = vector.shape_cast %176 : vector<32x128xf32> to vector<1x32x128xf32>
    tpu.vector_store %arg18[%c3_78, %c0_79, %c0_80], %179 {strides = array<i32>} : memref<4x32x128xf32, #tpu.memory_space<vmem>>, vector<1x32x128xf32>,
    return
  }
  func.func @transform_0(%arg0: i32) -> (i32, i32, i32) {
    %c0_i32 = arith.constant 0 : i32
    %c0_i32_0 = arith.constant 0 : i32
    %c0_i32_1 = arith.constant 0 : i32
    return %arg0, %c0_i32, %c0_i32_0 : i32, i32, i32
  }
  func.func @transform_1(%arg0: i32) -> (i32, i32, i32) {
    %c0_i32 = arith.constant 0 : i32
    %c0_i32_0 = arith.constant 0 : i32
    %c0_i32_1 = arith.constant 0 : i32
    return %arg0, %c0_i32, %c0_i32_0 : i32, i32, i32
  }
  func.func @transform_2(%arg0: i32) -> (i32, i32) {
    %c0_i32 = arith.constant 0 : i32
    %c0_i32_0 = arith.constant 0 : i32
    %c0_i32_1 = arith.constant 0 : i32
    return %c0_i32, %c0_i32_0 : i32, i32
  }
  func.func @transform_3(%arg0: i32) -> (i32, i32) {
    %c0_i32 = arith.constant 0 : i32
    %c0_i32_0 = arith.constant 0 : i32
    %c0_i32_1 = arith.constant 0 : i32
    return %c0_i32, %c0_i32_0 : i32, i32
  }
  func.func @transform_4(%arg0: i32) -> (i32, i32) {
    %c0_i32 = arith.constant 0 : i32
    %c0_i32_0 = arith.constant 0 : i32
    %c0_i32_1 = arith.constant 0 : i32
    return %c0_i32, %c0_i32_0 : i32, i32
  }
  func.func @transform_5(%arg0: i32) -> (i32, i32) {
    %c0_i32 = arith.constant 0 : i32
    %c0_i32_0 = arith.constant 0 : i32
    %c0_i32_1 = arith.constant 0 : i32
    return %c0_i32, %c0_i32_0 : i32, i32
  }
  func.func @transform_6(%arg0: i32) -> (i32, i32) {
    %c0_i32 = arith.constant 0 : i32
    %c0_i32_0 = arith.constant 0 : i32
    %c0_i32_1 = arith.constant 0 : i32
    return %c0_i32, %c0_i32_0 : i32, i32
  }
  func.func @transform_7(%arg0: i32) -> (i32, i32) {
    %c0_i32 = arith.constant 0 : i32
    %c0_i32_0 = arith.constant 0 : i32
    %c0_i32_1 = arith.constant 0 : i32
    return %c0_i32, %c0_i32_0 : i32, i32
  }
  func.func @transform_8(%arg0: i32) -> (i32, i32) {
    %c0_i32 = arith.constant 0 : i32
    %c0_i32_0 = arith.constant 0 : i32
    %c0_i32_1 = arith.constant 0 : i32
    return %c0_i32, %c0_i32_0 : i32, i32
  }
  func.func @transform_9(%arg0: i32) -> (i32, i32) {
    %c0_i32 = arith.constant 0 : i32
    %c0_i32_0 = arith.constant 0 : i32
    %c0_i32_1 = arith.constant 0 : i32
    return %c0_i32, %c0_i32_0 : i32, i32
  }
  func.func @transform_10(%arg0: i32) -> (i32, i32) {
    %c0_i32 = arith.constant 0 : i32
    %c0_i32_0 = arith.constant 0 : i32
    %c0_i32_1 = arith.constant 0 : i32
    return %c0_i32, %c0_i32_0 : i32, i32
  }
  func.func @transform_11(%arg0: i32) -> (i32, i32) {
    %c0_i32 = arith.constant 0 : i32
    %c0_i32_0 = arith.constant 0 : i32
    %c0_i32_1 = arith.constant 0 : i32
    return %c0_i32, %c0_i32_0 : i32, i32
  }
  func.func @transform_12(%arg0: i32) -> (i32, i32) {
    %c0_i32 = arith.constant 0 : i32
    %c0_i32_0 = arith.constant 0 : i32
    %c0_i32_1 = arith.constant 0 : i32
    return %c0_i32, %c0_i32_0 : i32, i32
  }
  func.func @transform_13(%arg0: i32) -> (i32, i32) {
    %c0_i32 = arith.constant 0 : i32
    %c0_i32_0 = arith.constant 0 : i32
    %c0_i32_1 = arith.constant 0 : i32
    return %c0_i32, %c0_i32_0 : i32, i32
  }
  func.func @transform_14(%arg0: i32) -> (i32, i32) {
    %c0_i32 = arith.constant 0 : i32
    %c0_i32_0 = arith.constant 0 : i32
    %c0_i32_1 = arith.constant 0 : i32
    return %c0_i32, %c0_i32_0 : i32, i32
  }
  func.func @transform_15(%arg0: i32) -> (i32, i32) {
    %c0_i32 = arith.constant 0 : i32
    %c0_i32_0 = arith.constant 0 : i32
    %c0_i32_1 = arith.constant 0 : i32
    return %c0_i32, %c0_i32_0 : i32, i32
  }
  func.func @transform_16(%arg0: i32) -> (i32, i32) {
    %c0_i32 = arith.constant 0 : i32
    %c0_i32_0 = arith.constant 0 : i32
    %c0_i32_1 = arith.constant 0 : i32
    return %c0_i32, %c0_i32_0 : i32, i32
  }
  func.func @transform_17(%arg0: i32) -> (i32, i32, i32) {
    %c0_i32 = arith.constant 0 : i32
    %c0_i32_0 = arith.constant 0 : i32
    %c0_i32_1 = arith.constant 0 : i32
    return %arg0, %c0_i32, %c0_i32_0 : i32, i32, i32
  }
}

</mosaic_0001>

<llo_original>
// kernel: de_model_forward.1
$region0: #{de_model_forward.1}
  #allocation0 [shape = 'u32[]', space=smem, size = 0x4, offset = 0x4, fixed_abs, tag = 'smem constant byte address 0x4 - core index']
  #allocation1 [shape = 'u32[144,128]{1,0:T(1,128)}', space=vmem, size = 0x12000, scoped, tag = 'internal scratch']
  %s0 = inlined_call_operand.vmem [shape: f32[4,32,128], index: 0, kind: input, shape index: {}]
  %s1 = inlined_call_operand.vmem [shape: f32[4,8,32], index: 1, kind: input, shape index: {}]
  %s2 = inlined_call_operand.vmem [shape: f32[1,32], index: 2, kind: input, shape index: {}]
  %s3 = inlined_call_operand.vmem [shape: f32[1,32], index: 3, kind: input, shape index: {}]
  %s4 = inlined_call_operand.vmem [shape: bf16[32,512], index: 4, kind: input, shape index: {}]
  %s5 = inlined_call_operand.vmem [shape: bf16[32,1024], index: 5, kind: input, shape index: {}]
  %s6 = inlined_call_operand.vmem [shape: bf16[512,32], index: 6, kind: input, shape index: {}]
  %s7 = inlined_call_operand.vmem [shape: f32[1,32], index: 7, kind: input, shape index: {}]
  %s8 = inlined_call_operand.vmem [shape: f32[1,32], index: 8, kind: input, shape index: {}]
  %s9 = inlined_call_operand.vmem [shape: f32[1,32], index: 9, kind: input, shape index: {}]
  %s10 = inlined_call_operand.vmem [shape: bf16[32,32], index: 10, kind: input, shape index: {}]
  %s11 = inlined_call_operand.vmem [shape: f32[1,32], index: 11, kind: input, shape index: {}]
  %s12 = inlined_call_operand.vmem [shape: bf16[32,32], index: 12, kind: input, shape index: {}]
  %s13 = inlined_call_operand.vmem [shape: f32[1,32], index: 13, kind: input, shape index: {}]
  %s14 = inlined_call_operand.vmem [shape: f32[64,8], index: 14, kind: input, shape index: {}]
  %s15 = inlined_call_operand.vmem [shape: f32[64,512], index: 15, kind: input, shape index: {}]
  %s16 = inlined_call_operand.vmem [shape: f32[64,64], index: 16, kind: input, shape index: {}]
  %s17 = inlined_call_operand.vmem [shape: f32[4,32,128], index: 17, kind: output, shape index: {}]
  %s18 = sld [smem:[#allocation0]]
  $region78: #{de_model_forward.1} parent=0
    _
  %s20 = ssub.s32 1, %s18
  %s21 = scalar_select 0, %s20, %s18
  // Predicated region
  $region2: #{de_model_forward.1} parent=0 // pred_check
    _
  $region3: #{de_model_forward.1} parent=0 // pred_check_branch
    %23 = sbr.rel (0) target = $region5
  $region4: #{de_model_forward.1} parent=0 // pred_region
    _
  $region5: #{de_model_forward.1} parent=0 // pred_fallthru
    _
  // Predicated region
  $region6: #{de_model_forward.1} parent=0 // pred_check
    _
  $region7: #{de_model_forward.1} parent=0 // pred_check_branch
    %25 = sbr.rel (0) target = $region9
  $region8: #{de_model_forward.1} parent=0 // pred_region
    _
  $region9: #{de_model_forward.1} parent=0 // pred_fallthru
    _
  // Predicated region
  $region10: #{de_model_forward.1} parent=0 // pred_check
    _
  $region11: #{de_model_forward.1} parent=0 // pred_check_branch
    %27 = sbr.rel (0) target = $region13
  $region12: #{de_model_forward.1} parent=0 // pred_region
    _
  $region13: #{de_model_forward.1} parent=0 // pred_fallthru
    _
  // Predicated region
  $region14: #{de_model_forward.1} parent=0 // pred_check
    _
  $region15: #{de_model_forward.1} parent=0 // pred_check_branch
    %29 = sbr.rel (0) target = $region17
  $region16: #{de_model_forward.1} parent=0 // pred_region
    _
  $region17: #{de_model_forward.1} parent=0 // pred_fallthru
    _
  // Predicated region
  $region18: #{de_model_forward.1} parent=0 // pred_check
    _
  $region19: #{de_model_forward.1} parent=0 // pred_check_branch
    %31 = sbr.rel (0) target = $region21
  $region20: #{de_model_forward.1} parent=0 // pred_region
    _
  $region21: #{de_model_forward.1} parent=0 // pred_fallthru
    _
  // Predicated region
  $region22: #{de_model_forward.1} parent=0 // pred_check
    _
  $region23: #{de_model_forward.1} parent=0 // pred_check_branch
    %33 = sbr.rel (0) target = $region25
  $region24: #{de_model_forward.1} parent=0 // pred_region
    _
  $region25: #{de_model_forward.1} parent=0 // pred_fallthru
    _
  // Predicated region
  $region26: #{de_model_forward.1} parent=0 // pred_check
    _
  $region27: #{de_model_forward.1} parent=0 // pred_check_branch
    %35 = sbr.rel (0) target = $region29
  $region28: #{de_model_forward.1} parent=0 // pred_region
    _
  $region29: #{de_model_forward.1} parent=0 // pred_fallthru
    _
  // Predicated region
  $region30: #{de_model_forward.1} parent=0 // pred_check
    _
  $region31: #{de_model_forward.1} parent=0 // pred_check_branch
    %37 = sbr.rel (0) target = $region33
  $region32: #{de_model_forward.1} parent=0 // pred_region
    _
  $region33: #{de_model_forward.1} parent=0 // pred_fallthru
    _
  // Predicated region
  $region34: #{de_model_forward.1} parent=0 // pred_check
    _
  $region35: #{de_model_forward.1} parent=0 // pred_check_branch
    %39 = sbr.rel (0) target = $region37
  $region36: #{de_model_forward.1} parent=0 // pred_region
    _
  $region37: #{de_model_forward.1} parent=0 // pred_fallthru
    _
  // Predicated region
  $region38: #{de_model_forward.1} parent=0 // pred_check
    _
  $region39: #{de_model_forward.1} parent=0 // pred_check_branch
    %41 = sbr.rel (0) target = $region41
  $region40: #{de_model_forward.1} parent=0 // pred_region
    _
  $region41: #{de_model_forward.1} parent=0 // pred_fallthru
    _
  // Predicated region
  $region42: #{de_model_forward.1} parent=0 // pred_check
    _
  $region43: #{de_model_forward.1} parent=0 // pred_check_branch
    %43 = sbr.rel (0) target = $region45
  $region44: #{de_model_forward.1} parent=0 // pred_region
    _
  $region45: #{de_model_forward.1} parent=0 // pred_fallthru
    _
  // Predicated region
  $region46: #{de_model_forward.1} parent=0 // pred_check
    _
  $region47: #{de_model_forward.1} parent=0 // pred_check_branch
    %45 = sbr.rel (0) target = $region49
  $region48: #{de_model_forward.1} parent=0 // pred_region
    _
  $region49: #{de_model_forward.1} parent=0 // pred_fallthru
    _
  // Predicated region
  $region50: #{de_model_forward.1} parent=0 // pred_check
    _
  $region51: #{de_model_forward.1} parent=0 // pred_check_branch
    %47 = sbr.rel (0) target = $region53
  $region52: #{de_model_forward.1} parent=0 // pred_region
    _
  $region53: #{de_model_forward.1} parent=0 // pred_fallthru
    _
  // Predicated region
  $region54: #{de_model_forward.1} parent=0 // pred_check
    _
  $region55: #{de_model_forward.1} parent=0 // pred_check_branch
    %49 = sbr.rel (0) target = $region57
  $region56: #{de_model_forward.1} parent=0 // pred_region
    _
  $region57: #{de_model_forward.1} parent=0 // pred_fallthru
    _
  // Predicated region
  $region58: #{de_model_forward.1} parent=0 // pred_check
    _
  $region59: #{de_model_forward.1} parent=0 // pred_check_branch
    %51 = sbr.rel (0) target = $region61
  $region60: #{de_model_forward.1} parent=0 // pred_region
    _
  $region61: #{de_model_forward.1} parent=0 // pred_fallthru
    _
  // Predicated region
  $region62: #{de_model_forward.1} parent=0 // pred_check
    _
  $region63: #{de_model_forward.1} parent=0 // pred_check_branch
    %53 = sbr.rel (0) target = $region65
  $region64: #{de_model_forward.1} parent=0 // pred_region
    _
  $region65: #{de_model_forward.1} parent=0 // pred_fallthru
    _
  // Predicated region
  $region66: #{de_model_forward.1} parent=0 // pred_check
    _
  $region67: #{de_model_forward.1} parent=0 // pred_check_branch
    %55 = sbr.rel (0) target = $region69
  $region68: #{de_model_forward.1} parent=0 // pred_region
    _
  $region69: #{de_model_forward.1} parent=0 // pred_fallthru
    _
  %v57 = vld [vmem:[%s0] sm:$0xff]
  %v58 = vld [vmem:[%s0 + $0x8] sm:$0xff]
  %v59 = vld [vmem:[%s0 + $0x10] sm:$0xff]
  %v60 = vld [vmem:[%s0 + $0x18] sm:$0xff]
  %61 = vxpose.xlu0.b32.start [1/16] %v57, 128
  %62 = vxpose.xlu0.b32.cont [2/16] %v58, 128
  %63 = vxpose.xlu0.b32.cont [3/16] %v59, 128
  %64 = vxpose.xlu0.b32.cont [4/16] %v60, 128
  %65 = vxpose.xlu0.b32.cont [5/16] 0.0, 128
  %66 = vxpose.xlu0.b32.cont [6/16] 0.0, 128
  %67 = vxpose.xlu0.b32.cont [7/16] 0.0, 128
  %68 = vxpose.xlu0.b32.cont [8/16] 0.0, 128
  %69 = vxpose.xlu0.b32.cont [9/16] 0.0, 128
  %70 = vxpose.xlu0.b32.cont [10/16] 0.0, 128
  %71 = vxpose.xlu0.b32.cont [11/16] 0.0, 128
  %72 = vxpose.xlu0.b32.cont [12/16] 0.0, 128
  %73 = vxpose.xlu0.b32.cont [13/16] 0.0, 128
  %74 = vxpose.xlu0.b32.cont [14/16] 0.0, 128
  %75 = vxpose.xlu0.b32.cont [15/16] 0.0, 128
  %76 = vxpose.xlu0.b32.end [16/16] 0.0, 128
  %v77 = vpop.trf.xlu0
  %v78 = vpop.trf.xlu0
  %v79 = vpop.trf.xlu0
  %v80 = vpop.trf.xlu0
  %v81 = vpop.trf.xlu0
  %v82 = vpop.trf.xlu0
  %v83 = vpop.trf.xlu0
  %v84 = vpop.trf.xlu0
  %v85 = vpop.trf.xlu0
  %v86 = vpop.trf.xlu0
  %v87 = vpop.trf.xlu0
  %v88 = vpop.trf.xlu0
  %v89 = vpop.trf.xlu0
  %v90 = vpop.trf.xlu0
  %v91 = vpop.trf.xlu0
  %v92 = vpop.trf.xlu0
  %s93 = scalar_lea.vmem %s0, 32
  %v94 = vld [vmem:[%s93] sm:$0xff]
  %v95 = vld [vmem:[%s93 + $0x8] sm:$0xff]
  %v96 = vld [vmem:[%s93 + $0x10] sm:$0xff]
  %v97 = vld [vmem:[%s93 + $0x18] sm:$0xff]
  %98 = vxpose.xlu0.b32.start [1/16] %v94, 128
  %99 = vxpose.xlu0.b32.cont [2/16] %v95, 128
  %100 = vxpose.xlu0.b32.cont [3/16] %v96, 128
  %101 = vxpose.xlu0.b32.cont [4/16] %v97, 128
  %102 = vxpose.xlu0.b32.cont [5/16] 0.0, 128
  %103 = vxpose.xlu0.b32.cont [6/16] 0.0, 128
  %104 = vxpose.xlu0.b32.cont [7/16] 0.0, 128
  %105 = vxpose.xlu0.b32.cont [8/16] 0.0, 128
  %106 = vxpose.xlu0.b32.cont [9/16] 0.0, 128
  %107 = vxpose.xlu0.b32.cont [10/16] 0.0, 128
  %108 = vxpose.xlu0.b32.cont [11/16] 0.0, 128
  %109 = vxpose.xlu0.b32.cont [12/16] 0.0, 128
  %110 = vxpose.xlu0.b32.cont [13/16] 0.0, 128
  %111 = vxpose.xlu0.b32.cont [14/16] 0.0, 128
  %112 = vxpose.xlu0.b32.cont [15/16] 0.0, 128
  %113 = vxpose.xlu0.b32.end [16/16] 0.0, 128
  %v114 = vpop.trf.xlu0
  %v115 = vpop.trf.xlu0
  %v116 = vpop.trf.xlu0
  %v117 = vpop.trf.xlu0
  %v118 = vpop.trf.xlu0
  %v119 = vpop.trf.xlu0
  %v120 = vpop.trf.xlu0
  %v121 = vpop.trf.xlu0
  %v122 = vpop.trf.xlu0
  %v123 = vpop.trf.xlu0
  %v124 = vpop.trf.xlu0
  %v125 = vpop.trf.xlu0
  %v126 = vpop.trf.xlu0
  %v127 = vpop.trf.xlu0
  %v128 = vpop.trf.xlu0
  %v129 = vpop.trf.xlu0
  %s130 = scalar_lea.vmem %s0, 64
  %v131 = vld [vmem:[%s130] sm:$0xff]
  %v132 = vld [vmem:[%s130 + $0x8] sm:$0xff]
  %v133 = vld [vmem:[%s130 + $0x10] sm:$0xff]
  %v134 = vld [vmem:[%s130 + $0x18] sm:$0xff]
  %135 = vxpose.xlu0.b32.start [1/16] %v131, 128
  %136 = vxpose.xlu0.b32.cont [2/16] %v132, 128
  %137 = vxpose.xlu0.b32.cont [3/16] %v133, 128
  %138 = vxpose.xlu0.b32.cont [4/16] %v134, 128
  %139 = vxpose.xlu0.b32.cont [5/16] 0.0, 128
  %140 = vxpose.xlu0.b32.cont [6/16] 0.0, 128
  %141 = vxpose.xlu0.b32.cont [7/16] 0.0, 128
  %142 = vxpose.xlu0.b32.cont [8/16] 0.0, 128
  %143 = vxpose.xlu0.b32.cont [9/16] 0.0, 128
  %144 = vxpose.xlu0.b32.cont [10/16] 0.0, 128
  %145 = vxpose.xlu0.b32.cont [11/16] 0.0, 128
  %146 = vxpose.xlu0.b32.cont [12/16] 0.0, 128
  %147 = vxpose.xlu0.b32.cont [13/16] 0.0, 128
  %148 = vxpose.xlu0.b32.cont [14/16] 0.0, 128
  %149 = vxpose.xlu0.b32.cont [15/16] 0.0, 128
  %150 = vxpose.xlu0.b32.end [16/16] 0.0, 128
  %v151 = vpop.trf.xlu0
  %v152 = vpop.trf.xlu0
  %v153 = vpop.trf.xlu0
  %v154 = vpop.trf.xlu0
  %v155 = vpop.trf.xlu0
  %v156 = vpop.trf.xlu0
  %v157 = vpop.trf.xlu0
  %v158 = vpop.trf.xlu0
  %v159 = vpop.trf.xlu0
  %v160 = vpop.trf.xlu0
  %v161 = vpop.trf.xlu0
  %v162 = vpop.trf.xlu0
  %v163 = vpop.trf.xlu0
  %v164 = vpop.trf.xlu0
  %v165 = vpop.trf.xlu0
  %v166 = vpop.trf.xlu0
  %s167 = scalar_lea.vmem %s0, 96
  %v168 = vld [vmem:[%s167] sm:$0xff]
  %v169 = vld [vmem:[%s167 + $0x8] sm:$0xff]
  %v170 = vld [vmem:[%s167 + $0x10] sm:$0xff]
  %v171 = vld [vmem:[%s167 + $0x18] sm:$0xff]
  %172 = vxpose.xlu0.b32.start [1/16] %v168, 128
  %173 = vxpose.xlu0.b32.cont [2/16] %v169, 128
  %174 = vxpose.xlu0.b32.cont [3/16] %v170, 128
  %175 = vxpose.xlu0.b32.cont [4/16] %v171, 128
  %176 = vxpose.xlu0.b32.cont [5/16] 0.0, 128
  %177 = vxpose.xlu0.b32.cont [6/16] 0.0, 128
  %178 = vxpose.xlu0.b32.cont [7/16] 0.0, 128
  %179 = vxpose.xlu0.b32.cont [8/16] 0.0, 128
  %180 = vxpose.xlu0.b32.cont [9/16] 0.0, 128
  %181 = vxpose.xlu0.b32.cont [10/16] 0.0, 128
  %182 = vxpose.xlu0.b32.cont [11/16] 0.0, 128
  %183 = vxpose.xlu0.b32.cont [12/16] 0.0, 128
  %184 = vxpose.xlu0.b32.cont [13/16] 0.0, 128
  %185 = vxpose.xlu0.b32.cont [14/16] 0.0, 128
  %186 = vxpose.xlu0.b32.cont [15/16] 0.0, 128
  %187 = vxpose.xlu0.b32.end [16/16] 0.0, 128
  %v188 = vpop.trf.xlu0
  %v189 = vpop.trf.xlu0
  %v190 = vpop.trf.xlu0
  %v191 = vpop.trf.xlu0
  %v192 = vpop.trf.xlu0
  %v193 = vpop.trf.xlu0
  %v194 = vpop.trf.xlu0
  %v195 = vpop.trf.xlu0
  %v196 = vpop.trf.xlu0
  %v197 = vpop.trf.xlu0
  %v198 = vpop.trf.xlu0
  %v199 = vpop.trf.xlu0
  %v200 = vpop.trf.xlu0
  %v201 = vpop.trf.xlu0
  %v202 = vpop.trf.xlu0
  %v203 = vpop.trf.xlu0
  %v204 = vld [vmem:[%s1] sm:$0xff]
  %v205 = vld [vmem:[%s1 + $0x8] sm:$0xff]
  %v206 = vld [vmem:[%s1 + $0x10] sm:$0xff]
  %v207 = vld [vmem:[%s1 + $0x18] sm:$0xff]
  %v208 = vld [vmem:[%s2] sm:$0x1]
  %v209 = vld [vmem:[%s3] sm:$0x1]
  %vm210 = vcmask 261120
  %v211 = vsel %vm210, %v77, 0.0
  %212 = vadd.xlane.f32.xlu0 %v211
  %v213 = vpop.xlane.xlu0 %212
  %v214 = vsel %vm210, %v78, 0.0
  %215 = vadd.xlane.f32.xlu0 %v214
  %v216 = vpop.xlane.xlu0 %215
  %v217 = vsel %vm210, %v79, 0.0
  %218 = vadd.xlane.f32.xlu0 %v217
  %v219 = vpop.xlane.xlu0 %218
  %v220 = vsel %vm210, %v80, 0.0
  %221 = vadd.xlane.f32.xlu0 %v220
  %v222 = vpop.xlane.xlu0 %221
  %v223 = vsel %vm210, %v81, 0.0
  %224 = vadd.xlane.f32.xlu0 %v223
  %v225 = vpop.xlane.xlu0 %224
  %v226 = vsel %vm210, %v82, 0.0
  %227 = vadd.xlane.f32.xlu0 %v226
  %v228 = vpop.xlane.xlu0 %227
  %v229 = vsel %vm210, %v83, 0.0
  %230 = vadd.xlane.f32.xlu0 %v229
  %v231 = vpop.xlane.xlu0 %230
  %v232 = vsel %vm210, %v84, 0.0
  %233 = vadd.xlane.f32.xlu0 %v232
  %v234 = vpop.xlane.xlu0 %233
  %v235 = vsel %vm210, %v85, 0.0
  %236 = vadd.xlane.f32.xlu0 %v235
  %v237 = vpop.xlane.xlu0 %236
  %v238 = vsel %vm210, %v86, 0.0
  %239 = vadd.xlane.f32.xlu0 %v238
  %v240 = vpop.xlane.xlu0 %239
  %v241 = vsel %vm210, %v87, 0.0
  %242 = vadd.xlane.f32.xlu0 %v241
  %v243 = vpop.xlane.xlu0 %242
  %v244 = vsel %vm210, %v88, 0.0
  %245 = vadd.xlane.f32.xlu0 %v244
  %v246 = vpop.xlane.xlu0 %245
  %v247 = vsel %vm210, %v89, 0.0
  %248 = vadd.xlane.f32.xlu0 %v247
  %v249 = vpop.xlane.xlu0 %248
  %v250 = vsel %vm210, %v90, 0.0
  %251 = vadd.xlane.f32.xlu0 %v250
  %v252 = vpop.xlane.xlu0 %251
  %v253 = vsel %vm210, %v91, 0.0
  %254 = vadd.xlane.f32.xlu0 %v253
  %v255 = vpop.xlane.xlu0 %254
  %v256 = vsel %vm210, %v92, 0.0
  %257 = vadd.xlane.f32.xlu0 %v256
  %v258 = vpop.xlane.xlu0 %257
  %v259 = vsel %vm210, %v114, 0.0
  %260 = vadd.xlane.f32.xlu0 %v259
  %v261 = vpop.xlane.xlu0 %260
  %v262 = vsel %vm210, %v115, 0.0
  %263 = vadd.xlane.f32.xlu0 %v262
  %v264 = vpop.xlane.xlu0 %263
  %v265 = vsel %vm210, %v116, 0.0
  %266 = vadd.xlane.f32.xlu0 %v265
  %v267 = vpop.xlane.xlu0 %266
  %v268 = vsel %vm210, %v117, 0.0
  %269 = vadd.xlane.f32.xlu0 %v268
  %v270 = vpop.xlane.xlu0 %269
  %v271 = vsel %vm210, %v118, 0.0
  %272 = vadd.xlane.f32.xlu0 %v271
  %v273 = vpop.xlane.xlu0 %272
  %v274 = vsel %vm210, %v119, 0.0
  %275 = vadd.xlane.f32.xlu0 %v274
  %v276 = vpop.xlane.xlu0 %275
  %v277 = vsel %vm210, %v120, 0.0
  %278 = vadd.xlane.f32.xlu0 %v277
  %v279 = vpop.xlane.xlu0 %278
  %v280 = vsel %vm210, %v121, 0.0
  %281 = vadd.xlane.f32.xlu0 %v280
  %v282 = vpop.xlane.xlu0 %281
  %v283 = vsel %vm210, %v122, 0.0
  %284 = vadd.xlane.f32.xlu0 %v283
  %v285 = vpop.xlane.xlu0 %284
  %v286 = vsel %vm210, %v123, 0.0
  %287 = vadd.xlane.f32.xlu0 %v286
  %v288 = vpop.xlane.xlu0 %287
  %v289 = vsel %vm210, %v124, 0.0
  %290 = vadd.xlane.f32.xlu0 %v289
  %v291 = vpop.xlane.xlu0 %290
  %v292 = vsel %vm210, %v125, 0.0
  %293 = vadd.xlane.f32.xlu0 %v292
  %v294 = vpop.xlane.xlu0 %293
  %v295 = vsel %vm210, %v126, 0.0
  %296 = vadd.xlane.f32.xlu0 %v295
  %v297 = vpop.xlane.xlu0 %296
  %v298 = vsel %vm210, %v127, 0.0
  %299 = vadd.xlane.f32.xlu0 %v298
  %v300 = vpop.xlane.xlu0 %299
  %v301 = vsel %vm210, %v128, 0.0
  %302 = vadd.xlane.f32.xlu0 %v301
  %v303 = vpop.xlane.xlu0 %302
  %v304 = vsel %vm210, %v129, 0.0
  %305 = vadd.xlane.f32.xlu0 %v304
  %v306 = vpop.xlane.xlu0 %305
  %v307 = vsel %vm210, %v151, 0.0
  %308 = vadd.xlane.f32.xlu0 %v307
  %v309 = vpop.xlane.xlu0 %308
  %v310 = vsel %vm210, %v152, 0.0
  %311 = vadd.xlane.f32.xlu0 %v310
  %v312 = vpop.xlane.xlu0 %311
  %v313 = vsel %vm210, %v153, 0.0
  %314 = vadd.xlane.f32.xlu0 %v313
  %v315 = vpop.xlane.xlu0 %314
  %v316 = vsel %vm210, %v154, 0.0
  %317 = vadd.xlane.f32.xlu0 %v316
  %v318 = vpop.xlane.xlu0 %317
  %v319 = vsel %vm210, %v155, 0.0
  %320 = vadd.xlane.f32.xlu0 %v319
  %v321 = vpop.xlane.xlu0 %320
  %v322 = vsel %vm210, %v156, 0.0
  %323 = vadd.xlane.f32.xlu0 %v322
  %v324 = vpop.xlane.xlu0 %323
  %v325 = vsel %vm210, %v157, 0.0
  %326 = vadd.xlane.f32.xlu0 %v325
  %v327 = vpop.xlane.xlu0 %326
  %v328 = vsel %vm210, %v158, 0.0
  %329 = vadd.xlane.f32.xlu0 %v328
  %v330 = vpop.xlane.xlu0 %329
  %v331 = vsel %vm210, %v159, 0.0
  %332 = vadd.xlane.f32.xlu0 %v331
  %v333 = vpop.xlane.xlu0 %332
  %v334 = vsel %vm210, %v160, 0.0
  %335 = vadd.xlane.f32.xlu0 %v334
  %v336 = vpop.xlane.xlu0 %335
  %v337 = vsel %vm210, %v161, 0.0
  %338 = vadd.xlane.f32.xlu0 %v337
  %v339 = vpop.xlane.xlu0 %338
  %v340 = vsel %vm210, %v162, 0.0
  %341 = vadd.xlane.f32.xlu0 %v340
  %v342 = vpop.xlane.xlu0 %341
  %v343 = vsel %vm210, %v163, 0.0
  %344 = vadd.xlane.f32.xlu0 %v343
  %v345 = vpop.xlane.xlu0 %344
  %v346 = vsel %vm210, %v164, 0.0
  %347 = vadd.xlane.f32.xlu0 %v346
  %v348 = vpop.xlane.xlu0 %347
  %v349 = vsel %vm210, %v165, 0.0
  %350 = vadd.xlane.f32.xlu0 %v349
  %v351 = vpop.xlane.xlu0 %350
  %v352 = vsel %vm210, %v166, 0.0
  %353 = vadd.xlane.f32.xlu0 %v352
  %v354 = vpop.xlane.xlu0 %353
  %v355 = vsel %vm210, %v188, 0.0
  %356 = vadd.xlane.f32.xlu0 %v355
  %v357 = vpop.xlane.xlu0 %356
  %v358 = vsel %vm210, %v189, 0.0
  %359 = vadd.xlane.f32.xlu0 %v358
  %v360 = vpop.xlane.xlu0 %359
  %v361 = vsel %vm210, %v190, 0.0
  %362 = vadd.xlane.f32.xlu0 %v361
  %v363 = vpop.xlane.xlu0 %362
  %v364 = vsel %vm210, %v191, 0.0
  %365 = vadd.xlane.f32.xlu0 %v364
  %v366 = vpop.xlane.xlu0 %365
  %v367 = vsel %vm210, %v192, 0.0
  %368 = vadd.xlane.f32.xlu0 %v367
  %v369 = vpop.xlane.xlu0 %368
  %v370 = vsel %vm210, %v193, 0.0
  %371 = vadd.xlane.f32.xlu0 %v370
  %v372 = vpop.xlane.xlu0 %371
  %v373 = vsel %vm210, %v194, 0.0
  %374 = vadd.xlane.f32.xlu0 %v373
  %v375 = vpop.xlane.xlu0 %374
  %v376 = vsel %vm210, %v195, 0.0
  %377 = vadd.xlane.f32.xlu0 %v376
  %v378 = vpop.xlane.xlu0 %377
  %v379 = vsel %vm210, %v196, 0.0
  %380 = vadd.xlane.f32.xlu0 %v379
  %v381 = vpop.xlane.xlu0 %380
  %v382 = vsel %vm210, %v197, 0.0
  %383 = vadd.xlane.f32.xlu0 %v382
  %v384 = vpop.xlane.xlu0 %383
  %v385 = vsel %vm210, %v198, 0.0
  %386 = vadd.xlane.f32.xlu0 %v385
  %v387 = vpop.xlane.xlu0 %386
  %v388 = vsel %vm210, %v199, 0.0
  %389 = vadd.xlane.f32.xlu0 %v388
  %v390 = vpop.xlane.xlu0 %389
  %v391 = vsel %vm210, %v200, 0.0
  %392 = vadd.xlane.f32.xlu0 %v391
  %v393 = vpop.xlane.xlu0 %392
  %v394 = vsel %vm210, %v201, 0.0
  %395 = vadd.xlane.f32.xlu0 %v394
  %v396 = vpop.xlane.xlu0 %395
  %v397 = vsel %vm210, %v202, 0.0
  %398 = vadd.xlane.f32.xlu0 %v397
  %v399 = vpop.xlane.xlu0 %398
  %v400 = vsel %vm210, %v203, 0.0
  %401 = vadd.xlane.f32.xlu0 %v400
  %v402 = vpop.xlane.xlu0 %401
  %v403 = vrcp.pop 32.0
  %v404 = vmul.f32 %v213, %v403
  %v405 = vmul.f32 %v216, %v403
  %v406 = vmul.f32 %v219, %v403
  %v407 = vmul.f32 %v222, %v403
  %v408 = vmul.f32 %v225, %v403
  %v409 = vmul.f32 %v228, %v403
  %v410 = vmul.f32 %v231, %v403
  %v411 = vmul.f32 %v234, %v403
  %v412 = vmul.f32 %v237, %v403
  %v413 = vmul.f32 %v240, %v403
  %v414 = vmul.f32 %v243, %v403
  %v415 = vmul.f32 %v246, %v403
  %v416 = vmul.f32 %v249, %v403
  %v417 = vmul.f32 %v252, %v403
  %v418 = vmul.f32 %v255, %v403
  %v419 = vmul.f32 %v258, %v403
  %v420 = vmul.f32 %v261, %v403
  %v421 = vmul.f32 %v264, %v403
  %v422 = vmul.f32 %v267, %v403
  %v423 = vmul.f32 %v270, %v403
  %v424 = vmul.f32 %v273, %v403
  %v425 = vmul.f32 %v276, %v403
  %v426 = vmul.f32 %v279, %v403
  %v427 = vmul.f32 %v282, %v403
  %v428 = vmul.f32 %v285, %v403
  %v429 = vmul.f32 %v288, %v403
  %v430 = vmul.f32 %v291, %v403
  %v431 = vmul.f32 %v294, %v403
  %v432 = vmul.f32 %v297, %v403
  %v433 = vmul.f32 %v300, %v403
  %v434 = vmul.f32 %v303, %v403
  %v435 = vmul.f32 %v306, %v403
  %v436 = vmul.f32 %v309, %v403
  %v437 = vmul.f32 %v312, %v403
  %v438 = vmul.f32 %v315, %v403
  %v439 = vmul.f32 %v318, %v403
  %v440 = vmul.f32 %v321, %v403
  %v441 = vmul.f32 %v324, %v403
  %v442 = vmul.f32 %v327, %v403
  %v443 = vmul.f32 %v330, %v403
  %v444 = vmul.f32 %v333, %v403
  %v445 = vmul.f32 %v336, %v403
  %v446 = vmul.f32 %v339, %v403
  %v447 = vmul.f32 %v342, %v403
  %v448 = vmul.f32 %v345, %v403
  %v449 = vmul.f32 %v348, %v403
  %v450 = vmul.f32 %v351, %v403
  %v451 = vmul.f32 %v354, %v403
  %v452 = vmul.f32 %v357, %v403
  %v453 = vmul.f32 %v360, %v403
  %v454 = vmul.f32 %v363, %v403
  %v455 = vmul.f32 %v366, %v403
  %v456 = vmul.f32 %v369, %v403
  %v457 = vmul.f32 %v372, %v403
  %v458 = vmul.f32 %v375, %v403
  %v459 = vmul.f32 %v378, %v403
  %v460 = vmul.f32 %v381, %v403
  %v461 = vmul.f32 %v384, %v403
  %v462 = vmul.f32 %v387, %v403
  %v463 = vmul.f32 %v390, %v403
  %v464 = vmul.f32 %v393, %v403
  %v465 = vmul.f32 %v396, %v403
  %v466 = vmul.f32 %v399, %v403
  %v467 = vmul.f32 %v402, %v403
  %v468 = vsub.f32 %v77, %v404
  %v469 = vsub.f32 %v78, %v405
  %v470 = vsub.f32 %v79, %v406
  %v471 = vsub.f32 %v80, %v407
  %v472 = vsub.f32 %v81, %v408
  %v473 = vsub.f32 %v82, %v409
  %v474 = vsub.f32 %v83, %v410
  %v475 = vsub.f32 %v84, %v411
  %v476 = vsub.f32 %v85, %v412
  %v477 = vsub.f32 %v86, %v413
  %v478 = vsub.f32 %v87, %v414
  %v479 = vsub.f32 %v88, %v415
  %v480 = vsub.f32 %v89, %v416
  %v481 = vsub.f32 %v90, %v417
  %v482 = vsub.f32 %v91, %v418
  %v483 = vsub.f32 %v92, %v419
  %v484 = vsub.f32 %v114, %v420
  %v485 = vsub.f32 %v115, %v421
  %v486 = vsub.f32 %v116, %v422
  %v487 = vsub.f32 %v117, %v423
  %v488 = vsub.f32 %v118, %v424
  %v489 = vsub.f32 %v119, %v425
  %v490 = vsub.f32 %v120, %v426
  %v491 = vsub.f32 %v121, %v427
  %v492 = vsub.f32 %v122, %v428
  %v493 = vsub.f32 %v123, %v429
  %v494 = vsub.f32 %v124, %v430
  %v495 = vsub.f32 %v125, %v431
  %v496 = vsub.f32 %v126, %v432
  %v497 = vsub.f32 %v127, %v433
  %v498 = vsub.f32 %v128, %v434
  %v499 = vsub.f32 %v129, %v435
  %v500 = vsub.f32 %v151, %v436
  %v501 = vsub.f32 %v152, %v437
  %v502 = vsub.f32 %v153, %v438
  %v503 = vsub.f32 %v154, %v439
  %v504 = vsub.f32 %v155, %v440
  %v505 = vsub.f32 %v156, %v441
  %v506 = vsub.f32 %v157, %v442
  %v507 = vsub.f32 %v158, %v443
  %v508 = vsub.f32 %v159, %v444
  %v509 = vsub.f32 %v160, %v445
  %v510 = vsub.f32 %v161, %v446
  %v511 = vsub.f32 %v162, %v447
  %v512 = vsub.f32 %v163, %v448
  %v513 = vsub.f32 %v164, %v449
  %v514 = vsub.f32 %v165, %v450
  %v515 = vsub.f32 %v166, %v451
  %v516 = vsub.f32 %v188, %v452
  %v517 = vsub.f32 %v189, %v453
  %v518 = vsub.f32 %v190, %v454
  %v519 = vsub.f32 %v191, %v455
  %v520 = vsub.f32 %v192, %v456
  %v521 = vsub.f32 %v193, %v457
  %v522 = vsub.f32 %v194, %v458
  %v523 = vsub.f32 %v195, %v459
  %v524 = vsub.f32 %v196, %v460
  %v525 = vsub.f32 %v197, %v461
  %v526 = vsub.f32 %v198, %v462
  %v527 = vsub.f32 %v199, %v463
  %v528 = vsub.f32 %v200, %v464
  %v529 = vsub.f32 %v201, %v465
  %v530 = vsub.f32 %v202, %v466
  %v531 = vsub.f32 %v203, %v467
  %v532 = vmul.f32 %v468, %v468
  %v533 = vmul.f32 %v469, %v469
  %v534 = vmul.f32 %v470, %v470
  %v535 = vmul.f32 %v471, %v471
  %v536 = vmul.f32 %v472, %v472
  %v537 = vmul.f32 %v473, %v473
  %v538 = vmul.f32 %v474, %v474
  %v539 = vmul.f32 %v475, %v475
  %v540 = vmul.f32 %v476, %v476
  %v541 = vmul.f32 %v477, %v477
  %v542 = vmul.f32 %v478, %v478
  %v543 = vmul.f32 %v479, %v479
  %v544 = vmul.f32 %v480, %v480
  %v545 = vmul.f32 %v481, %v481
  %v546 = vmul.f32 %v482, %v482
  %v547 = vmul.f32 %v483, %v483
  %v548 = vmul.f32 %v484, %v484
  %v549 = vmul.f32 %v485, %v485
  %v550 = vmul.f32 %v486, %v486
  %v551 = vmul.f32 %v487, %v487
  %v552 = vmul.f32 %v488, %v488
  %v553 = vmul.f32 %v489, %v489
  %v554 = vmul.f32 %v490, %v490
  %v555 = vmul.f32 %v491, %v491
  %v556 = vmul.f32 %v492, %v492
  %v557 = vmul.f32 %v493, %v493
  %v558 = vmul.f32 %v494, %v494
  %v559 = vmul.f32 %v495, %v495
  %v560 = vmul.f32 %v496, %v496
  %v561 = vmul.f32 %v497, %v497
  %v562 = vmul.f32 %v498, %v498
  %v563 = vmul.f32 %v499, %v499
  %v564 = vmul.f32 %v500, %v500
  %v565 = vmul.f32 %v501, %v501
  %v566 = vmul.f32 %v502, %v502
  %v567 = vmul.f32 %v503, %v503
  %v568 = vmul.f32 %v504, %v504
  %v569 = vmul.f32 %v505, %v505
  %v570 = vmul.f32 %v506, %v506
  %v571 = vmul.f32 %v507, %v507
  %v572 = vmul.f32 %v508, %v508
  %v573 = vmul.f32 %v509, %v509
  %v574 = vmul.f32 %v510, %v510
  %v575 = vmul.f32 %v511, %v511
  %v576 = vmul.f32 %v512, %v512
  %v577 = vmul.f32 %v513, %v513
  %v578 = vmul.f32 %v514, %v514
  %v579 = vmul.f32 %v515, %v515
  %v580 = vmul.f32 %v516, %v516
  %v581 = vmul.f32 %v517, %v517
  %v582 = vmul.f32 %v518, %v518
  %v583 = vmul.f32 %v519, %v519
  %v584 = vmul.f32 %v520, %v520
  %v585 = vmul.f32 %v521, %v521
  %v586 = vmul.f32 %v522, %v522
  %v587 = vmul.f32 %v523, %v523
  %v588 = vmul.f32 %v524, %v524
  %v589 = vmul.f32 %v525, %v525
  %v590 = vmul.f32 %v526, %v526
  %v591 = vmul.f32 %v527, %v527
  %v592 = vmul.f32 %v528, %v528
  %v593 = vmul.f32 %v529, %v529
  %v594 = vmul.f32 %v530, %v530
  %v595 = vmul.f32 %v531, %v531
  %v596 = vsel %vm210, %v532, 0.0
  %597 = vadd.xlane.f32.xlu0 %v596
  %v598 = vpop.xlane.xlu0 %597
  %v599 = vsel %vm210, %v533, 0.0
  %600 = vadd.xlane.f32.xlu0 %v599
  %v601 = vpop.xlane.xlu0 %600
  %v602 = vsel %vm210, %v534, 0.0
  %603 = vadd.xlane.f32.xlu0 %v602
  %v604 = vpop.xlane.xlu0 %603
  %v605 = vsel %vm210, %v535, 0.0
  %606 = vadd.xlane.f32.xlu0 %v605
  %v607 = vpop.xlane.xlu0 %606
  %v608 = vsel %vm210, %v536, 0.0
  %609 = vadd.xlane.f32.xlu0 %v608
  %v610 = vpop.xlane.xlu0 %609
  %v611 = vsel %vm210, %v537, 0.0
  %612 = vadd.xlane.f32.xlu0 %v611
  %v613 = vpop.xlane.xlu0 %612
  %v614 = vsel %vm210, %v538, 0.0
  %615 = vadd.xlane.f32.xlu0 %v614
  %v616 = vpop.xlane.xlu0 %615
  %v617 = vsel %vm210, %v539, 0.0
  %618 = vadd.xlane.f32.xlu0 %v617
  %v619 = vpop.xlane.xlu0 %618
  %v620 = vsel %vm210, %v540, 0.0
  %621 = vadd.xlane.f32.xlu0 %v620
  %v622 = vpop.xlane.xlu0 %621
  %v623 = vsel %vm210, %v541, 0.0
  %624 = vadd.xlane.f32.xlu0 %v623
  %v625 = vpop.xlane.xlu0 %624
  %v626 = vsel %vm210, %v542, 0.0
  %627 = vadd.xlane.f32.xlu0 %v626
  %v628 = vpop.xlane.xlu0 %627
  %v629 = vsel %vm210, %v543, 0.0
  %630 = vadd.xlane.f32.xlu0 %v629
  %v631 = vpop.xlane.xlu0 %630
  %v632 = vsel %vm210, %v544, 0.0
  %633 = vadd.xlane.f32.xlu0 %v632
  %v634 = vpop.xlane.xlu0 %633
  %v635 = vsel %vm210, %v545, 0.0
  %636 = vadd.xlane.f32.xlu0 %v635
  %v637 = vpop.xlane.xlu0 %636
  %v638 = vsel %vm210, %v546, 0.0
  %639 = vadd.xlane.f32.xlu0 %v638
  %v640 = vpop.xlane.xlu0 %639
  %v641 = vsel %vm210, %v547, 0.0
  %642 = vadd.xlane.f32.xlu0 %v641
  %v643 = vpop.xlane.xlu0 %642
  %v644 = vsel %vm210, %v548, 0.0
  %645 = vadd.xlane.f32.xlu0 %v644
  %v646 = vpop.xlane.xlu0 %645
  %v647 = vsel %vm210, %v549, 0.0
  %648 = vadd.xlane.f32.xlu0 %v647
  %v649 = vpop.xlane.xlu0 %648
  %v650 = vsel %vm210, %v550, 0.0
  %651 = vadd.xlane.f32.xlu0 %v650
  %v652 = vpop.xlane.xlu0 %651
  %v653 = vsel %vm210, %v551, 0.0
  %654 = vadd.xlane.f32.xlu0 %v653
  %v655 = vpop.xlane.xlu0 %654
  %v656 = vsel %vm210, %v552, 0.0
  %657 = vadd.xlane.f32.xlu0 %v656
  %v658 = vpop.xlane.xlu0 %657
  %v659 = vsel %vm210, %v553, 0.0
  %660 = vadd.xlane.f32.xlu0 %v659
  %v661 = vpop.xlane.xlu0 %660
  %v662 = vsel %vm210, %v554, 0.0
  %663 = vadd.xlane.f32.xlu0 %v662
  %v664 = vpop.xlane.xlu0 %663
  %v665 = vsel %vm210, %v555, 0.0
  %666 = vadd.xlane.f32.xlu0 %v665
  %v667 = vpop.xlane.xlu0 %666
  %v668 = vsel %vm210, %v556, 0.0
  %669 = vadd.xlane.f32.xlu0 %v668
  %v670 = vpop.xlane.xlu0 %669
  %v671 = vsel %vm210, %v557, 0.0
  %672 = vadd.xlane.f32.xlu0 %v671
  %v673 = vpop.xlane.xlu0 %672
  %v674 = vsel %vm210, %v558, 0.0
  %675 = vadd.xlane.f32.xlu0 %v674
  %v676 = vpop.xlane.xlu0 %675
  %v677 = vsel %vm210, %v559, 0.0
  %678 = vadd.xlane.f32.xlu0 %v677
  %v679 = vpop.xlane.xlu0 %678
  %v680 = vsel %vm210, %v560, 0.0
  %681 = vadd.xlane.f32.xlu0 %v680
  %v682 = vpop.xlane.xlu0 %681
  %v683 = vsel %vm210, %v561, 0.0
  %684 = vadd.xlane.f32.xlu0 %v683
  %v685 = vpop.xlane.xlu0 %684
  %v686 = vsel %vm210, %v562, 0.0
  %687 = vadd.xlane.f32.xlu0 %v686
  %v688 = vpop.xlane.xlu0 %687
  %v689 = vsel %vm210, %v563, 0.0
  %690 = vadd.xlane.f32.xlu0 %v689
  %v691 = vpop.xlane.xlu0 %690
  %v692 = vsel %vm210, %v564, 0.0
  %693 = vadd.xlane.f32.xlu0 %v692
  %v694 = vpop.xlane.xlu0 %693
  %v695 = vsel %vm210, %v565, 0.0
  %696 = vadd.xlane.f32.xlu0 %v695
  %v697 = vpop.xlane.xlu0 %696
  %v698 = vsel %vm210, %v566, 0.0
  %699 = vadd.xlane.f32.xlu0 %v698
  %v700 = vpop.xlane.xlu0 %699
  %v701 = vsel %vm210, %v567, 0.0
  %702 = vadd.xlane.f32.xlu0 %v701
  %v703 = vpop.xlane.xlu0 %702
  %v704 = vsel %vm210, %v568, 0.0
  %705 = vadd.xlane.f32.xlu0 %v704
  %v706 = vpop.xlane.xlu0 %705
  %v707 = vsel %vm210, %v569, 0.0
  %708 = vadd.xlane.f32.xlu0 %v707
  %v709 = vpop.xlane.xlu0 %708
  %v710 = vsel %vm210, %v570, 0.0
  %711 = vadd.xlane.f32.xlu0 %v710
  %v712 = vpop.xlane.xlu0 %711
  %v713 = vsel %vm210, %v571, 0.0
  %714 = vadd.xlane.f32.xlu0 %v713
  %v715 = vpop.xlane.xlu0 %714
  %v716 = vsel %vm210, %v572, 0.0
  %717 = vadd.xlane.f32.xlu0 %v716
  %v718 = vpop.xlane.xlu0 %717
  %v719 = vsel %vm210, %v573, 0.0
  %720 = vadd.xlane.f32.xlu0 %v719
  %v721 = vpop.xlane.xlu0 %720
  %v722 = vsel %vm210, %v574, 0.0
  %723 = vadd.xlane.f32.xlu0 %v722
  %v724 = vpop.xlane.xlu0 %723
  %v725 = vsel %vm210, %v575, 0.0
  %726 = vadd.xlane.f32.xlu0 %v725
  %v727 = vpop.xlane.xlu0 %726
  %v728 = vsel %vm210, %v576, 0.0
  %729 = vadd.xlane.f32.xlu0 %v728
  %v730 = vpop.xlane.xlu0 %729
  %v731 = vsel %vm210, %v577, 0.0
  %732 = vadd.xlane.f32.xlu0 %v731
  %v733 = vpop.xlane.xlu0 %732
  %v734 = vsel %vm210, %v578, 0.0
  %735 = vadd.xlane.f32.xlu0 %v734
  %v736 = vpop.xlane.xlu0 %735
  %v737 = vsel %vm210, %v579, 0.0
  %738 = vadd.xlane.f32.xlu0 %v737
  %v739 = vpop.xlane.xlu0 %738
  %v740 = vsel %vm210, %v580, 0.0
  %741 = vadd.xlane.f32.xlu0 %v740
  %v742 = vpop.xlane.xlu0 %741
  %v743 = vsel %vm210, %v581, 0.0
  %744 = vadd.xlane.f32.xlu0 %v743
  %v745 = vpop.xlane.xlu0 %744
  %v746 = vsel %vm210, %v582, 0.0
  %747 = vadd.xlane.f32.xlu0 %v746
  %v748 = vpop.xlane.xlu0 %747
  %v749 = vsel %vm210, %v583, 0.0
  %750 = vadd.xlane.f32.xlu0 %v749
  %v751 = vpop.xlane.xlu0 %750
  %v752 = vsel %vm210, %v584, 0.0
  %753 = vadd.xlane.f32.xlu0 %v752
  %v754 = vpop.xlane.xlu0 %753
  %v755 = vsel %vm210, %v585, 0.0
  %756 = vadd.xlane.f32.xlu0 %v755
  %v757 = vpop.xlane.xlu0 %756
  %v758 = vsel %vm210, %v586, 0.0
  %759 = vadd.xlane.f32.xlu0 %v758
  %v760 = vpop.xlane.xlu0 %759
  %v761 = vsel %vm210, %v587, 0.0
  %762 = vadd.xlane.f32.xlu0 %v761
  %v763 = vpop.xlane.xlu0 %762
  %v764 = vsel %vm210, %v588, 0.0
  %765 = vadd.xlane.f32.xlu0 %v764
  %v766 = vpop.xlane.xlu0 %765
  %v767 = vsel %vm210, %v589, 0.0
  %768 = vadd.xlane.f32.xlu0 %v767
  %v769 = vpop.xlane.xlu0 %768
  %v770 = vsel %vm210, %v590, 0.0
  %771 = vadd.xlane.f32.xlu0 %v770
  %v772 = vpop.xlane.xlu0 %771
  %v773 = vsel %vm210, %v591, 0.0
  %774 = vadd.xlane.f32.xlu0 %v773
  %v775 = vpop.xlane.xlu0 %774
  %v776 = vsel %vm210, %v592, 0.0
  %777 = vadd.xlane.f32.xlu0 %v776
  %v778 = vpop.xlane.xlu0 %777
  %v779 = vsel %vm210, %v593, 0.0
  %780 = vadd.xlane.f32.xlu0 %v779
  %v781 = vpop.xlane.xlu0 %780
  %v782 = vsel %vm210, %v594, 0.0
  %783 = vadd.xlane.f32.xlu0 %v782
  %v784 = vpop.xlane.xlu0 %783
  %v785 = vsel %vm210, %v595, 0.0
  %786 = vadd.xlane.f32.xlu0 %v785
  %v787 = vpop.xlane.xlu0 %786
  %v788 = vmul.f32 %v598, %v403
  %v789 = vmul.f32 %v601, %v403
  %v790 = vmul.f32 %v604, %v403
  %v791 = vmul.f32 %v607, %v403
  %v792 = vmul.f32 %v610, %v403
  %v793 = vmul.f32 %v613, %v403
  %v794 = vmul.f32 %v616, %v403
  %v795 = vmul.f32 %v619, %v403
  %v796 = vmul.f32 %v622, %v403
  %v797 = vmul.f32 %v625, %v403
  %v798 = vmul.f32 %v628, %v403
  %v799 = vmul.f32 %v631, %v403
  %v800 = vmul.f32 %v634, %v403
  %v801 = vmul.f32 %v637, %v403
  %v802 = vmul.f32 %v640, %v403
  %v803 = vmul.f32 %v643, %v403
  %v804 = vmul.f32 %v646, %v403
  %v805 = vmul.f32 %v649, %v403
  %v806 = vmul.f32 %v652, %v403
  %v807 = vmul.f32 %v655, %v403
  %v808 = vmul.f32 %v658, %v403
  %v809 = vmul.f32 %v661, %v403
  %v810 = vmul.f32 %v664, %v403
  %v811 = vmul.f32 %v667, %v403
  %v812 = vmul.f32 %v670, %v403
  %v813 = vmul.f32 %v673, %v403
  %v814 = vmul.f32 %v676, %v403
  %v815 = vmul.f32 %v679, %v403
  %v816 = vmul.f32 %v682, %v403
  %v817 = vmul.f32 %v685, %v403
  %v818 = vmul.f32 %v688, %v403
  %v819 = vmul.f32 %v691, %v403
  %v820 = vmul.f32 %v694, %v403
  %v821 = vmul.f32 %v697, %v403
  %v822 = vmul.f32 %v700, %v403
  %v823 = vmul.f32 %v703, %v403
  %v824 = vmul.f32 %v706, %v403
  %v825 = vmul.f32 %v709, %v403
  %v826 = vmul.f32 %v712, %v403
  %v827 = vmul.f32 %v715, %v403
  %v828 = vmul.f32 %v718, %v403
  %v829 = vmul.f32 %v721, %v403
  %v830 = vmul.f32 %v724, %v403
  %v831 = vmul.f32 %v727, %v403
  %v832 = vmul.f32 %v730, %v403
  %v833 = vmul.f32 %v733, %v403
  %v834 = vmul.f32 %v736, %v403
  %v835 = vmul.f32 %v739, %v403
  %v836 = vmul.f32 %v742, %v403
  %v837 = vmul.f32 %v745, %v403
  %v838 = vmul.f32 %v748, %v403
  %v839 = vmul.f32 %v751, %v403
  %v840 = vmul.f32 %v754, %v403
  %v841 = vmul.f32 %v757, %v403
  %v842 = vmul.f32 %v760, %v403
  %v843 = vmul.f32 %v763, %v403
  %v844 = vmul.f32 %v766, %v403
  %v845 = vmul.f32 %v769, %v403
  %v846 = vmul.f32 %v772, %v403
  %v847 = vmul.f32 %v775, %v403
  %v848 = vmul.f32 %v778, %v403
  %v849 = vmul.f32 %v781, %v403
  %v850 = vmul.f32 %v784, %v403
  %v851 = vmul.f32 %v787, %v403
  %v852 = vadd.f32 %v788, 1e-05
  %v853 = vadd.f32 %v789, 1e-05
  %v854 = vadd.f32 %v790, 1e-05
  %v855 = vadd.f32 %v791, 1e-05
  %v856 = vadd.f32 %v792, 1e-05
  %v857 = vadd.f32 %v793, 1e-05
  %v858 = vadd.f32 %v794, 1e-05
  %v859 = vadd.f32 %v795, 1e-05
  %v860 = vadd.f32 %v796, 1e-05
  %v861 = vadd.f32 %v797, 1e-05
  %v862 = vadd.f32 %v798, 1e-05
  %v863 = vadd.f32 %v799, 1e-05
  %v864 = vadd.f32 %v800, 1e-05
  %v865 = vadd.f32 %v801, 1e-05
  %v866 = vadd.f32 %v802, 1e-05
  %v867 = vadd.f32 %v803, 1e-05
  %v868 = vadd.f32 %v804, 1e-05
  %v869 = vadd.f32 %v805, 1e-05
  %v870 = vadd.f32 %v806, 1e-05
  %v871 = vadd.f32 %v807, 1e-05
  %v872 = vadd.f32 %v808, 1e-05
  %v873 = vadd.f32 %v809, 1e-05
  %v874 = vadd.f32 %v810, 1e-05
  %v875 = vadd.f32 %v811, 1e-05
  %v876 = vadd.f32 %v812, 1e-05
  %v877 = vadd.f32 %v813, 1e-05
  %v878 = vadd.f32 %v814, 1e-05
  %v879 = vadd.f32 %v815, 1e-05
  %v880 = vadd.f32 %v816, 1e-05
  %v881 = vadd.f32 %v817, 1e-05
  %v882 = vadd.f32 %v818, 1e-05
  %v883 = vadd.f32 %v819, 1e-05
  %v884 = vadd.f32 %v820, 1e-05
  %v885 = vadd.f32 %v821, 1e-05
  %v886 = vadd.f32 %v822, 1e-05
  %v887 = vadd.f32 %v823, 1e-05
  %v888 = vadd.f32 %v824, 1e-05
  %v889 = vadd.f32 %v825, 1e-05
  %v890 = vadd.f32 %v826, 1e-05
  %v891 = vadd.f32 %v827, 1e-05
  %v892 = vadd.f32 %v828, 1e-05
  %v893 = vadd.f32 %v829, 1e-05
  %v894 = vadd.f32 %v830, 1e-05
  %v895 = vadd.f32 %v831, 1e-05
  %v896 = vadd.f32 %v832, 1e-05
  %v897 = vadd.f32 %v833, 1e-05
  %v898 = vadd.f32 %v834, 1e-05
  %v899 = vadd.f32 %v835, 1e-05
  %v900 = vadd.f32 %v836, 1e-05
  %v901 = vadd.f32 %v837, 1e-05
  %v902 = vadd.f32 %v838, 1e-05
  %v903 = vadd.f32 %v839, 1e-05
  %v904 = vadd.f32 %v840, 1e-05
  %v905 = vadd.f32 %v841, 1e-05
  %v906 = vadd.f32 %v842, 1e-05
  %v907 = vadd.f32 %v843, 1e-05
  %v908 = vadd.f32 %v844, 1e-05
  %v909 = vadd.f32 %v845, 1e-05
  %v910 = vadd.f32 %v846, 1e-05
  %v911 = vadd.f32 %v847, 1e-05
  %v912 = vadd.f32 %v848, 1e-05
  %v913 = vadd.f32 %v849, 1e-05
  %v914 = vadd.f32 %v850, 1e-05
  %v915 = vadd.f32 %v851, 1e-05
  %v916 = vrsqrt.pop %v852
  %v917 = vrsqrt.pop %v853
  %v918 = vrsqrt.pop %v854
  %v919 = vrsqrt.pop %v855
  %v920 = vrsqrt.pop %v856
  %v921 = vrsqrt.pop %v857
  %v922 = vrsqrt.pop %v858
  %v923 = vrsqrt.pop %v859
  %v924 = vrsqrt.pop %v860
  %v925 = vrsqrt.pop %v861
  %v926 = vrsqrt.pop %v862
  %v927 = vrsqrt.pop %v863
  %v928 = vrsqrt.pop %v864
  %v929 = vrsqrt.pop %v865
  %v930 = vrsqrt.pop %v866
  %v931 = vrsqrt.pop %v867
  %v932 = vrsqrt.pop %v868
  %v933 = vrsqrt.pop %v869
  %v934 = vrsqrt.pop %v870
  %v935 = vrsqrt.pop %v871
  %v936 = vrsqrt.pop %v872
  %v937 = vrsqrt.pop %v873
  %v938 = vrsqrt.pop %v874
  %v939 = vrsqrt.pop %v875
  %v940 = vrsqrt.pop %v876
  %v941 = vrsqrt.pop %v877
  %v942 = vrsqrt.pop %v878
  %v943 = vrsqrt.pop %v879
  %v944 = vrsqrt.pop %v880
  %v945 = vrsqrt.pop %v881
  %v946 = vrsqrt.pop %v882
  %v947 = vrsqrt.pop %v883
  %v948 = vrsqrt.pop %v884
  %v949 = vrsqrt.pop %v885
  %v950 = vrsqrt.pop %v886
  %v951 = vrsqrt.pop %v887
  %v952 = vrsqrt.pop %v888
  %v953 = vrsqrt.pop %v889
  %v954 = vrsqrt.pop %v890
  %v955 = vrsqrt.pop %v891
  %v956 = vrsqrt.pop %v892
  %v957 = vrsqrt.pop %v893
  %v958 = vrsqrt.pop %v894
  %v959 = vrsqrt.pop %v895
  %v960 = vrsqrt.pop %v896
  %v961 = vrsqrt.pop %v897
  %v962 = vrsqrt.pop %v898
  %v963 = vrsqrt.pop %v899
  %v964 = vrsqrt.pop %v900
  %v965 = vrsqrt.pop %v901
  %v966 = vrsqrt.pop %v902
  %v967 = vrsqrt.pop %v903
  %v968 = vrsqrt.pop %v904
  %v969 = vrsqrt.pop %v905
  %v970 = vrsqrt.pop %v906
  %v971 = vrsqrt.pop %v907
  %v972 = vrsqrt.pop %v908
  %v973 = vrsqrt.pop %v909
  %v974 = vrsqrt.pop %v910
  %v975 = vrsqrt.pop %v911
  %v976 = vrsqrt.pop %v912
  %v977 = vrsqrt.pop %v913
  %v978 = vrsqrt.pop %v914
  %v979 = vrsqrt.pop %v915
  %v980 = vmul.f32 %v468, %v916
  %v981 = vmul.f32 %v469, %v917
  %v982 = vmul.f32 %v470, %v918
  %v983 = vmul.f32 %v471, %v919
  %v984 = vmul.f32 %v472, %v920
  %v985 = vmul.f32 %v473, %v921
  %v986 = vmul.f32 %v474, %v922
  %v987 = vmul.f32 %v475, %v923
  %v988 = vmul.f32 %v476, %v924
  %v989 = vmul.f32 %v477, %v925
  %v990 = vmul.f32 %v478, %v926
  %v991 = vmul.f32 %v479, %v927
  %v992 = vmul.f32 %v480, %v928
  %v993 = vmul.f32 %v481, %v929
  %v994 = vmul.f32 %v482, %v930
  %v995 = vmul.f32 %v483, %v931
  %v996 = vmul.f32 %v484, %v932
  %v997 = vmul.f32 %v485, %v933
  %v998 = vmul.f32 %v486, %v934
  %v999 = vmul.f32 %v487, %v935
  %v1000 = vmul.f32 %v488, %v936
  %v1001 = vmul.f32 %v489, %v937
  %v1002 = vmul.f32 %v490, %v938
  %v1003 = vmul.f32 %v491, %v939
  %v1004 = vmul.f32 %v492, %v940
  %v1005 = vmul.f32 %v493, %v941
  %v1006 = vmul.f32 %v494, %v942
  %v1007 = vmul.f32 %v495, %v943
  %v1008 = vmul.f32 %v496, %v944
  %v1009 = vmul.f32 %v497, %v945
  %v1010 = vmul.f32 %v498, %v946
  %v1011 = vmul.f32 %v499, %v947
  %v1012 = vmul.f32 %v500, %v948
  %v1013 = vmul.f32 %v501, %v949
  %v1014 = vmul.f32 %v502, %v950
  %v1015 = vmul.f32 %v503, %v951
  %v1016 = vmul.f32 %v504, %v952
  %v1017 = vmul.f32 %v505, %v953
  %v1018 = vmul.f32 %v506, %v954
  %v1019 = vmul.f32 %v507, %v955
  %v1020 = vmul.f32 %v508, %v956
  %v1021 = vmul.f32 %v509, %v957
  %v1022 = vmul.f32 %v510, %v958
  %v1023 = vmul.f32 %v511, %v959
  %v1024 = vmul.f32 %v512, %v960
  %v1025 = vmul.f32 %v513, %v961
  %v1026 = vmul.f32 %v514, %v962
  %v1027 = vmul.f32 %v515, %v963
  %v1028 = vmul.f32 %v516, %v964
  %v1029 = vmul.f32 %v517, %v965
  %v1030 = vmul.f32 %v518, %v966
  %v1031 = vmul.f32 %v519, %v967
  %v1032 = vmul.f32 %v520, %v968
  %v1033 = vmul.f32 %v521, %v969
  %v1034 = vmul.f32 %v522, %v970
  %v1035 = vmul.f32 %v523, %v971
  %v1036 = vmul.f32 %v524, %v972
  %v1037 = vmul.f32 %v525, %v973
  %v1038 = vmul.f32 %v526, %v974
  %v1039 = vmul.f32 %v527, %v975
  %v1040 = vmul.f32 %v528, %v976
  %v1041 = vmul.f32 %v529, %v977
  %v1042 = vmul.f32 %v530, %v978
  %v1043 = vmul.f32 %v531, %v979
  %v1045 = vlaneseq
  %v1046 = vshrl.u32 %v1045, 7
  %v1047 = vsub.s32 0, %v1046
  %v1048 = vrot.slane %v208, %v1047
  %v1050 = vmul.f32 %v980, %v1048
  %v1051 = vmul.f32 %v981, %v1048
  %v1052 = vmul.f32 %v982, %v1048
  %v1053 = vmul.f32 %v983, %v1048
  %v1054 = vmul.f32 %v984, %v1048
  %v1055 = vmul.f32 %v985, %v1048
  %v1056 = vmul.f32 %v986, %v1048
  %v1057 = vmul.f32 %v987, %v1048
  %v1058 = vmul.f32 %v988, %v1048
  %v1059 = vmul.f32 %v989, %v1048
  %v1060 = vmul.f32 %v990, %v1048
  %v1061 = vmul.f32 %v991, %v1048
  %v1062 = vmul.f32 %v992, %v1048
  %v1063 = vmul.f32 %v993, %v1048
  %v1064 = vmul.f32 %v994, %v1048
  %v1065 = vmul.f32 %v995, %v1048
  %v1066 = vmul.f32 %v996, %v1048
  %v1067 = vmul.f32 %v997, %v1048
  %v1068 = vmul.f32 %v998, %v1048
  %v1069 = vmul.f32 %v999, %v1048
  %v1070 = vmul.f32 %v1000, %v1048
  %v1071 = vmul.f32 %v1001, %v1048
  %v1072 = vmul.f32 %v1002, %v1048
  %v1073 = vmul.f32 %v1003, %v1048
  %v1074 = vmul.f32 %v1004, %v1048
  %v1075 = vmul.f32 %v1005, %v1048
  %v1076 = vmul.f32 %v1006, %v1048
  %v1077 = vmul.f32 %v1007, %v1048
  %v1078 = vmul.f32 %v1008, %v1048
  %v1079 = vmul.f32 %v1009, %v1048
  %v1080 = vmul.f32 %v1010, %v1048
  %v1081 = vmul.f32 %v1011, %v1048
  %v1082 = vmul.f32 %v1012, %v1048
  %v1083 = vmul.f32 %v1013, %v1048
  %v1084 = vmul.f32 %v1014, %v1048
  %v1085 = vmul.f32 %v1015, %v1048
  %v1086 = vmul.f32 %v1016, %v1048
  %v1087 = vmul.f32 %v1017, %v1048
  %v1088 = vmul.f32 %v1018, %v1048
  %v1089 = vmul.f32 %v1019, %v1048
  %v1090 = vmul.f32 %v1020, %v1048
  %v1091 = vmul.f32 %v1021, %v1048
  %v1092 = vmul.f32 %v1022, %v1048
  %v1093 = vmul.f32 %v1023, %v1048
  %v1094 = vmul.f32 %v1024, %v1048
  %v1095 = vmul.f32 %v1025, %v1048
  %v1096 = vmul.f32 %v1026, %v1048
  %v1097 = vmul.f32 %v1027, %v1048
  %v1098 = vmul.f32 %v1028, %v1048
  %v1099 = vmul.f32 %v1029, %v1048
  %v1100 = vmul.f32 %v1030, %v1048
  %v1101 = vmul.f32 %v1031, %v1048
  %v1102 = vmul.f32 %v1032, %v1048
  %v1103 = vmul.f32 %v1033, %v1048
  %v1104 = vmul.f32 %v1034, %v1048
  %v1105 = vmul.f32 %v1035, %v1048
  %v1106 = vmul.f32 %v1036, %v1048
  %v1107 = vmul.f32 %v1037, %v1048
  %v1108 = vmul.f32 %v1038, %v1048
  %v1109 = vmul.f32 %v1039, %v1048
  %v1110 = vmul.f32 %v1040, %v1048
  %v1111 = vmul.f32 %v1041, %v1048
  %v1112 = vmul.f32 %v1042, %v1048
  %v1113 = vmul.f32 %v1043, %v1048
  %v1115 = vlaneseq
  %v1116 = vshrl.u32 %v1115, 7
  %v1117 = vsub.s32 0, %v1116
  %v1118 = vrot.slane %v209, %v1117
  %v1120 = vadd.f32 %v1050, %v1118
  %v1121 = vadd.f32 %v1051, %v1118
  %v1122 = vadd.f32 %v1052, %v1118
  %v1123 = vadd.f32 %v1053, %v1118
  %v1124 = vadd.f32 %v1054, %v1118
  %v1125 = vadd.f32 %v1055, %v1118
  %v1126 = vadd.f32 %v1056, %v1118
  %v1127 = vadd.f32 %v1057, %v1118
  %v1128 = vadd.f32 %v1058, %v1118
  %v1129 = vadd.f32 %v1059, %v1118
  %v1130 = vadd.f32 %v1060, %v1118
  %v1131 = vadd.f32 %v1061, %v1118
  %v1132 = vadd.f32 %v1062, %v1118
  %v1133 = vadd.f32 %v1063, %v1118
  %v1134 = vadd.f32 %v1064, %v1118
  %v1135 = vadd.f32 %v1065, %v1118
  %v1136 = vadd.f32 %v1066, %v1118
  %v1137 = vadd.f32 %v1067, %v1118
  %v1138 = vadd.f32 %v1068, %v1118
  %v1139 = vadd.f32 %v1069, %v1118
  %v1140 = vadd.f32 %v1070, %v1118
  %v1141 = vadd.f32 %v1071, %v1118
  %v1142 = vadd.f32 %v1072, %v1118
  %v1143 = vadd.f32 %v1073, %v1118
  %v1144 = vadd.f32 %v1074, %v1118
  %v1145 = vadd.f32 %v1075, %v1118
  %v1146 = vadd.f32 %v1076, %v1118
  %v1147 = vadd.f32 %v1077, %v1118
  %v1148 = vadd.f32 %v1078, %v1118
  %v1149 = vadd.f32 %v1079, %v1118
  %v1150 = vadd.f32 %v1080, %v1118
  %v1151 = vadd.f32 %v1081, %v1118
  %v1152 = vadd.f32 %v1082, %v1118
  %v1153 = vadd.f32 %v1083, %v1118
  %v1154 = vadd.f32 %v1084, %v1118
  %v1155 = vadd.f32 %v1085, %v1118
  %v1156 = vadd.f32 %v1086, %v1118
  %v1157 = vadd.f32 %v1087, %v1118
  %v1158 = vadd.f32 %v1088, %v1118
  %v1159 = vadd.f32 %v1089, %v1118
  %v1160 = vadd.f32 %v1090, %v1118
  %v1161 = vadd.f32 %v1091, %v1118
  %v1162 = vadd.f32 %v1092, %v1118
  %v1163 = vadd.f32 %v1093, %v1118
  %v1164 = vadd.f32 %v1094, %v1118
  %v1165 = vadd.f32 %v1095, %v1118
  %v1166 = vadd.f32 %v1096, %v1118
  %v1167 = vadd.f32 %v1097, %v1118
  %v1168 = vadd.f32 %v1098, %v1118
  %v1169 = vadd.f32 %v1099, %v1118
  %v1170 = vadd.f32 %v1100, %v1118
  %v1171 = vadd.f32 %v1101, %v1118
  %v1172 = vadd.f32 %v1102, %v1118
  %v1173 = vadd.f32 %v1103, %v1118
  %v1174 = vadd.f32 %v1104, %v1118
  %v1175 = vadd.f32 %v1105, %v1118
  %v1176 = vadd.f32 %v1106, %v1118
  %v1177 = vadd.f32 %v1107, %v1118
  %v1178 = vadd.f32 %v1108, %v1118
  %v1179 = vadd.f32 %v1109, %v1118
  %v1180 = vadd.f32 %v1110, %v1118
  %v1181 = vadd.f32 %v1111, %v1118
  %v1182 = vadd.f32 %v1112, %v1118
  %v1183 = vadd.f32 %v1113, %v1118
  %v1184 = vpack.c.bf16 %v1121, %v1120
  %v1185 = vpack.c.bf16 %v1123, %v1122
  %v1186 = vpack.c.bf16 %v1125, %v1124
  %v1187 = vpack.c.bf16 %v1127, %v1126
  %v1188 = vpack.c.bf16 %v1129, %v1128
  %v1189 = vpack.c.bf16 %v1131, %v1130
  %v1190 = vpack.c.bf16 %v1133, %v1132
  %v1191 = vpack.c.bf16 %v1135, %v1134
  %v1192 = vpack.c.bf16 %v1137, %v1136
  %v1193 = vpack.c.bf16 %v1139, %v1138
  %v1194 = vpack.c.bf16 %v1141, %v1140
  %v1195 = vpack.c.bf16 %v1143, %v1142
  %v1196 = vpack.c.bf16 %v1145, %v1144
  %v1197 = vpack.c.bf16 %v1147, %v1146
  %v1198 = vpack.c.bf16 %v1149, %v1148
  %v1199 = vpack.c.bf16 %v1151, %v1150
  %v1200 = vpack.c.bf16 %v1153, %v1152
  %v1201 = vpack.c.bf16 %v1155, %v1154
  %v1202 = vpack.c.bf16 %v1157, %v1156
  %v1203 = vpack.c.bf16 %v1159, %v1158
  %v1204 = vpack.c.bf16 %v1161, %v1160
  %v1205 = vpack.c.bf16 %v1163, %v1162
  %v1206 = vpack.c.bf16 %v1165, %v1164
  %v1207 = vpack.c.bf16 %v1167, %v1166
  %v1208 = vpack.c.bf16 %v1169, %v1168
  %v1209 = vpack.c.bf16 %v1171, %v1170
  %v1210 = vpack.c.bf16 %v1173, %v1172
  %v1211 = vpack.c.bf16 %v1175, %v1174
  %v1212 = vpack.c.bf16 %v1177, %v1176
  %v1213 = vpack.c.bf16 %v1179, %v1178
  %v1214 = vpack.c.bf16 %v1181, %v1180
  %v1215 = vpack.c.bf16 %v1183, %v1182
  %v1216 = vsel %vm210, %v204, 0.0
  %1217 = vadd.xlane.f32.xlu0 %v1216
  %v1218 = vpop.xlane.xlu0 %1217
  %v1219 = vsel %vm210, %v205, 0.0
  %1220 = vadd.xlane.f32.xlu0 %v1219
  %v1221 = vpop.xlane.xlu0 %1220
  %v1222 = vsel %vm210, %v206, 0.0
  %1223 = vadd.xlane.f32.xlu0 %v1222
  %v1224 = vpop.xlane.xlu0 %1223
  %v1225 = vsel %vm210, %v207, 0.0
  %1226 = vadd.xlane.f32.xlu0 %v1225
  %v1227 = vpop.xlane.xlu0 %1226
  %v1228 = vmul.f32 %v1218, %v403
  %v1229 = vmul.f32 %v1221, %v403
  %v1230 = vmul.f32 %v1224, %v403
  %v1231 = vmul.f32 %v1227, %v403
  %v1232 = vsub.f32 %v204, %v1228
  %v1233 = vsub.f32 %v205, %v1229
  %v1234 = vsub.f32 %v206, %v1230
  %v1235 = vsub.f32 %v207, %v1231
  %v1236 = vmul.f32 %v1232, %v1232
  %v1237 = vmul.f32 %v1233, %v1233
  %v1238 = vmul.f32 %v1234, %v1234
  %v1239 = vmul.f32 %v1235, %v1235
  %v1240 = vsel %vm210, %v1236, 0.0
  %1241 = vadd.xlane.f32.xlu0 %v1240
  %v1242 = vpop.xlane.xlu0 %1241
  %v1243 = vsel %vm210, %v1237, 0.0
  %1244 = vadd.xlane.f32.xlu0 %v1243
  %v1245 = vpop.xlane.xlu0 %1244
  %v1246 = vsel %vm210, %v1238, 0.0
  %1247 = vadd.xlane.f32.xlu0 %v1246
  %v1248 = vpop.xlane.xlu0 %1247
  %v1249 = vsel %vm210, %v1239, 0.0
  %1250 = vadd.xlane.f32.xlu0 %v1249
  %v1251 = vpop.xlane.xlu0 %1250
  %v1252 = vmul.f32 %v1242, %v403
  %v1253 = vmul.f32 %v1245, %v403
  %v1254 = vmul.f32 %v1248, %v403
  %v1255 = vmul.f32 %v1251, %v403
  %v1256 = vadd.f32 %v1252, 1e-05
  %v1257 = vadd.f32 %v1253, 1e-05
  %v1258 = vadd.f32 %v1254, 1e-05
  %v1259 = vadd.f32 %v1255, 1e-05
  %v1260 = vrsqrt.pop %v1256
  %v1261 = vrsqrt.pop %v1257
  %v1262 = vrsqrt.pop %v1258
  %v1263 = vrsqrt.pop %v1259
  %v1264 = vmul.f32 %v1232, %v1260
  %v1265 = vmul.f32 %v1233, %v1261
  %v1266 = vmul.f32 %v1234, %v1262
  %v1267 = vmul.f32 %v1235, %v1263
  %v1268 = vmul.f32 %v1264, %v1048
  %v1269 = vmul.f32 %v1265, %v1048
  %v1270 = vmul.f32 %v1266, %v1048
  %v1271 = vmul.f32 %v1267, %v1048
  %v1272 = vadd.f32 %v1268, %v1118
  %v1273 = vadd.f32 %v1269, %v1118
  %v1274 = vadd.f32 %v1270, %v1118
  %v1275 = vadd.f32 %v1271, %v1118
  %v1276 = vpack.c.bf16 %v1273, %v1272
  %v1277 = vpack.c.bf16 %v1275, %v1274
  %v1278 = vld [vmem:[%s4] sm:$0xff]
  %v1279 = vld [vmem:[%s4 + $0x8] sm:$0xff]
  %v1280 = vld [vmem:[%s4 + $0x10] sm:$0xff]
  %v1281 = vld [vmem:[%s4 + $0x18] sm:$0xff]
  %v1282 = vld [vmem:[%s4 + $0x20] sm:$0xff]
  %v1283 = vld [vmem:[%s4 + $0x28] sm:$0xff]
  %v1284 = vld [vmem:[%s4 + $0x30] sm:$0xff]
  %v1285 = vld [vmem:[%s4 + $0x38] sm:$0xff]
  %v1294 = vunpack.c.l.b16 %v1278
  %v1295 = vunpack.c.h.b16 %v1278
  %v1296 = vunpack.c.l.b16 %v1279
  %v1297 = vunpack.c.h.b16 %v1279
  %v1298 = vunpack.c.l.b16 %v1280
  %v1299 = vunpack.c.h.b16 %v1280
  %v1300 = vunpack.c.l.b16 %v1281
  %v1301 = vunpack.c.h.b16 %v1281
  %v1302 = vunpack.c.l.b16 %v1282
  %v1303 = vunpack.c.h.b16 %v1282
  %v1304 = vunpack.c.l.b16 %v1283
  %v1305 = vunpack.c.h.b16 %v1283
  %v1306 = vunpack.c.l.b16 %v1284
  %v1307 = vunpack.c.h.b16 %v1284
  %v1308 = vunpack.c.l.b16 %v1285
  %v1309 = vunpack.c.h.b16 %v1285
  %v1310 = vpack.c.b16 %v1298, %v1294
  %v1311 = vpack.c.b16 %v1299, %v1295
  %v1312 = vpack.c.b16 %v1300, %v1296
  %v1313 = vpack.c.b16 %v1301, %v1297
  %v1314 = vpack.c.b16 %v1306, %v1302
  %v1315 = vpack.c.b16 %v1307, %v1303
  %v1316 = vpack.c.b16 %v1308, %v1304
  %v1317 = vpack.c.b16 %v1309, %v1305
  %v1327 = vsel %vm210, %v1184, 0
  %v1330 = vsel %vm210, %v1185, 0
  %v1333 = vsel %vm210, %v1186, 0
  %v1336 = vsel %vm210, %v1187, 0
  %v1339 = vsel %vm210, %v1188, 0
  %v1342 = vsel %vm210, %v1189, 0
  %v1345 = vsel %vm210, %v1190, 0
  %v1348 = vsel %vm210, %v1191, 0
  %v1351 = vsel %vm210, %v1192, 0
  %v1354 = vsel %vm210, %v1193, 0
  %v1357 = vsel %vm210, %v1194, 0
  %v1360 = vsel %vm210, %v1195, 0
  %v1363 = vsel %vm210, %v1196, 0
  %v1366 = vsel %vm210, %v1197, 0
  %v1369 = vsel %vm210, %v1198, 0
  %v1372 = vsel %vm210, %v1199, 0
  %v1375 = vsel %vm210, %v1200, 0
  %v1378 = vsel %vm210, %v1201, 0
  %v1381 = vsel %vm210, %v1202, 0
  %v1384 = vsel %vm210, %v1203, 0
  %v1387 = vsel %vm210, %v1204, 0
  %v1390 = vsel %vm210, %v1205, 0
  %v1393 = vsel %vm210, %v1206, 0
  %v1396 = vsel %vm210, %v1207, 0
  %v1399 = vsel %vm210, %v1208, 0
  %v1402 = vsel %vm210, %v1209, 0
  %v1405 = vsel %vm210, %v1210, 0
  %v1408 = vsel %vm210, %v1211, 0
  %v1411 = vsel %vm210, %v1212, 0
  %v1414 = vsel %vm210, %v1213, 0
  %v1417 = vsel %vm210, %v1214, 0
  %v1420 = vsel %vm210, %v1215, 0
  %1422 = vmatprep.subr.bf16.mxu0 %v1311
  %1423 = vmatpush1.bf16.msra.mxu0 %v1310
  %1424 = vmatprep.subr.bf16.mxu0 %v1315
  %1425 = vmatpush1.bf16.msra.mxu0 %v1314
  %1426 = vmatprep.subr.bf16.mxu0 0
  %1427 = vmatpush1.bf16.msra.mxu0 0
  %1428 = vmatprep.subr.bf16.mxu0 0
  %1429 = vmatpush1.bf16.msra.mxu0 0
  %1430 = vmatprep.subr.bf16.mxu0 0
  %1431 = vmatpush1.bf16.msra.mxu0 0
  %1432 = vmatprep.subr.bf16.mxu0 0
  %1433 = vmatpush1.bf16.msra.mxu0 0
  %1434 = vmatprep.subr.bf16.mxu0 0
  %1435 = vmatpush1.bf16.msra.mxu0 0
  %1436 = vmatprep.subr.bf16.mxu0 0
  %1437 = vmatpush1.bf16.msra.mxu0 0
  %1438 = vmatprep.subr.bf16.mxu0 0
  %1439 = vmatpush1.bf16.msra.mxu0 0
  %1440 = vmatprep.subr.bf16.mxu0 0
  %1441 = vmatpush1.bf16.msra.mxu0 0
  %1442 = vmatprep.subr.bf16.mxu0 0
  %1443 = vmatpush1.bf16.msra.mxu0 0
  %1444 = vmatprep.subr.bf16.mxu0 0
  %1445 = vmatpush1.bf16.msra.mxu0 0
  %1446 = vmatprep.subr.bf16.mxu0 0
  %1447 = vmatpush1.bf16.msra.mxu0 0
  %1448 = vmatprep.subr.bf16.mxu0 0
  %1449 = vmatpush1.bf16.msra.mxu0 0
  %1450 = vmatprep.subr.bf16.mxu0 0
  %1451 = vmatpush1.bf16.msra.mxu0 0
  %1452 = vmatprep.subr.bf16.mxu0 0
  %1453 = vmatpush1.bf16.msra.mxu0 0
  %1454 = vmatprep.mubr.bf16.mxu0 0
  %1455 = vmatmul.mubr.bf16.gmra.mrb[0].mxu0 %v1327
  %v1456 = vpop.f32.mrb[0].mxu0
  %v1457 = vadd.f32 0.0, %v1456
  %v1458 = vpop.f32.mrb[0].mxu0
  %v1459 = vadd.f32 0.0, %v1458
  %v1460 = vpop.f32.mrb[0].mxu0
  %v1461 = vadd.f32 0.0, %v1460
  %v1462 = vpop.f32.mrb[0].mxu0
  %v1463 = vadd.f32 0.0, %v1462
  %1464 = vmatprep.mubr.bf16.mxu0 0
  %1465 = vmatmul.mubr.bf16.gmra.mrb[0].mxu0 %v1330
  %v1466 = vpop.f32.mrb[0].mxu0
  %v1467 = vadd.f32 0.0, %v1466
  %v1468 = vpop.f32.mrb[0].mxu0
  %v1469 = vadd.f32 0.0, %v1468
  %v1470 = vpop.f32.mrb[0].mxu0
  %v1471 = vadd.f32 0.0, %v1470
  %v1472 = vpop.f32.mrb[0].mxu0
  %v1473 = vadd.f32 0.0, %v1472
  %1474 = vmatprep.mubr.bf16.mxu0 0
  %1475 = vmatmul.mubr.bf16.gmra.mrb[0].mxu0 %v1333
  %v1476 = vpop.f32.mrb[0].mxu0
  %v1477 = vadd.f32 0.0, %v1476
  %v1478 = vpop.f32.mrb[0].mxu0
  %v1479 = vadd.f32 0.0, %v1478
  %v1480 = vpop.f32.mrb[0].mxu0
  %v1481 = vadd.f32 0.0, %v1480
  %v1482 = vpop.f32.mrb[0].mxu0
  %v1483 = vadd.f32 0.0, %v1482
  %1484 = vmatprep.mubr.bf16.mxu0 0
  %1485 = vmatmul.mubr.bf16.gmra.mrb[0].mxu0 %v1336
  %v1486 = vpop.f32.mrb[0].mxu0
  %v1487 = vadd.f32 0.0, %v1486
  %v1488 = vpop.f32.mrb[0].mxu0
  %v1489 = vadd.f32 0.0, %v1488
  %v1490 = vpop.f32.mrb[0].mxu0
  %v1491 = vadd.f32 0.0, %v1490
  %v1492 = vpop.f32.mrb[0].mxu0
  %v1493 = vadd.f32 0.0, %v1492
  %1494 = vmatprep.mubr.bf16.mxu0 0
  %1495 = vmatmul.mubr.bf16.gmra.mrb[0].mxu0 %v1339
  %v1496 = vpop.f32.mrb[0].mxu0
  %v1497 = vadd.f32 0.0, %v1496
  %v1498 = vpop.f32.mrb[0].mxu0
  %v1499 = vadd.f32 0.0, %v1498
  %v1500 = vpop.f32.mrb[0].mxu0
  %v1501 = vadd.f32 0.0, %v1500
  %v1502 = vpop.f32.mrb[0].mxu0
  %v1503 = vadd.f32 0.0, %v1502
  %1504 = vmatprep.mubr.bf16.mxu0 0
  %1505 = vmatmul.mubr.bf16.gmra.mrb[0].mxu0 %v1342
  %v1506 = vpop.f32.mrb[0].mxu0
  %v1507 = vadd.f32 0.0, %v1506
  %v1508 = vpop.f32.mrb[0].mxu0
  %v1509 = vadd.f32 0.0, %v1508
  %v1510 = vpop.f32.mrb[0].mxu0
  %v1511 = vadd.f32 0.0, %v1510
  %v1512 = vpop.f32.mrb[0].mxu0
  %v1513 = vadd.f32 0.0, %v1512
  %1514 = vmatprep.mubr.bf16.mxu0 0
  %1515 = vmatmul.mubr.bf16.gmra.mrb[0].mxu0 %v1345
  %v1516 = vpop.f32.mrb[0].mxu0
  %v1517 = vadd.f32 0.0, %v1516
  %v1518 = vpop.f32.mrb[0].mxu0
  %v1519 = vadd.f32 0.0, %v1518
  %v1520 = vpop.f32.mrb[0].mxu0
  %v1521 = vadd.f32 0.0, %v1520
  %v1522 = vpop.f32.mrb[0].mxu0
  %v1523 = vadd.f32 0.0, %v1522
  %1524 = vmatprep.mubr.bf16.mxu0 0
  %1525 = vmatmul.mubr.bf16.gmra.mrb[0].mxu0 %v1348
  %v1526 = vpop.f32.mrb[0].mxu0
  %v1527 = vadd.f32 0.0, %v1526
  %v1528 = vpop.f32.mrb[0].mxu0
  %v1529 = vadd.f32 0.0, %v1528
  %v1530 = vpop.f32.mrb[0].mxu0
  %v1531 = vadd.f32 0.0, %v1530
  %v1532 = vpop.f32.mrb[0].mxu0
  %v1533 = vadd.f32 0.0, %v1532
  %1534 = vmatprep.mubr.bf16.mxu0 0
  %1535 = vmatmul.mubr.bf16.gmra.mrb[0].mxu0 %v1351
  %v1536 = vpop.f32.mrb[0].mxu0
  %v1537 = vadd.f32 0.0, %v1536
  %v1538 = vpop.f32.mrb[0].mxu0
  %v1539 = vadd.f32 0.0, %v1538
  %v1540 = vpop.f32.mrb[0].mxu0
  %v1541 = vadd.f32 0.0, %v1540
  %v1542 = vpop.f32.mrb[0].mxu0
  %v1543 = vadd.f32 0.0, %v1542
  %1544 = vmatprep.mubr.bf16.mxu0 0
  %1545 = vmatmul.mubr.bf16.gmra.mrb[0].mxu0 %v1354
  %v1546 = vpop.f32.mrb[0].mxu0
  %v1547 = vadd.f32 0.0, %v1546
  %v1548 = vpop.f32.mrb[0].mxu0
  %v1549 = vadd.f32 0.0, %v1548
  %v1550 = vpop.f32.mrb[0].mxu0
  %v1551 = vadd.f32 0.0, %v1550
  %v1552 = vpop.f32.mrb[0].mxu0
  %v1553 = vadd.f32 0.0, %v1552
  %1554 = vmatprep.mubr.bf16.mxu0 0
  %1555 = vmatmul.mubr.bf16.gmra.mrb[0].mxu0 %v1357
  %v1556 = vpop.f32.mrb[0].mxu0
  %v1557 = vadd.f32 0.0, %v1556
  %v1558 = vpop.f32.mrb[0].mxu0
  %v1559 = vadd.f32 0.0, %v1558
  %v1560 = vpop.f32.mrb[0].mxu0
  %v1561 = vadd.f32 0.0, %v1560
  %v1562 = vpop.f32.mrb[0].mxu0
  %v1563 = vadd.f32 0.0, %v1562
  %1564 = vmatprep.mubr.bf16.mxu0 0
  %1565 = vmatmul.mubr.bf16.gmra.mrb[0].mxu0 %v1360
  %v1566 = vpop.f32.mrb[0].mxu0
  %v1567 = vadd.f32 0.0, %v1566
  %v1568 = vpop.f32.mrb[0].mxu0
  %v1569 = vadd.f32 0.0, %v1568
  %v1570 = vpop.f32.mrb[0].mxu0
  %v1571 = vadd.f32 0.0, %v1570
  %v1572 = vpop.f32.mrb[0].mxu0
  %v1573 = vadd.f32 0.0, %v1572
  %1574 = vmatprep.mubr.bf16.mxu0 0
  %1575 = vmatmul.mubr.bf16.gmra.mrb[0].mxu0 %v1363
  %v1576 = vpop.f32.mrb[0].mxu0
  %v1577 = vadd.f32 0.0, %v1576
  %v1578 = vpop.f32.mrb[0].mxu0
  %v1579 = vadd.f32 0.0, %v1578
  %v1580 = vpop.f32.mrb[0].mxu0
  %v1581 = vadd.f32 0.0, %v1580
  %v1582 = vpop.f32.mrb[0].mxu0
  %v1583 = vadd.f32 0.0, %v1582
  %1584 = vmatprep.mubr.bf16.mxu0 0
  %1585 = vmatmul.mubr.bf16.gmra.mrb[0].mxu0 %v1366
  %v1586 = vpop.f32.mrb[0].mxu0
  %v1587 = vadd.f32 0.0, %v1586
  %v1588 = vpop.f32.mrb[0].mxu0
  %v1589 = vadd.f32 0.0, %v1588
  %v1590 = vpop.f32.mrb[0].mxu0
  %v1591 = vadd.f32 0.0, %v1590
  %v1592 = vpop.f32.mrb[0].mxu0
  %v1593 = vadd.f32 0.0, %v1592
  %1594 = vmatprep.mubr.bf16.mxu0 0
  %1595 = vmatmul.mubr.bf16.gmra.mrb[0].mxu0 %v1369
  %v1596 = vpop.f32.mrb[0].mxu0
  %v1597 = vadd.f32 0.0, %v1596
  %v1598 = vpop.f32.mrb[0].mxu0
  %v1599 = vadd.f32 0.0, %v1598
  %v1600 = vpop.f32.mrb[0].mxu0
  %v1601 = vadd.f32 0.0, %v1600
  %v1602 = vpop.f32.mrb[0].mxu0
  %v1603 = vadd.f32 0.0, %v1602
  %1604 = vmatprep.mubr.bf16.mxu0 0
  %1605 = vmatmul.mubr.bf16.gmra.mrb[0].mxu0 %v1372
  %v1606 = vpop.f32.mrb[0].mxu0
  %v1607 = vadd.f32 0.0, %v1606
  %v1608 = vpop.f32.mrb[0].mxu0
  %v1609 = vadd.f32 0.0, %v1608
  %v1610 = vpop.f32.mrb[0].mxu0
  %v1611 = vadd.f32 0.0, %v1610
  %v1612 = vpop.f32.mrb[0].mxu0
  %v1613 = vadd.f32 0.0, %v1612
  %1614 = vmatprep.mubr.bf16.mxu0 0
  %1615 = vmatmul.mubr.bf16.gmra.mrb[0].mxu0 %v1375
  %v1616 = vpop.f32.mrb[0].mxu0
  %v1617 = vadd.f32 0.0, %v1616
  %v1618 = vpop.f32.mrb[0].mxu0
  %v1619 = vadd.f32 0.0, %v1618
  %v1620 = vpop.f32.mrb[0].mxu0
  %v1621 = vadd.f32 0.0, %v1620
  %v1622 = vpop.f32.mrb[0].mxu0
  %v1623 = vadd.f32 0.0, %v1622
  %1624 = vmatprep.mubr.bf16.mxu0 0
  %1625 = vmatmul.mubr.bf16.gmra.mrb[0].mxu0 %v1378
  %v1626 = vpop.f32.mrb[0].mxu0
  %v1627 = vadd.f32 0.0, %v1626
  %v1628 = vpop.f32.mrb[0].mxu0
  %v1629 = vadd.f32 0.0, %v1628
  %v1630 = vpop.f32.mrb[0].mxu0
  %v1631 = vadd.f32 0.0, %v1630
  %v1632 = vpop.f32.mrb[0].mxu0
  %v1633 = vadd.f32 0.0, %v1632
  %1634 = vmatprep.mubr.bf16.mxu0 0
  %1635 = vmatmul.mubr.bf16.gmra.mrb[0].mxu0 %v1381
  %v1636 = vpop.f32.mrb[0].mxu0
  %v1637 = vadd.f32 0.0, %v1636
  %v1638 = vpop.f32.mrb[0].mxu0
  %v1639 = vadd.f32 0.0, %v1638
  %v1640 = vpop.f32.mrb[0].mxu0
  %v1641 = vadd.f32 0.0, %v1640
  %v1642 = vpop.f32.mrb[0].mxu0
  %v1643 = vadd.f32 0.0, %v1642
  %1644 = vmatprep.mubr.bf16.mxu0 0
  %1645 = vmatmul.mubr.bf16.gmra.mrb[0].mxu0 %v1384
  %v1646 = vpop.f32.mrb[0].mxu0
  %v1647 = vadd.f32 0.0, %v1646
  %v1648 = vpop.f32.mrb[0].mxu0
  %v1649 = vadd.f32 0.0, %v1648
  %v1650 = vpop.f32.mrb[0].mxu0
  %v1651 = vadd.f32 0.0, %v1650
  %v1652 = vpop.f32.mrb[0].mxu0
  %v1653 = vadd.f32 0.0, %v1652
  %1654 = vmatprep.mubr.bf16.mxu0 0
  %1655 = vmatmul.mubr.bf16.gmra.mrb[0].mxu0 %v1387
  %v1656 = vpop.f32.mrb[0].mxu0
  %v1657 = vadd.f32 0.0, %v1656
  %v1658 = vpop.f32.mrb[0].mxu0
  %v1659 = vadd.f32 0.0, %v1658
  %v1660 = vpop.f32.mrb[0].mxu0
  %v1661 = vadd.f32 0.0, %v1660
  %v1662 = vpop.f32.mrb[0].mxu0
  %v1663 = vadd.f32 0.0, %v1662
  %1664 = vmatprep.mubr.bf16.mxu0 0
  %1665 = vmatmul.mubr.bf16.gmra.mrb[0].mxu0 %v1390
  %v1666 = vpop.f32.mrb[0].mxu0
  %v1667 = vadd.f32 0.0, %v1666
  %v1668 = vpop.f32.mrb[0].mxu0
  %v1669 = vadd.f32 0.0, %v1668
  %v1670 = vpop.f32.mrb[0].mxu0
  %v1671 = vadd.f32 0.0, %v1670
  %v1672 = vpop.f32.mrb[0].mxu0
  %v1673 = vadd.f32 0.0, %v1672
  %1674 = vmatprep.mubr.bf16.mxu0 0
  %1675 = vmatmul.mubr.bf16.gmra.mrb[0].mxu0 %v1393
  %v1676 = vpop.f32.mrb[0].mxu0
  %v1677 = vadd.f32 0.0, %v1676
  %v1678 = vpop.f32.mrb[0].mxu0
  %v1679 = vadd.f32 0.0, %v1678
  %v1680 = vpop.f32.mrb[0].mxu0
  %v1681 = vadd.f32 0.0, %v1680
  %v1682 = vpop.f32.mrb[0].mxu0
  %v1683 = vadd.f32 0.0, %v1682
  %1684 = vmatprep.mubr.bf16.mxu0 0
  %1685 = vmatmul.mubr.bf16.gmra.mrb[0].mxu0 %v1396
  %v1686 = vpop.f32.mrb[0].mxu0
  %v1687 = vadd.f32 0.0, %v1686
  %v1688 = vpop.f32.mrb[0].mxu0
  %v1689 = vadd.f32 0.0, %v1688
  %v1690 = vpop.f32.mrb[0].mxu0
  %v1691 = vadd.f32 0.0, %v1690
  %v1692 = vpop.f32.mrb[0].mxu0
  %v1693 = vadd.f32 0.0, %v1692
  %1694 = vmatprep.mubr.bf16.mxu0 0
  %1695 = vmatmul.mubr.bf16.gmra.mrb[0].mxu0 %v1399
  %v1696 = vpop.f32.mrb[0].mxu0
  %v1697 = vadd.f32 0.0, %v1696
  %v1698 = vpop.f32.mrb[0].mxu0
  %v1699 = vadd.f32 0.0, %v1698
  %v1700 = vpop.f32.mrb[0].mxu0
  %v1701 = vadd.f32 0.0, %v1700
  %v1702 = vpop.f32.mrb[0].mxu0
  %v1703 = vadd.f32 0.0, %v1702
  %1704 = vmatprep.mubr.bf16.mxu0 0
  %1705 = vmatmul.mubr.bf16.gmra.mrb[0].mxu0 %v1402
  %v1706 = vpop.f32.mrb[0].mxu0
  %v1707 = vadd.f32 0.0, %v1706
  %v1708 = vpop.f32.mrb[0].mxu0
  %v1709 = vadd.f32 0.0, %v1708
  %v1710 = vpop.f32.mrb[0].mxu0
  %v1711 = vadd.f32 0.0, %v1710
  %v1712 = vpop.f32.mrb[0].mxu0
  %v1713 = vadd.f32 0.0, %v1712
  %1714 = vmatprep.mubr.bf16.mxu0 0
  %1715 = vmatmul.mubr.bf16.gmra.mrb[0].mxu0 %v1405
  %v1716 = vpop.f32.mrb[0].mxu0
  %v1717 = vadd.f32 0.0, %v1716
  %v1718 = vpop.f32.mrb[0].mxu0
  %v1719 = vadd.f32 0.0, %v1718
  %v1720 = vpop.f32.mrb[0].mxu0
  %v1721 = vadd.f32 0.0, %v1720
  %v1722 = vpop.f32.mrb[0].mxu0
  %v1723 = vadd.f32 0.0, %v1722
  %1724 = vmatprep.mubr.bf16.mxu0 0
  %1725 = vmatmul.mubr.bf16.gmra.mrb[0].mxu0 %v1408
  %v1726 = vpop.f32.mrb[0].mxu0
  %v1727 = vadd.f32 0.0, %v1726
  %v1728 = vpop.f32.mrb[0].mxu0
  %v1729 = vadd.f32 0.0, %v1728
  %v1730 = vpop.f32.mrb[0].mxu0
  %v1731 = vadd.f32 0.0, %v1730
  %v1732 = vpop.f32.mrb[0].mxu0
  %v1733 = vadd.f32 0.0, %v1732
  %1734 = vmatprep.mubr.bf16.mxu0 0
  %1735 = vmatmul.mubr.bf16.gmra.mrb[0].mxu0 %v1411
  %v1736 = vpop.f32.mrb[0].mxu0
  %v1737 = vadd.f32 0.0, %v1736
  %v1738 = vpop.f32.mrb[0].mxu0
  %v1739 = vadd.f32 0.0, %v1738
  %v1740 = vpop.f32.mrb[0].mxu0
  %v1741 = vadd.f32 0.0, %v1740
  %v1742 = vpop.f32.mrb[0].mxu0
  %v1743 = vadd.f32 0.0, %v1742
  %1744 = vmatprep.mubr.bf16.mxu0 0
  %1745 = vmatmul.mubr.bf16.gmra.mrb[0].mxu0 %v1414
  %v1746 = vpop.f32.mrb[0].mxu0
  %v1747 = vadd.f32 0.0, %v1746
  %v1748 = vpop.f32.mrb[0].mxu0
  %v1749 = vadd.f32 0.0, %v1748
  %v1750 = vpop.f32.mrb[0].mxu0
  %v1751 = vadd.f32 0.0, %v1750
  %v1752 = vpop.f32.mrb[0].mxu0
  %v1753 = vadd.f32 0.0, %v1752
  %1754 = vmatprep.mubr.bf16.mxu0 0
  %1755 = vmatmul.mubr.bf16.gmra.mrb[0].mxu0 %v1417
  %v1756 = vpop.f32.mrb[0].mxu0
  %v1757 = vadd.f32 0.0, %v1756
  %v1758 = vpop.f32.mrb[0].mxu0
  %v1759 = vadd.f32 0.0, %v1758
  %v1760 = vpop.f32.mrb[0].mxu0
  %v1761 = vadd.f32 0.0, %v1760
  %v1762 = vpop.f32.mrb[0].mxu0
  %v1763 = vadd.f32 0.0, %v1762
  %1764 = vmatprep.mubr.bf16.mxu0 0
  %1765 = vmatmul.mubr.bf16.gmra.mrb[0].mxu0 %v1420
  %v1766 = vpop.f32.mrb[0].mxu0
  %v1767 = vadd.f32 0.0, %v1766
  %v1768 = vpop.f32.mrb[0].mxu0
  %v1769 = vadd.f32 0.0, %v1768
  %v1770 = vpop.f32.mrb[0].mxu0
  %v1771 = vadd.f32 0.0, %v1770
  %v1772 = vpop.f32.mrb[0].mxu0
  %v1773 = vadd.f32 0.0, %v1772
  %1774 = vdwg.mxu0
  %1775 = vmatprep.subr.bf16.mxu0 %v1313
  %1776 = vmatpush1.bf16.msra.mxu0 %v1312
  %1777 = vmatprep.subr.bf16.mxu0 %v1317
  %1778 = vmatpush1.bf16.msra.mxu0 %v1316
  %1779 = vmatprep.subr.bf16.mxu0 0
  %1780 = vmatpush1.bf16.msra.mxu0 0
  %1781 = vmatprep.subr.bf16.mxu0 0
  %1782 = vmatpush1.bf16.msra.mxu0 0
  %1783 = vmatprep.subr.bf16.mxu0 0
  %1784 = vmatpush1.bf16.msra.mxu0 0
  %1785 = vmatprep.subr.bf16.mxu0 0
  %1786 = vmatpush1.bf16.msra.mxu0 0
  %1787 = vmatprep.subr.bf16.mxu0 0
  %1788 = vmatpush1.bf16.msra.mxu0 0
  %1789 = vmatprep.subr.bf16.mxu0 0
  %1790 = vmatpush1.bf16.msra.mxu0 0
  %1791 = vmatprep.subr.bf16.mxu0 0
  %1792 = vmatpush1.bf16.msra.mxu0 0
  %1793 = vmatprep.subr.bf16.mxu0 0
  %1794 = vmatpush1.bf16.msra.mxu0 0
  %1795 = vmatprep.subr.bf16.mxu0 0
  %1796 = vmatpush1.bf16.msra.mxu0 0
  %1797 = vmatprep.subr.bf16.mxu0 0
  %1798 = vmatpush1.bf16.msra.mxu0 0
  %1799 = vmatprep.subr.bf16.mxu0 0
  %1800 = vmatpush1.bf16.msra.mxu0 0
  %1801 = vmatprep.subr.bf16.mxu0 0
  %1802 = vmatpush1.bf16.msra.mxu0 0
  %1803 = vmatprep.subr.bf16.mxu0 0
  %1804 = vmatpush1.bf16.msra.mxu0 0
  %1805 = vmatprep.subr.bf16.mxu0 0
  %1806 = vmatpush1.bf16.msra.mxu0 0
  %1807 = vmatprep.mubr.bf16.mxu0 0
  %1808 = vmatmul.mubr.bf16.gmra.mrb[0].mxu0 %v1327
  %v1809 = vpop.f32.mrb[0].mxu0
  %v1810 = vadd.f32 0.0, %v1809
  %v1811 = vpop.f32.mrb[0].mxu0
  %v1812 = vadd.f32 0.0, %v1811
  %v1813 = vpop.f32.mrb[0].mxu0
  %v1814 = vadd.f32 0.0, %v1813
  %v1815 = vpop.f32.mrb[0].mxu0
  %v1816 = vadd.f32 0.0, %v1815
  %1817 = vmatprep.mubr.bf16.mxu0 0
  %1818 = vmatmul.mubr.bf16.gmra.mrb[0].mxu0 %v1330
  %v1819 = vpop.f32.mrb[0].mxu0
  %v1820 = vadd.f32 0.0, %v1819
  %v1821 = vpop.f32.mrb[0].mxu0
  %v1822 = vadd.f32 0.0, %v1821
  %v1823 = vpop.f32.mrb[0].mxu0
  %v1824 = vadd.f32 0.0, %v1823
  %v1825 = vpop.f32.mrb[0].mxu0
  %v1826 = vadd.f32 0.0, %v1825
  %1827 = vmatprep.mubr.bf16.mxu0 0
  %1828 = vmatmul.mubr.bf16.gmra.mrb[0].mxu0 %v1333
  %v1829 = vpop.f32.mrb[0].mxu0
  %v1830 = vadd.f32 0.0, %v1829
  %v1831 = vpop.f32.mrb[0].mxu0
  %v1832 = vadd.f32 0.0, %v1831
  %v1833 = vpop.f32.mrb[0].mxu0
  %v1834 = vadd.f32 0.0, %v1833
  %v1835 = vpop.f32.mrb[0].mxu0
  %v1836 = vadd.f32 0.0, %v1835
  %1837 = vmatprep.mubr.bf16.mxu0 0
  %1838 = vmatmul.mubr.bf16.gmra.mrb[0].mxu0 %v1336
  %v1839 = vpop.f32.mrb[0].mxu0
  %v1840 = vadd.f32 0.0, %v1839
  %v1841 = vpop.f32.mrb[0].mxu0
  %v1842 = vadd.f32 0.0, %v1841
  %v1843 = vpop.f32.mrb[0].mxu0
  %v1844 = vadd.f32 0.0, %v1843
  %v1845 = vpop.f32.mrb[0].mxu0
  %v1846 = vadd.f32 0.0, %v1845
  %1847 = vmatprep.mubr.bf16.mxu0 0
  %1848 = vmatmul.mubr.bf16.gmra.mrb[0].mxu0 %v1339
  %v1849 = vpop.f32.mrb[0].mxu0
  %v1850 = vadd.f32 0.0, %v1849
  %v1851 = vpop.f32.mrb[0].mxu0
  %v1852 = vadd.f32 0.0, %v1851
  %v1853 = vpop.f32.mrb[0].mxu0
  %v1854 = vadd.f32 0.0, %v1853
  %v1855 = vpop.f32.mrb[0].mxu0
  %v1856 = vadd.f32 0.0, %v1855
  %1857 = vmatprep.mubr.bf16.mxu0 0
  %1858 = vmatmul.mubr.bf16.gmra.mrb[0].mxu0 %v1342
  %v1859 = vpop.f32.mrb[0].mxu0
  %v1860 = vadd.f32 0.0, %v1859
  %v1861 = vpop.f32.mrb[0].mxu0
  %v1862 = vadd.f32 0.0, %v1861
  %v1863 = vpop.f32.mrb[0].mxu0
  %v1864 = vadd.f32 0.0, %v1863
  %v1865 = vpop.f32.mrb[0].mxu0
  %v1866 = vadd.f32 0.0, %v1865
  %1867 = vmatprep.mubr.bf16.mxu0 0
  %1868 = vmatmul.mubr.bf16.gmra.mrb[0].mxu0 %v1345
  %v1869 = vpop.f32.mrb[0].mxu0
  %v1870 = vadd.f32 0.0, %v1869
  %v1871 = vpop.f32.mrb[0].mxu0
  %v1872 = vadd.f32 0.0, %v1871
  %v1873 = vpop.f32.mrb[0].mxu0
  %v1874 = vadd.f32 0.0, %v1873
  %v1875 = vpop.f32.mrb[0].mxu0
  %v1876 = vadd.f32 0.0, %v1875
  %1877 = vmatprep.mubr.bf16.mxu0 0
  %1878 = vmatmul.mubr.bf16.gmra.mrb[0].mxu0 %v1348
  %v1879 = vpop.f32.mrb[0].mxu0
  %v1880 = vadd.f32 0.0, %v1879
  %v1881 = vpop.f32.mrb[0].mxu0
  %v1882 = vadd.f32 0.0, %v1881
  %v1883 = vpop.f32.mrb[0].mxu0
  %v1884 = vadd.f32 0.0, %v1883
  %v1885 = vpop.f32.mrb[0].mxu0
  %v1886 = vadd.f32 0.0, %v1885
  %1887 = vmatprep.mubr.bf16.mxu0 0
  %1888 = vmatmul.mubr.bf16.gmra.mrb[0].mxu0 %v1351
  %v1889 = vpop.f32.mrb[0].mxu0
  %v1890 = vadd.f32 0.0, %v1889
  %v1891 = vpop.f32.mrb[0].mxu0
  %v1892 = vadd.f32 0.0, %v1891
  %v1893 = vpop.f32.mrb[0].mxu0
  %v1894 = vadd.f32 0.0, %v1893
  %v1895 = vpop.f32.mrb[0].mxu0
  %v1896 = vadd.f32 0.0, %v1895
  %1897 = vmatprep.mubr.bf16.mxu0 0
  %1898 = vmatmul.mubr.bf16.gmra.mrb[0].mxu0 %v1354
  %v1899 = vpop.f32.mrb[0].mxu0
  %v1900 = vadd.f32 0.0, %v1899
  %v1901 = vpop.f32.mrb[0].mxu0
  %v1902 = vadd.f32 0.0, %v1901
  %v1903 = vpop.f32.mrb[0].mxu0
  %v1904 = vadd.f32 0.0, %v1903
  %v1905 = vpop.f32.mrb[0].mxu0
  %v1906 = vadd.f32 0.0, %v1905
  %1907 = vmatprep.mubr.bf16.mxu0 0
  %1908 = vmatmul.mubr.bf16.gmra.mrb[0].mxu0 %v1357
  %v1909 = vpop.f32.mrb[0].mxu0
  %v1910 = vadd.f32 0.0, %v1909
  %v1911 = vpop.f32.mrb[0].mxu0
  %v1912 = vadd.f32 0.0, %v1911
  %v1913 = vpop.f32.mrb[0].mxu0
  %v1914 = vadd.f32 0.0, %v1913
  %v1915 = vpop.f32.mrb[0].mxu0
  %v1916 = vadd.f32 0.0, %v1915
  %1917 = vmatprep.mubr.bf16.mxu0 0
  %1918 = vmatmul.mubr.bf16.gmra.mrb[0].mxu0 %v1360
  %v1919 = vpop.f32.mrb[0].mxu0
  %v1920 = vadd.f32 0.0, %v1919
  %v1921 = vpop.f32.mrb[0].mxu0
  %v1922 = vadd.f32 0.0, %v1921
  %v1923 = vpop.f32.mrb[0].mxu0
  %v1924 = vadd.f32 0.0, %v1923
  %v1925 = vpop.f32.mrb[0].mxu0
  %v1926 = vadd.f32 0.0, %v1925
  %1927 = vmatprep.mubr.bf16.mxu0 0
  %1928 = vmatmul.mubr.bf16.gmra.mrb[0].mxu0 %v1363
  %v1929 = vpop.f32.mrb[0].mxu0
  %v1930 = vadd.f32 0.0, %v1929
  %v1931 = vpop.f32.mrb[0].mxu0
  %v1932 = vadd.f32 0.0, %v1931
  %v1933 = vpop.f32.mrb[0].mxu0
  %v1934 = vadd.f32 0.0, %v1933
  %v1935 = vpop.f32.mrb[0].mxu0
  %v1936 = vadd.f32 0.0, %v1935
  %1937 = vmatprep.mubr.bf16.mxu0 0
  %1938 = vmatmul.mubr.bf16.gmra.mrb[0].mxu0 %v1366
  %v1939 = vpop.f32.mrb[0].mxu0
  %v1940 = vadd.f32 0.0, %v1939
  %v1941 = vpop.f32.mrb[0].mxu0
  %v1942 = vadd.f32 0.0, %v1941
  %v1943 = vpop.f32.mrb[0].mxu0
  %v1944 = vadd.f32 0.0, %v1943
  %v1945 = vpop.f32.mrb[0].mxu0
  %v1946 = vadd.f32 0.0, %v1945
  %1947 = vmatprep.mubr.bf16.mxu0 0
  %1948 = vmatmul.mubr.bf16.gmra.mrb[0].mxu0 %v1369
  %v1949 = vpop.f32.mrb[0].mxu0
  %v1950 = vadd.f32 0.0, %v1949
  %v1951 = vpop.f32.mrb[0].mxu0
  %v1952 = vadd.f32 0.0, %v1951
  %v1953 = vpop.f32.mrb[0].mxu0
  %v1954 = vadd.f32 0.0, %v1953
  %v1955 = vpop.f32.mrb[0].mxu0
  %v1956 = vadd.f32 0.0, %v1955
  %1957 = vmatprep.mubr.bf16.mxu0 0
  %1958 = vmatmul.mubr.bf16.gmra.mrb[0].mxu0 %v1372
  %v1959 = vpop.f32.mrb[0].mxu0
  %v1960 = vadd.f32 0.0, %v1959
  %v1961 = vpop.f32.mrb[0].mxu0
  %v1962 = vadd.f32 0.0, %v1961
  %v1963 = vpop.f32.mrb[0].mxu0
  %v1964 = vadd.f32 0.0, %v1963
  %v1965 = vpop.f32.mrb[0].mxu0
  %v1966 = vadd.f32 0.0, %v1965
  %1967 = vmatprep.mubr.bf16.mxu0 0
  %1968 = vmatmul.mubr.bf16.gmra.mrb[0].mxu0 %v1375
  %v1969 = vpop.f32.mrb[0].mxu0
  %v1970 = vadd.f32 0.0, %v1969
  %v1971 = vpop.f32.mrb[0].mxu0
  %v1972 = vadd.f32 0.0, %v1971
  %v1973 = vpop.f32.mrb[0].mxu0
  %v1974 = vadd.f32 0.0, %v1973
  %v1975 = vpop.f32.mrb[0].mxu0
  %v1976 = vadd.f32 0.0, %v1975
  %1977 = vmatprep.mubr.bf16.mxu0 0
  %1978 = vmatmul.mubr.bf16.gmra.mrb[0].mxu0 %v1378
  %v1979 = vpop.f32.mrb[0].mxu0
  %v1980 = vadd.f32 0.0, %v1979
  %v1981 = vpop.f32.mrb[0].mxu0
  %v1982 = vadd.f32 0.0, %v1981
  %v1983 = vpop.f32.mrb[0].mxu0
  %v1984 = vadd.f32 0.0, %v1983
  %v1985 = vpop.f32.mrb[0].mxu0
  %v1986 = vadd.f32 0.0, %v1985
  %1987 = vmatprep.mubr.bf16.mxu0 0
  %1988 = vmatmul.mubr.bf16.gmra.mrb[0].mxu0 %v1381
  %v1989 = vpop.f32.mrb[0].mxu0
  %v1990 = vadd.f32 0.0, %v1989
  %v1991 = vpop.f32.mrb[0].mxu0
  %v1992 = vadd.f32 0.0, %v1991
  %v1993 = vpop.f32.mrb[0].mxu0
  %v1994 = vadd.f32 0.0, %v1993
  %v1995 = vpop.f32.mrb[0].mxu0
  %v1996 = vadd.f32 0.0, %v1995
  %1997 = vmatprep.mubr.bf16.mxu0 0
  %1998 = vmatmul.mubr.bf16.gmra.mrb[0].mxu0 %v1384
  %v1999 = vpop.f32.mrb[0].mxu0
  %v2000 = vadd.f32 0.0, %v1999
  %v2001 = vpop.f32.mrb[0].mxu0
  %v2002 = vadd.f32 0.0, %v2001
  %v2003 = vpop.f32.mrb[0].mxu0
  %v2004 = vadd.f32 0.0, %v2003
  %v2005 = vpop.f32.mrb[0].mxu0
  %v2006 = vadd.f32 0.0, %v2005
  %2007 = vmatprep.mubr.bf16.mxu0 0
  %2008 = vmatmul.mubr.bf16.gmra.mrb[0].mxu0 %v1387
  %v2009 = vpop.f32.mrb[0].mxu0
  %v2010 = vadd.f32 0.0, %v2009
  %v2011 = vpop.f32.mrb[0].mxu0
  %v2012 = vadd.f32 0.0, %v2011
  %v2013 = vpop.f32.mrb[0].mxu0
  %v2014 = vadd.f32 0.0, %v2013
  %v2015 = vpop.f32.mrb[0].mxu0
  %v2016 = vadd.f32 0.0, %v2015
  %2017 = vmatprep.mubr.bf16.mxu0 0
  %2018 = vmatmul.mubr.bf16.gmra.mrb[0].mxu0 %v1390
  %v2019 = vpop.f32.mrb[0].mxu0
  %v2020 = vadd.f32 0.0, %v2019
  %v2021 = vpop.f32.mrb[0].mxu0
  %v2022 = vadd.f32 0.0, %v2021
  %v2023 = vpop.f32.mrb[0].mxu0
  %v2024 = vadd.f32 0.0, %v2023
  %v2025 = vpop.f32.mrb[0].mxu0
  %v2026 = vadd.f32 0.0, %v2025
  %2027 = vmatprep.mubr.bf16.mxu0 0
  %2028 = vmatmul.mubr.bf16.gmra.mrb[0].mxu0 %v1393
  %v2029 = vpop.f32.mrb[0].mxu0
  %v2030 = vadd.f32 0.0, %v2029
  %v2031 = vpop.f32.mrb[0].mxu0
  %v2032 = vadd.f32 0.0, %v2031
  %v2033 = vpop.f32.mrb[0].mxu0
  %v2034 = vadd.f32 0.0, %v2033
  %v2035 = vpop.f32.mrb[0].mxu0
  %v2036 = vadd.f32 0.0, %v2035
  %2037 = vmatprep.mubr.bf16.mxu0 0
  %2038 = vmatmul.mubr.bf16.gmra.mrb[0].mxu0 %v1396
  %v2039 = vpop.f32.mrb[0].mxu0
  %v2040 = vadd.f32 0.0, %v2039
  %v2041 = vpop.f32.mrb[0].mxu0
  %v2042 = vadd.f32 0.0, %v2041
  %v2043 = vpop.f32.mrb[0].mxu0
  %v2044 = vadd.f32 0.0, %v2043
  %v2045 = vpop.f32.mrb[0].mxu0
  %v2046 = vadd.f32 0.0, %v2045
  %2047 = vmatprep.mubr.bf16.mxu0 0
  %2048 = vmatmul.mubr.bf16.gmra.mrb[0].mxu0 %v1399
  %v2049 = vpop.f32.mrb[0].mxu0
  %v2050 = vadd.f32 0.0, %v2049
  %v2051 = vpop.f32.mrb[0].mxu0
  %v2052 = vadd.f32 0.0, %v2051
  %v2053 = vpop.f32.mrb[0].mxu0
  %v2054 = vadd.f32 0.0, %v2053
  %v2055 = vpop.f32.mrb[0].mxu0
  %v2056 = vadd.f32 0.0, %v2055
  %2057 = vmatprep.mubr.bf16.mxu0 0
  %2058 = vmatmul.mubr.bf16.gmra.mrb[0].mxu0 %v1402
  %v2059 = vpop.f32.mrb[0].mxu0
  %v2060 = vadd.f32 0.0, %v2059
  %v2061 = vpop.f32.mrb[0].mxu0
  %v2062 = vadd.f32 0.0, %v2061
  %v2063 = vpop.f32.mrb[0].mxu0
  %v2064 = vadd.f32 0.0, %v2063
  %v2065 = vpop.f32.mrb[0].mxu0
  %v2066 = vadd.f32 0.0, %v2065
  %2067 = vmatprep.mubr.bf16.mxu0 0
  %2068 = vmatmul.mubr.bf16.gmra.mrb[0].mxu0 %v1405
  %v2069 = vpop.f32.mrb[0].mxu0
  %v2070 = vadd.f32 0.0, %v2069
  %v2071 = vpop.f32.mrb[0].mxu0
  %v2072 = vadd.f32 0.0, %v2071
  %v2073 = vpop.f32.mrb[0].mxu0
  %v2074 = vadd.f32 0.0, %v2073
  %v2075 = vpop.f32.mrb[0].mxu0
  %v2076 = vadd.f32 0.0, %v2075
  %2077 = vmatprep.mubr.bf16.mxu0 0
  %2078 = vmatmul.mubr.bf16.gmra.mrb[0].mxu0 %v1408
  %v2079 = vpop.f32.mrb[0].mxu0
  %v2080 = vadd.f32 0.0, %v2079
  %v2081 = vpop.f32.mrb[0].mxu0
  %v2082 = vadd.f32 0.0, %v2081
  %v2083 = vpop.f32.mrb[0].mxu0
  %v2084 = vadd.f32 0.0, %v2083
  %v2085 = vpop.f32.mrb[0].mxu0
  %v2086 = vadd.f32 0.0, %v2085
  %2087 = vmatprep.mubr.bf16.mxu0 0
  %2088 = vmatmul.mubr.bf16.gmra.mrb[0].mxu0 %v1411
  %v2089 = vpop.f32.mrb[0].mxu0
  %v2090 = vadd.f32 0.0, %v2089
  %v2091 = vpop.f32.mrb[0].mxu0
  %v2092 = vadd.f32 0.0, %v2091
  %v2093 = vpop.f32.mrb[0].mxu0
  %v2094 = vadd.f32 0.0, %v2093
  %v2095 = vpop.f32.mrb[0].mxu0
  %v2096 = vadd.f32 0.0, %v2095
  %2097 = vmatprep.mubr.bf16.mxu0 0
  %2098 = vmatmul.mubr.bf16.gmra.mrb[0].mxu0 %v1414
  %v2099 = vpop.f32.mrb[0].mxu0
  %v2100 = vadd.f32 0.0, %v2099
  %v2101 = vpop.f32.mrb[0].mxu0
  %v2102 = vadd.f32 0.0, %v2101
  %v2103 = vpop.f32.mrb[0].mxu0
  %v2104 = vadd.f32 0.0, %v2103
  %v2105 = vpop.f32.mrb[0].mxu0
  %v2106 = vadd.f32 0.0, %v2105
  %2107 = vmatprep.mubr.bf16.mxu0 0
  %2108 = vmatmul.mubr.bf16.gmra.mrb[0].mxu0 %v1417
  %v2109 = vpop.f32.mrb[0].mxu0
  %v2110 = vadd.f32 0.0, %v2109
  %v2111 = vpop.f32.mrb[0].mxu0
  %v2112 = vadd.f32 0.0, %v2111
  %v2113 = vpop.f32.mrb[0].mxu0
  %v2114 = vadd.f32 0.0, %v2113
  %v2115 = vpop.f32.mrb[0].mxu0
  %v2116 = vadd.f32 0.0, %v2115
  %2117 = vmatprep.mubr.bf16.mxu0 0
  %2118 = vmatmul.mubr.bf16.gmra.mrb[0].mxu0 %v1420
  %v2119 = vpop.f32.mrb[0].mxu0
  %v2120 = vadd.f32 0.0, %v2119
  %v2121 = vpop.f32.mrb[0].mxu0
  %v2122 = vadd.f32 0.0, %v2121
  %v2123 = vpop.f32.mrb[0].mxu0
  %v2124 = vadd.f32 0.0, %v2123
  %v2125 = vpop.f32.mrb[0].mxu0
  %v2126 = vadd.f32 0.0, %v2125
  %2127 = vdwg.mxu0
  %v2128 = vld [vmem:[%s5] sm:$0xff]
  %v2129 = vld [vmem:[%s5 + $0x8] sm:$0xff]
  %v2130 = vld [vmem:[%s5 + $0x10] sm:$0xff]
  %v2131 = vld [vmem:[%s5 + $0x18] sm:$0xff]
  %v2132 = vld [vmem:[%s5 + $0x20] sm:$0xff]
  %v2133 = vld [vmem:[%s5 + $0x28] sm:$0xff]
  %v2134 = vld [vmem:[%s5 + $0x30] sm:$0xff]
  %v2135 = vld [vmem:[%s5 + $0x38] sm:$0xff]
  %v2136 = vld [vmem:[%s5 + $0x40] sm:$0xff]
  %v2137 = vld [vmem:[%s5 + $0x48] sm:$0xff]
  %v2138 = vld [vmem:[%s5 + $0x50] sm:$0xff]
  %v2139 = vld [vmem:[%s5 + $0x58] sm:$0xff]
  %v2140 = vld [vmem:[%s5 + $0x60] sm:$0xff]
  %v2141 = vld [vmem:[%s5 + $0x68] sm:$0xff]
  %v2142 = vld [vmem:[%s5 + $0x70] sm:$0xff]
  %v2143 = vld [vmem:[%s5 + $0x78] sm:$0xff]
  %v2160 = vunpack.c.l.b16 %v2128
  %v2161 = vunpack.c.h.b16 %v2128
  %v2162 = vunpack.c.l.b16 %v2129
  %v2163 = vunpack.c.h.b16 %v2129
  %v2164 = vunpack.c.l.b16 %v2130
  %v2165 = vunpack.c.h.b16 %v2130
  %v2166 = vunpack.c.l.b16 %v2131
  %v2167 = vunpack.c.h.b16 %v2131
  %v2168 = vunpack.c.l.b16 %v2132
  %v2169 = vunpack.c.h.b16 %v2132
  %v2170 = vunpack.c.l.b16 %v2133
  %v2171 = vunpack.c.h.b16 %v2133
  %v2172 = vunpack.c.l.b16 %v2134
  %v2173 = vunpack.c.h.b16 %v2134
  %v2174 = vunpack.c.l.b16 %v2135
  %v2175 = vunpack.c.h.b16 %v2135
  %v2176 = vunpack.c.l.b16 %v2136
  %v2177 = vunpack.c.h.b16 %v2136
  %v2178 = vunpack.c.l.b16 %v2137
  %v2179 = vunpack.c.h.b16 %v2137
  %v2180 = vunpack.c.l.b16 %v2138
  %v2181 = vunpack.c.h.b16 %v2138
  %v2182 = vunpack.c.l.b16 %v2139
  %v2183 = vunpack.c.h.b16 %v2139
  %v2184 = vunpack.c.l.b16 %v2140
  %v2185 = vunpack.c.h.b16 %v2140
  %v2186 = vunpack.c.l.b16 %v2141
  %v2187 = vunpack.c.h.b16 %v2141
  %v2188 = vunpack.c.l.b16 %v2142
  %v2189 = vunpack.c.h.b16 %v2142
  %v2190 = vunpack.c.l.b16 %v2143
  %v2191 = vunpack.c.h.b16 %v2143
  %v2192 = vpack.c.b16 %v2168, %v2160
  %v2193 = vpack.c.b16 %v2169, %v2161
  %v2194 = vpack.c.b16 %v2170, %v2162
  %v2195 = vpack.c.b16 %v2171, %v2163
  %v2196 = vpack.c.b16 %v2172, %v2164
  %v2197 = vpack.c.b16 %v2173, %v2165
  %v2198 = vpack.c.b16 %v2174, %v2166
  %v2199 = vpack.c.b16 %v2175, %v2167
  %v2200 = vpack.c.b16 %v2184, %v2176
  %v2201 = vpack.c.b16 %v2185, %v2177
  %v2202 = vpack.c.b16 %v2186, %v2178
  %v2203 = vpack.c.b16 %v2187, %v2179
  %v2204 = vpack.c.b16 %v2188, %v2180
  %v2205 = vpack.c.b16 %v2189, %v2181
  %v2206 = vpack.c.b16 %v2190, %v2182
  %v2207 = vpack.c.b16 %v2191, %v2183
  %v2225 = vsel %vm210, %v1276, 0
  %v2228 = vsel %vm210, %v1277, 0
  %2230 = vmatprep.subr.bf16.mxu0 %v2193
  %2231 = vmatpush1.bf16.msra.mxu0 %v2192
  %2232 = vmatprep.subr.bf16.mxu0 %v2201
  %2233 = vmatpush1.bf16.msra.mxu0 %v2200
  %2234 = vmatprep.subr.bf16.mxu0 0
  %2235 = vmatpush1.bf16.msra.mxu0 0
  %2236 = vmatprep.subr.bf16.mxu0 0
  %2237 = vmatpush1.bf16.msra.mxu0 0
  %2238 = vmatprep.subr.bf16.mxu0 0
  %2239 = vmatpush1.bf16.msra.mxu0 0
  %2240 = vmatprep.subr.bf16.mxu0 0
  %2241 = vmatpush1.bf16.msra.mxu0 0
  %2242 = vmatprep.subr.bf16.mxu0 0
  %2243 = vmatpush1.bf16.msra.mxu0 0
  %2244 = vmatprep.subr.bf16.mxu0 0
  %2245 = vmatpush1.bf16.msra.mxu0 0
  %2246 = vmatprep.subr.bf16.mxu0 0
  %2247 = vmatpush1.bf16.msra.mxu0 0
  %2248 = vmatprep.subr.bf16.mxu0 0
  %2249 = vmatpush1.bf16.msra.mxu0 0
  %2250 = vmatprep.subr.bf16.mxu0 0
  %2251 = vmatpush1.bf16.msra.mxu0 0
  %2252 = vmatprep.subr.bf16.mxu0 0
  %2253 = vmatpush1.bf16.msra.mxu0 0
  %2254 = vmatprep.subr.bf16.mxu0 0
  %2255 = vmatpush1.bf16.msra.mxu0 0
  %2256 = vmatprep.subr.bf16.mxu0 0
  %2257 = vmatpush1.bf16.msra.mxu0 0
  %2258 = vmatprep.subr.bf16.mxu0 0
  %2259 = vmatpush1.bf16.msra.mxu0 0
  %2260 = vmatprep.subr.bf16.mxu0 0
  %2261 = vmatpush1.bf16.msra.mxu0 0
  %2262 = vmatprep.mubr.bf16.mxu0 0
  %2263 = vmatmul.mubr.bf16.gmra.mrb[0].mxu0 %v2225
  %v2264 = vpop.f32.mrb[0].mxu0
  %v2265 = vadd.f32 0.0, %v2264
  %v2266 = vpop.f32.mrb[0].mxu0
  %v2267 = vadd.f32 0.0, %v2266
  %v2268 = vpop.f32.mrb[0].mxu0
  %v2269 = vadd.f32 0.0, %v2268
  %v2270 = vpop.f32.mrb[0].mxu0
  %v2271 = vadd.f32 0.0, %v2270
  %2272 = vmatprep.mubr.bf16.mxu0 0
  %2273 = vmatmul.mubr.bf16.gmra.mrb[0].mxu0 %v2228
  %v2274 = vpop.f32.mrb[0].mxu0
  %v2275 = vadd.f32 0.0, %v2274
  %v2276 = vpop.f32.mrb[0].mxu0
  %v2277 = vadd.f32 0.0, %v2276
  %v2278 = vpop.f32.mrb[0].mxu0
  %v2279 = vadd.f32 0.0, %v2278
  %v2280 = vpop.f32.mrb[0].mxu0
  %v2281 = vadd.f32 0.0, %v2280
  %2282 = vdwg.mxu0
  %2283 = vmatprep.subr.bf16.mxu0 %v2195
  %2284 = vmatpush1.bf16.msra.mxu0 %v2194
  %2285 = vmatprep.subr.bf16.mxu0 %v2203
  %2286 = vmatpush1.bf16.msra.mxu0 %v2202
  %2287 = vmatprep.subr.bf16.mxu0 0
  %2288 = vmatpush1.bf16.msra.mxu0 0
  %2289 = vmatprep.subr.bf16.mxu0 0
  %2290 = vmatpush1.bf16.msra.mxu0 0
  %2291 = vmatprep.subr.bf16.mxu0 0
  %2292 = vmatpush1.bf16.msra.mxu0 0
  %2293 = vmatprep.subr.bf16.mxu0 0
  %2294 = vmatpush1.bf16.msra.mxu0 0
  %2295 = vmatprep.subr.bf16.mxu0 0
  %2296 = vmatpush1.bf16.msra.mxu0 0
  %2297 = vmatprep.subr.bf16.mxu0 0
  %2298 = vmatpush1.bf16.msra.mxu0 0
  %2299 = vmatprep.subr.bf16.mxu0 0
  %2300 = vmatpush1.bf16.msra.mxu0 0
  %2301 = vmatprep.subr.bf16.mxu0 0
  %2302 = vmatpush1.bf16.msra.mxu0 0
  %2303 = vmatprep.subr.bf16.mxu0 0
  %2304 = vmatpush1.bf16.msra.mxu0 0
  %2305 = vmatprep.subr.bf16.mxu0 0
  %2306 = vmatpush1.bf16.msra.mxu0 0
  %2307 = vmatprep.subr.bf16.mxu0 0
  %2308 = vmatpush1.bf16.msra.mxu0 0
  %2309 = vmatprep.subr.bf16.mxu0 0
  %2310 = vmatpush1.bf16.msra.mxu0 0
  %2311 = vmatprep.subr.bf16.mxu0 0
  %2312 = vmatpush1.bf16.msra.mxu0 0
  %2313 = vmatprep.subr.bf16.mxu0 0
  %2314 = vmatpush1.bf16.msra.mxu0 0
  %2315 = vmatprep.mubr.bf16.mxu0 0
  %2316 = vmatmul.mubr.bf16.gmra.mrb[0].mxu0 %v2225
  %v2317 = vpop.f32.mrb[0].mxu0
  %v2318 = vadd.f32 0.0, %v2317
  %v2319 = vpop.f32.mrb[0].mxu0
  %v2320 = vadd.f32 0.0, %v2319
  %v2321 = vpop.f32.mrb[0].mxu0
  %v2322 = vadd.f32 0.0, %v2321
  %v2323 = vpop.f32.mrb[0].mxu0
  %v2324 = vadd.f32 0.0, %v2323
  %2325 = vmatprep.mubr.bf16.mxu0 0
  %2326 = vmatmul.mubr.bf16.gmra.mrb[0].mxu0 %v2228
  %v2327 = vpop.f32.mrb[0].mxu0
  %v2328 = vadd.f32 0.0, %v2327
  %v2329 = vpop.f32.mrb[0].mxu0
  %v2330 = vadd.f32 0.0, %v2329
  %v2331 = vpop.f32.mrb[0].mxu0
  %v2332 = vadd.f32 0.0, %v2331
  %v2333 = vpop.f32.mrb[0].mxu0
  %v2334 = vadd.f32 0.0, %v2333
  %2335 = vdwg.mxu0
  %2336 = vmatprep.subr.bf16.mxu0 %v2197
  %2337 = vmatpush1.bf16.msra.mxu0 %v2196
  %2338 = vmatprep.subr.bf16.mxu0 %v2205
  %2339 = vmatpush1.bf16.msra.mxu0 %v2204
  %2340 = vmatprep.subr.bf16.mxu0 0
  %2341 = vmatpush1.bf16.msra.mxu0 0
  %2342 = vmatprep.subr.bf16.mxu0 0
  %2343 = vmatpush1.bf16.msra.mxu0 0
  %2344 = vmatprep.subr.bf16.mxu0 0
  %2345 = vmatpush1.bf16.msra.mxu0 0
  %2346 = vmatprep.subr.bf16.mxu0 0
  %2347 = vmatpush1.bf16.msra.mxu0 0
  %2348 = vmatprep.subr.bf16.mxu0 0
  %2349 = vmatpush1.bf16.msra.mxu0 0
  %2350 = vmatprep.subr.bf16.mxu0 0
  %2351 = vmatpush1.bf16.msra.mxu0 0
  %2352 = vmatprep.subr.bf16.mxu0 0
  %2353 = vmatpush1.bf16.msra.mxu0 0
  %2354 = vmatprep.subr.bf16.mxu0 0
  %2355 = vmatpush1.bf16.msra.mxu0 0
  %2356 = vmatprep.subr.bf16.mxu0 0
  %2357 = vmatpush1.bf16.msra.mxu0 0
  %2358 = vmatprep.subr.bf16.mxu0 0
  %2359 = vmatpush1.bf16.msra.mxu0 0
  %2360 = vmatprep.subr.bf16.mxu0 0
  %2361 = vmatpush1.bf16.msra.mxu0 0
  %2362 = vmatprep.subr.bf16.mxu0 0
  %2363 = vmatpush1.bf16.msra.mxu0 0
  %2364 = vmatprep.subr.bf16.mxu0 0
  %2365 = vmatpush1.bf16.msra.mxu0 0
  %2366 = vmatprep.subr.bf16.mxu0 0
  %2367 = vmatpush1.bf16.msra.mxu0 0
  %2368 = vmatprep.mubr.bf16.mxu0 0
  %2369 = vmatmul.mubr.bf16.gmra.mrb[0].mxu0 %v2225
  %v2370 = vpop.f32.mrb[0].mxu0
  %v2371 = vadd.f32 0.0, %v2370
  %v2372 = vpop.f32.mrb[0].mxu0
  %v2373 = vadd.f32 0.0, %v2372
  %v2374 = vpop.f32.mrb[0].mxu0
  %v2375 = vadd.f32 0.0, %v2374
  %v2376 = vpop.f32.mrb[0].mxu0
  %v2377 = vadd.f32 0.0, %v2376
  %2378 = vmatprep.mubr.bf16.mxu0 0
  %2379 = vmatmul.mubr.bf16.gmra.mrb[0].mxu0 %v2228
  %v2380 = vpop.f32.mrb[0].mxu0
  %v2381 = vadd.f32 0.0, %v2380
  %v2382 = vpop.f32.mrb[0].mxu0
  %v2383 = vadd.f32 0.0, %v2382
  %v2384 = vpop.f32.mrb[0].mxu0
  %v2385 = vadd.f32 0.0, %v2384
  %v2386 = vpop.f32.mrb[0].mxu0
  %v2387 = vadd.f32 0.0, %v2386
  %2388 = vdwg.mxu0
  %2389 = vmatprep.subr.bf16.mxu0 %v2199
  %2390 = vmatpush1.bf16.msra.mxu0 %v2198
  %2391 = vmatprep.subr.bf16.mxu0 %v2207
  %2392 = vmatpush1.bf16.msra.mxu0 %v2206
  %2393 = vmatprep.subr.bf16.mxu0 0
  %2394 = vmatpush1.bf16.msra.mxu0 0
  %2395 = vmatprep.subr.bf16.mxu0 0
  %2396 = vmatpush1.bf16.msra.mxu0 0
  %2397 = vmatprep.subr.bf16.mxu0 0
  %2398 = vmatpush1.bf16.msra.mxu0 0
  %2399 = vmatprep.subr.bf16.mxu0 0
  %2400 = vmatpush1.bf16.msra.mxu0 0
  %2401 = vmatprep.subr.bf16.mxu0 0
  %2402 = vmatpush1.bf16.msra.mxu0 0
  %2403 = vmatprep.subr.bf16.mxu0 0
  %2404 = vmatpush1.bf16.msra.mxu0 0
  %2405 = vmatprep.subr.bf16.mxu0 0
  %2406 = vmatpush1.bf16.msra.mxu0 0
  %2407 = vmatprep.subr.bf16.mxu0 0
  %2408 = vmatpush1.bf16.msra.mxu0 0
  %2409 = vmatprep.subr.bf16.mxu0 0
  %2410 = vmatpush1.bf16.msra.mxu0 0
  %2411 = vmatprep.subr.bf16.mxu0 0
  %2412 = vmatpush1.bf16.msra.mxu0 0
  %2413 = vmatprep.subr.bf16.mxu0 0
  %2414 = vmatpush1.bf16.msra.mxu0 0
  %2415 = vmatprep.subr.bf16.mxu0 0
  %2416 = vmatpush1.bf16.msra.mxu0 0
  %2417 = vmatprep.subr.bf16.mxu0 0
  %2418 = vmatpush1.bf16.msra.mxu0 0
  %2419 = vmatprep.subr.bf16.mxu0 0
  %2420 = vmatpush1.bf16.msra.mxu0 0
  %2421 = vmatprep.mubr.bf16.mxu0 0
  %2422 = vmatmul.mubr.bf16.gmra.mrb[0].mxu0 %v2225
  %v2423 = vpop.f32.mrb[0].mxu0
  %v2424 = vadd.f32 0.0, %v2423
  %v2425 = vpop.f32.mrb[0].mxu0
  %v2426 = vadd.f32 0.0, %v2425
  %v2427 = vpop.f32.mrb[0].mxu0
  %v2428 = vadd.f32 0.0, %v2427
  %v2429 = vpop.f32.mrb[0].mxu0
  %v2430 = vadd.f32 0.0, %v2429
  %2431 = vmatprep.mubr.bf16.mxu0 0
  %2432 = vmatmul.mubr.bf16.gmra.mrb[0].mxu0 %v2228
  %v2433 = vpop.f32.mrb[0].mxu0
  %v2434 = vadd.f32 0.0, %v2433
  %v2435 = vpop.f32.mrb[0].mxu0
  %v2436 = vadd.f32 0.0, %v2435
  %v2437 = vpop.f32.mrb[0].mxu0
  %v2438 = vadd.f32 0.0, %v2437
  %v2439 = vpop.f32.mrb[0].mxu0
  %v2440 = vadd.f32 0.0, %v2439
  %2441 = vdwg.mxu0
  %v2442 = vpack.c.bf16 %v1461, %v1457
  %v2443 = vpack.c.bf16 %v1463, %v1459
  %v2444 = vpack.c.bf16 %v1814, %v1810
  %v2445 = vpack.c.bf16 %v1816, %v1812
  %v2446 = vpack.c.bf16 %v1471, %v1467
  %v2447 = vpack.c.bf16 %v1473, %v1469
  %v2448 = vpack.c.bf16 %v1824, %v1820
  %v2449 = vpack.c.bf16 %v1826, %v1822
  %v2450 = vpack.c.bf16 %v1481, %v1477
  %v2451 = vpack.c.bf16 %v1483, %v1479
  %v2452 = vpack.c.bf16 %v1834, %v1830
  %v2453 = vpack.c.bf16 %v1836, %v1832
  %v2454 = vpack.c.bf16 %v1491, %v1487
  %v2455 = vpack.c.bf16 %v1493, %v1489
  %v2456 = vpack.c.bf16 %v1844, %v1840
  %v2457 = vpack.c.bf16 %v1846, %v1842
  %v2458 = vpack.c.bf16 %v1501, %v1497
  %v2459 = vpack.c.bf16 %v1503, %v1499
  %v2460 = vpack.c.bf16 %v1854, %v1850
  %v2461 = vpack.c.bf16 %v1856, %v1852
  %v2462 = vpack.c.bf16 %v1511, %v1507
  %v2463 = vpack.c.bf16 %v1513, %v1509
  %v2464 = vpack.c.bf16 %v1864, %v1860
  %v2465 = vpack.c.bf16 %v1866, %v1862
  %v2466 = vpack.c.bf16 %v1521, %v1517
  %v2467 = vpack.c.bf16 %v1523, %v1519
  %v2468 = vpack.c.bf16 %v1874, %v1870
  %v2469 = vpack.c.bf16 %v1876, %v1872
  %v2470 = vpack.c.bf16 %v1531, %v1527
  %v2471 = vpack.c.bf16 %v1533, %v1529
  %v2472 = vpack.c.bf16 %v1884, %v1880
  %v2473 = vpack.c.bf16 %v1886, %v1882
  %v2474 = vpack.c.bf16 %v1541, %v1537
  %v2475 = vpack.c.bf16 %v1543, %v1539
  %v2476 = vpack.c.bf16 %v1894, %v1890
  %v2477 = vpack.c.bf16 %v1896, %v1892
  %v2478 = vpack.c.bf16 %v1551, %v1547
  %v2479 = vpack.c.bf16 %v1553, %v1549
  %v2480 = vpack.c.bf16 %v1904, %v1900
  %v2481 = vpack.c.bf16 %v1906, %v1902
  %v2482 = vpack.c.bf16 %v1561, %v1557
  %v2483 = vpack.c.bf16 %v1563, %v1559
  %v2484 = vpack.c.bf16 %v1914, %v1910
  %v2485 = vpack.c.bf16 %v1916, %v1912
  %v2486 = vpack.c.bf16 %v1571, %v1567
  %v2487 = vpack.c.bf16 %v1573, %v1569
  %v2488 = vpack.c.bf16 %v1924, %v1920
  %v2489 = vpack.c.bf16 %v1926, %v1922
  %v2490 = vpack.c.bf16 %v1581, %v1577
  %v2491 = vpack.c.bf16 %v1583, %v1579
  %v2492 = vpack.c.bf16 %v1934, %v1930
  %v2493 = vpack.c.bf16 %v1936, %v1932
  %v2494 = vpack.c.bf16 %v1591, %v1587
  %v2495 = vpack.c.bf16 %v1593, %v1589
  %v2496 = vpack.c.bf16 %v1944, %v1940
  %v2497 = vpack.c.bf16 %v1946, %v1942
  %v2498 = vpack.c.bf16 %v1601, %v1597
  %v2499 = vpack.c.bf16 %v1603, %v1599
  %v2500 = vpack.c.bf16 %v1954, %v1950
  %v2501 = vpack.c.bf16 %v1956, %v1952
  %v2502 = vpack.c.bf16 %v1611, %v1607
  %v2503 = vpack.c.bf16 %v1613, %v1609
  %v2504 = vpack.c.bf16 %v1964, %v1960
  %v2505 = vpack.c.bf16 %v1966, %v1962
  %v2506 = vpack.c.bf16 %v1621, %v1617
  %v2507 = vpack.c.bf16 %v1623, %v1619
  %v2508 = vpack.c.bf16 %v1974, %v1970
  %v2509 = vpack.c.bf16 %v1976, %v1972
  %v2510 = vpack.c.bf16 %v1631, %v1627
  %v2511 = vpack.c.bf16 %v1633, %v1629
  %v2512 = vpack.c.bf16 %v1984, %v1980
  %v2513 = vpack.c.bf16 %v1986, %v1982
  %v2514 = vpack.c.bf16 %v1641, %v1637
  %v2515 = vpack.c.bf16 %v1643, %v1639
  %v2516 = vpack.c.bf16 %v1994, %v1990
  %v2517 = vpack.c.bf16 %v1996, %v1992
  %v2518 = vpack.c.bf16 %v1651, %v1647
  %v2519 = vpack.c.bf16 %v1653, %v1649
  %v2520 = vpack.c.bf16 %v2004, %v2000
  %v2521 = vpack.c.bf16 %v2006, %v2002
  %v2522 = vpack.c.bf16 %v1661, %v1657
  %v2523 = vpack.c.bf16 %v1663, %v1659
  %v2524 = vpack.c.bf16 %v2014, %v2010
  %v2525 = vpack.c.bf16 %v2016, %v2012
  %v2526 = vpack.c.bf16 %v1671, %v1667
  %v2527 = vpack.c.bf16 %v1673, %v1669
  %v2528 = vpack.c.bf16 %v2024, %v2020
  %v2529 = vpack.c.bf16 %v2026, %v2022
  %v2530 = vpack.c.bf16 %v1681, %v1677
  %v2531 = vpack.c.bf16 %v1683, %v1679
  %v2532 = vpack.c.bf16 %v2034, %v2030
  %v2533 = vpack.c.bf16 %v2036, %v2032
  %v2534 = vpack.c.bf16 %v1691, %v1687
  %v2535 = vpack.c.bf16 %v1693, %v1689
  %v2536 = vpack.c.bf16 %v2044, %v2040
  %v2537 = vpack.c.bf16 %v2046, %v2042
  %v2538 = vpack.c.bf16 %v1701, %v1697
  %v2539 = vpack.c.bf16 %v1703, %v1699
  %v2540 = vpack.c.bf16 %v2054, %v2050
  %v2541 = vpack.c.bf16 %v2056, %v2052
  %v2542 = vpack.c.bf16 %v1711, %v1707
  %v2543 = vpack.c.bf16 %v1713, %v1709
  %v2544 = vpack.c.bf16 %v2064, %v2060
  %v2545 = vpack.c.bf16 %v2066, %v2062
  %v2546 = vpack.c.bf16 %v1721, %v1717
  %v2547 = vpack.c.bf16 %v1723, %v1719
  %v2548 = vpack.c.bf16 %v2074, %v2070
  %v2549 = vpack.c.bf16 %v2076, %v2072
  %v2550 = vpack.c.bf16 %v1731, %v1727
  %v2551 = vpack.c.bf16 %v1733, %v1729
  %v2552 = vpack.c.bf16 %v2084, %v2080
  %v2553 = vpack.c.bf16 %v2086, %v2082
  %v2554 = vpack.c.bf16 %v1741, %v1737
  %v2555 = vpack.c.bf16 %v1743, %v1739
  %v2556 = vpack.c.bf16 %v2094, %v2090
  %v2557 = vpack.c.bf16 %v2096, %v2092
  %v2558 = vpack.c.bf16 %v1751, %v1747
  %v2559 = vpack.c.bf16 %v1753, %v1749
  %v2560 = vpack.c.bf16 %v2104, %v2100
  %v2561 = vpack.c.bf16 %v2106, %v2102
  %v2562 = vpack.c.bf16 %v1761, %v1757
  %v2563 = vpack.c.bf16 %v1763, %v1759
  %v2564 = vpack.c.bf16 %v2114, %v2110
  %v2565 = vpack.c.bf16 %v2116, %v2112
  %v2566 = vpack.c.bf16 %v1771, %v1767
  %v2567 = vpack.c.bf16 %v1773, %v1769
  %v2568 = vpack.c.bf16 %v2124, %v2120
  %v2569 = vpack.c.bf16 %v2126, %v2122
  %v2570 = vld [vmem:[%s14] sm:$0xff]
  %v2571 = vld [vmem:[%s14 + $0x8] sm:$0xff]
  %v2572 = vld [vmem:[%s14 + $0x10] sm:$0xff]
  %v2573 = vld [vmem:[%s14 + $0x18] sm:$0xff]
  %v2574 = vld [vmem:[%s14 + $0x20] sm:$0xff]
  %v2575 = vld [vmem:[%s14 + $0x28] sm:$0xff]
  %v2576 = vld [vmem:[%s14 + $0x30] sm:$0xff]
  %v2577 = vld [vmem:[%s14 + $0x38] sm:$0xff]
  %v2578 = vld [vmem:[%s15] sm:$0xff]
  %v2579 = vld [vmem:[%s15 + $0x8] sm:$0xff]
  %v2580 = vld [vmem:[%s15 + $0x10] sm:$0xff]
  %v2581 = vld [vmem:[%s15 + $0x18] sm:$0xff]
  %v2582 = vld [vmem:[%s15 + $0x20] sm:$0xff]
  %v2583 = vld [vmem:[%s15 + $0x28] sm:$0xff]
  %v2584 = vld [vmem:[%s15 + $0x30] sm:$0xff]
  %v2585 = vld [vmem:[%s15 + $0x38] sm:$0xff]
  %v2586 = vld [vmem:[%s15 + $0x40] sm:$0xff]
  %v2587 = vld [vmem:[%s15 + $0x48] sm:$0xff]
  %v2588 = vld [vmem:[%s15 + $0x50] sm:$0xff]
  %v2589 = vld [vmem:[%s15 + $0x58] sm:$0xff]
  %v2590 = vld [vmem:[%s15 + $0x60] sm:$0xff]
  %v2591 = vld [vmem:[%s15 + $0x68] sm:$0xff]
  %v2592 = vld [vmem:[%s15 + $0x70] sm:$0xff]
  %v2593 = vld [vmem:[%s15 + $0x78] sm:$0xff]
  %v2594 = vld [vmem:[%s15 + $0x80] sm:$0xff]
  %v2595 = vld [vmem:[%s15 + $0x88] sm:$0xff]
  %v2596 = vld [vmem:[%s15 + $0x90] sm:$0xff]
  %v2597 = vld [vmem:[%s15 + $0x98] sm:$0xff]
  %v2598 = vld [vmem:[%s15 + $0xa0] sm:$0xff]
  %v2599 = vld [vmem:[%s15 + $0xa8] sm:$0xff]
  %v2600 = vld [vmem:[%s15 + $0xb0] sm:$0xff]
  %v2601 = vld [vmem:[%s15 + $0xb8] sm:$0xff]
  %v2602 = vld [vmem:[%s15 + $0xc0] sm:$0xff]
  %v2603 = vld [vmem:[%s15 + $0xc8] sm:$0xff]
  %v2604 = vld [vmem:[%s15 + $0xd0] sm:$0xff]
  %v2605 = vld [vmem:[%s15 + $0xd8] sm:$0xff]
  %v2606 = vld [vmem:[%s15 + $0xe0] sm:$0xff]
  %v2607 = vld [vmem:[%s15 + $0xe8] sm:$0xff]
  %v2608 = vld [vmem:[%s15 + $0xf0] sm:$0xff]
  %v2609 = vld [vmem:[%s15 + $0xf8] sm:$0xff]
  %vm2610 = vcmask 64512
  %v2612 = vsel %vm2610, %v2570, 0
  %v2615 = vsel %vm2610, %v2571, 0
  %v2618 = vsel %vm2610, %v2572, 0
  %v2621 = vsel %vm2610, %v2573, 0
  %v2624 = vsel %vm2610, %v2574, 0
  %v2627 = vsel %vm2610, %v2575, 0
  %v2630 = vsel %vm2610, %v2576, 0
  %v2633 = vsel %vm2610, %v2577, 0
  %2635 = vmatprep.subr.mxu0 %v2267
  %2636 = vmatpush1.msra.mxu0 %v2265
  %2637 = vmatprep.subr.mxu0 0.0
  %2638 = vmatpush1.msra.mxu0 0.0
  %2639 = vmatprep.subr.mxu0 0.0
  %2640 = vmatpush1.msra.mxu0 0.0
  %2641 = vmatprep.subr.mxu0 0.0
  %2642 = vmatpush1.msra.mxu0 0.0
  %2643 = vmatprep.subr.mxu0 0.0
  %2644 = vmatpush1.msra.mxu0 0.0
  %2645 = vmatprep.subr.mxu0 0.0
  %2646 = vmatpush1.msra.mxu0 0.0
  %2647 = vmatprep.subr.mxu0 0.0
  %2648 = vmatpush1.msra.mxu0 0.0
  %2649 = vmatprep.subr.mxu0 0.0
  %2650 = vmatpush1.msra.mxu0 0.0
  %2651 = vmatprep.subr.mxu0 0.0
  %2652 = vmatpush1.msra.mxu0 0.0
  %2653 = vmatprep.subr.mxu0 0.0
  %2654 = vmatpush1.msra.mxu0 0.0
  %2655 = vmatprep.subr.mxu0 0.0
  %2656 = vmatpush1.msra.mxu0 0.0
  %2657 = vmatprep.subr.mxu0 0.0
  %2658 = vmatpush1.msra.mxu0 0.0
  %2659 = vmatprep.subr.mxu0 0.0
  %2660 = vmatpush1.msra.mxu0 0.0
  %2661 = vmatprep.subr.mxu0 0.0
  %2662 = vmatpush1.msra.mxu0 0.0
  %2663 = vmatprep.subr.mxu0 0.0
  %2664 = vmatpush1.msra.mxu0 0.0
  %2665 = vmatprep.subr.mxu0 0.0
  %2666 = vmatpush1.msra.mxu0 0.0
  %2667 = vmatprep.subr.mxu0 0.0
  %2668 = vmatpush1.msra.mxu0 0.0
  %2669 = vmatprep.subr.mxu0 0.0
  %2670 = vmatpush1.msra.mxu0 0.0
  %2671 = vmatprep.subr.mxu0 0.0
  %2672 = vmatpush1.msra.mxu0 0.0
  %2673 = vmatprep.subr.mxu0 0.0
  %2674 = vmatpush1.msra.mxu0 0.0
  %2675 = vmatprep.subr.mxu0 0.0
  %2676 = vmatpush1.msra.mxu0 0.0
  %2677 = vmatprep.subr.mxu0 0.0
  %2678 = vmatpush1.msra.mxu0 0.0
  %2679 = vmatprep.subr.mxu0 0.0
  %2680 = vmatpush1.msra.mxu0 0.0
  %2681 = vmatprep.subr.mxu0 0.0
  %2682 = vmatpush1.msra.mxu0 0.0
  %2683 = vmatprep.subr.mxu0 0.0
  %2684 = vmatpush1.msra.mxu0 0.0
  %2685 = vmatprep.subr.mxu0 0.0
  %2686 = vmatpush1.msra.mxu0 0.0
  %2687 = vmatprep.subr.mxu0 0.0
  %2688 = vmatpush1.msra.mxu0 0.0
  %2689 = vmatprep.subr.mxu0 0.0
  %2690 = vmatpush1.msra.mxu0 0.0
  %2691 = vmatprep.subr.mxu0 0.0
  %2692 = vmatpush1.msra.mxu0 0.0
  %2693 = vmatprep.subr.mxu0 0.0
  %2694 = vmatpush1.msra.mxu0 0.0
  %2695 = vmatprep.subr.mxu0 0.0
  %2696 = vmatpush1.msra.mxu0 0.0
  %2697 = vmatprep.subr.mxu0 0.0
  %2698 = vmatpush1.msra.mxu0 0.0
  %2699 = vmatprep.mubr.f32.mxu0 0.0
  %2700 = vmatmul.mubr.f32.gmra.mrb[0].mxu0 %v2612
  %v2701 = vpop.f32.mrb[0].mxu0
  %v2702 = vadd.f32 0.0, %v2701
  %v2703 = vpop.f32.mrb[0].mxu0
  %v2704 = vadd.f32 0.0, %v2703
  %2705 = vmatprep.mubr.f32.mxu0 0.0
  %2706 = vmatmul.mubr.f32.gmra.mrb[0].mxu0 %v2615
  %v2707 = vpop.f32.mrb[0].mxu0
  %v2708 = vadd.f32 0.0, %v2707
  %v2709 = vpop.f32.mrb[0].mxu0
  %v2710 = vadd.f32 0.0, %v2709
  %2711 = vmatprep.mubr.f32.mxu0 0.0
  %2712 = vmatmul.mubr.f32.gmra.mrb[0].mxu0 %v2618
  %v2713 = vpop.f32.mrb[0].mxu0
  %v2714 = vadd.f32 0.0, %v2713
  %v2715 = vpop.f32.mrb[0].mxu0
  %v2716 = vadd.f32 0.0, %v2715
  %2717 = vmatprep.mubr.f32.mxu0 0.0
  %2718 = vmatmul.mubr.f32.gmra.mrb[0].mxu0 %v2621
  %v2719 = vpop.f32.mrb[0].mxu0
  %v2720 = vadd.f32 0.0, %v2719
  %v2721 = vpop.f32.mrb[0].mxu0
  %v2722 = vadd.f32 0.0, %v2721
  %2723 = vmatprep.mubr.f32.mxu0 0.0
  %2724 = vmatmul.mubr.f32.gmra.mrb[0].mxu0 %v2624
  %v2725 = vpop.f32.mrb[0].mxu0
  %v2726 = vadd.f32 0.0, %v2725
  %v2727 = vpop.f32.mrb[0].mxu0
  %v2728 = vadd.f32 0.0, %v2727
  %2729 = vmatprep.mubr.f32.mxu0 0.0
  %2730 = vmatmul.mubr.f32.gmra.mrb[0].mxu0 %v2627
  %v2731 = vpop.f32.mrb[0].mxu0
  %v2732 = vadd.f32 0.0, %v2731
  %v2733 = vpop.f32.mrb[0].mxu0
  %v2734 = vadd.f32 0.0, %v2733
  %2735 = vmatprep.mubr.f32.mxu0 0.0
  %2736 = vmatmul.mubr.f32.gmra.mrb[0].mxu0 %v2630
  %v2737 = vpop.f32.mrb[0].mxu0
  %v2738 = vadd.f32 0.0, %v2737
  %v2739 = vpop.f32.mrb[0].mxu0
  %v2740 = vadd.f32 0.0, %v2739
  %2741 = vmatprep.mubr.f32.mxu0 0.0
  %2742 = vmatmul.mubr.f32.gmra.mrb[0].mxu0 %v2633
  %v2743 = vpop.f32.mrb[0].mxu0
  %v2744 = vadd.f32 0.0, %v2743
  %v2745 = vpop.f32.mrb[0].mxu0
  %v2746 = vadd.f32 0.0, %v2745
  %2747 = vdwg.mxu0
  %2748 = vmatprep.subr.mxu0 %v2320
  %2749 = vmatpush1.msra.mxu0 %v2318
  %2750 = vmatprep.subr.mxu0 0.0
  %2751 = vmatpush1.msra.mxu0 0.0
  %2752 = vmatprep.subr.mxu0 0.0
  %2753 = vmatpush1.msra.mxu0 0.0
  %2754 = vmatprep.subr.mxu0 0.0
  %2755 = vmatpush1.msra.mxu0 0.0
  %2756 = vmatprep.subr.mxu0 0.0
  %2757 = vmatpush1.msra.mxu0 0.0
  %2758 = vmatprep.subr.mxu0 0.0
  %2759 = vmatpush1.msra.mxu0 0.0
  %2760 = vmatprep.subr.mxu0 0.0
  %2761 = vmatpush1.msra.mxu0 0.0
  %2762 = vmatprep.subr.mxu0 0.0
  %2763 = vmatpush1.msra.mxu0 0.0
  %2764 = vmatprep.subr.mxu0 0.0
  %2765 = vmatpush1.msra.mxu0 0.0
  %2766 = vmatprep.subr.mxu0 0.0
  %2767 = vmatpush1.msra.mxu0 0.0
  %2768 = vmatprep.subr.mxu0 0.0
  %2769 = vmatpush1.msra.mxu0 0.0
  %2770 = vmatprep.subr.mxu0 0.0
  %2771 = vmatpush1.msra.mxu0 0.0
  %2772 = vmatprep.subr.mxu0 0.0
  %2773 = vmatpush1.msra.mxu0 0.0
  %2774 = vmatprep.subr.mxu0 0.0
  %2775 = vmatpush1.msra.mxu0 0.0
  %2776 = vmatprep.subr.mxu0 0.0
  %2777 = vmatpush1.msra.mxu0 0.0
  %2778 = vmatprep.subr.mxu0 0.0
  %2779 = vmatpush1.msra.mxu0 0.0
  %2780 = vmatprep.subr.mxu0 0.0
  %2781 = vmatpush1.msra.mxu0 0.0
  %2782 = vmatprep.subr.mxu0 0.0
  %2783 = vmatpush1.msra.mxu0 0.0
  %2784 = vmatprep.subr.mxu0 0.0
  %2785 = vmatpush1.msra.mxu0 0.0
  %2786 = vmatprep.subr.mxu0 0.0
  %2787 = vmatpush1.msra.mxu0 0.0
  %2788 = vmatprep.subr.mxu0 0.0
  %2789 = vmatpush1.msra.mxu0 0.0
  %2790 = vmatprep.subr.mxu0 0.0
  %2791 = vmatpush1.msra.mxu0 0.0
  %2792 = vmatprep.subr.mxu0 0.0
  %2793 = vmatpush1.msra.mxu0 0.0
  %2794 = vmatprep.subr.mxu0 0.0
  %2795 = vmatpush1.msra.mxu0 0.0
  %2796 = vmatprep.subr.mxu0 0.0
  %2797 = vmatpush1.msra.mxu0 0.0
  %2798 = vmatprep.subr.mxu0 0.0
  %2799 = vmatpush1.msra.mxu0 0.0
  %2800 = vmatprep.subr.mxu0 0.0
  %2801 = vmatpush1.msra.mxu0 0.0
  %2802 = vmatprep.subr.mxu0 0.0
  %2803 = vmatpush1.msra.mxu0 0.0
  %2804 = vmatprep.subr.mxu0 0.0
  %2805 = vmatpush1.msra.mxu0 0.0
  %2806 = vmatprep.subr.mxu0 0.0
  %2807 = vmatpush1.msra.mxu0 0.0
  %2808 = vmatprep.subr.mxu0 0.0
  %2809 = vmatpush1.msra.mxu0 0.0
  %2810 = vmatprep.subr.mxu0 0.0
  %2811 = vmatpush1.msra.mxu0 0.0
  %2812 = vmatprep.mubr.f32.mxu0 0.0
  %2813 = vmatmul.mubr.f32.gmra.mrb[0].mxu0 %v2612
  %v2814 = vpop.f32.mrb[0].mxu0
  %v2815 = vadd.f32 0.0, %v2814
  %v2816 = vpop.f32.mrb[0].mxu0
  %v2817 = vadd.f32 0.0, %v2816
  %2818 = vmatprep.mubr.f32.mxu0 0.0
  %2819 = vmatmul.mubr.f32.gmra.mrb[0].mxu0 %v2615
  %v2820 = vpop.f32.mrb[0].mxu0
  %v2821 = vadd.f32 0.0, %v2820
  %v2822 = vpop.f32.mrb[0].mxu0
  %v2823 = vadd.f32 0.0, %v2822
  %2824 = vmatprep.mubr.f32.mxu0 0.0
  %2825 = vmatmul.mubr.f32.gmra.mrb[0].mxu0 %v2618
  %v2826 = vpop.f32.mrb[0].mxu0
  %v2827 = vadd.f32 0.0, %v2826
  %v2828 = vpop.f32.mrb[0].mxu0
  %v2829 = vadd.f32 0.0, %v2828
  %2830 = vmatprep.mubr.f32.mxu0 0.0
  %2831 = vmatmul.mubr.f32.gmra.mrb[0].mxu0 %v2621
  %v2832 = vpop.f32.mrb[0].mxu0
  %v2833 = vadd.f32 0.0, %v2832
  %v2834 = vpop.f32.mrb[0].mxu0
  %v2835 = vadd.f32 0.0, %v2834
  %2836 = vmatprep.mubr.f32.mxu0 0.0
  %2837 = vmatmul.mubr.f32.gmra.mrb[0].mxu0 %v2624
  %v2838 = vpop.f32.mrb[0].mxu0
  %v2839 = vadd.f32 0.0, %v2838
  %v2840 = vpop.f32.mrb[0].mxu0
  %v2841 = vadd.f32 0.0, %v2840
  %2842 = vmatprep.mubr.f32.mxu0 0.0
  %2843 = vmatmul.mubr.f32.gmra.mrb[0].mxu0 %v2627
  %v2844 = vpop.f32.mrb[0].mxu0
  %v2845 = vadd.f32 0.0, %v2844
  %v2846 = vpop.f32.mrb[0].mxu0
  %v2847 = vadd.f32 0.0, %v2846
  %2848 = vmatprep.mubr.f32.mxu0 0.0
  %2849 = vmatmul.mubr.f32.gmra.mrb[0].mxu0 %v2630
  %v2850 = vpop.f32.mrb[0].mxu0
  %v2851 = vadd.f32 0.0, %v2850
  %v2852 = vpop.f32.mrb[0].mxu0
  %v2853 = vadd.f32 0.0, %v2852
  %2854 = vmatprep.mubr.f32.mxu0 0.0
  %2855 = vmatmul.mubr.f32.gmra.mrb[0].mxu0 %v2633
  %v2856 = vpop.f32.mrb[0].mxu0
  %v2857 = vadd.f32 0.0, %v2856
  %v2858 = vpop.f32.mrb[0].mxu0
  %v2859 = vadd.f32 0.0, %v2858
  %2860 = vdwg.mxu0
  %2861 = vmatprep.subr.mxu0 %v2271
  %2862 = vmatpush1.msra.mxu0 %v2269
  %2863 = vmatprep.subr.mxu0 0.0
  %2864 = vmatpush1.msra.mxu0 0.0
  %2865 = vmatprep.subr.mxu0 0.0
  %2866 = vmatpush1.msra.mxu0 0.0
  %2867 = vmatprep.subr.mxu0 0.0
  %2868 = vmatpush1.msra.mxu0 0.0
  %2869 = vmatprep.subr.mxu0 0.0
  %2870 = vmatpush1.msra.mxu0 0.0
  %2871 = vmatprep.subr.mxu0 0.0
  %2872 = vmatpush1.msra.mxu0 0.0
  %2873 = vmatprep.subr.mxu0 0.0
  %2874 = vmatpush1.msra.mxu0 0.0
  %2875 = vmatprep.subr.mxu0 0.0
  %2876 = vmatpush1.msra.mxu0 0.0
  %2877 = vmatprep.subr.mxu0 0.0
  %2878 = vmatpush1.msra.mxu0 0.0
  %2879 = vmatprep.subr.mxu0 0.0
  %2880 = vmatpush1.msra.mxu0 0.0
  %2881 = vmatprep.subr.mxu0 0.0
  %2882 = vmatpush1.msra.mxu0 0.0
  %2883 = vmatprep.subr.mxu0 0.0
  %2884 = vmatpush1.msra.mxu0 0.0
  %2885 = vmatprep.subr.mxu0 0.0
  %2886 = vmatpush1.msra.mxu0 0.0
  %2887 = vmatprep.subr.mxu0 0.0
  %2888 = vmatpush1.msra.mxu0 0.0
  %2889 = vmatprep.subr.mxu0 0.0
  %2890 = vmatpush1.msra.mxu0 0.0
  %2891 = vmatprep.subr.mxu0 0.0
  %2892 = vmatpush1.msra.mxu0 0.0
  %2893 = vmatprep.subr.mxu0 0.0
  %2894 = vmatpush1.msra.mxu0 0.0
  %2895 = vmatprep.subr.mxu0 0.0
  %2896 = vmatpush1.msra.mxu0 0.0
  %2897 = vmatprep.subr.mxu0 0.0
  %2898 = vmatpush1.msra.mxu0 0.0
  %2899 = vmatprep.subr.mxu0 0.0
  %2900 = vmatpush1.msra.mxu0 0.0
  %2901 = vmatprep.subr.mxu0 0.0
  %2902 = vmatpush1.msra.mxu0 0.0
  %2903 = vmatprep.subr.mxu0 0.0
  %2904 = vmatpush1.msra.mxu0 0.0
  %2905 = vmatprep.subr.mxu0 0.0
  %2906 = vmatpush1.msra.mxu0 0.0
  %2907 = vmatprep.subr.mxu0 0.0
  %2908 = vmatpush1.msra.mxu0 0.0
  %2909 = vmatprep.subr.mxu0 0.0
  %2910 = vmatpush1.msra.mxu0 0.0
  %2911 = vmatprep.subr.mxu0 0.0
  %2912 = vmatpush1.msra.mxu0 0.0
  %2913 = vmatprep.subr.mxu0 0.0
  %2914 = vmatpush1.msra.mxu0 0.0
  %2915 = vmatprep.subr.mxu0 0.0
  %2916 = vmatpush1.msra.mxu0 0.0
  %2917 = vmatprep.subr.mxu0 0.0
  %2918 = vmatpush1.msra.mxu0 0.0
  %2919 = vmatprep.subr.mxu0 0.0
  %2920 = vmatpush1.msra.mxu0 0.0
  %2921 = vmatprep.subr.mxu0 0.0
  %2922 = vmatpush1.msra.mxu0 0.0
  %2923 = vmatprep.subr.mxu0 0.0
  %2924 = vmatpush1.msra.mxu0 0.0
  %2925 = vmatprep.mubr.f32.mxu0 0.0
  %2926 = vmatmul.mubr.f32.gmra.mrb[0].mxu0 %v2612
  %v2927 = vpop.f32.mrb[0].mxu0
  %v2928 = vadd.f32 0.0, %v2927
  %v2929 = vpop.f32.mrb[0].mxu0
  %v2930 = vadd.f32 0.0, %v2929
  %2931 = vmatprep.mubr.f32.mxu0 0.0
  %2932 = vmatmul.mubr.f32.gmra.mrb[0].mxu0 %v2615
  %v2933 = vpop.f32.mrb[0].mxu0
  %v2934 = vadd.f32 0.0, %v2933
  %v2935 = vpop.f32.mrb[0].mxu0
  %v2936 = vadd.f32 0.0, %v2935
  %2937 = vmatprep.mubr.f32.mxu0 0.0
  %2938 = vmatmul.mubr.f32.gmra.mrb[0].mxu0 %v2618
  %v2939 = vpop.f32.mrb[0].mxu0
  %v2940 = vadd.f32 0.0, %v2939
  %v2941 = vpop.f32.mrb[0].mxu0
  %v2942 = vadd.f32 0.0, %v2941
  %2943 = vmatprep.mubr.f32.mxu0 0.0
  %2944 = vmatmul.mubr.f32.gmra.mrb[0].mxu0 %v2621
  %v2945 = vpop.f32.mrb[0].mxu0
  %v2946 = vadd.f32 0.0, %v2945
  %v2947 = vpop.f32.mrb[0].mxu0
  %v2948 = vadd.f32 0.0, %v2947
  %2949 = vmatprep.mubr.f32.mxu0 0.0
  %2950 = vmatmul.mubr.f32.gmra.mrb[0].mxu0 %v2624
  %v2951 = vpop.f32.mrb[0].mxu0
  %v2952 = vadd.f32 0.0, %v2951
  %v2953 = vpop.f32.mrb[0].mxu0
  %v2954 = vadd.f32 0.0, %v2953
  %2955 = vmatprep.mubr.f32.mxu0 0.0
  %2956 = vmatmul.mubr.f32.gmra.mrb[0].mxu0 %v2627
  %v2957 = vpop.f32.mrb[0].mxu0
  %v2958 = vadd.f32 0.0, %v2957
  %v2959 = vpop.f32.mrb[0].mxu0
  %v2960 = vadd.f32 0.0, %v2959
  %2961 = vmatprep.mubr.f32.mxu0 0.0
  %2962 = vmatmul.mubr.f32.gmra.mrb[0].mxu0 %v2630
  %v2963 = vpop.f32.mrb[0].mxu0
  %v2964 = vadd.f32 0.0, %v2963
  %v2965 = vpop.f32.mrb[0].mxu0
  %v2966 = vadd.f32 0.0, %v2965
  %2967 = vmatprep.mubr.f32.mxu0 0.0
  %2968 = vmatmul.mubr.f32.gmra.mrb[0].mxu0 %v2633
  %v2969 = vpop.f32.mrb[0].mxu0
  %v2970 = vadd.f32 0.0, %v2969
  %v2971 = vpop.f32.mrb[0].mxu0
  %v2972 = vadd.f32 0.0, %v2971
  %2973 = vdwg.mxu0
  %2974 = vmatprep.subr.mxu0 %v2324
  %2975 = vmatpush1.msra.mxu0 %v2322
  %2976 = vmatprep.subr.mxu0 0.0
  %2977 = vmatpush1.msra.mxu0 0.0
  %2978 = vmatprep.subr.mxu0 0.0
  %2979 = vmatpush1.msra.mxu0 0.0
  %2980 = vmatprep.subr.mxu0 0.0
  %2981 = vmatpush1.msra.mxu0 0.0
  %2982 = vmatprep.subr.mxu0 0.0
  %2983 = vmatpush1.msra.mxu0 0.0
  %2984 = vmatprep.subr.mxu0 0.0
  %2985 = vmatpush1.msra.mxu0 0.0
  %2986 = vmatprep.subr.mxu0 0.0
  %2987 = vmatpush1.msra.mxu0 0.0
  %2988 = vmatprep.subr.mxu0 0.0
  %2989 = vmatpush1.msra.mxu0 0.0
  %2990 = vmatprep.subr.mxu0 0.0
  %2991 = vmatpush1.msra.mxu0 0.0
  %2992 = vmatprep.subr.mxu0 0.0
  %2993 = vmatpush1.msra.mxu0 0.0
  %2994 = vmatprep.subr.mxu0 0.0
  %2995 = vmatpush1.msra.mxu0 0.0
  %2996 = vmatprep.subr.mxu0 0.0
  %2997 = vmatpush1.msra.mxu0 0.0
  %2998 = vmatprep.subr.mxu0 0.0
  %2999 = vmatpush1.msra.mxu0 0.0
  %3000 = vmatprep.subr.mxu0 0.0
  %3001 = vmatpush1.msra.mxu0 0.0
  %3002 = vmatprep.subr.mxu0 0.0
  %3003 = vmatpush1.msra.mxu0 0.0
  %3004 = vmatprep.subr.mxu0 0.0
  %3005 = vmatpush1.msra.mxu0 0.0
  %3006 = vmatprep.subr.mxu0 0.0
  %3007 = vmatpush1.msra.mxu0 0.0
  %3008 = vmatprep.subr.mxu0 0.0
  %3009 = vmatpush1.msra.mxu0 0.0
  %3010 = vmatprep.subr.mxu0 0.0
  %3011 = vmatpush1.msra.mxu0 0.0
  %3012 = vmatprep.subr.mxu0 0.0
  %3013 = vmatpush1.msra.mxu0 0.0
  %3014 = vmatprep.subr.mxu0 0.0
  %3015 = vmatpush1.msra.mxu0 0.0
  %3016 = vmatprep.subr.mxu0 0.0
  %3017 = vmatpush1.msra.mxu0 0.0
  %3018 = vmatprep.subr.mxu0 0.0
  %3019 = vmatpush1.msra.mxu0 0.0
  %3020 = vmatprep.subr.mxu0 0.0
  %3021 = vmatpush1.msra.mxu0 0.0
  %3022 = vmatprep.subr.mxu0 0.0
  %3023 = vmatpush1.msra.mxu0 0.0
  %3024 = vmatprep.subr.mxu0 0.0
  %3025 = vmatpush1.msra.mxu0 0.0
  %3026 = vmatprep.subr.mxu0 0.0
  %3027 = vmatpush1.msra.mxu0 0.0
  %3028 = vmatprep.subr.mxu0 0.0
  %3029 = vmatpush1.msra.mxu0 0.0
  %3030 = vmatprep.subr.mxu0 0.0
  %3031 = vmatpush1.msra.mxu0 0.0
  %3032 = vmatprep.subr.mxu0 0.0
  %3033 = vmatpush1.msra.mxu0 0.0
  %3034 = vmatprep.subr.mxu0 0.0
  %3035 = vmatpush1.msra.mxu0 0.0
  %3036 = vmatprep.subr.mxu0 0.0
  %3037 = vmatpush1.msra.mxu0 0.0
  %3038 = vmatprep.mubr.f32.mxu0 0.0
  %3039 = vmatmul.mubr.f32.gmra.mrb[0].mxu0 %v2612
  %v3040 = vpop.f32.mrb[0].mxu0
  %v3041 = vadd.f32 0.0, %v3040
  %v3042 = vpop.f32.mrb[0].mxu0
  %v3043 = vadd.f32 0.0, %v3042
  %3044 = vmatprep.mubr.f32.mxu0 0.0
  %3045 = vmatmul.mubr.f32.gmra.mrb[0].mxu0 %v2615
  %v3046 = vpop.f32.mrb[0].mxu0
  %v3047 = vadd.f32 0.0, %v3046
  %v3048 = vpop.f32.mrb[0].mxu0
  %v3049 = vadd.f32 0.0, %v3048
  %3050 = vmatprep.mubr.f32.mxu0 0.0
  %3051 = vmatmul.mubr.f32.gmra.mrb[0].mxu0 %v2618
  %v3052 = vpop.f32.mrb[0].mxu0
  %v3053 = vadd.f32 0.0, %v3052
  %v3054 = vpop.f32.mrb[0].mxu0
  %v3055 = vadd.f32 0.0, %v3054
  %3056 = vmatprep.mubr.f32.mxu0 0.0
  %3057 = vmatmul.mubr.f32.gmra.mrb[0].mxu0 %v2621
  %v3058 = vpop.f32.mrb[0].mxu0
  %v3059 = vadd.f32 0.0, %v3058
  %v3060 = vpop.f32.mrb[0].mxu0
  %v3061 = vadd.f32 0.0, %v3060
  %3062 = vmatprep.mubr.f32.mxu0 0.0
  %3063 = vmatmul.mubr.f32.gmra.mrb[0].mxu0 %v2624
  %v3064 = vpop.f32.mrb[0].mxu0
  %v3065 = vadd.f32 0.0, %v3064
  %v3066 = vpop.f32.mrb[0].mxu0
  %v3067 = vadd.f32 0.0, %v3066
  %3068 = vmatprep.mubr.f32.mxu0 0.0
  %3069 = vmatmul.mubr.f32.gmra.mrb[0].mxu0 %v2627
  %v3070 = vpop.f32.mrb[0].mxu0
  %v3071 = vadd.f32 0.0, %v3070
  %v3072 = vpop.f32.mrb[0].mxu0
  %v3073 = vadd.f32 0.0, %v3072
  %3074 = vmatprep.mubr.f32.mxu0 0.0
  %3075 = vmatmul.mubr.f32.gmra.mrb[0].mxu0 %v2630
  %v3076 = vpop.f32.mrb[0].mxu0
  %v3077 = vadd.f32 0.0, %v3076
  %v3078 = vpop.f32.mrb[0].mxu0
  %v3079 = vadd.f32 0.0, %v3078
  %3080 = vmatprep.mubr.f32.mxu0 0.0
  %3081 = vmatmul.mubr.f32.gmra.mrb[0].mxu0 %v2633
  %v3082 = vpop.f32.mrb[0].mxu0
  %v3083 = vadd.f32 0.0, %v3082
  %v3084 = vpop.f32.mrb[0].mxu0
  %v3085 = vadd.f32 0.0, %v3084
  %3086 = vdwg.mxu0
  %3087 = vmatprep.subr.mxu0 %v2277
  %3088 = vmatpush1.msra.mxu0 %v2275
  %3089 = vmatprep.subr.mxu0 0.0
  %3090 = vmatpush1.msra.mxu0 0.0
  %3091 = vmatprep.subr.mxu0 0.0
  %3092 = vmatpush1.msra.mxu0 0.0
  %3093 = vmatprep.subr.mxu0 0.0
  %3094 = vmatpush1.msra.mxu0 0.0
  %3095 = vmatprep.subr.mxu0 0.0
  %3096 = vmatpush1.msra.mxu0 0.0
  %3097 = vmatprep.subr.mxu0 0.0
  %3098 = vmatpush1.msra.mxu0 0.0
  %3099 = vmatprep.subr.mxu0 0.0
  %3100 = vmatpush1.msra.mxu0 0.0
  %3101 = vmatprep.subr.mxu0 0.0
  %3102 = vmatpush1.msra.mxu0 0.0
  %3103 = vmatprep.subr.mxu0 0.0
  %3104 = vmatpush1.msra.mxu0 0.0
  %3105 = vmatprep.subr.mxu0 0.0
  %3106 = vmatpush1.msra.mxu0 0.0
  %3107 = vmatprep.subr.mxu0 0.0
  %3108 = vmatpush1.msra.mxu0 0.0
  %3109 = vmatprep.subr.mxu0 0.0
  %3110 = vmatpush1.msra.mxu0 0.0
  %3111 = vmatprep.subr.mxu0 0.0
  %3112 = vmatpush1.msra.mxu0 0.0
  %3113 = vmatprep.subr.mxu0 0.0
  %3114 = vmatpush1.msra.mxu0 0.0
  %3115 = vmatprep.subr.mxu0 0.0
  %3116 = vmatpush1.msra.mxu0 0.0
  %3117 = vmatprep.subr.mxu0 0.0
  %3118 = vmatpush1.msra.mxu0 0.0
  %3119 = vmatprep.subr.mxu0 0.0
  %3120 = vmatpush1.msra.mxu0 0.0
  %3121 = vmatprep.subr.mxu0 0.0
  %3122 = vmatpush1.msra.mxu0 0.0
  %3123 = vmatprep.subr.mxu0 0.0
  %3124 = vmatpush1.msra.mxu0 0.0
  %3125 = vmatprep.subr.mxu0 0.0
  %3126 = vmatpush1.msra.mxu0 0.0
  %3127 = vmatprep.subr.mxu0 0.0
  %3128 = vmatpush1.msra.mxu0 0.0
  %3129 = vmatprep.subr.mxu0 0.0
  %3130 = vmatpush1.msra.mxu0 0.0
  %3131 = vmatprep.subr.mxu0 0.0
  %3132 = vmatpush1.msra.mxu0 0.0
  %3133 = vmatprep.subr.mxu0 0.0
  %3134 = vmatpush1.msra.mxu0 0.0
  %3135 = vmatprep.subr.mxu0 0.0
  %3136 = vmatpush1.msra.mxu0 0.0
  %3137 = vmatprep.subr.mxu0 0.0
  %3138 = vmatpush1.msra.mxu0 0.0
  %3139 = vmatprep.subr.mxu0 0.0
  %3140 = vmatpush1.msra.mxu0 0.0
  %3141 = vmatprep.subr.mxu0 0.0
  %3142 = vmatpush1.msra.mxu0 0.0
  %3143 = vmatprep.subr.mxu0 0.0
  %3144 = vmatpush1.msra.mxu0 0.0
  %3145 = vmatprep.subr.mxu0 0.0
  %3146 = vmatpush1.msra.mxu0 0.0
  %3147 = vmatprep.subr.mxu0 0.0
  %3148 = vmatpush1.msra.mxu0 0.0
  %3149 = vmatprep.subr.mxu0 0.0
  %3150 = vmatpush1.msra.mxu0 0.0
  %3151 = vmatprep.mubr.f32.mxu0 0.0
  %3152 = vmatmul.mubr.f32.gmra.mrb[0].mxu0 %v2612
  %v3153 = vpop.f32.mrb[0].mxu0
  %v3154 = vadd.f32 0.0, %v3153
  %v3155 = vpop.f32.mrb[0].mxu0
  %v3156 = vadd.f32 0.0, %v3155
  %3157 = vmatprep.mubr.f32.mxu0 0.0
  %3158 = vmatmul.mubr.f32.gmra.mrb[0].mxu0 %v2615
  %v3159 = vpop.f32.mrb[0].mxu0
  %v3160 = vadd.f32 0.0, %v3159
  %v3161 = vpop.f32.mrb[0].mxu0
  %v3162 = vadd.f32 0.0, %v3161
  %3163 = vmatprep.mubr.f32.mxu0 0.0
  %3164 = vmatmul.mubr.f32.gmra.mrb[0].mxu0 %v2618
  %v3165 = vpop.f32.mrb[0].mxu0
  %v3166 = vadd.f32 0.0, %v3165
  %v3167 = vpop.f32.mrb[0].mxu0
  %v3168 = vadd.f32 0.0, %v3167
  %3169 = vmatprep.mubr.f32.mxu0 0.0
  %3170 = vmatmul.mubr.f32.gmra.mrb[0].mxu0 %v2621
  %v3171 = vpop.f32.mrb[0].mxu0
  %v3172 = vadd.f32 0.0, %v3171
  %v3173 = vpop.f32.mrb[0].mxu0
  %v3174 = vadd.f32 0.0, %v3173
  %3175 = vmatprep.mubr.f32.mxu0 0.0
  %3176 = vmatmul.mubr.f32.gmra.mrb[0].mxu0 %v2624
  %v3177 = vpop.f32.mrb[0].mxu0
  %v3178 = vadd.f32 0.0, %v3177
  %v3179 = vpop.f32.mrb[0].mxu0
  %v3180 = vadd.f32 0.0, %v3179
  %3181 = vmatprep.mubr.f32.mxu0 0.0
  %3182 = vmatmul.mubr.f32.gmra.mrb[0].mxu0 %v2627
  %v3183 = vpop.f32.mrb[0].mxu0
  %v3184 = vadd.f32 0.0, %v3183
  %v3185 = vpop.f32.mrb[0].mxu0
  %v3186 = vadd.f32 0.0, %v3185
  %3187 = vmatprep.mubr.f32.mxu0 0.0
  %3188 = vmatmul.mubr.f32.gmra.mrb[0].mxu0 %v2630
  %v3189 = vpop.f32.mrb[0].mxu0
  %v3190 = vadd.f32 0.0, %v3189
  %v3191 = vpop.f32.mrb[0].mxu0
  %v3192 = vadd.f32 0.0, %v3191
  %3193 = vmatprep.mubr.f32.mxu0 0.0
  %3194 = vmatmul.mubr.f32.gmra.mrb[0].mxu0 %v2633
  %v3195 = vpop.f32.mrb[0].mxu0
  %v3196 = vadd.f32 0.0, %v3195
  %v3197 = vpop.f32.mrb[0].mxu0
  %v3198 = vadd.f32 0.0, %v3197
  %3199 = vdwg.mxu0
  %3200 = vmatprep.subr.mxu0 %v2330
  %3201 = vmatpush1.msra.mxu0 %v2328
  %3202 = vmatprep.subr.mxu0 0.0
  %3203 = vmatpush1.msra.mxu0 0.0
  %3204 = vmatprep.subr.mxu0 0.0
  %3205 = vmatpush1.msra.mxu0 0.0
  %3206 = vmatprep.subr.mxu0 0.0
  %3207 = vmatpush1.msra.mxu0 0.0
  %3208 = vmatprep.subr.mxu0 0.0
  %3209 = vmatpush1.msra.mxu0 0.0
  %3210 = vmatprep.subr.mxu0 0.0
  %3211 = vmatpush1.msra.mxu0 0.0
  %3212 = vmatprep.subr.mxu0 0.0
  %3213 = vmatpush1.msra.mxu0 0.0
  %3214 = vmatprep.subr.mxu0 0.0
  %3215 = vmatpush1.msra.mxu0 0.0
  %3216 = vmatprep.subr.mxu0 0.0
  %3217 = vmatpush1.msra.mxu0 0.0
  %3218 = vmatprep.subr.mxu0 0.0
  %3219 = vmatpush1.msra.mxu0 0.0
  %3220 = vmatprep.subr.mxu0 0.0
  %3221 = vmatpush1.msra.mxu0 0.0
  %3222 = vmatprep.subr.mxu0 0.0
  %3223 = vmatpush1.msra.mxu0 0.0
  %3224 = vmatprep.subr.mxu0 0.0
  %3225 = vmatpush1.msra.mxu0 0.0
  %3226 = vmatprep.subr.mxu0 0.0
  %3227 = vmatpush1.msra.mxu0 0.0
  %3228 = vmatprep.subr.mxu0 0.0
  %3229 = vmatpush1.msra.mxu0 0.0
  %3230 = vmatprep.subr.mxu0 0.0
  %3231 = vmatpush1.msra.mxu0 0.0
  %3232 = vmatprep.subr.mxu0 0.0
  %3233 = vmatpush1.msra.mxu0 0.0
  %3234 = vmatprep.subr.mxu0 0.0
  %3235 = vmatpush1.msra.mxu0 0.0
  %3236 = vmatprep.subr.mxu0 0.0
  %3237 = vmatpush1.msra.mxu0 0.0
  %3238 = vmatprep.subr.mxu0 0.0
  %3239 = vmatpush1.msra.mxu0 0.0
  %3240 = vmatprep.subr.mxu0 0.0
  %3241 = vmatpush1.msra.mxu0 0.0
  %3242 = vmatprep.subr.mxu0 0.0
  %3243 = vmatpush1.msra.mxu0 0.0
  %3244 = vmatprep.subr.mxu0 0.0
  %3245 = vmatpush1.msra.mxu0 0.0
  %3246 = vmatprep.subr.mxu0 0.0
  %3247 = vmatpush1.msra.mxu0 0.0
  %3248 = vmatprep.subr.mxu0 0.0
  %3249 = vmatpush1.msra.mxu0 0.0
  %3250 = vmatprep.subr.mxu0 0.0
  %3251 = vmatpush1.msra.mxu0 0.0
  %3252 = vmatprep.subr.mxu0 0.0
  %3253 = vmatpush1.msra.mxu0 0.0
  %3254 = vmatprep.subr.mxu0 0.0
  %3255 = vmatpush1.msra.mxu0 0.0
  %3256 = vmatprep.subr.mxu0 0.0
  %3257 = vmatpush1.msra.mxu0 0.0
  %3258 = vmatprep.subr.mxu0 0.0
  %3259 = vmatpush1.msra.mxu0 0.0
  %3260 = vmatprep.subr.mxu0 0.0
  %3261 = vmatpush1.msra.mxu0 0.0
  %3262 = vmatprep.subr.mxu0 0.0
  %3263 = vmatpush1.msra.mxu0 0.0
  %3264 = vmatprep.mubr.f32.mxu0 0.0
  %3265 = vmatmul.mubr.f32.gmra.mrb[0].mxu0 %v2612
  %v3266 = vpop.f32.mrb[0].mxu0
  %v3267 = vadd.f32 0.0, %v3266
  %v3268 = vpop.f32.mrb[0].mxu0
  %v3269 = vadd.f32 0.0, %v3268
  %3270 = vmatprep.mubr.f32.mxu0 0.0
  %3271 = vmatmul.mubr.f32.gmra.mrb[0].mxu0 %v2615
  %v3272 = vpop.f32.mrb[0].mxu0
  %v3273 = vadd.f32 0.0, %v3272
  %v3274 = vpop.f32.mrb[0].mxu0
  %v3275 = vadd.f32 0.0, %v3274
  %3276 = vmatprep.mubr.f32.mxu0 0.0
  %3277 = vmatmul.mubr.f32.gmra.mrb[0].mxu0 %v2618
  %v3278 = vpop.f32.mrb[0].mxu0
  %v3279 = vadd.f32 0.0, %v3278
  %v3280 = vpop.f32.mrb[0].mxu0
  %v3281 = vadd.f32 0.0, %v3280
  %3282 = vmatprep.mubr.f32.mxu0 0.0
  %3283 = vmatmul.mubr.f32.gmra.mrb[0].mxu0 %v2621
  %v3284 = vpop.f32.mrb[0].mxu0
  %v3285 = vadd.f32 0.0, %v3284
  %v3286 = vpop.f32.mrb[0].mxu0
  %v3287 = vadd.f32 0.0, %v3286
  %3288 = vmatprep.mubr.f32.mxu0 0.0
  %3289 = vmatmul.mubr.f32.gmra.mrb[0].mxu0 %v2624
  %v3290 = vpop.f32.mrb[0].mxu0
  %v3291 = vadd.f32 0.0, %v3290
  %v3292 = vpop.f32.mrb[0].mxu0
  %v3293 = vadd.f32 0.0, %v3292
  %3294 = vmatprep.mubr.f32.mxu0 0.0
  %3295 = vmatmul.mubr.f32.gmra.mrb[0].mxu0 %v2627
  %v3296 = vpop.f32.mrb[0].mxu0
  %v3297 = vadd.f32 0.0, %v3296
  %v3298 = vpop.f32.mrb[0].mxu0
  %v3299 = vadd.f32 0.0, %v3298
  %3300 = vmatprep.mubr.f32.mxu0 0.0
  %3301 = vmatmul.mubr.f32.gmra.mrb[0].mxu0 %v2630
  %v3302 = vpop.f32.mrb[0].mxu0
  %v3303 = vadd.f32 0.0, %v3302
  %v3304 = vpop.f32.mrb[0].mxu0
  %v3305 = vadd.f32 0.0, %v3304
  %3306 = vmatprep.mubr.f32.mxu0 0.0
  %3307 = vmatmul.mubr.f32.gmra.mrb[0].mxu0 %v2633
  %v3308 = vpop.f32.mrb[0].mxu0
  %v3309 = vadd.f32 0.0, %v3308
  %v3310 = vpop.f32.mrb[0].mxu0
  %v3311 = vadd.f32 0.0, %v3310
  %3312 = vdwg.mxu0
  %3313 = vmatprep.subr.mxu0 %v2281
  %3314 = vmatpush1.msra.mxu0 %v2279
  %3315 = vmatprep.subr.mxu0 0.0
  %3316 = vmatpush1.msra.mxu0 0.0
  %3317 = vmatprep.subr.mxu0 0.0
  %3318 = vmatpush1.msra.mxu0 0.0
  %3319 = vmatprep.subr.mxu0 0.0
  %3320 = vmatpush1.msra.mxu0 0.0
  %3321 = vmatprep.subr.mxu0 0.0
  %3322 = vmatpush1.msra.mxu0 0.0
  %3323 = vmatprep.subr.mxu0 0.0
  %3324 = vmatpush1.msra.mxu0 0.0
  %3325 = vmatprep.subr.mxu0 0.0
  %3326 = vmatpush1.msra.mxu0 0.0
  %3327 = vmatprep.subr.mxu0 0.0
  %3328 = vmatpush1.msra.mxu0 0.0
  %3329 = vmatprep.subr.mxu0 0.0
  %3330 = vmatpush1.msra.mxu0 0.0
  %3331 = vmatprep.subr.mxu0 0.0
  %3332 = vmatpush1.msra.mxu0 0.0
  %3333 = vmatprep.subr.mxu0 0.0
  %3334 = vmatpush1.msra.mxu0 0.0
  %3335 = vmatprep.subr.mxu0 0.0
  %3336 = vmatpush1.msra.mxu0 0.0
  %3337 = vmatprep.subr.mxu0 0.0
  %3338 = vmatpush1.msra.mxu0 0.0
  %3339 = vmatprep.subr.mxu0 0.0
  %3340 = vmatpush1.msra.mxu0 0.0
  %3341 = vmatprep.subr.mxu0 0.0
  %3342 = vmatpush1.msra.mxu0 0.0
  %3343 = vmatprep.subr.mxu0 0.0
  %3344 = vmatpush1.msra.mxu0 0.0
  %3345 = vmatprep.subr.mxu0 0.0
  %3346 = vmatpush1.msra.mxu0 0.0
  %3347 = vmatprep.subr.mxu0 0.0
  %3348 = vmatpush1.msra.mxu0 0.0
  %3349 = vmatprep.subr.mxu0 0.0
  %3350 = vmatpush1.msra.mxu0 0.0
  %3351 = vmatprep.subr.mxu0 0.0
  %3352 = vmatpush1.msra.mxu0 0.0
  %3353 = vmatprep.subr.mxu0 0.0
  %3354 = vmatpush1.msra.mxu0 0.0
  %3355 = vmatprep.subr.mxu0 0.0
  %3356 = vmatpush1.msra.mxu0 0.0
  %3357 = vmatprep.subr.mxu0 0.0
  %3358 = vmatpush1.msra.mxu0 0.0
  %3359 = vmatprep.subr.mxu0 0.0
  %3360 = vmatpush1.msra.mxu0 0.0
  %3361 = vmatprep.subr.mxu0 0.0
  %3362 = vmatpush1.msra.mxu0 0.0
  %3363 = vmatprep.subr.mxu0 0.0
  %3364 = vmatpush1.msra.mxu0 0.0
  %3365 = vmatprep.subr.mxu0 0.0
  %3366 = vmatpush1.msra.mxu0 0.0
  %3367 = vmatprep.subr.mxu0 0.0
  %3368 = vmatpush1.msra.mxu0 0.0
  %3369 = vmatprep.subr.mxu0 0.0
  %3370 = vmatpush1.msra.mxu0 0.0
  %3371 = vmatprep.subr.mxu0 0.0
  %3372 = vmatpush1.msra.mxu0 0.0
  %3373 = vmatprep.subr.mxu0 0.0
  %3374 = vmatpush1.msra.mxu0 0.0
  %3375 = vmatprep.subr.mxu0 0.0
  %3376 = vmatpush1.msra.mxu0 0.0
  %3377 = vmatprep.mubr.f32.mxu0 0.0
  %3378 = vmatmul.mubr.f32.gmra.mrb[0].mxu0 %v2612
  %v3379 = vpop.f32.mrb[0].mxu0
  %v3380 = vadd.f32 0.0, %v3379
  %v3381 = vpop.f32.mrb[0].mxu0
  %v3382 = vadd.f32 0.0, %v3381
  %3383 = vmatprep.mubr.f32.mxu0 0.0
  %3384 = vmatmul.mubr.f32.gmra.mrb[0].mxu0 %v2615
  %v3385 = vpop.f32.mrb[0].mxu0
  %v3386 = vadd.f32 0.0, %v3385
  %v3387 = vpop.f32.mrb[0].mxu0
  %v3388 = vadd.f32 0.0, %v3387
  %3389 = vmatprep.mubr.f32.mxu0 0.0
  %3390 = vmatmul.mubr.f32.gmra.mrb[0].mxu0 %v2618
  %v3391 = vpop.f32.mrb[0].mxu0
  %v3392 = vadd.f32 0.0, %v3391
  %v3393 = vpop.f32.mrb[0].mxu0
  %v3394 = vadd.f32 0.0, %v3393
  %3395 = vmatprep.mubr.f32.mxu0 0.0
  %3396 = vmatmul.mubr.f32.gmra.mrb[0].mxu0 %v2621
  %v3397 = vpop.f32.mrb[0].mxu0
  %v3398 = vadd.f32 0.0, %v3397
  %v3399 = vpop.f32.mrb[0].mxu0
  %v3400 = vadd.f32 0.0, %v3399
  %3401 = vmatprep.mubr.f32.mxu0 0.0
  %3402 = vmatmul.mubr.f32.gmra.mrb[0].mxu0 %v2624
  %v3403 = vpop.f32.mrb[0].mxu0
  %v3404 = vadd.f32 0.0, %v3403
  %v3405 = vpop.f32.mrb[0].mxu0
  %v3406 = vadd.f32 0.0, %v3405
  %3407 = vmatprep.mubr.f32.mxu0 0.0
  %3408 = vmatmul.mubr.f32.gmra.mrb[0].mxu0 %v2627
  %v3409 = vpop.f32.mrb[0].mxu0
  %v3410 = vadd.f32 0.0, %v3409
  %v3411 = vpop.f32.mrb[0].mxu0
  %v3412 = vadd.f32 0.0, %v3411
  %3413 = vmatprep.mubr.f32.mxu0 0.0
  %3414 = vmatmul.mubr.f32.gmra.mrb[0].mxu0 %v2630
  %v3415 = vpop.f32.mrb[0].mxu0
  %v3416 = vadd.f32 0.0, %v3415
  %v3417 = vpop.f32.mrb[0].mxu0
  %v3418 = vadd.f32 0.0, %v3417
  %3419 = vmatprep.mubr.f32.mxu0 0.0
  %3420 = vmatmul.mubr.f32.gmra.mrb[0].mxu0 %v2633
  %v3421 = vpop.f32.mrb[0].mxu0
  %v3422 = vadd.f32 0.0, %v3421
  %v3423 = vpop.f32.mrb[0].mxu0
  %v3424 = vadd.f32 0.0, %v3423
  %3425 = vdwg.mxu0
  %3426 = vmatprep.subr.mxu0 %v2334
  %3427 = vmatpush1.msra.mxu0 %v2332
  %3428 = vmatprep.subr.mxu0 0.0
  %3429 = vmatpush1.msra.mxu0 0.0
  %3430 = vmatprep.subr.mxu0 0.0
  %3431 = vmatpush1.msra.mxu0 0.0
  %3432 = vmatprep.subr.mxu0 0.0
  %3433 = vmatpush1.msra.mxu0 0.0
  %3434 = vmatprep.subr.mxu0 0.0
  %3435 = vmatpush1.msra.mxu0 0.0
  %3436 = vmatprep.subr.mxu0 0.0
  %3437 = vmatpush1.msra.mxu0 0.0
  %3438 = vmatprep.subr.mxu0 0.0
  %3439 = vmatpush1.msra.mxu0 0.0
  %3440 = vmatprep.subr.mxu0 0.0
  %3441 = vmatpush1.msra.mxu0 0.0
  %3442 = vmatprep.subr.mxu0 0.0
  %3443 = vmatpush1.msra.mxu0 0.0
  %3444 = vmatprep.subr.mxu0 0.0
  %3445 = vmatpush1.msra.mxu0 0.0
  %3446 = vmatprep.subr.mxu0 0.0
  %3447 = vmatpush1.msra.mxu0 0.0
  %3448 = vmatprep.subr.mxu0 0.0
  %3449 = vmatpush1.msra.mxu0 0.0
  %3450 = vmatprep.subr.mxu0 0.0
  %3451 = vmatpush1.msra.mxu0 0.0
  %3452 = vmatprep.subr.mxu0 0.0
  %3453 = vmatpush1.msra.mxu0 0.0
  %3454 = vmatprep.subr.mxu0 0.0
  %3455 = vmatpush1.msra.mxu0 0.0
  %3456 = vmatprep.subr.mxu0 0.0
  %3457 = vmatpush1.msra.mxu0 0.0
  %3458 = vmatprep.subr.mxu0 0.0
  %3459 = vmatpush1.msra.mxu0 0.0
  %3460 = vmatprep.subr.mxu0 0.0
  %3461 = vmatpush1.msra.mxu0 0.0
  %3462 = vmatprep.subr.mxu0 0.0
  %3463 = vmatpush1.msra.mxu0 0.0
  %3464 = vmatprep.subr.mxu0 0.0
  %3465 = vmatpush1.msra.mxu0 0.0
  %3466 = vmatprep.subr.mxu0 0.0
  %3467 = vmatpush1.msra.mxu0 0.0
  %3468 = vmatprep.subr.mxu0 0.0
  %3469 = vmatpush1.msra.mxu0 0.0
  %3470 = vmatprep.subr.mxu0 0.0
  %3471 = vmatpush1.msra.mxu0 0.0
  %3472 = vmatprep.subr.mxu0 0.0
  %3473 = vmatpush1.msra.mxu0 0.0
  %3474 = vmatprep.subr.mxu0 0.0
  %3475 = vmatpush1.msra.mxu0 0.0
  %3476 = vmatprep.subr.mxu0 0.0
  %3477 = vmatpush1.msra.mxu0 0.0
  %3478 = vmatprep.subr.mxu0 0.0
  %3479 = vmatpush1.msra.mxu0 0.0
  %3480 = vmatprep.subr.mxu0 0.0
  %3481 = vmatpush1.msra.mxu0 0.0
  %3482 = vmatprep.subr.mxu0 0.0
  %3483 = vmatpush1.msra.mxu0 0.0
  %3484 = vmatprep.subr.mxu0 0.0
  %3485 = vmatpush1.msra.mxu0 0.0
  %3486 = vmatprep.subr.mxu0 0.0
  %3487 = vmatpush1.msra.mxu0 0.0
  %3488 = vmatprep.subr.mxu0 0.0
  %3489 = vmatpush1.msra.mxu0 0.0
  %3490 = vmatprep.mubr.f32.mxu0 0.0
  %3491 = vmatmul.mubr.f32.gmra.mrb[0].mxu0 %v2612
  %v3492 = vpop.f32.mrb[0].mxu0
  %v3493 = vadd.f32 0.0, %v3492
  %v3494 = vpop.f32.mrb[0].mxu0
  %v3495 = vadd.f32 0.0, %v3494
  %3496 = vmatprep.mubr.f32.mxu0 0.0
  %3497 = vmatmul.mubr.f32.gmra.mrb[0].mxu0 %v2615
  %v3498 = vpop.f32.mrb[0].mxu0
  %v3499 = vadd.f32 0.0, %v3498
  %v3500 = vpop.f32.mrb[0].mxu0
  %v3501 = vadd.f32 0.0, %v3500
  %3502 = vmatprep.mubr.f32.mxu0 0.0
  %3503 = vmatmul.mubr.f32.gmra.mrb[0].mxu0 %v2618
  %v3504 = vpop.f32.mrb[0].mxu0
  %v3505 = vadd.f32 0.0, %v3504
  %v3506 = vpop.f32.mrb[0].mxu0
  %v3507 = vadd.f32 0.0, %v3506
  %3508 = vmatprep.mubr.f32.mxu0 0.0
  %3509 = vmatmul.mubr.f32.gmra.mrb[0].mxu0 %v2621
  %v3510 = vpop.f32.mrb[0].mxu0
  %v3511 = vadd.f32 0.0, %v3510
  %v3512 = vpop.f32.mrb[0].mxu0
  %v3513 = vadd.f32 0.0, %v3512
  %3514 = vmatprep.mubr.f32.mxu0 0.0
  %3515 = vmatmul.mubr.f32.gmra.mrb[0].mxu0 %v2624
  %v3516 = vpop.f32.mrb[0].mxu0
  %v3517 = vadd.f32 0.0, %v3516
  %v3518 = vpop.f32.mrb[0].mxu0
  %v3519 = vadd.f32 0.0, %v3518
  %3520 = vmatprep.mubr.f32.mxu0 0.0
  %3521 = vmatmul.mubr.f32.gmra.mrb[0].mxu0 %v2627
  %v3522 = vpop.f32.mrb[0].mxu0
  %v3523 = vadd.f32 0.0, %v3522
  %v3524 = vpop.f32.mrb[0].mxu0
  %v3525 = vadd.f32 0.0, %v3524
  %3526 = vmatprep.mubr.f32.mxu0 0.0
  %3527 = vmatmul.mubr.f32.gmra.mrb[0].mxu0 %v2630
  %v3528 = vpop.f32.mrb[0].mxu0
  %v3529 = vadd.f32 0.0, %v3528
  %v3530 = vpop.f32.mrb[0].mxu0
  %v3531 = vadd.f32 0.0, %v3530
  %3532 = vmatprep.mubr.f32.mxu0 0.0
  %3533 = vmatmul.mubr.f32.gmra.mrb[0].mxu0 %v2633
  %v3534 = vpop.f32.mrb[0].mxu0
  %v3535 = vadd.f32 0.0, %v3534
  %v3536 = vpop.f32.mrb[0].mxu0
  %v3537 = vadd.f32 0.0, %v3536
  %3538 = vdwg.mxu0
  %v3539 = vmul.f32 %v2702, %v2578
  %v3540 = vmul.f32 %v2704, %v2579
  %v3541 = vmul.f32 %v2815, %v2580
  %v3542 = vmul.f32 %v2817, %v2581
  %v3543 = vmul.f32 %v2708, %v2582
  %v3544 = vmul.f32 %v2710, %v2583
  %v3545 = vmul.f32 %v2821, %v2584
  %v3546 = vmul.f32 %v2823, %v2585
  %v3547 = vmul.f32 %v2714, %v2586
  %v3548 = vmul.f32 %v2716, %v2587
  %v3549 = vmul.f32 %v2827, %v2588
  %v3550 = vmul.f32 %v2829, %v2589
  %v3551 = vmul.f32 %v2720, %v2590
  %v3552 = vmul.f32 %v2722, %v2591
  %v3553 = vmul.f32 %v2833, %v2592
  %v3554 = vmul.f32 %v2835, %v2593
  %v3555 = vmul.f32 %v2726, %v2594
  %v3556 = vmul.f32 %v2728, %v2595
  %v3557 = vmul.f32 %v2839, %v2596
  %v3558 = vmul.f32 %v2841, %v2597
  %v3559 = vmul.f32 %v2732, %v2598
  %v3560 = vmul.f32 %v2734, %v2599
  %v3561 = vmul.f32 %v2845, %v2600
  %v3562 = vmul.f32 %v2847, %v2601
  %v3563 = vmul.f32 %v2738, %v2602
  %v3564 = vmul.f32 %v2740, %v2603
  %v3565 = vmul.f32 %v2851, %v2604
  %v3566 = vmul.f32 %v2853, %v2605
  %v3567 = vmul.f32 %v2744, %v2606
  %v3568 = vmul.f32 %v2746, %v2607
  %v3569 = vmul.f32 %v2857, %v2608
  %v3570 = vmul.f32 %v2859, %v2609
  %v3571 = vmul.f32 %v2928, %v2578
  %v3572 = vmul.f32 %v2930, %v2579
  %v3573 = vmul.f32 %v3041, %v2580
  %v3574 = vmul.f32 %v3043, %v2581
  %v3575 = vmul.f32 %v2934, %v2582
  %v3576 = vmul.f32 %v2936, %v2583
  %v3577 = vmul.f32 %v3047, %v2584
  %v3578 = vmul.f32 %v3049, %v2585
  %v3579 = vmul.f32 %v2940, %v2586
  %v3580 = vmul.f32 %v2942, %v2587
  %v3581 = vmul.f32 %v3053, %v2588
  %v3582 = vmul.f32 %v3055, %v2589
  %v3583 = vmul.f32 %v2946, %v2590
  %v3584 = vmul.f32 %v2948, %v2591
  %v3585 = vmul.f32 %v3059, %v2592
  %v3586 = vmul.f32 %v3061, %v2593
  %v3587 = vmul.f32 %v2952, %v2594
  %v3588 = vmul.f32 %v2954, %v2595
  %v3589 = vmul.f32 %v3065, %v2596
  %v3590 = vmul.f32 %v3067, %v2597
  %v3591 = vmul.f32 %v2958, %v2598
  %v3592 = vmul.f32 %v2960, %v2599
  %v3593 = vmul.f32 %v3071, %v2600
  %v3594 = vmul.f32 %v3073, %v2601
  %v3595 = vmul.f32 %v2964, %v2602
  %v3596 = vmul.f32 %v2966, %v2603
  %v3597 = vmul.f32 %v3077, %v2604
  %v3598 = vmul.f32 %v3079, %v2605
  %v3599 = vmul.f32 %v2970, %v2606
  %v3600 = vmul.f32 %v2972, %v2607
  %v3601 = vmul.f32 %v3083, %v2608
  %v3602 = vmul.f32 %v3085, %v2609
  %v3603 = vmul.f32 %v3154, %v2578
  %v3604 = vmul.f32 %v3156, %v2579
  %v3605 = vmul.f32 %v3267, %v2580
  %v3606 = vmul.f32 %v3269, %v2581
  %v3607 = vmul.f32 %v3160, %v2582
  %v3608 = vmul.f32 %v3162, %v2583
  %v3609 = vmul.f32 %v3273, %v2584
  %v3610 = vmul.f32 %v3275, %v2585
  %v3611 = vmul.f32 %v3166, %v2586
  %v3612 = vmul.f32 %v3168, %v2587
  %v3613 = vmul.f32 %v3279, %v2588
  %v3614 = vmul.f32 %v3281, %v2589
  %v3615 = vmul.f32 %v3172, %v2590
  %v3616 = vmul.f32 %v3174, %v2591
  %v3617 = vmul.f32 %v3285, %v2592
  %v3618 = vmul.f32 %v3287, %v2593
  %v3619 = vmul.f32 %v3178, %v2594
  %v3620 = vmul.f32 %v3180, %v2595
  %v3621 = vmul.f32 %v3291, %v2596
  %v3622 = vmul.f32 %v3293, %v2597
  %v3623 = vmul.f32 %v3184, %v2598
  %v3624 = vmul.f32 %v3186, %v2599
  %v3625 = vmul.f32 %v3297, %v2600
  %v3626 = vmul.f32 %v3299, %v2601
  %v3627 = vmul.f32 %v3190, %v2602
  %v3628 = vmul.f32 %v3192, %v2603
  %v3629 = vmul.f32 %v3303, %v2604
  %v3630 = vmul.f32 %v3305, %v2605
  %v3631 = vmul.f32 %v3196, %v2606
  %v3632 = vmul.f32 %v3198, %v2607
  %v3633 = vmul.f32 %v3309, %v2608
  %v3634 = vmul.f32 %v3311, %v2609
  %v3635 = vmul.f32 %v3380, %v2578
  %v3636 = vmul.f32 %v3382, %v2579
  %v3637 = vmul.f32 %v3493, %v2580
  %v3638 = vmul.f32 %v3495, %v2581
  %v3639 = vmul.f32 %v3386, %v2582
  %v3640 = vmul.f32 %v3388, %v2583
  %v3641 = vmul.f32 %v3499, %v2584
  %v3642 = vmul.f32 %v3501, %v2585
  %v3643 = vmul.f32 %v3392, %v2586
  %v3644 = vmul.f32 %v3394, %v2587
  %v3645 = vmul.f32 %v3505, %v2588
  %v3646 = vmul.f32 %v3507, %v2589
  %v3647 = vmul.f32 %v3398, %v2590
  %v3648 = vmul.f32 %v3400, %v2591
  %v3649 = vmul.f32 %v3511, %v2592
  %v3650 = vmul.f32 %v3513, %v2593
  %v3651 = vmul.f32 %v3404, %v2594
  %v3652 = vmul.f32 %v3406, %v2595
  %v3653 = vmul.f32 %v3517, %v2596
  %v3654 = vmul.f32 %v3519, %v2597
  %v3655 = vmul.f32 %v3410, %v2598
  %v3656 = vmul.f32 %v3412, %v2599
  %v3657 = vmul.f32 %v3523, %v2600
  %v3658 = vmul.f32 %v3525, %v2601
  %v3659 = vmul.f32 %v3416, %v2602
  %v3660 = vmul.f32 %v3418, %v2603
  %v3661 = vmul.f32 %v3529, %v2604
  %v3662 = vmul.f32 %v3531, %v2605
  %v3663 = vmul.f32 %v3422, %v2606
  %v3664 = vmul.f32 %v3424, %v2607
  %v3665 = vmul.f32 %v3535, %v2608
  %v3666 = vmul.f32 %v3537, %v2609
  %v3667 = vpack.c.bf16 %v3543, %v3539
  %v3668 = vpack.c.bf16 %v3544, %v3540
  %v3669 = vpack.c.bf16 %v3545, %v3541
  %v3670 = vpack.c.bf16 %v3546, %v3542
  %v3671 = vpack.c.bf16 %v3551, %v3547
  %v3672 = vpack.c.bf16 %v3552, %v3548
  %v3673 = vpack.c.bf16 %v3553, %v3549
  %v3674 = vpack.c.bf16 %v3554, %v3550
  %v3675 = vpack.c.bf16 %v3559, %v3555
  %v3676 = vpack.c.bf16 %v3560, %v3556
  %v3677 = vpack.c.bf16 %v3561, %v3557
  %v3678 = vpack.c.bf16 %v3562, %v3558
  %v3679 = vpack.c.bf16 %v3567, %v3563
  %v3680 = vpack.c.bf16 %v3568, %v3564
  %v3681 = vpack.c.bf16 %v3569, %v3565
  %v3682 = vpack.c.bf16 %v3570, %v3566
  %v3683 = vpack.c.bf16 %v3575, %v3571
  %v3684 = vpack.c.bf16 %v3576, %v3572
  %v3685 = vpack.c.bf16 %v3577, %v3573
  %v3686 = vpack.c.bf16 %v3578, %v3574
  %v3687 = vpack.c.bf16 %v3583, %v3579
  %v3688 = vpack.c.bf16 %v3584, %v3580
  %v3689 = vpack.c.bf16 %v3585, %v3581
  %v3690 = vpack.c.bf16 %v3586, %v3582
  %v3691 = vpack.c.bf16 %v3591, %v3587
  %v3692 = vpack.c.bf16 %v3592, %v3588
  %v3693 = vpack.c.bf16 %v3593, %v3589
  %v3694 = vpack.c.bf16 %v3594, %v3590
  %v3695 = vpack.c.bf16 %v3599, %v3595
  %v3696 = vpack.c.bf16 %v3600, %v3596
  %v3697 = vpack.c.bf16 %v3601, %v3597
  %v3698 = vpack.c.bf16 %v3602, %v3598
  %v3699 = vpack.c.bf16 %v3607, %v3603
  %v3700 = vpack.c.bf16 %v3608, %v3604
  %v3701 = vpack.c.bf16 %v3609, %v3605
  %v3702 = vpack.c.bf16 %v3610, %v3606
  %v3703 = vpack.c.bf16 %v3615, %v3611
  %v3704 = vpack.c.bf16 %v3616, %v3612
  %v3705 = vpack.c.bf16 %v3617, %v3613
  %v3706 = vpack.c.bf16 %v3618, %v3614
  %v3707 = vpack.c.bf16 %v3623, %v3619
  %v3708 = vpack.c.bf16 %v3624, %v3620
  %v3709 = vpack.c.bf16 %v3625, %v3621
  %v3710 = vpack.c.bf16 %v3626, %v3622
  %v3711 = vpack.c.bf16 %v3631, %v3627
  %v3712 = vpack.c.bf16 %v3632, %v3628
  %v3713 = vpack.c.bf16 %v3633, %v3629
  %v3714 = vpack.c.bf16 %v3634, %v3630
  %v3715 = vpack.c.bf16 %v3639, %v3635
  %v3716 = vpack.c.bf16 %v3640, %v3636
  %v3717 = vpack.c.bf16 %v3641, %v3637
  %v3718 = vpack.c.bf16 %v3642, %v3638
  %v3719 = vpack.c.bf16 %v3647, %v3643
  %v3720 = vpack.c.bf16 %v3648, %v3644
  %v3721 = vpack.c.bf16 %v3649, %v3645
  %v3722 = vpack.c.bf16 %v3650, %v3646
  %v3723 = vpack.c.bf16 %v3655, %v3651
  %v3724 = vpack.c.bf16 %v3656, %v3652
  %v3725 = vpack.c.bf16 %v3657, %v3653
  %v3726 = vpack.c.bf16 %v3658, %v3654
  %v3727 = vpack.c.bf16 %v3663, %v3659
  %v3728 = vpack.c.bf16 %v3664, %v3660
  %v3729 = vpack.c.bf16 %v3665, %v3661
  %v3730 = vpack.c.bf16 %v3666, %v3662
  %3731 = vmatprep.subr.mxu0 %v2373
  %3732 = vmatpush1.msra.mxu0 %v2371
  %3733 = vmatprep.subr.mxu0 0.0
  %3734 = vmatpush1.msra.mxu0 0.0
  %3735 = vmatprep.subr.mxu0 0.0
  %3736 = vmatpush1.msra.mxu0 0.0
  %3737 = vmatprep.subr.mxu0 0.0
  %3738 = vmatpush1.msra.mxu0 0.0
  %3739 = vmatprep.subr.mxu0 0.0
  %3740 = vmatpush1.msra.mxu0 0.0
  %3741 = vmatprep.subr.mxu0 0.0
  %3742 = vmatpush1.msra.mxu0 0.0
  %3743 = vmatprep.subr.mxu0 0.0
  %3744 = vmatpush1.msra.mxu0 0.0
  %3745 = vmatprep.subr.mxu0 0.0
  %3746 = vmatpush1.msra.mxu0 0.0
  %3747 = vmatprep.subr.mxu0 0.0
  %3748 = vmatpush1.msra.mxu0 0.0
  %3749 = vmatprep.subr.mxu0 0.0
  %3750 = vmatpush1.msra.mxu0 0.0
  %3751 = vmatprep.subr.mxu0 0.0
  %3752 = vmatpush1.msra.mxu0 0.0
  %3753 = vmatprep.subr.mxu0 0.0
  %3754 = vmatpush1.msra.mxu0 0.0
  %3755 = vmatprep.subr.mxu0 0.0
  %3756 = vmatpush1.msra.mxu0 0.0
  %3757 = vmatprep.subr.mxu0 0.0
  %3758 = vmatpush1.msra.mxu0 0.0
  %3759 = vmatprep.subr.mxu0 0.0
  %3760 = vmatpush1.msra.mxu0 0.0
  %3761 = vmatprep.subr.mxu0 0.0
  %3762 = vmatpush1.msra.mxu0 0.0
  %3763 = vmatprep.subr.mxu0 0.0
  %3764 = vmatpush1.msra.mxu0 0.0
  %3765 = vmatprep.subr.mxu0 0.0
  %3766 = vmatpush1.msra.mxu0 0.0
  %3767 = vmatprep.subr.mxu0 0.0
  %3768 = vmatpush1.msra.mxu0 0.0
  %3769 = vmatprep.subr.mxu0 0.0
  %3770 = vmatpush1.msra.mxu0 0.0
  %3771 = vmatprep.subr.mxu0 0.0
  %3772 = vmatpush1.msra.mxu0 0.0
  %3773 = vmatprep.subr.mxu0 0.0
  %3774 = vmatpush1.msra.mxu0 0.0
  %3775 = vmatprep.subr.mxu0 0.0
  %3776 = vmatpush1.msra.mxu0 0.0
  %3777 = vmatprep.subr.mxu0 0.0
  %3778 = vmatpush1.msra.mxu0 0.0
  %3779 = vmatprep.subr.mxu0 0.0
  %3780 = vmatpush1.msra.mxu0 0.0
  %3781 = vmatprep.subr.mxu0 0.0
  %3782 = vmatpush1.msra.mxu0 0.0
  %3783 = vmatprep.subr.mxu0 0.0
  %3784 = vmatpush1.msra.mxu0 0.0
  %3785 = vmatprep.subr.mxu0 0.0
  %3786 = vmatpush1.msra.mxu0 0.0
  %3787 = vmatprep.subr.mxu0 0.0
  %3788 = vmatpush1.msra.mxu0 0.0
  %3789 = vmatprep.subr.mxu0 0.0
  %3790 = vmatpush1.msra.mxu0 0.0
  %3791 = vmatprep.subr.mxu0 0.0
  %3792 = vmatpush1.msra.mxu0 0.0
  %3793 = vmatprep.subr.mxu0 0.0
  %3794 = vmatpush1.msra.mxu0 0.0
  %3795 = vmatprep.mubr.f32.mxu0 0.0
  %3796 = vmatmul.mubr.f32.gmra.mrb[0].mxu0 %v2612
  %v3797 = vpop.f32.mrb[0].mxu0
  %v3798 = vadd.f32 0.0, %v3797
  %v3799 = vpop.f32.mrb[0].mxu0
  %v3800 = vadd.f32 0.0, %v3799
  %3801 = vmatprep.mubr.f32.mxu0 0.0
  %3802 = vmatmul.mubr.f32.gmra.mrb[0].mxu0 %v2615
  %v3803 = vpop.f32.mrb[0].mxu0
  %v3804 = vadd.f32 0.0, %v3803
  %v3805 = vpop.f32.mrb[0].mxu0
  %v3806 = vadd.f32 0.0, %v3805
  %3807 = vmatprep.mubr.f32.mxu0 0.0
  %3808 = vmatmul.mubr.f32.gmra.mrb[0].mxu0 %v2618
  %v3809 = vpop.f32.mrb[0].mxu0
  %v3810 = vadd.f32 0.0, %v3809
  %v3811 = vpop.f32.mrb[0].mxu0
  %v3812 = vadd.f32 0.0, %v3811
  %3813 = vmatprep.mubr.f32.mxu0 0.0
  %3814 = vmatmul.mubr.f32.gmra.mrb[0].mxu0 %v2621
  %v3815 = vpop.f32.mrb[0].mxu0
  %v3816 = vadd.f32 0.0, %v3815
  %v3817 = vpop.f32.mrb[0].mxu0
  %v3818 = vadd.f32 0.0, %v3817
  %3819 = vmatprep.mubr.f32.mxu0 0.0
  %3820 = vmatmul.mubr.f32.gmra.mrb[0].mxu0 %v2624
  %v3821 = vpop.f32.mrb[0].mxu0
  %v3822 = vadd.f32 0.0, %v3821
  %v3823 = vpop.f32.mrb[0].mxu0
  %v3824 = vadd.f32 0.0, %v3823
  %3825 = vmatprep.mubr.f32.mxu0 0.0
  %3826 = vmatmul.mubr.f32.gmra.mrb[0].mxu0 %v2627
  %v3827 = vpop.f32.mrb[0].mxu0
  %v3828 = vadd.f32 0.0, %v3827
  %v3829 = vpop.f32.mrb[0].mxu0
  %v3830 = vadd.f32 0.0, %v3829
  %3831 = vmatprep.mubr.f32.mxu0 0.0
  %3832 = vmatmul.mubr.f32.gmra.mrb[0].mxu0 %v2630
  %v3833 = vpop.f32.mrb[0].mxu0
  %v3834 = vadd.f32 0.0, %v3833
  %v3835 = vpop.f32.mrb[0].mxu0
  %v3836 = vadd.f32 0.0, %v3835
  %3837 = vmatprep.mubr.f32.mxu0 0.0
  %3838 = vmatmul.mubr.f32.gmra.mrb[0].mxu0 %v2633
  %v3839 = vpop.f32.mrb[0].mxu0
  %v3840 = vadd.f32 0.0, %v3839
  %v3841 = vpop.f32.mrb[0].mxu0
  %v3842 = vadd.f32 0.0, %v3841
  %3843 = vdwg.mxu0
  %3844 = vmatprep.subr.mxu0 %v2426
  %3845 = vmatpush1.msra.mxu0 %v2424
  %3846 = vmatprep.subr.mxu0 0.0
  %3847 = vmatpush1.msra.mxu0 0.0
  %3848 = vmatprep.subr.mxu0 0.0
  %3849 = vmatpush1.msra.mxu0 0.0
  %3850 = vmatprep.subr.mxu0 0.0
  %3851 = vmatpush1.msra.mxu0 0.0
  %3852 = vmatprep.subr.mxu0 0.0
  %3853 = vmatpush1.msra.mxu0 0.0
  %3854 = vmatprep.subr.mxu0 0.0
  %3855 = vmatpush1.msra.mxu0 0.0
  %3856 = vmatprep.subr.mxu0 0.0
  %3857 = vmatpush1.msra.mxu0 0.0
  %3858 = vmatprep.subr.mxu0 0.0
  %3859 = vmatpush1.msra.mxu0 0.0
  %3860 = vmatprep.subr.mxu0 0.0
  %3861 = vmatpush1.msra.mxu0 0.0
  %3862 = vmatprep.subr.mxu0 0.0
  %3863 = vmatpush1.msra.mxu0 0.0
  %3864 = vmatprep.subr.mxu0 0.0
  %3865 = vmatpush1.msra.mxu0 0.0
  %3866 = vmatprep.subr.mxu0 0.0
  %3867 = vmatpush1.msra.mxu0 0.0
  %3868 = vmatprep.subr.mxu0 0.0
  %3869 = vmatpush1.msra.mxu0 0.0
  %3870 = vmatprep.subr.mxu0 0.0
  %3871 = vmatpush1.msra.mxu0 0.0
  %3872 = vmatprep.subr.mxu0 0.0
  %3873 = vmatpush1.msra.mxu0 0.0
  %3874 = vmatprep.subr.mxu0 0.0
  %3875 = vmatpush1.msra.mxu0 0.0
  %3876 = vmatprep.subr.mxu0 0.0
  %3877 = vmatpush1.msra.mxu0 0.0
  %3878 = vmatprep.subr.mxu0 0.0
  %3879 = vmatpush1.msra.mxu0 0.0
  %3880 = vmatprep.subr.mxu0 0.0
  %3881 = vmatpush1.msra.mxu0 0.0
  %3882 = vmatprep.subr.mxu0 0.0
  %3883 = vmatpush1.msra.mxu0 0.0
  %3884 = vmatprep.subr.mxu0 0.0
  %3885 = vmatpush1.msra.mxu0 0.0
  %3886 = vmatprep.subr.mxu0 0.0
  %3887 = vmatpush1.msra.mxu0 0.0
  %3888 = vmatprep.subr.mxu0 0.0
  %3889 = vmatpush1.msra.mxu0 0.0
  %3890 = vmatprep.subr.mxu0 0.0
  %3891 = vmatpush1.msra.mxu0 0.0
  %3892 = vmatprep.subr.mxu0 0.0
  %3893 = vmatpush1.msra.mxu0 0.0
  %3894 = vmatprep.subr.mxu0 0.0
  %3895 = vmatpush1.msra.mxu0 0.0
  %3896 = vmatprep.subr.mxu0 0.0
  %3897 = vmatpush1.msra.mxu0 0.0
  %3898 = vmatprep.subr.mxu0 0.0
  %3899 = vmatpush1.msra.mxu0 0.0
  %3900 = vmatprep.subr.mxu0 0.0
  %3901 = vmatpush1.msra.mxu0 0.0
  %3902 = vmatprep.subr.mxu0 0.0
  %3903 = vmatpush1.msra.mxu0 0.0
  %3904 = vmatprep.subr.mxu0 0.0
  %3905 = vmatpush1.msra.mxu0 0.0
  %3906 = vmatprep.subr.mxu0 0.0
  %3907 = vmatpush1.msra.mxu0 0.0
  %3908 = vmatprep.mubr.f32.mxu0 0.0
  %3909 = vmatmul.mubr.f32.gmra.mrb[0].mxu0 %v2612
  %v3910 = vpop.f32.mrb[0].mxu0
  %v3911 = vadd.f32 0.0, %v3910
  %v3912 = vpop.f32.mrb[0].mxu0
  %v3913 = vadd.f32 0.0, %v3912
  %3914 = vmatprep.mubr.f32.mxu0 0.0
  %3915 = vmatmul.mubr.f32.gmra.mrb[0].mxu0 %v2615
  %v3916 = vpop.f32.mrb[0].mxu0
  %v3917 = vadd.f32 0.0, %v3916
  %v3918 = vpop.f32.mrb[0].mxu0
  %v3919 = vadd.f32 0.0, %v3918
  %3920 = vmatprep.mubr.f32.mxu0 0.0
  %3921 = vmatmul.mubr.f32.gmra.mrb[0].mxu0 %v2618
  %v3922 = vpop.f32.mrb[0].mxu0
  %v3923 = vadd.f32 0.0, %v3922
  %v3924 = vpop.f32.mrb[0].mxu0
  %v3925 = vadd.f32 0.0, %v3924
  %3926 = vmatprep.mubr.f32.mxu0 0.0
  %3927 = vmatmul.mubr.f32.gmra.mrb[0].mxu0 %v2621
  %v3928 = vpop.f32.mrb[0].mxu0
  %v3929 = vadd.f32 0.0, %v3928
  %v3930 = vpop.f32.mrb[0].mxu0
  %v3931 = vadd.f32 0.0, %v3930
  %3932 = vmatprep.mubr.f32.mxu0 0.0
  %3933 = vmatmul.mubr.f32.gmra.mrb[0].mxu0 %v2624
  %v3934 = vpop.f32.mrb[0].mxu0
  %v3935 = vadd.f32 0.0, %v3934
  %v3936 = vpop.f32.mrb[0].mxu0
  %v3937 = vadd.f32 0.0, %v3936
  %3938 = vmatprep.mubr.f32.mxu0 0.0
  %3939 = vmatmul.mubr.f32.gmra.mrb[0].mxu0 %v2627
  %v3940 = vpop.f32.mrb[0].mxu0
  %v3941 = vadd.f32 0.0, %v3940
  %v3942 = vpop.f32.mrb[0].mxu0
  %v3943 = vadd.f32 0.0, %v3942
  %3944 = vmatprep.mubr.f32.mxu0 0.0
  %3945 = vmatmul.mubr.f32.gmra.mrb[0].mxu0 %v2630
  %v3946 = vpop.f32.mrb[0].mxu0
  %v3947 = vadd.f32 0.0, %v3946
  %v3948 = vpop.f32.mrb[0].mxu0
  %v3949 = vadd.f32 0.0, %v3948
  %3950 = vmatprep.mubr.f32.mxu0 0.0
  %3951 = vmatmul.mubr.f32.gmra.mrb[0].mxu0 %v2633
  %v3952 = vpop.f32.mrb[0].mxu0
  %v3953 = vadd.f32 0.0, %v3952
  %v3954 = vpop.f32.mrb[0].mxu0
  %v3955 = vadd.f32 0.0, %v3954
  %3956 = vdwg.mxu0
  %3957 = vmatprep.subr.mxu0 %v2377
  %3958 = vmatpush1.msra.mxu0 %v2375
  %3959 = vmatprep.subr.mxu0 0.0
  %3960 = vmatpush1.msra.mxu0 0.0
  %3961 = vmatprep.subr.mxu0 0.0
  %3962 = vmatpush1.msra.mxu0 0.0
  %3963 = vmatprep.subr.mxu0 0.0
  %3964 = vmatpush1.msra.mxu0 0.0
  %3965 = vmatprep.subr.mxu0 0.0
  %3966 = vmatpush1.msra.mxu0 0.0
  %3967 = vmatprep.subr.mxu0 0.0
  %3968 = vmatpush1.msra.mxu0 0.0
  %3969 = vmatprep.subr.mxu0 0.0
  %3970 = vmatpush1.msra.mxu0 0.0
  %3971 = vmatprep.subr.mxu0 0.0
  %3972 = vmatpush1.msra.mxu0 0.0
  %3973 = vmatprep.subr.mxu0 0.0
  %3974 = vmatpush1.msra.mxu0 0.0
  %3975 = vmatprep.subr.mxu0 0.0
  %3976 = vmatpush1.msra.mxu0 0.0
  %3977 = vmatprep.subr.mxu0 0.0
  %3978 = vmatpush1.msra.mxu0 0.0
  %3979 = vmatprep.subr.mxu0 0.0
  %3980 = vmatpush1.msra.mxu0 0.0
  %3981 = vmatprep.subr.mxu0 0.0
  %3982 = vmatpush1.msra.mxu0 0.0
  %3983 = vmatprep.subr.mxu0 0.0
  %3984 = vmatpush1.msra.mxu0 0.0
  %3985 = vmatprep.subr.mxu0 0.0
  %3986 = vmatpush1.msra.mxu0 0.0
  %3987 = vmatprep.subr.mxu0 0.0
  %3988 = vmatpush1.msra.mxu0 0.0
  %3989 = vmatprep.subr.mxu0 0.0
  %3990 = vmatpush1.msra.mxu0 0.0
  %3991 = vmatprep.subr.mxu0 0.0
  %3992 = vmatpush1.msra.mxu0 0.0
  %3993 = vmatprep.subr.mxu0 0.0
  %3994 = vmatpush1.msra.mxu0 0.0
  %3995 = vmatprep.subr.mxu0 0.0
  %3996 = vmatpush1.msra.mxu0 0.0
  %3997 = vmatprep.subr.mxu0 0.0
  %3998 = vmatpush1.msra.mxu0 0.0
  %3999 = vmatprep.subr.mxu0 0.0
  %4000 = vmatpush1.msra.mxu0 0.0
  %4001 = vmatprep.subr.mxu0 0.0
  %4002 = vmatpush1.msra.mxu0 0.0
  %4003 = vmatprep.subr.mxu0 0.0
  %4004 = vmatpush1.msra.mxu0 0.0
  %4005 = vmatprep.subr.mxu0 0.0
  %4006 = vmatpush1.msra.mxu0 0.0
  %4007 = vmatprep.subr.mxu0 0.0
  %4008 = vmatpush1.msra.mxu0 0.0
  %4009 = vmatprep.subr.mxu0 0.0
  %4010 = vmatpush1.msra.mxu0 0.0
  %4011 = vmatprep.subr.mxu0 0.0
  %4012 = vmatpush1.msra.mxu0 0.0
  %4013 = vmatprep.subr.mxu0 0.0
  %4014 = vmatpush1.msra.mxu0 0.0
  %4015 = vmatprep.subr.mxu0 0.0
  %4016 = vmatpush1.msra.mxu0 0.0
  %4017 = vmatprep.subr.mxu0 0.0
  %4018 = vmatpush1.msra.mxu0 0.0
  %4019 = vmatprep.subr.mxu0 0.0
  %4020 = vmatpush1.msra.mxu0 0.0
  %4021 = vmatprep.mubr.f32.mxu0 0.0
  %4022 = vmatmul.mubr.f32.gmra.mrb[0].mxu0 %v2612
  %v4023 = vpop.f32.mrb[0].mxu0
  %v4024 = vadd.f32 0.0, %v4023
  %v4025 = vpop.f32.mrb[0].mxu0
  %v4026 = vadd.f32 0.0, %v4025
  %4027 = vmatprep.mubr.f32.mxu0 0.0
  %4028 = vmatmul.mubr.f32.gmra.mrb[0].mxu0 %v2615
  %v4029 = vpop.f32.mrb[0].mxu0
  %v4030 = vadd.f32 0.0, %v4029
  %v4031 = vpop.f32.mrb[0].mxu0
  %v4032 = vadd.f32 0.0, %v4031
  %4033 = vmatprep.mubr.f32.mxu0 0.0
  %4034 = vmatmul.mubr.f32.gmra.mrb[0].mxu0 %v2618
  %v4035 = vpop.f32.mrb[0].mxu0
  %v4036 = vadd.f32 0.0, %v4035
  %v4037 = vpop.f32.mrb[0].mxu0
  %v4038 = vadd.f32 0.0, %v4037
  %4039 = vmatprep.mubr.f32.mxu0 0.0
  %4040 = vmatmul.mubr.f32.gmra.mrb[0].mxu0 %v2621
  %v4041 = vpop.f32.mrb[0].mxu0
  %v4042 = vadd.f32 0.0, %v4041
  %v4043 = vpop.f32.mrb[0].mxu0
  %v4044 = vadd.f32 0.0, %v4043
  %4045 = vmatprep.mubr.f32.mxu0 0.0
  %4046 = vmatmul.mubr.f32.gmra.mrb[0].mxu0 %v2624
  %v4047 = vpop.f32.mrb[0].mxu0
  %v4048 = vadd.f32 0.0, %v4047
  %v4049 = vpop.f32.mrb[0].mxu0
  %v4050 = vadd.f32 0.0, %v4049
  %4051 = vmatprep.mubr.f32.mxu0 0.0
  %4052 = vmatmul.mubr.f32.gmra.mrb[0].mxu0 %v2627
  %v4053 = vpop.f32.mrb[0].mxu0
  %v4054 = vadd.f32 0.0, %v4053
  %v4055 = vpop.f32.mrb[0].mxu0
  %v4056 = vadd.f32 0.0, %v4055
  %4057 = vmatprep.mubr.f32.mxu0 0.0
  %4058 = vmatmul.mubr.f32.gmra.mrb[0].mxu0 %v2630
  %v4059 = vpop.f32.mrb[0].mxu0
  %v4060 = vadd.f32 0.0, %v4059
  %v4061 = vpop.f32.mrb[0].mxu0
  %v4062 = vadd.f32 0.0, %v4061
  %4063 = vmatprep.mubr.f32.mxu0 0.0
  %4064 = vmatmul.mubr.f32.gmra.mrb[0].mxu0 %v2633
  %v4065 = vpop.f32.mrb[0].mxu0
  %v4066 = vadd.f32 0.0, %v4065
  %v4067 = vpop.f32.mrb[0].mxu0
  %v4068 = vadd.f32 0.0, %v4067
  %4069 = vdwg.mxu0
  %4070 = vmatprep.subr.mxu0 %v2430
  %4071 = vmatpush1.msra.mxu0 %v2428
  %4072 = vmatprep.subr.mxu0 0.0
  %4073 = vmatpush1.msra.mxu0 0.0
  %4074 = vmatprep.subr.mxu0 0.0
  %4075 = vmatpush1.msra.mxu0 0.0
  %4076 = vmatprep.subr.mxu0 0.0
  %4077 = vmatpush1.msra.mxu0 0.0
  %4078 = vmatprep.subr.mxu0 0.0
  %4079 = vmatpush1.msra.mxu0 0.0
  %4080 = vmatprep.subr.mxu0 0.0
  %4081 = vmatpush1.msra.mxu0 0.0
  %4082 = vmatprep.subr.mxu0 0.0
  %4083 = vmatpush1.msra.mxu0 0.0
  %4084 = vmatprep.subr.mxu0 0.0
  %4085 = vmatpush1.msra.mxu0 0.0
  %4086 = vmatprep.subr.mxu0 0.0
  %4087 = vmatpush1.msra.mxu0 0.0
  %4088 = vmatprep.subr.mxu0 0.0
  %4089 = vmatpush1.msra.mxu0 0.0
  %4090 = vmatprep.subr.mxu0 0.0
  %4091 = vmatpush1.msra.mxu0 0.0
  %4092 = vmatprep.subr.mxu0 0.0
  %4093 = vmatpush1.msra.mxu0 0.0
  %4094 = vmatprep.subr.mxu0 0.0
  %4095 = vmatpush1.msra.mxu0 0.0
  %4096 = vmatprep.subr.mxu0 0.0
  %4097 = vmatpush1.msra.mxu0 0.0
  %4098 = vmatprep.subr.mxu0 0.0
  %4099 = vmatpush1.msra.mxu0 0.0
  %4100 = vmatprep.subr.mxu0 0.0
  %4101 = vmatpush1.msra.mxu0 0.0
  %4102 = vmatprep.subr.mxu0 0.0
  %4103 = vmatpush1.msra.mxu0 0.0
  %4104 = vmatprep.subr.mxu0 0.0
  %4105 = vmatpush1.msra.mxu0 0.0
  %4106 = vmatprep.subr.mxu0 0.0
  %4107 = vmatpush1.msra.mxu0 0.0
  %4108 = vmatprep.subr.mxu0 0.0
  %4109 = vmatpush1.msra.mxu0 0.0
  %4110 = vmatprep.subr.mxu0 0.0
  %4111 = vmatpush1.msra.mxu0 0.0
  %4112 = vmatprep.subr.mxu0 0.0
  %4113 = vmatpush1.msra.mxu0 0.0
  %4114 = vmatprep.subr.mxu0 0.0
  %4115 = vmatpush1.msra.mxu0 0.0
  %4116 = vmatprep.subr.mxu0 0.0
  %4117 = vmatpush1.msra.mxu0 0.0
  %4118 = vmatprep.subr.mxu0 0.0
  %4119 = vmatpush1.msra.mxu0 0.0
  %4120 = vmatprep.subr.mxu0 0.0
  %4121 = vmatpush1.msra.mxu0 0.0
  %4122 = vmatprep.subr.mxu0 0.0
  %4123 = vmatpush1.msra.mxu0 0.0
  %4124 = vmatprep.subr.mxu0 0.0
  %4125 = vmatpush1.msra.mxu0 0.0
  %4126 = vmatprep.subr.mxu0 0.0
  %4127 = vmatpush1.msra.mxu0 0.0
  %4128 = vmatprep.subr.mxu0 0.0
  %4129 = vmatpush1.msra.mxu0 0.0
  %4130 = vmatprep.subr.mxu0 0.0
  %4131 = vmatpush1.msra.mxu0 0.0
  %4132 = vmatprep.subr.mxu0 0.0
  %4133 = vmatpush1.msra.mxu0 0.0
  %4134 = vmatprep.mubr.f32.mxu0 0.0
  %4135 = vmatmul.mubr.f32.gmra.mrb[0].mxu0 %v2612
  %v4136 = vpop.f32.mrb[0].mxu0
  %v4137 = vadd.f32 0.0, %v4136
  %v4138 = vpop.f32.mrb[0].mxu0
  %v4139 = vadd.f32 0.0, %v4138
  %4140 = vmatprep.mubr.f32.mxu0 0.0
  %4141 = vmatmul.mubr.f32.gmra.mrb[0].mxu0 %v2615
  %v4142 = vpop.f32.mrb[0].mxu0
  %v4143 = vadd.f32 0.0, %v4142
  %v4144 = vpop.f32.mrb[0].mxu0
  %v4145 = vadd.f32 0.0, %v4144
  %4146 = vmatprep.mubr.f32.mxu0 0.0
  %4147 = vmatmul.mubr.f32.gmra.mrb[0].mxu0 %v2618
  %v4148 = vpop.f32.mrb[0].mxu0
  %v4149 = vadd.f32 0.0, %v4148
  %v4150 = vpop.f32.mrb[0].mxu0
  %v4151 = vadd.f32 0.0, %v4150
  %4152 = vmatprep.mubr.f32.mxu0 0.0
  %4153 = vmatmul.mubr.f32.gmra.mrb[0].mxu0 %v2621
  %v4154 = vpop.f32.mrb[0].mxu0
  %v4155 = vadd.f32 0.0, %v4154
  %v4156 = vpop.f32.mrb[0].mxu0
  %v4157 = vadd.f32 0.0, %v4156
  %4158 = vmatprep.mubr.f32.mxu0 0.0
  %4159 = vmatmul.mubr.f32.gmra.mrb[0].mxu0 %v2624
  %v4160 = vpop.f32.mrb[0].mxu0
  %v4161 = vadd.f32 0.0, %v4160
  %v4162 = vpop.f32.mrb[0].mxu0
  %v4163 = vadd.f32 0.0, %v4162
  %4164 = vmatprep.mubr.f32.mxu0 0.0
  %4165 = vmatmul.mubr.f32.gmra.mrb[0].mxu0 %v2627
  %v4166 = vpop.f32.mrb[0].mxu0
  %v4167 = vadd.f32 0.0, %v4166
  %v4168 = vpop.f32.mrb[0].mxu0
  %v4169 = vadd.f32 0.0, %v4168
  %4170 = vmatprep.mubr.f32.mxu0 0.0
  %4171 = vmatmul.mubr.f32.gmra.mrb[0].mxu0 %v2630
  %v4172 = vpop.f32.mrb[0].mxu0
  %v4173 = vadd.f32 0.0, %v4172
  %v4174 = vpop.f32.mrb[0].mxu0
  %v4175 = vadd.f32 0.0, %v4174
  %4176 = vmatprep.mubr.f32.mxu0 0.0
  %4177 = vmatmul.mubr.f32.gmra.mrb[0].mxu0 %v2633
  %v4178 = vpop.f32.mrb[0].mxu0
  %v4179 = vadd.f32 0.0, %v4178
  %v4180 = vpop.f32.mrb[0].mxu0
  %v4181 = vadd.f32 0.0, %v4180
  %4182 = vdwg.mxu0
  %4183 = vmatprep.subr.mxu0 %v2383
  %4184 = vmatpush1.msra.mxu0 %v2381
  %4185 = vmatprep.subr.mxu0 0.0
  %4186 = vmatpush1.msra.mxu0 0.0
  %4187 = vmatprep.subr.mxu0 0.0
  %4188 = vmatpush1.msra.mxu0 0.0
  %4189 = vmatprep.subr.mxu0 0.0
  %4190 = vmatpush1.msra.mxu0 0.0
  %4191 = vmatprep.subr.mxu0 0.0
  %4192 = vmatpush1.msra.mxu0 0.0
  %4193 = vmatprep.subr.mxu0 0.0
  %4194 = vmatpush1.msra.mxu0 0.0
  %4195 = vmatprep.subr.mxu0 0.0
  %4196 = vmatpush1.msra.mxu0 0.0
  %4197 = vmatprep.subr.mxu0 0.0
  %4198 = vmatpush1.msra.mxu0 0.0
  %4199 = vmatprep.subr.mxu0 0.0
  %4200 = vmatpush1.msra.mxu0 0.0
  %4201 = vmatprep.subr.mxu0 0.0
  %4202 = vmatpush1.msra.mxu0 0.0
  %4203 = vmatprep.subr.mxu0 0.0
  %4204 = vmatpush1.msra.mxu0 0.0
  %4205 = vmatprep.subr.mxu0 0.0
  %4206 = vmatpush1.msra.mxu0 0.0
  %4207 = vmatprep.subr.mxu0 0.0
  %4208 = vmatpush1.msra.mxu0 0.0
  %4209 = vmatprep.subr.mxu0 0.0
  %4210 = vmatpush1.msra.mxu0 0.0
  %4211 = vmatprep.subr.mxu0 0.0
  %4212 = vmatpush1.msra.mxu0 0.0
  %4213 = vmatprep.subr.mxu0 0.0
  %4214 = vmatpush1.msra.mxu0 0.0
  %4215 = vmatprep.subr.mxu0 0.0
  %4216 = vmatpush1.msra.mxu0 0.0
  %4217 = vmatprep.subr.mxu0 0.0
  %4218 = vmatpush1.msra.mxu0 0.0
  %4219 = vmatprep.subr.mxu0 0.0
  %4220 = vmatpush1.msra.mxu0 0.0
  %4221 = vmatprep.subr.mxu0 0.0
  %4222 = vmatpush1.msra.mxu0 0.0
  %4223 = vmatprep.subr.mxu0 0.0
  %4224 = vmatpush1.msra.mxu0 0.0
  %4225 = vmatprep.subr.mxu0 0.0
  %4226 = vmatpush1.msra.mxu0 0.0
  %4227 = vmatprep.subr.mxu0 0.0
  %4228 = vmatpush1.msra.mxu0 0.0
  %4229 = vmatprep.subr.mxu0 0.0
  %4230 = vmatpush1.msra.mxu0 0.0
  %4231 = vmatprep.subr.mxu0 0.0
  %4232 = vmatpush1.msra.mxu0 0.0
  %4233 = vmatprep.subr.mxu0 0.0
  %4234 = vmatpush1.msra.mxu0 0.0
  %4235 = vmatprep.subr.mxu0 0.0
  %4236 = vmatpush1.msra.mxu0 0.0
  %4237 = vmatprep.subr.mxu0 0.0
  %4238 = vmatpush1.msra.mxu0 0.0
  %4239 = vmatprep.subr.mxu0 0.0
  %4240 = vmatpush1.msra.mxu0 0.0
  %4241 = vmatprep.subr.mxu0 0.0
  %4242 = vmatpush1.msra.mxu0 0.0
  %4243 = vmatprep.subr.mxu0 0.0
  %4244 = vmatpush1.msra.mxu0 0.0
  %4245 = vmatprep.subr.mxu0 0.0
  %4246 = vmatpush1.msra.mxu0 0.0
  %4247 = vmatprep.mubr.f32.mxu0 0.0
  %4248 = vmatmul.mubr.f32.gmra.mrb[0].mxu0 %v2612
  %v4249 = vpop.f32.mrb[0].mxu0
  %v4250 = vadd.f32 0.0, %v4249
  %v4251 = vpop.f32.mrb[0].mxu0
  %v4252 = vadd.f32 0.0, %v4251
  %4253 = vmatprep.mubr.f32.mxu0 0.0
  %4254 = vmatmul.mubr.f32.gmra.mrb[0].mxu0 %v2615
  %v4255 = vpop.f32.mrb[0].mxu0
  %v4256 = vadd.f32 0.0, %v4255
  %v4257 = vpop.f32.mrb[0].mxu0
  %v4258 = vadd.f32 0.0, %v4257
  %4259 = vmatprep.mubr.f32.mxu0 0.0
  %4260 = vmatmul.mubr.f32.gmra.mrb[0].mxu0 %v2618
  %v4261 = vpop.f32.mrb[0].mxu0
  %v4262 = vadd.f32 0.0, %v4261
  %v4263 = vpop.f32.mrb[0].mxu0
  %v4264 = vadd.f32 0.0, %v4263
  %4265 = vmatprep.mubr.f32.mxu0 0.0
  %4266 = vmatmul.mubr.f32.gmra.mrb[0].mxu0 %v2621
  %v4267 = vpop.f32.mrb[0].mxu0
  %v4268 = vadd.f32 0.0, %v4267
  %v4269 = vpop.f32.mrb[0].mxu0
  %v4270 = vadd.f32 0.0, %v4269
  %4271 = vmatprep.mubr.f32.mxu0 0.0
  %4272 = vmatmul.mubr.f32.gmra.mrb[0].mxu0 %v2624
  %v4273 = vpop.f32.mrb[0].mxu0
  %v4274 = vadd.f32 0.0, %v4273
  %v4275 = vpop.f32.mrb[0].mxu0
  %v4276 = vadd.f32 0.0, %v4275
  %4277 = vmatprep.mubr.f32.mxu0 0.0
  %4278 = vmatmul.mubr.f32.gmra.mrb[0].mxu0 %v2627
  %v4279 = vpop.f32.mrb[0].mxu0
  %v4280 = vadd.f32 0.0, %v4279
  %v4281 = vpop.f32.mrb[0].mxu0
  %v4282 = vadd.f32 0.0, %v4281
  %4283 = vmatprep.mubr.f32.mxu0 0.0
  %4284 = vmatmul.mubr.f32.gmra.mrb[0].mxu0 %v2630
  %v4285 = vpop.f32.mrb[0].mxu0
  %v4286 = vadd.f32 0.0, %v4285
  %v4287 = vpop.f32.mrb[0].mxu0
  %v4288 = vadd.f32 0.0, %v4287
  %4289 = vmatprep.mubr.f32.mxu0 0.0
  %4290 = vmatmul.mubr.f32.gmra.mrb[0].mxu0 %v2633
  %v4291 = vpop.f32.mrb[0].mxu0
  %v4292 = vadd.f32 0.0, %v4291
  %v4293 = vpop.f32.mrb[0].mxu0
  %v4294 = vadd.f32 0.0, %v4293
  %4295 = vdwg.mxu0
  %4296 = vmatprep.subr.mxu0 %v2436
  %4297 = vmatpush1.msra.mxu0 %v2434
  %4298 = vmatprep.subr.mxu0 0.0
  %4299 = vmatpush1.msra.mxu0 0.0
  %4300 = vmatprep.subr.mxu0 0.0
  %4301 = vmatpush1.msra.mxu0 0.0
  %4302 = vmatprep.subr.mxu0 0.0
  %4303 = vmatpush1.msra.mxu0 0.0
  %4304 = vmatprep.subr.mxu0 0.0
  %4305 = vmatpush1.msra.mxu0 0.0
  %4306 = vmatprep.subr.mxu0 0.0
  %4307 = vmatpush1.msra.mxu0 0.0
  %4308 = vmatprep.subr.mxu0 0.0
  %4309 = vmatpush1.msra.mxu0 0.0
  %4310 = vmatprep.subr.mxu0 0.0
  %4311 = vmatpush1.msra.mxu0 0.0
  %4312 = vmatprep.subr.mxu0 0.0
  %4313 = vmatpush1.msra.mxu0 0.0
  %4314 = vmatprep.subr.mxu0 0.0
  %4315 = vmatpush1.msra.mxu0 0.0
  %4316 = vmatprep.subr.mxu0 0.0
  %4317 = vmatpush1.msra.mxu0 0.0
  %4318 = vmatprep.subr.mxu0 0.0
  %4319 = vmatpush1.msra.mxu0 0.0
  %4320 = vmatprep.subr.mxu0 0.0
  %4321 = vmatpush1.msra.mxu0 0.0
  %4322 = vmatprep.subr.mxu0 0.0
  %4323 = vmatpush1.msra.mxu0 0.0
  %4324 = vmatprep.subr.mxu0 0.0
  %4325 = vmatpush1.msra.mxu0 0.0
  %4326 = vmatprep.subr.mxu0 0.0
  %4327 = vmatpush1.msra.mxu0 0.0
  %4328 = vmatprep.subr.mxu0 0.0
  %4329 = vmatpush1.msra.mxu0 0.0
  %4330 = vmatprep.subr.mxu0 0.0
  %4331 = vmatpush1.msra.mxu0 0.0
  %4332 = vmatprep.subr.mxu0 0.0
  %4333 = vmatpush1.msra.mxu0 0.0
  %4334 = vmatprep.subr.mxu0 0.0
  %4335 = vmatpush1.msra.mxu0 0.0
  %4336 = vmatprep.subr.mxu0 0.0
  %4337 = vmatpush1.msra.mxu0 0.0
  %4338 = vmatprep.subr.mxu0 0.0
  %4339 = vmatpush1.msra.mxu0 0.0
  %4340 = vmatprep.subr.mxu0 0.0
  %4341 = vmatpush1.msra.mxu0 0.0
  %4342 = vmatprep.subr.mxu0 0.0
  %4343 = vmatpush1.msra.mxu0 0.0
  %4344 = vmatprep.subr.mxu0 0.0
  %4345 = vmatpush1.msra.mxu0 0.0
  %4346 = vmatprep.subr.mxu0 0.0
  %4347 = vmatpush1.msra.mxu0 0.0
  %4348 = vmatprep.subr.mxu0 0.0
  %4349 = vmatpush1.msra.mxu0 0.0
  %4350 = vmatprep.subr.mxu0 0.0
  %4351 = vmatpush1.msra.mxu0 0.0
  %4352 = vmatprep.subr.mxu0 0.0
  %4353 = vmatpush1.msra.mxu0 0.0
  %4354 = vmatprep.subr.mxu0 0.0
  %4355 = vmatpush1.msra.mxu0 0.0
  %4356 = vmatprep.subr.mxu0 0.0
  %4357 = vmatpush1.msra.mxu0 0.0
  %4358 = vmatprep.subr.mxu0 0.0
  %4359 = vmatpush1.msra.mxu0 0.0
  %4360 = vmatprep.mubr.f32.mxu0 0.0
  %4361 = vmatmul.mubr.f32.gmra.mrb[0].mxu0 %v2612
  %v4362 = vpop.f32.mrb[0].mxu0
  %v4363 = vadd.f32 0.0, %v4362
  %v4364 = vpop.f32.mrb[0].mxu0
  %v4365 = vadd.f32 0.0, %v4364
  %4366 = vmatprep.mubr.f32.mxu0 0.0
  %4367 = vmatmul.mubr.f32.gmra.mrb[0].mxu0 %v2615
  %v4368 = vpop.f32.mrb[0].mxu0
  %v4369 = vadd.f32 0.0, %v4368
  %v4370 = vpop.f32.mrb[0].mxu0
  %v4371 = vadd.f32 0.0, %v4370
  %4372 = vmatprep.mubr.f32.mxu0 0.0
  %4373 = vmatmul.mubr.f32.gmra.mrb[0].mxu0 %v2618
  %v4374 = vpop.f32.mrb[0].mxu0
  %v4375 = vadd.f32 0.0, %v4374
  %v4376 = vpop.f32.mrb[0].mxu0
  %v4377 = vadd.f32 0.0, %v4376
  %4378 = vmatprep.mubr.f32.mxu0 0.0
  %4379 = vmatmul.mubr.f32.gmra.mrb[0].mxu0 %v2621
  %v4380 = vpop.f32.mrb[0].mxu0
  %v4381 = vadd.f32 0.0, %v4380
  %v4382 = vpop.f32.mrb[0].mxu0
  %v4383 = vadd.f32 0.0, %v4382
  %4384 = vmatprep.mubr.f32.mxu0 0.0
  %4385 = vmatmul.mubr.f32.gmra.mrb[0].mxu0 %v2624
  %v4386 = vpop.f32.mrb[0].mxu0
  %v4387 = vadd.f32 0.0, %v4386
  %v4388 = vpop.f32.mrb[0].mxu0
  %v4389 = vadd.f32 0.0, %v4388
  %4390 = vmatprep.mubr.f32.mxu0 0.0
  %4391 = vmatmul.mubr.f32.gmra.mrb[0].mxu0 %v2627
  %v4392 = vpop.f32.mrb[0].mxu0
  %v4393 = vadd.f32 0.0, %v4392
  %v4394 = vpop.f32.mrb[0].mxu0
  %v4395 = vadd.f32 0.0, %v4394
  %4396 = vmatprep.mubr.f32.mxu0 0.0
  %4397 = vmatmul.mubr.f32.gmra.mrb[0].mxu0 %v2630
  %v4398 = vpop.f32.mrb[0].mxu0
  %v4399 = vadd.f32 0.0, %v4398
  %v4400 = vpop.f32.mrb[0].mxu0
  %v4401 = vadd.f32 0.0, %v4400
  %4402 = vmatprep.mubr.f32.mxu0 0.0
  %4403 = vmatmul.mubr.f32.gmra.mrb[0].mxu0 %v2633
  %v4404 = vpop.f32.mrb[0].mxu0
  %v4405 = vadd.f32 0.0, %v4404
  %v4406 = vpop.f32.mrb[0].mxu0
  %v4407 = vadd.f32 0.0, %v4406
  %4408 = vdwg.mxu0
  %4409 = vmatprep.subr.mxu0 %v2387
  %4410 = vmatpush1.msra.mxu0 %v2385
  %4411 = vmatprep.subr.mxu0 0.0
  %4412 = vmatpush1.msra.mxu0 0.0
  %4413 = vmatprep.subr.mxu0 0.0
  %4414 = vmatpush1.msra.mxu0 0.0
  %4415 = vmatprep.subr.mxu0 0.0
  %4416 = vmatpush1.msra.mxu0 0.0
  %4417 = vmatprep.subr.mxu0 0.0
  %4418 = vmatpush1.msra.mxu0 0.0
  %4419 = vmatprep.subr.mxu0 0.0
  %4420 = vmatpush1.msra.mxu0 0.0
  %4421 = vmatprep.subr.mxu0 0.0
  %4422 = vmatpush1.msra.mxu0 0.0
  %4423 = vmatprep.subr.mxu0 0.0
  %4424 = vmatpush1.msra.mxu0 0.0
  %4425 = vmatprep.subr.mxu0 0.0
  %4426 = vmatpush1.msra.mxu0 0.0
  %4427 = vmatprep.subr.mxu0 0.0
  %4428 = vmatpush1.msra.mxu0 0.0
  %4429 = vmatprep.subr.mxu0 0.0
  %4430 = vmatpush1.msra.mxu0 0.0
  %4431 = vmatprep.subr.mxu0 0.0
  %4432 = vmatpush1.msra.mxu0 0.0
  %4433 = vmatprep.subr.mxu0 0.0
  %4434 = vmatpush1.msra.mxu0 0.0
  %4435 = vmatprep.subr.mxu0 0.0
  %4436 = vmatpush1.msra.mxu0 0.0
  %4437 = vmatprep.subr.mxu0 0.0
  %4438 = vmatpush1.msra.mxu0 0.0
  %4439 = vmatprep.subr.mxu0 0.0
  %4440 = vmatpush1.msra.mxu0 0.0
  %4441 = vmatprep.subr.mxu0 0.0
  %4442 = vmatpush1.msra.mxu0 0.0
  %4443 = vmatprep.subr.mxu0 0.0
  %4444 = vmatpush1.msra.mxu0 0.0
  %4445 = vmatprep.subr.mxu0 0.0
  %4446 = vmatpush1.msra.mxu0 0.0
  %4447 = vmatprep.subr.mxu0 0.0
  %4448 = vmatpush1.msra.mxu0 0.0
  %4449 = vmatprep.subr.mxu0 0.0
  %4450 = vmatpush1.msra.mxu0 0.0
  %4451 = vmatprep.subr.mxu0 0.0
  %4452 = vmatpush1.msra.mxu0 0.0
  %4453 = vmatprep.subr.mxu0 0.0
  %4454 = vmatpush1.msra.mxu0 0.0
  %4455 = vmatprep.subr.mxu0 0.0
  %4456 = vmatpush1.msra.mxu0 0.0
  %4457 = vmatprep.subr.mxu0 0.0
  %4458 = vmatpush1.msra.mxu0 0.0
  %4459 = vmatprep.subr.mxu0 0.0
  %4460 = vmatpush1.msra.mxu0 0.0
  %4461 = vmatprep.subr.mxu0 0.0
  %4462 = vmatpush1.msra.mxu0 0.0
  %4463 = vmatprep.subr.mxu0 0.0
  %4464 = vmatpush1.msra.mxu0 0.0
  %4465 = vmatprep.subr.mxu0 0.0
  %4466 = vmatpush1.msra.mxu0 0.0
  %4467 = vmatprep.subr.mxu0 0.0
  %4468 = vmatpush1.msra.mxu0 0.0
  %4469 = vmatprep.subr.mxu0 0.0
  %4470 = vmatpush1.msra.mxu0 0.0
  %4471 = vmatprep.subr.mxu0 0.0
  %4472 = vmatpush1.msra.mxu0 0.0
  %4473 = vmatprep.mubr.f32.mxu0 0.0
  %4474 = vmatmul.mubr.f32.gmra.mrb[0].mxu0 %v2612
  %v4475 = vpop.f32.mrb[0].mxu0
  %v4476 = vadd.f32 0.0, %v4475
  %v4477 = vpop.f32.mrb[0].mxu0
  %v4478 = vadd.f32 0.0, %v4477
  %4479 = vmatprep.mubr.f32.mxu0 0.0
  %4480 = vmatmul.mubr.f32.gmra.mrb[0].mxu0 %v2615
  %v4481 = vpop.f32.mrb[0].mxu0
  %v4482 = vadd.f32 0.0, %v4481
  %v4483 = vpop.f32.mrb[0].mxu0
  %v4484 = vadd.f32 0.0, %v4483
  %4485 = vmatprep.mubr.f32.mxu0 0.0
  %4486 = vmatmul.mubr.f32.gmra.mrb[0].mxu0 %v2618
  %v4487 = vpop.f32.mrb[0].mxu0
  %v4488 = vadd.f32 0.0, %v4487
  %v4489 = vpop.f32.mrb[0].mxu0
  %v4490 = vadd.f32 0.0, %v4489
  %4491 = vmatprep.mubr.f32.mxu0 0.0
  %4492 = vmatmul.mubr.f32.gmra.mrb[0].mxu0 %v2621
  %v4493 = vpop.f32.mrb[0].mxu0
  %v4494 = vadd.f32 0.0, %v4493
  %v4495 = vpop.f32.mrb[0].mxu0
  %v4496 = vadd.f32 0.0, %v4495
  %4497 = vmatprep.mubr.f32.mxu0 0.0
  %4498 = vmatmul.mubr.f32.gmra.mrb[0].mxu0 %v2624
  %v4499 = vpop.f32.mrb[0].mxu0
  %v4500 = vadd.f32 0.0, %v4499
  %v4501 = vpop.f32.mrb[0].mxu0
  %v4502 = vadd.f32 0.0, %v4501
  %4503 = vmatprep.mubr.f32.mxu0 0.0
  %4504 = vmatmul.mubr.f32.gmra.mrb[0].mxu0 %v2627
  %v4505 = vpop.f32.mrb[0].mxu0
  %v4506 = vadd.f32 0.0, %v4505
  %v4507 = vpop.f32.mrb[0].mxu0
  %v4508 = vadd.f32 0.0, %v4507
  %4509 = vmatprep.mubr.f32.mxu0 0.0
  %4510 = vmatmul.mubr.f32.gmra.mrb[0].mxu0 %v2630
  %v4511 = vpop.f32.mrb[0].mxu0
  %v4512 = vadd.f32 0.0, %v4511
  %v4513 = vpop.f32.mrb[0].mxu0
  %v4514 = vadd.f32 0.0, %v4513
  %4515 = vmatprep.mubr.f32.mxu0 0.0
  %4516 = vmatmul.mubr.f32.gmra.mrb[0].mxu0 %v2633
  %v4517 = vpop.f32.mrb[0].mxu0
  %v4518 = vadd.f32 0.0, %v4517
  %v4519 = vpop.f32.mrb[0].mxu0
  %v4520 = vadd.f32 0.0, %v4519
  %4521 = vdwg.mxu0
  %4522 = vmatprep.subr.mxu0 %v2440
  %4523 = vmatpush1.msra.mxu0 %v2438
  %4524 = vmatprep.subr.mxu0 0.0
  %4525 = vmatpush1.msra.mxu0 0.0
  %4526 = vmatprep.subr.mxu0 0.0
  %4527 = vmatpush1.msra.mxu0 0.0
  %4528 = vmatprep.subr.mxu0 0.0
  %4529 = vmatpush1.msra.mxu0 0.0
  %4530 = vmatprep.subr.mxu0 0.0
  %4531 = vmatpush1.msra.mxu0 0.0
  %4532 = vmatprep.subr.mxu0 0.0
  %4533 = vmatpush1.msra.mxu0 0.0
  %4534 = vmatprep.subr.mxu0 0.0
  %4535 = vmatpush1.msra.mxu0 0.0
  %4536 = vmatprep.subr.mxu0 0.0
  %4537 = vmatpush1.msra.mxu0 0.0
  %4538 = vmatprep.subr.mxu0 0.0
  %4539 = vmatpush1.msra.mxu0 0.0
  %4540 = vmatprep.subr.mxu0 0.0
  %4541 = vmatpush1.msra.mxu0 0.0
  %4542 = vmatprep.subr.mxu0 0.0
  %4543 = vmatpush1.msra.mxu0 0.0
  %4544 = vmatprep.subr.mxu0 0.0
  %4545 = vmatpush1.msra.mxu0 0.0
  %4546 = vmatprep.subr.mxu0 0.0
  %4547 = vmatpush1.msra.mxu0 0.0
  %4548 = vmatprep.subr.mxu0 0.0
  %4549 = vmatpush1.msra.mxu0 0.0
  %4550 = vmatprep.subr.mxu0 0.0
  %4551 = vmatpush1.msra.mxu0 0.0
  %4552 = vmatprep.subr.mxu0 0.0
  %4553 = vmatpush1.msra.mxu0 0.0
  %4554 = vmatprep.subr.mxu0 0.0
  %4555 = vmatpush1.msra.mxu0 0.0
  %4556 = vmatprep.subr.mxu0 0.0
  %4557 = vmatpush1.msra.mxu0 0.0
  %4558 = vmatprep.subr.mxu0 0.0
  %4559 = vmatpush1.msra.mxu0 0.0
  %4560 = vmatprep.subr.mxu0 0.0
  %4561 = vmatpush1.msra.mxu0 0.0
  %4562 = vmatprep.subr.mxu0 0.0
  %4563 = vmatpush1.msra.mxu0 0.0
  %4564 = vmatprep.subr.mxu0 0.0
  %4565 = vmatpush1.msra.mxu0 0.0
  %4566 = vmatprep.subr.mxu0 0.0
  %4567 = vmatpush1.msra.mxu0 0.0
  %4568 = vmatprep.subr.mxu0 0.0
  %4569 = vmatpush1.msra.mxu0 0.0
  %4570 = vmatprep.subr.mxu0 0.0
  %4571 = vmatpush1.msra.mxu0 0.0
  %4572 = vmatprep.subr.mxu0 0.0
  %4573 = vmatpush1.msra.mxu0 0.0
  %4574 = vmatprep.subr.mxu0 0.0
  %4575 = vmatpush1.msra.mxu0 0.0
  %4576 = vmatprep.subr.mxu0 0.0
  %4577 = vmatpush1.msra.mxu0 0.0
  %4578 = vmatprep.subr.mxu0 0.0
  %4579 = vmatpush1.msra.mxu0 0.0
  %4580 = vmatprep.subr.mxu0 0.0
  %4581 = vmatpush1.msra.mxu0 0.0
  %4582 = vmatprep.subr.mxu0 0.0
  %4583 = vmatpush1.msra.mxu0 0.0
  %4584 = vmatprep.subr.mxu0 0.0
  %4585 = vmatpush1.msra.mxu0 0.0
  %4586 = vmatprep.mubr.f32.mxu0 0.0
  %4587 = vmatmul.mubr.f32.gmra.mrb[0].mxu0 %v2612
  %v4588 = vpop.f32.mrb[0].mxu0
  %v4589 = vadd.f32 0.0, %v4588
  %v4590 = vpop.f32.mrb[0].mxu0
  %v4591 = vadd.f32 0.0, %v4590
  %4592 = vmatprep.mubr.f32.mxu0 0.0
  %4593 = vmatmul.mubr.f32.gmra.mrb[0].mxu0 %v2615
  %v4594 = vpop.f32.mrb[0].mxu0
  %v4595 = vadd.f32 0.0, %v4594
  %v4596 = vpop.f32.mrb[0].mxu0
  %v4597 = vadd.f32 0.0, %v4596
  %4598 = vmatprep.mubr.f32.mxu0 0.0
  %4599 = vmatmul.mubr.f32.gmra.mrb[0].mxu0 %v2618
  %v4600 = vpop.f32.mrb[0].mxu0
  %v4601 = vadd.f32 0.0, %v4600
  %v4602 = vpop.f32.mrb[0].mxu0
  %v4603 = vadd.f32 0.0, %v4602
  %4604 = vmatprep.mubr.f32.mxu0 0.0
  %4605 = vmatmul.mubr.f32.gmra.mrb[0].mxu0 %v2621
  %v4606 = vpop.f32.mrb[0].mxu0
  %v4607 = vadd.f32 0.0, %v4606
  %v4608 = vpop.f32.mrb[0].mxu0
  %v4609 = vadd.f32 0.0, %v4608
  %4610 = vmatprep.mubr.f32.mxu0 0.0
  %4611 = vmatmul.mubr.f32.gmra.mrb[0].mxu0 %v2624
  %v4612 = vpop.f32.mrb[0].mxu0
  %v4613 = vadd.f32 0.0, %v4612
  %v4614 = vpop.f32.mrb[0].mxu0
  %v4615 = vadd.f32 0.0, %v4614
  %4616 = vmatprep.mubr.f32.mxu0 0.0
  %4617 = vmatmul.mubr.f32.gmra.mrb[0].mxu0 %v2627
  %v4618 = vpop.f32.mrb[0].mxu0
  %v4619 = vadd.f32 0.0, %v4618
  %v4620 = vpop.f32.mrb[0].mxu0
  %v4621 = vadd.f32 0.0, %v4620
  %4622 = vmatprep.mubr.f32.mxu0 0.0
  %4623 = vmatmul.mubr.f32.gmra.mrb[0].mxu0 %v2630
  %v4624 = vpop.f32.mrb[0].mxu0
  %v4625 = vadd.f32 0.0, %v4624
  %v4626 = vpop.f32.mrb[0].mxu0
  %v4627 = vadd.f32 0.0, %v4626
  %4628 = vmatprep.mubr.f32.mxu0 0.0
  %4629 = vmatmul.mubr.f32.gmra.mrb[0].mxu0 %v2633
  %v4630 = vpop.f32.mrb[0].mxu0
  %v4631 = vadd.f32 0.0, %v4630
  %v4632 = vpop.f32.mrb[0].mxu0
  %v4633 = vadd.f32 0.0, %v4632
  %4634 = vdwg.mxu0
  %v4635 = vmul.f32 %v3798, %v2578
  %v4636 = vmul.f32 %v3800, %v2579
  %v4637 = vmul.f32 %v3911, %v2580
  %v4638 = vmul.f32 %v3913, %v2581
  %v4639 = vmul.f32 %v3804, %v2582
  %v4640 = vmul.f32 %v3806, %v2583
  %v4641 = vmul.f32 %v3917, %v2584
  %v4642 = vmul.f32 %v3919, %v2585
  %v4643 = vmul.f32 %v3810, %v2586
  %v4644 = vmul.f32 %v3812, %v2587
  %v4645 = vmul.f32 %v3923, %v2588
  %v4646 = vmul.f32 %v3925, %v2589
  %v4647 = vmul.f32 %v3816, %v2590
  %v4648 = vmul.f32 %v3818, %v2591
  %v4649 = vmul.f32 %v3929, %v2592
  %v4650 = vmul.f32 %v3931, %v2593
  %v4651 = vmul.f32 %v3822, %v2594
  %v4652 = vmul.f32 %v3824, %v2595
  %v4653 = vmul.f32 %v3935, %v2596
  %v4654 = vmul.f32 %v3937, %v2597
  %v4655 = vmul.f32 %v3828, %v2598
  %v4656 = vmul.f32 %v3830, %v2599
  %v4657 = vmul.f32 %v3941, %v2600
  %v4658 = vmul.f32 %v3943, %v2601
  %v4659 = vmul.f32 %v3834, %v2602
  %v4660 = vmul.f32 %v3836, %v2603
  %v4661 = vmul.f32 %v3947, %v2604
  %v4662 = vmul.f32 %v3949, %v2605
  %v4663 = vmul.f32 %v3840, %v2606
  %v4664 = vmul.f32 %v3842, %v2607
  %v4665 = vmul.f32 %v3953, %v2608
  %v4666 = vmul.f32 %v3955, %v2609
  %v4667 = vmul.f32 %v4024, %v2578
  %v4668 = vmul.f32 %v4026, %v2579
  %v4669 = vmul.f32 %v4137, %v2580
  %v4670 = vmul.f32 %v4139, %v2581
  %v4671 = vmul.f32 %v4030, %v2582
  %v4672 = vmul.f32 %v4032, %v2583
  %v4673 = vmul.f32 %v4143, %v2584
  %v4674 = vmul.f32 %v4145, %v2585
  %v4675 = vmul.f32 %v4036, %v2586
  %v4676 = vmul.f32 %v4038, %v2587
  %v4677 = vmul.f32 %v4149, %v2588
  %v4678 = vmul.f32 %v4151, %v2589
  %v4679 = vmul.f32 %v4042, %v2590
  %v4680 = vmul.f32 %v4044, %v2591
  %v4681 = vmul.f32 %v4155, %v2592
  %v4682 = vmul.f32 %v4157, %v2593
  %v4683 = vmul.f32 %v4048, %v2594
  %v4684 = vmul.f32 %v4050, %v2595
  %v4685 = vmul.f32 %v4161, %v2596
  %v4686 = vmul.f32 %v4163, %v2597
  %v4687 = vmul.f32 %v4054, %v2598
  %v4688 = vmul.f32 %v4056, %v2599
  %v4689 = vmul.f32 %v4167, %v2600
  %v4690 = vmul.f32 %v4169, %v2601
  %v4691 = vmul.f32 %v4060, %v2602
  %v4692 = vmul.f32 %v4062, %v2603
  %v4693 = vmul.f32 %v4173, %v2604
  %v4694 = vmul.f32 %v4175, %v2605
  %v4695 = vmul.f32 %v4066, %v2606
  %v4696 = vmul.f32 %v4068, %v2607
  %v4697 = vmul.f32 %v4179, %v2608
  %v4698 = vmul.f32 %v4181, %v2609
  %v4699 = vmul.f32 %v4250, %v2578
  %v4700 = vmul.f32 %v4252, %v2579
  %v4701 = vmul.f32 %v4363, %v2580
  %v4702 = vmul.f32 %v4365, %v2581
  %v4703 = vmul.f32 %v4256, %v2582
  %v4704 = vmul.f32 %v4258, %v2583
  %v4705 = vmul.f32 %v4369, %v2584
  %v4706 = vmul.f32 %v4371, %v2585
  %v4707 = vmul.f32 %v4262, %v2586
  %v4708 = vmul.f32 %v4264, %v2587
  %v4709 = vmul.f32 %v4375, %v2588
  %v4710 = vmul.f32 %v4377, %v2589
  %v4711 = vmul.f32 %v4268, %v2590
  %v4712 = vmul.f32 %v4270, %v2591
  %v4713 = vmul.f32 %v4381, %v2592
  %v4714 = vmul.f32 %v4383, %v2593
  %v4715 = vmul.f32 %v4274, %v2594
  %v4716 = vmul.f32 %v4276, %v2595
  %v4717 = vmul.f32 %v4387, %v2596
  %v4718 = vmul.f32 %v4389, %v2597
  %v4719 = vmul.f32 %v4280, %v2598
  %v4720 = vmul.f32 %v4282, %v2599
  %v4721 = vmul.f32 %v4393, %v2600
  %v4722 = vmul.f32 %v4395, %v2601
  %v4723 = vmul.f32 %v4286, %v2602
  %v4724 = vmul.f32 %v4288, %v2603
  %v4725 = vmul.f32 %v4399, %v2604
  %v4726 = vmul.f32 %v4401, %v2605
  %v4727 = vmul.f32 %v4292, %v2606
  %v4728 = vmul.f32 %v4294, %v2607
  %v4729 = vmul.f32 %v4405, %v2608
  %v4730 = vmul.f32 %v4407, %v2609
  %v4731 = vmul.f32 %v4476, %v2578
  %v4732 = vmul.f32 %v4478, %v2579
  %v4733 = vmul.f32 %v4589, %v2580
  %v4734 = vmul.f32 %v4591, %v2581
  %v4735 = vmul.f32 %v4482, %v2582
  %v4736 = vmul.f32 %v4484, %v2583
  %v4737 = vmul.f32 %v4595, %v2584
  %v4738 = vmul.f32 %v4597, %v2585
  %v4739 = vmul.f32 %v4488, %v2586
  %v4740 = vmul.f32 %v4490, %v2587
  %v4741 = vmul.f32 %v4601, %v2588
  %v4742 = vmul.f32 %v4603, %v2589
  %v4743 = vmul.f32 %v4494, %v2590
  %v4744 = vmul.f32 %v4496, %v2591
  %v4745 = vmul.f32 %v4607, %v2592
  %v4746 = vmul.f32 %v4609, %v2593
  %v4747 = vmul.f32 %v4500, %v2594
  %v4748 = vmul.f32 %v4502, %v2595
  %v4749 = vmul.f32 %v4613, %v2596
  %v4750 = vmul.f32 %v4615, %v2597
  %v4751 = vmul.f32 %v4506, %v2598
  %v4752 = vmul.f32 %v4508, %v2599
  %v4753 = vmul.f32 %v4619, %v2600
  %v4754 = vmul.f32 %v4621, %v2601
  %v4755 = vmul.f32 %v4512, %v2602
  %v4756 = vmul.f32 %v4514, %v2603
  %v4757 = vmul.f32 %v4625, %v2604
  %v4758 = vmul.f32 %v4627, %v2605
  %v4759 = vmul.f32 %v4518, %v2606
  %v4760 = vmul.f32 %v4520, %v2607
  %v4761 = vmul.f32 %v4631, %v2608
  %v4762 = vmul.f32 %v4633, %v2609
  %v4763 = vpack.c.bf16 %v4639, %v4635
  %v4764 = vpack.c.bf16 %v4640, %v4636
  %v4765 = vpack.c.bf16 %v4641, %v4637
  %v4766 = vpack.c.bf16 %v4642, %v4638
  %v4767 = vpack.c.bf16 %v4647, %v4643
  %v4768 = vpack.c.bf16 %v4648, %v4644
  %v4769 = vpack.c.bf16 %v4649, %v4645
  %v4770 = vpack.c.bf16 %v4650, %v4646
  %v4771 = vpack.c.bf16 %v4655, %v4651
  %v4772 = vpack.c.bf16 %v4656, %v4652
  %v4773 = vpack.c.bf16 %v4657, %v4653
  %v4774 = vpack.c.bf16 %v4658, %v4654
  %v4775 = vpack.c.bf16 %v4663, %v4659
  %v4776 = vpack.c.bf16 %v4664, %v4660
  %v4777 = vpack.c.bf16 %v4665, %v4661
  %v4778 = vpack.c.bf16 %v4666, %v4662
  %v4779 = vpack.c.bf16 %v4671, %v4667
  %v4780 = vpack.c.bf16 %v4672, %v4668
  %v4781 = vpack.c.bf16 %v4673, %v4669
  %v4782 = vpack.c.bf16 %v4674, %v4670
  %v4783 = vpack.c.bf16 %v4679, %v4675
  %v4784 = vpack.c.bf16 %v4680, %v4676
  %v4785 = vpack.c.bf16 %v4681, %v4677
  %v4786 = vpack.c.bf16 %v4682, %v4678
  %v4787 = vpack.c.bf16 %v4687, %v4683
  %v4788 = vpack.c.bf16 %v4688, %v4684
  %v4789 = vpack.c.bf16 %v4689, %v4685
  %v4790 = vpack.c.bf16 %v4690, %v4686
  %v4791 = vpack.c.bf16 %v4695, %v4691
  %v4792 = vpack.c.bf16 %v4696, %v4692
  %v4793 = vpack.c.bf16 %v4697, %v4693
  %v4794 = vpack.c.bf16 %v4698, %v4694
  %v4795 = vpack.c.bf16 %v4703, %v4699
  %v4796 = vpack.c.bf16 %v4704, %v4700
  %v4797 = vpack.c.bf16 %v4705, %v4701
  %v4798 = vpack.c.bf16 %v4706, %v4702
  %v4799 = vpack.c.bf16 %v4711, %v4707
  %v4800 = vpack.c.bf16 %v4712, %v4708
  %v4801 = vpack.c.bf16 %v4713, %v4709
  %v4802 = vpack.c.bf16 %v4714, %v4710
  %v4803 = vpack.c.bf16 %v4719, %v4715
  %v4804 = vpack.c.bf16 %v4720, %v4716
  %v4805 = vpack.c.bf16 %v4721, %v4717
  %v4806 = vpack.c.bf16 %v4722, %v4718
  %v4807 = vpack.c.bf16 %v4727, %v4723
  %v4808 = vpack.c.bf16 %v4728, %v4724
  %v4809 = vpack.c.bf16 %v4729, %v4725
  %v4810 = vpack.c.bf16 %v4730, %v4726
  %v4811 = vpack.c.bf16 %v4735, %v4731
  %v4812 = vpack.c.bf16 %v4736, %v4732
  %v4813 = vpack.c.bf16 %v4737, %v4733
  %v4814 = vpack.c.bf16 %v4738, %v4734
  %v4815 = vpack.c.bf16 %v4743, %v4739
  %v4816 = vpack.c.bf16 %v4744, %v4740
  %v4817 = vpack.c.bf16 %v4745, %v4741
  %v4818 = vpack.c.bf16 %v4746, %v4742
  %v4819 = vpack.c.bf16 %v4751, %v4747
  %v4820 = vpack.c.bf16 %v4752, %v4748
  %v4821 = vpack.c.bf16 %v4753, %v4749
  %v4822 = vpack.c.bf16 %v4754, %v4750
  %v4823 = vpack.c.bf16 %v4759, %v4755
  %v4824 = vpack.c.bf16 %v4760, %v4756
  %v4825 = vpack.c.bf16 %v4761, %v4757
  %v4826 = vpack.c.bf16 %v4762, %v4758
  %4827 = vmatprep.subr.bf16.mxu0 %v3668
  %4828 = vmatpush1.bf16.xpose.msra.mxu0 %v3667
  %4829 = vmatprep.subr.bf16.mxu0 %v3672
  %4830 = vmatpush1.bf16.xpose.msra.mxu0 %v3671
  %4831 = vmatprep.subr.bf16.mxu0 %v3676
  %4832 = vmatpush1.bf16.xpose.msra.mxu0 %v3675
  %4833 = vmatprep.subr.bf16.mxu0 %v3680
  %4834 = vmatpush1.bf16.xpose.msra.mxu0 %v3679
  %4835 = vmatprep.subr.bf16.mxu0 0
  %4836 = vmatpush1.bf16.xpose.msra.mxu0 0
  %4837 = vmatprep.subr.bf16.mxu0 0
  %4838 = vmatpush1.bf16.xpose.msra.mxu0 0
  %4839 = vmatprep.subr.bf16.mxu0 0
  %4840 = vmatpush1.bf16.xpose.msra.mxu0 0
  %4841 = vmatprep.subr.bf16.mxu0 0
  %4842 = vmatpush1.bf16.xpose.msra.mxu0 0
  %4843 = vmatprep.subr.bf16.mxu0 0
  %4844 = vmatpush1.bf16.xpose.msra.mxu0 0
  %4845 = vmatprep.subr.bf16.mxu0 0
  %4846 = vmatpush1.bf16.xpose.msra.mxu0 0
  %4847 = vmatprep.subr.bf16.mxu0 0
  %4848 = vmatpush1.bf16.xpose.msra.mxu0 0
  %4849 = vmatprep.subr.bf16.mxu0 0
  %4850 = vmatpush1.bf16.xpose.msra.mxu0 0
  %4851 = vmatprep.subr.bf16.mxu0 0
  %4852 = vmatpush1.bf16.xpose.msra.mxu0 0
  %4853 = vmatprep.subr.bf16.mxu0 0
  %4854 = vmatpush1.bf16.xpose.msra.mxu0 0
  %4855 = vmatprep.subr.bf16.mxu0 0
  %4856 = vmatpush1.bf16.xpose.msra.mxu0 0
  %4857 = vmatprep.subr.bf16.mxu0 0
  %4858 = vmatpush1.bf16.xpose.msra.mxu0 0
  %4859 = vmatprep.mubr.bf16.mxu0 %v2443
  %4860 = vmatmul.mubr.bf16.gmra.mrb[0].mxu0 %v2442
  %v4861 = vpop.f32.mrb[0].mxu0
  %v4862 = vadd.f32 0.0, %v4861
  %v4863 = vpop.f32.mrb[0].mxu0
  %v4864 = vpop.f32.mrb[0].mxu0
  %v4865 = vadd.f32 0.0, %v4864
  %v4866 = vpop.f32.mrb[0].mxu0
  %4867 = vmatprep.mubr.bf16.mxu0 %v2447
  %4868 = vmatmul.mubr.bf16.gmra.mrb[0].mxu0 %v2446
  %v4869 = vpop.f32.mrb[0].mxu0
  %v4870 = vadd.f32 0.0, %v4869
  %v4871 = vpop.f32.mrb[0].mxu0
  %v4872 = vpop.f32.mrb[0].mxu0
  %v4873 = vadd.f32 0.0, %v4872
  %v4874 = vpop.f32.mrb[0].mxu0
  %4875 = vmatprep.mubr.bf16.mxu0 %v2451
  %4876 = vmatmul.mubr.bf16.gmra.mrb[0].mxu0 %v2450
  %v4877 = vpop.f32.mrb[0].mxu0
  %v4878 = vadd.f32 0.0, %v4877
  %v4879 = vpop.f32.mrb[0].mxu0
  %v4880 = vpop.f32.mrb[0].mxu0
  %v4881 = vadd.f32 0.0, %v4880
  %v4882 = vpop.f32.mrb[0].mxu0
  %4883 = vmatprep.mubr.bf16.mxu0 %v2455
  %4884 = vmatmul.mubr.bf16.gmra.mrb[0].mxu0 %v2454
  %v4885 = vpop.f32.mrb[0].mxu0
  %v4886 = vadd.f32 0.0, %v4885
  %v4887 = vpop.f32.mrb[0].mxu0
  %v4888 = vpop.f32.mrb[0].mxu0
  %v4889 = vadd.f32 0.0, %v4888
  %v4890 = vpop.f32.mrb[0].mxu0
  %4891 = vmatprep.mubr.bf16.mxu0 %v2459
  %4892 = vmatmul.mubr.bf16.gmra.mrb[0].mxu0 %v2458
  %v4893 = vpop.f32.mrb[0].mxu0
  %v4894 = vadd.f32 0.0, %v4893
  %v4895 = vpop.f32.mrb[0].mxu0
  %v4896 = vpop.f32.mrb[0].mxu0
  %v4897 = vadd.f32 0.0, %v4896
  %v4898 = vpop.f32.mrb[0].mxu0
  %4899 = vmatprep.mubr.bf16.mxu0 %v2463
  %4900 = vmatmul.mubr.bf16.gmra.mrb[0].mxu0 %v2462
  %v4901 = vpop.f32.mrb[0].mxu0
  %v4902 = vadd.f32 0.0, %v4901
  %v4903 = vpop.f32.mrb[0].mxu0
  %v4904 = vpop.f32.mrb[0].mxu0
  %v4905 = vadd.f32 0.0, %v4904
  %v4906 = vpop.f32.mrb[0].mxu0
  %4907 = vmatprep.mubr.bf16.mxu0 %v2467
  %4908 = vmatmul.mubr.bf16.gmra.mrb[0].mxu0 %v2466
  %v4909 = vpop.f32.mrb[0].mxu0
  %v4910 = vadd.f32 0.0, %v4909
  %v4911 = vpop.f32.mrb[0].mxu0
  %v4912 = vpop.f32.mrb[0].mxu0
  %v4913 = vadd.f32 0.0, %v4912
  %v4914 = vpop.f32.mrb[0].mxu0
  %4915 = vmatprep.mubr.bf16.mxu0 %v2471
  %4916 = vmatmul.mubr.bf16.gmra.mrb[0].mxu0 %v2470
  %v4917 = vpop.f32.mrb[0].mxu0
  %v4918 = vadd.f32 0.0, %v4917
  %v4919 = vpop.f32.mrb[0].mxu0
  %v4920 = vpop.f32.mrb[0].mxu0
  %v4921 = vadd.f32 0.0, %v4920
  %v4922 = vpop.f32.mrb[0].mxu0
  %4923 = vdwg.mxu0
  %4924 = vmatprep.subr.bf16.mxu0 %v3670
  %4925 = vmatpush1.bf16.xpose.msra.mxu0 %v3669
  %4926 = vmatprep.subr.bf16.mxu0 %v3674
  %4927 = vmatpush1.bf16.xpose.msra.mxu0 %v3673
  %4928 = vmatprep.subr.bf16.mxu0 %v3678
  %4929 = vmatpush1.bf16.xpose.msra.mxu0 %v3677
  %4930 = vmatprep.subr.bf16.mxu0 %v3682
  %4931 = vmatpush1.bf16.xpose.msra.mxu0 %v3681
  %4932 = vmatprep.subr.bf16.mxu0 0
  %4933 = vmatpush1.bf16.xpose.msra.mxu0 0
  %4934 = vmatprep.subr.bf16.mxu0 0
  %4935 = vmatpush1.bf16.xpose.msra.mxu0 0
  %4936 = vmatprep.subr.bf16.mxu0 0
  %4937 = vmatpush1.bf16.xpose.msra.mxu0 0
  %4938 = vmatprep.subr.bf16.mxu0 0
  %4939 = vmatpush1.bf16.xpose.msra.mxu0 0
  %4940 = vmatprep.subr.bf16.mxu0 0
  %4941 = vmatpush1.bf16.xpose.msra.mxu0 0
  %4942 = vmatprep.subr.bf16.mxu0 0
  %4943 = vmatpush1.bf16.xpose.msra.mxu0 0
  %4944 = vmatprep.subr.bf16.mxu0 0
  %4945 = vmatpush1.bf16.xpose.msra.mxu0 0
  %4946 = vmatprep.subr.bf16.mxu0 0
  %4947 = vmatpush1.bf16.xpose.msra.mxu0 0
  %4948 = vmatprep.subr.bf16.mxu0 0
  %4949 = vmatpush1.bf16.xpose.msra.mxu0 0
  %4950 = vmatprep.subr.bf16.mxu0 0
  %4951 = vmatpush1.bf16.xpose.msra.mxu0 0
  %4952 = vmatprep.subr.bf16.mxu0 0
  %4953 = vmatpush1.bf16.xpose.msra.mxu0 0
  %4954 = vmatprep.subr.bf16.mxu0 0
  %4955 = vmatpush1.bf16.xpose.msra.mxu0 0
  %4956 = vmatprep.mubr.bf16.mxu0 %v2445
  %4957 = vmatmul.mubr.bf16.gmra.mrb[0].mxu0 %v2444
  %v4958 = vpop.f32.mrb[0].mxu0
  %v4959 = vadd.f32 %v4862, %v4958
  %v4960 = vpop.f32.mrb[0].mxu0
  %v4961 = vpop.f32.mrb[0].mxu0
  %v4962 = vadd.f32 %v4865, %v4961
  %v4963 = vpop.f32.mrb[0].mxu0
  %4964 = vmatprep.mubr.bf16.mxu0 %v2449
  %4965 = vmatmul.mubr.bf16.gmra.mrb[0].mxu0 %v2448
  %v4966 = vpop.f32.mrb[0].mxu0
  %v4967 = vadd.f32 %v4870, %v4966
  %v4968 = vpop.f32.mrb[0].mxu0
  %v4969 = vpop.f32.mrb[0].mxu0
  %v4970 = vadd.f32 %v4873, %v4969
  %v4971 = vpop.f32.mrb[0].mxu0
  %4972 = vmatprep.mubr.bf16.mxu0 %v2453
  %4973 = vmatmul.mubr.bf16.gmra.mrb[0].mxu0 %v2452
  %v4974 = vpop.f32.mrb[0].mxu0
  %v4975 = vadd.f32 %v4878, %v4974
  %v4976 = vpop.f32.mrb[0].mxu0
  %v4977 = vpop.f32.mrb[0].mxu0
  %v4978 = vadd.f32 %v4881, %v4977
  %v4979 = vpop.f32.mrb[0].mxu0
  %4980 = vmatprep.mubr.bf16.mxu0 %v2457
  %4981 = vmatmul.mubr.bf16.gmra.mrb[0].mxu0 %v2456
  %v4982 = vpop.f32.mrb[0].mxu0
  %v4983 = vadd.f32 %v4886, %v4982
  %v4984 = vpop.f32.mrb[0].mxu0
  %v4985 = vpop.f32.mrb[0].mxu0
  %v4986 = vadd.f32 %v4889, %v4985
  %v4987 = vpop.f32.mrb[0].mxu0
  %4988 = vmatprep.mubr.bf16.mxu0 %v2461
  %4989 = vmatmul.mubr.bf16.gmra.mrb[0].mxu0 %v2460
  %v4990 = vpop.f32.mrb[0].mxu0
  %v4991 = vadd.f32 %v4894, %v4990
  %v4992 = vpop.f32.mrb[0].mxu0
  %v4993 = vpop.f32.mrb[0].mxu0
  %v4994 = vadd.f32 %v4897, %v4993
  %v4995 = vpop.f32.mrb[0].mxu0
  %4996 = vmatprep.mubr.bf16.mxu0 %v2465
  %4997 = vmatmul.mubr.bf16.gmra.mrb[0].mxu0 %v2464
  %v4998 = vpop.f32.mrb[0].mxu0
  %v4999 = vadd.f32 %v4902, %v4998
  %v5000 = vpop.f32.mrb[0].mxu0
  %v5001 = vpop.f32.mrb[0].mxu0
  %v5002 = vadd.f32 %v4905, %v5001
  %v5003 = vpop.f32.mrb[0].mxu0
  %5004 = vmatprep.mubr.bf16.mxu0 %v2469
  %5005 = vmatmul.mubr.bf16.gmra.mrb[0].mxu0 %v2468
  %v5006 = vpop.f32.mrb[0].mxu0
  %v5007 = vadd.f32 %v4910, %v5006
  %v5008 = vpop.f32.mrb[0].mxu0
  %v5009 = vpop.f32.mrb[0].mxu0
  %v5010 = vadd.f32 %v4913, %v5009
  %v5011 = vpop.f32.mrb[0].mxu0
  %5012 = vmatprep.mubr.bf16.mxu0 %v2473
  %5013 = vmatmul.mubr.bf16.gmra.mrb[0].mxu0 %v2472
  %v5014 = vpop.f32.mrb[0].mxu0
  %v5015 = vadd.f32 %v4918, %v5014
  %v5016 = vpop.f32.mrb[0].mxu0
  %v5017 = vpop.f32.mrb[0].mxu0
  %v5018 = vadd.f32 %v4921, %v5017
  %v5019 = vpop.f32.mrb[0].mxu0
  %5020 = vdwg.mxu0
  %5021 = vmatprep.subr.bf16.mxu0 %v3684
  %5022 = vmatpush1.bf16.xpose.msra.mxu0 %v3683
  %5023 = vmatprep.subr.bf16.mxu0 %v3688
  %5024 = vmatpush1.bf16.xpose.msra.mxu0 %v3687
  %5025 = vmatprep.subr.bf16.mxu0 %v3692
  %5026 = vmatpush1.bf16.xpose.msra.mxu0 %v3691
  %5027 = vmatprep.subr.bf16.mxu0 %v3696
  %5028 = vmatpush1.bf16.xpose.msra.mxu0 %v3695
  %5029 = vmatprep.subr.bf16.mxu0 0
  %5030 = vmatpush1.bf16.xpose.msra.mxu0 0
  %5031 = vmatprep.subr.bf16.mxu0 0
  %5032 = vmatpush1.bf16.xpose.msra.mxu0 0
  %5033 = vmatprep.subr.bf16.mxu0 0
  %5034 = vmatpush1.bf16.xpose.msra.mxu0 0
  %5035 = vmatprep.subr.bf16.mxu0 0
  %5036 = vmatpush1.bf16.xpose.msra.mxu0 0
  %5037 = vmatprep.subr.bf16.mxu0 0
  %5038 = vmatpush1.bf16.xpose.msra.mxu0 0
  %5039 = vmatprep.subr.bf16.mxu0 0
  %5040 = vmatpush1.bf16.xpose.msra.mxu0 0
  %5041 = vmatprep.subr.bf16.mxu0 0
  %5042 = vmatpush1.bf16.xpose.msra.mxu0 0
  %5043 = vmatprep.subr.bf16.mxu0 0
  %5044 = vmatpush1.bf16.xpose.msra.mxu0 0
  %5045 = vmatprep.subr.bf16.mxu0 0
  %5046 = vmatpush1.bf16.xpose.msra.mxu0 0
  %5047 = vmatprep.subr.bf16.mxu0 0
  %5048 = vmatpush1.bf16.xpose.msra.mxu0 0
  %5049 = vmatprep.subr.bf16.mxu0 0
  %5050 = vmatpush1.bf16.xpose.msra.mxu0 0
  %5051 = vmatprep.subr.bf16.mxu0 0
  %5052 = vmatpush1.bf16.xpose.msra.mxu0 0
  %5053 = vmatprep.mubr.bf16.mxu0 %v2475
  %5054 = vmatmul.mubr.bf16.gmra.mrb[0].mxu0 %v2474
  %v5055 = vpop.f32.mrb[0].mxu0
  %v5056 = vadd.f32 0.0, %v5055
  %v5057 = vpop.f32.mrb[0].mxu0
  %v5058 = vpop.f32.mrb[0].mxu0
  %v5059 = vadd.f32 0.0, %v5058
  %v5060 = vpop.f32.mrb[0].mxu0
  %5061 = vmatprep.mubr.bf16.mxu0 %v2479
  %5062 = vmatmul.mubr.bf16.gmra.mrb[0].mxu0 %v2478
  %v5063 = vpop.f32.mrb[0].mxu0
  %v5064 = vadd.f32 0.0, %v5063
  %v5065 = vpop.f32.mrb[0].mxu0
  %v5066 = vpop.f32.mrb[0].mxu0
  %v5067 = vadd.f32 0.0, %v5066
  %v5068 = vpop.f32.mrb[0].mxu0
  %5069 = vmatprep.mubr.bf16.mxu0 %v2483
  %5070 = vmatmul.mubr.bf16.gmra.mrb[0].mxu0 %v2482
  %v5071 = vpop.f32.mrb[0].mxu0
  %v5072 = vadd.f32 0.0, %v5071
  %v5073 = vpop.f32.mrb[0].mxu0
  %v5074 = vpop.f32.mrb[0].mxu0
  %v5075 = vadd.f32 0.0, %v5074
  %v5076 = vpop.f32.mrb[0].mxu0
  %5077 = vmatprep.mubr.bf16.mxu0 %v2487
  %5078 = vmatmul.mubr.bf16.gmra.mrb[0].mxu0 %v2486
  %v5079 = vpop.f32.mrb[0].mxu0
  %v5080 = vadd.f32 0.0, %v5079
  %v5081 = vpop.f32.mrb[0].mxu0
  %v5082 = vpop.f32.mrb[0].mxu0
  %v5083 = vadd.f32 0.0, %v5082
  %v5084 = vpop.f32.mrb[0].mxu0
  %5085 = vmatprep.mubr.bf16.mxu0 %v2491
  %5086 = vmatmul.mubr.bf16.gmra.mrb[0].mxu0 %v2490
  %v5087 = vpop.f32.mrb[0].mxu0
  %v5088 = vadd.f32 0.0, %v5087
  %v5089 = vpop.f32.mrb[0].mxu0
  %v5090 = vpop.f32.mrb[0].mxu0
  %v5091 = vadd.f32 0.0, %v5090
  %v5092 = vpop.f32.mrb[0].mxu0
  %5093 = vmatprep.mubr.bf16.mxu0 %v2495
  %5094 = vmatmul.mubr.bf16.gmra.mrb[0].mxu0 %v2494
  %v5095 = vpop.f32.mrb[0].mxu0
  %v5096 = vadd.f32 0.0, %v5095
  %v5097 = vpop.f32.mrb[0].mxu0
  %v5098 = vpop.f32.mrb[0].mxu0
  %v5099 = vadd.f32 0.0, %v5098
  %v5100 = vpop.f32.mrb[0].mxu0
  %5101 = vmatprep.mubr.bf16.mxu0 %v2499
  %5102 = vmatmul.mubr.bf16.gmra.mrb[0].mxu0 %v2498
  %v5103 = vpop.f32.mrb[0].mxu0
  %v5104 = vadd.f32 0.0, %v5103
  %v5105 = vpop.f32.mrb[0].mxu0
  %v5106 = vpop.f32.mrb[0].mxu0
  %v5107 = vadd.f32 0.0, %v5106
  %v5108 = vpop.f32.mrb[0].mxu0
  %5109 = vmatprep.mubr.bf16.mxu0 %v2503
  %5110 = vmatmul.mubr.bf16.gmra.mrb[0].mxu0 %v2502
  %v5111 = vpop.f32.mrb[0].mxu0
  %v5112 = vadd.f32 0.0, %v5111
  %v5113 = vpop.f32.mrb[0].mxu0
  %v5114 = vpop.f32.mrb[0].mxu0
  %v5115 = vadd.f32 0.0, %v5114
  %v5116 = vpop.f32.mrb[0].mxu0
  %5117 = vdwg.mxu0
  %5118 = vmatprep.subr.bf16.mxu0 %v3686
  %5119 = vmatpush1.bf16.xpose.msra.mxu0 %v3685
  %5120 = vmatprep.subr.bf16.mxu0 %v3690
  %5121 = vmatpush1.bf16.xpose.msra.mxu0 %v3689
  %5122 = vmatprep.subr.bf16.mxu0 %v3694
  %5123 = vmatpush1.bf16.xpose.msra.mxu0 %v3693
  %5124 = vmatprep.subr.bf16.mxu0 %v3698
  %5125 = vmatpush1.bf16.xpose.msra.mxu0 %v3697
  %5126 = vmatprep.subr.bf16.mxu0 0
  %5127 = vmatpush1.bf16.xpose.msra.mxu0 0
  %5128 = vmatprep.subr.bf16.mxu0 0
  %5129 = vmatpush1.bf16.xpose.msra.mxu0 0
  %5130 = vmatprep.subr.bf16.mxu0 0
  %5131 = vmatpush1.bf16.xpose.msra.mxu0 0
  %5132 = vmatprep.subr.bf16.mxu0 0
  %5133 = vmatpush1.bf16.xpose.msra.mxu0 0
  %5134 = vmatprep.subr.bf16.mxu0 0
  %5135 = vmatpush1.bf16.xpose.msra.mxu0 0
  %5136 = vmatprep.subr.bf16.mxu0 0
  %5137 = vmatpush1.bf16.xpose.msra.mxu0 0
  %5138 = vmatprep.subr.bf16.mxu0 0
  %5139 = vmatpush1.bf16.xpose.msra.mxu0 0
  %5140 = vmatprep.subr.bf16.mxu0 0
  %5141 = vmatpush1.bf16.xpose.msra.mxu0 0
  %5142 = vmatprep.subr.bf16.mxu0 0
  %5143 = vmatpush1.bf16.xpose.msra.mxu0 0
  %5144 = vmatprep.subr.bf16.mxu0 0
  %5145 = vmatpush1.bf16.xpose.msra.mxu0 0
  %5146 = vmatprep.subr.bf16.mxu0 0
  %5147 = vmatpush1.bf16.xpose.msra.mxu0 0
  %5148 = vmatprep.subr.bf16.mxu0 0
  %5149 = vmatpush1.bf16.xpose.msra.mxu0 0
  %5150 = vmatprep.mubr.bf16.mxu0 %v2477
  %5151 = vmatmul.mubr.bf16.gmra.mrb[0].mxu0 %v2476
  %v5152 = vpop.f32.mrb[0].mxu0
  %v5153 = vadd.f32 %v5056, %v5152
  %v5154 = vpop.f32.mrb[0].mxu0
  %v5155 = vpop.f32.mrb[0].mxu0
  %v5156 = vadd.f32 %v5059, %v5155
  %v5157 = vpop.f32.mrb[0].mxu0
  %5158 = vmatprep.mubr.bf16.mxu0 %v2481
  %5159 = vmatmul.mubr.bf16.gmra.mrb[0].mxu0 %v2480
  %v5160 = vpop.f32.mrb[0].mxu0
  %v5161 = vadd.f32 %v5064, %v5160
  %v5162 = vpop.f32.mrb[0].mxu0
  %v5163 = vpop.f32.mrb[0].mxu0
  %v5164 = vadd.f32 %v5067, %v5163
  %v5165 = vpop.f32.mrb[0].mxu0
  %5166 = vmatprep.mubr.bf16.mxu0 %v2485
  %5167 = vmatmul.mubr.bf16.gmra.mrb[0].mxu0 %v2484
  %v5168 = vpop.f32.mrb[0].mxu0
  %v5169 = vadd.f32 %v5072, %v5168
  %v5170 = vpop.f32.mrb[0].mxu0
  %v5171 = vpop.f32.mrb[0].mxu0
  %v5172 = vadd.f32 %v5075, %v5171
  %v5173 = vpop.f32.mrb[0].mxu0
  %5174 = vmatprep.mubr.bf16.mxu0 %v2489
  %5175 = vmatmul.mubr.bf16.gmra.mrb[0].mxu0 %v2488
  %v5176 = vpop.f32.mrb[0].mxu0
  %v5177 = vadd.f32 %v5080, %v5176
  %v5178 = vpop.f32.mrb[0].mxu0
  %v5179 = vpop.f32.mrb[0].mxu0
  %v5180 = vadd.f32 %v5083, %v5179
  %v5181 = vpop.f32.mrb[0].mxu0
  %5182 = vmatprep.mubr.bf16.mxu0 %v2493
  %5183 = vmatmul.mubr.bf16.gmra.mrb[0].mxu0 %v2492
  %v5184 = vpop.f32.mrb[0].mxu0
  %v5185 = vadd.f32 %v5088, %v5184
  %v5186 = vpop.f32.mrb[0].mxu0
  %v5187 = vpop.f32.mrb[0].mxu0
  %v5188 = vadd.f32 %v5091, %v5187
  %v5189 = vpop.f32.mrb[0].mxu0
  %5190 = vmatprep.mubr.bf16.mxu0 %v2497
  %5191 = vmatmul.mubr.bf16.gmra.mrb[0].mxu0 %v2496
  %v5192 = vpop.f32.mrb[0].mxu0
  %v5193 = vadd.f32 %v5096, %v5192
  %v5194 = vpop.f32.mrb[0].mxu0
  %v5195 = vpop.f32.mrb[0].mxu0
  %v5196 = vadd.f32 %v5099, %v5195
  %v5197 = vpop.f32.mrb[0].mxu0
  %5198 = vmatprep.mubr.bf16.mxu0 %v2501
  %5199 = vmatmul.mubr.bf16.gmra.mrb[0].mxu0 %v2500
  %v5200 = vpop.f32.mrb[0].mxu0
  %v5201 = vadd.f32 %v5104, %v5200
  %v5202 = vpop.f32.mrb[0].mxu0
  %v5203 = vpop.f32.mrb[0].mxu0
  %v5204 = vadd.f32 %v5107, %v5203
  %v5205 = vpop.f32.mrb[0].mxu0
  %5206 = vmatprep.mubr.bf16.mxu0 %v2505
  %5207 = vmatmul.mubr.bf16.gmra.mrb[0].mxu0 %v2504
  %v5208 = vpop.f32.mrb[0].mxu0
  %v5209 = vadd.f32 %v5112, %v5208
  %v5210 = vpop.f32.mrb[0].mxu0
  %v5211 = vpop.f32.mrb[0].mxu0
  %v5212 = vadd.f32 %v5115, %v5211
  %v5213 = vpop.f32.mrb[0].mxu0
  %5214 = vdwg.mxu0
  %5215 = vmatprep.subr.bf16.mxu0 %v3700
  %5216 = vmatpush1.bf16.xpose.msra.mxu0 %v3699
  %5217 = vmatprep.subr.bf16.mxu0 %v3704
  %5218 = vmatpush1.bf16.xpose.msra.mxu0 %v3703
  %5219 = vmatprep.subr.bf16.mxu0 %v3708
  %5220 = vmatpush1.bf16.xpose.msra.mxu0 %v3707
  %5221 = vmatprep.subr.bf16.mxu0 %v3712
  %5222 = vmatpush1.bf16.xpose.msra.mxu0 %v3711
  %5223 = vmatprep.subr.bf16.mxu0 0
  %5224 = vmatpush1.bf16.xpose.msra.mxu0 0
  %5225 = vmatprep.subr.bf16.mxu0 0
  %5226 = vmatpush1.bf16.xpose.msra.mxu0 0
  %5227 = vmatprep.subr.bf16.mxu0 0
  %5228 = vmatpush1.bf16.xpose.msra.mxu0 0
  %5229 = vmatprep.subr.bf16.mxu0 0
  %5230 = vmatpush1.bf16.xpose.msra.mxu0 0
  %5231 = vmatprep.subr.bf16.mxu0 0
  %5232 = vmatpush1.bf16.xpose.msra.mxu0 0
  %5233 = vmatprep.subr.bf16.mxu0 0
  %5234 = vmatpush1.bf16.xpose.msra.mxu0 0
  %5235 = vmatprep.subr.bf16.mxu0 0
  %5236 = vmatpush1.bf16.xpose.msra.mxu0 0
  %5237 = vmatprep.subr.bf16.mxu0 0
  %5238 = vmatpush1.bf16.xpose.msra.mxu0 0
  %5239 = vmatprep.subr.bf16.mxu0 0
  %5240 = vmatpush1.bf16.xpose.msra.mxu0 0
  %5241 = vmatprep.subr.bf16.mxu0 0
  %5242 = vmatpush1.bf16.xpose.msra.mxu0 0
  %5243 = vmatprep.subr.bf16.mxu0 0
  %5244 = vmatpush1.bf16.xpose.msra.mxu0 0
  %5245 = vmatprep.subr.bf16.mxu0 0
  %5246 = vmatpush1.bf16.xpose.msra.mxu0 0
  %5247 = vmatprep.mubr.bf16.mxu0 %v2507
  %5248 = vmatmul.mubr.bf16.gmra.mrb[0].mxu0 %v2506
  %v5249 = vpop.f32.mrb[0].mxu0
  %v5250 = vadd.f32 0.0, %v5249
  %v5251 = vpop.f32.mrb[0].mxu0
  %v5252 = vpop.f32.mrb[0].mxu0
  %v5253 = vadd.f32 0.0, %v5252
  %v5254 = vpop.f32.mrb[0].mxu0
  %5255 = vmatprep.mubr.bf16.mxu0 %v2511
  %5256 = vmatmul.mubr.bf16.gmra.mrb[0].mxu0 %v2510
  %v5257 = vpop.f32.mrb[0].mxu0
  %v5258 = vadd.f32 0.0, %v5257
  %v5259 = vpop.f32.mrb[0].mxu0
  %v5260 = vpop.f32.mrb[0].mxu0
  %v5261 = vadd.f32 0.0, %v5260
  %v5262 = vpop.f32.mrb[0].mxu0
  %5263 = vmatprep.mubr.bf16.mxu0 %v2515
  %5264 = vmatmul.mubr.bf16.gmra.mrb[0].mxu0 %v2514
  %v5265 = vpop.f32.mrb[0].mxu0
  %v5266 = vadd.f32 0.0, %v5265
  %v5267 = vpop.f32.mrb[0].mxu0
  %v5268 = vpop.f32.mrb[0].mxu0
  %v5269 = vadd.f32 0.0, %v5268
  %v5270 = vpop.f32.mrb[0].mxu0
  %5271 = vmatprep.mubr.bf16.mxu0 %v2519
  %5272 = vmatmul.mubr.bf16.gmra.mrb[0].mxu0 %v2518
  %v5273 = vpop.f32.mrb[0].mxu0
  %v5274 = vadd.f32 0.0, %v5273
  %v5275 = vpop.f32.mrb[0].mxu0
  %v5276 = vpop.f32.mrb[0].mxu0
  %v5277 = vadd.f32 0.0, %v5276
  %v5278 = vpop.f32.mrb[0].mxu0
  %5279 = vmatprep.mubr.bf16.mxu0 %v2523
  %5280 = vmatmul.mubr.bf16.gmra.mrb[0].mxu0 %v2522
  %v5281 = vpop.f32.mrb[0].mxu0
  %v5282 = vadd.f32 0.0, %v5281
  %v5283 = vpop.f32.mrb[0].mxu0
  %v5284 = vpop.f32.mrb[0].mxu0
  %v5285 = vadd.f32 0.0, %v5284
  %v5286 = vpop.f32.mrb[0].mxu0
  %5287 = vmatprep.mubr.bf16.mxu0 %v2527
  %5288 = vmatmul.mubr.bf16.gmra.mrb[0].mxu0 %v2526
  %v5289 = vpop.f32.mrb[0].mxu0
  %v5290 = vadd.f32 0.0, %v5289
  %v5291 = vpop.f32.mrb[0].mxu0
  %v5292 = vpop.f32.mrb[0].mxu0
  %v5293 = vadd.f32 0.0, %v5292
  %v5294 = vpop.f32.mrb[0].mxu0
  %5295 = vmatprep.mubr.bf16.mxu0 %v2531
  %5296 = vmatmul.mubr.bf16.gmra.mrb[0].mxu0 %v2530
  %v5297 = vpop.f32.mrb[0].mxu0
  %v5298 = vadd.f32 0.0, %v5297
  %v5299 = vpop.f32.mrb[0].mxu0
  %v5300 = vpop.f32.mrb[0].mxu0
  %v5301 = vadd.f32 0.0, %v5300
  %v5302 = vpop.f32.mrb[0].mxu0
  %5303 = vmatprep.mubr.bf16.mxu0 %v2535
  %5304 = vmatmul.mubr.bf16.gmra.mrb[0].mxu0 %v2534
  %v5305 = vpop.f32.mrb[0].mxu0
  %v5306 = vadd.f32 0.0, %v5305
  %v5307 = vpop.f32.mrb[0].mxu0
  %v5308 = vpop.f32.mrb[0].mxu0
  %v5309 = vadd.f32 0.0, %v5308
  %v5310 = vpop.f32.mrb[0].mxu0
  %5311 = vdwg.mxu0
  %5312 = vmatprep.subr.bf16.mxu0 %v3702
  %5313 = vmatpush1.bf16.xpose.msra.mxu0 %v3701
  %5314 = vmatprep.subr.bf16.mxu0 %v3706
  %5315 = vmatpush1.bf16.xpose.msra.mxu0 %v3705
  %5316 = vmatprep.subr.bf16.mxu0 %v3710
  %5317 = vmatpush1.bf16.xpose.msra.mxu0 %v3709
  %5318 = vmatprep.subr.bf16.mxu0 %v3714
  %5319 = vmatpush1.bf16.xpose.msra.mxu0 %v3713
  %5320 = vmatprep.subr.bf16.mxu0 0
  %5321 = vmatpush1.bf16.xpose.msra.mxu0 0
  %5322 = vmatprep.subr.bf16.mxu0 0
  %5323 = vmatpush1.bf16.xpose.msra.mxu0 0
  %5324 = vmatprep.subr.bf16.mxu0 0
  %5325 = vmatpush1.bf16.xpose.msra.mxu0 0
  %5326 = vmatprep.subr.bf16.mxu0 0
  %5327 = vmatpush1.bf16.xpose.msra.mxu0 0
  %5328 = vmatprep.subr.bf16.mxu0 0
  %5329 = vmatpush1.bf16.xpose.msra.mxu0 0
  %5330 = vmatprep.subr.bf16.mxu0 0
  %5331 = vmatpush1.bf16.xpose.msra.mxu0 0
  %5332 = vmatprep.subr.bf16.mxu0 0
  %5333 = vmatpush1.bf16.xpose.msra.mxu0 0
  %5334 = vmatprep.subr.bf16.mxu0 0
  %5335 = vmatpush1.bf16.xpose.msra.mxu0 0
  %5336 = vmatprep.subr.bf16.mxu0 0
  %5337 = vmatpush1.bf16.xpose.msra.mxu0 0
  %5338 = vmatprep.subr.bf16.mxu0 0
  %5339 = vmatpush1.bf16.xpose.msra.mxu0 0
  %5340 = vmatprep.subr.bf16.mxu0 0
  %5341 = vmatpush1.bf16.xpose.msra.mxu0 0
  %5342 = vmatprep.subr.bf16.mxu0 0
  %5343 = vmatpush1.bf16.xpose.msra.mxu0 0
  %5344 = vmatprep.mubr.bf16.mxu0 %v2509
  %5345 = vmatmul.mubr.bf16.gmra.mrb[0].mxu0 %v2508
  %v5346 = vpop.f32.mrb[0].mxu0
  %v5347 = vadd.f32 %v5250, %v5346
  %v5348 = vpop.f32.mrb[0].mxu0
  %v5349 = vpop.f32.mrb[0].mxu0
  %v5350 = vadd.f32 %v5253, %v5349
  %v5351 = vpop.f32.mrb[0].mxu0
  %5352 = vmatprep.mubr.bf16.mxu0 %v2513
  %5353 = vmatmul.mubr.bf16.gmra.mrb[0].mxu0 %v2512
  %v5354 = vpop.f32.mrb[0].mxu0
  %v5355 = vadd.f32 %v5258, %v5354
  %v5356 = vpop.f32.mrb[0].mxu0
  %v5357 = vpop.f32.mrb[0].mxu0
  %v5358 = vadd.f32 %v5261, %v5357
  %v5359 = vpop.f32.mrb[0].mxu0
  %5360 = vmatprep.mubr.bf16.mxu0 %v2517
  %5361 = vmatmul.mubr.bf16.gmra.mrb[0].mxu0 %v2516
  %v5362 = vpop.f32.mrb[0].mxu0
  %v5363 = vadd.f32 %v5266, %v5362
  %v5364 = vpop.f32.mrb[0].mxu0
  %v5365 = vpop.f32.mrb[0].mxu0
  %v5366 = vadd.f32 %v5269, %v5365
  %v5367 = vpop.f32.mrb[0].mxu0
  %5368 = vmatprep.mubr.bf16.mxu0 %v2521
  %5369 = vmatmul.mubr.bf16.gmra.mrb[0].mxu0 %v2520
  %v5370 = vpop.f32.mrb[0].mxu0
  %v5371 = vadd.f32 %v5274, %v5370
  %v5372 = vpop.f32.mrb[0].mxu0
  %v5373 = vpop.f32.mrb[0].mxu0
  %v5374 = vadd.f32 %v5277, %v5373
  %v5375 = vpop.f32.mrb[0].mxu0
  %5376 = vmatprep.mubr.bf16.mxu0 %v2525
  %5377 = vmatmul.mubr.bf16.gmra.mrb[0].mxu0 %v2524
  %v5378 = vpop.f32.mrb[0].mxu0
  %v5379 = vadd.f32 %v5282, %v5378
  %v5380 = vpop.f32.mrb[0].mxu0
  %v5381 = vpop.f32.mrb[0].mxu0
  %v5382 = vadd.f32 %v5285, %v5381
  %v5383 = vpop.f32.mrb[0].mxu0
  %5384 = vmatprep.mubr.bf16.mxu0 %v2529
  %5385 = vmatmul.mubr.bf16.gmra.mrb[0].mxu0 %v2528
  %v5386 = vpop.f32.mrb[0].mxu0
  %v5387 = vadd.f32 %v5290, %v5386
  %v5388 = vpop.f32.mrb[0].mxu0
  %v5389 = vpop.f32.mrb[0].mxu0
  %v5390 = vadd.f32 %v5293, %v5389
  %v5391 = vpop.f32.mrb[0].mxu0
  %5392 = vmatprep.mubr.bf16.mxu0 %v2533
  %5393 = vmatmul.mubr.bf16.gmra.mrb[0].mxu0 %v2532
  %v5394 = vpop.f32.mrb[0].mxu0
  %v5395 = vadd.f32 %v5298, %v5394
  %v5396 = vpop.f32.mrb[0].mxu0
  %v5397 = vpop.f32.mrb[0].mxu0
  %v5398 = vadd.f32 %v5301, %v5397
  %v5399 = vpop.f32.mrb[0].mxu0
  %5400 = vmatprep.mubr.bf16.mxu0 %v2537
  %5401 = vmatmul.mubr.bf16.gmra.mrb[0].mxu0 %v2536
  %v5402 = vpop.f32.mrb[0].mxu0
  %v5403 = vadd.f32 %v5306, %v5402
  %v5404 = vpop.f32.mrb[0].mxu0
  %v5405 = vpop.f32.mrb[0].mxu0
  %v5406 = vadd.f32 %v5309, %v5405
  %v5407 = vpop.f32.mrb[0].mxu0
  %5408 = vdwg.mxu0
  %5409 = vmatprep.subr.bf16.mxu0 %v3716
  %5410 = vmatpush1.bf16.xpose.msra.mxu0 %v3715
  %5411 = vmatprep.subr.bf16.mxu0 %v3720
  %5412 = vmatpush1.bf16.xpose.msra.mxu0 %v3719
  %5413 = vmatprep.subr.bf16.mxu0 %v3724
  %5414 = vmatpush1.bf16.xpose.msra.mxu0 %v3723
  %5415 = vmatprep.subr.bf16.mxu0 %v3728
  %5416 = vmatpush1.bf16.xpose.msra.mxu0 %v3727
  %5417 = vmatprep.subr.bf16.mxu0 0
  %5418 = vmatpush1.bf16.xpose.msra.mxu0 0
  %5419 = vmatprep.subr.bf16.mxu0 0
  %5420 = vmatpush1.bf16.xpose.msra.mxu0 0
  %5421 = vmatprep.subr.bf16.mxu0 0
  %5422 = vmatpush1.bf16.xpose.msra.mxu0 0
  %5423 = vmatprep.subr.bf16.mxu0 0
  %5424 = vmatpush1.bf16.xpose.msra.mxu0 0
  %5425 = vmatprep.subr.bf16.mxu0 0
  %5426 = vmatpush1.bf16.xpose.msra.mxu0 0
  %5427 = vmatprep.subr.bf16.mxu0 0
  %5428 = vmatpush1.bf16.xpose.msra.mxu0 0
  %5429 = vmatprep.subr.bf16.mxu0 0
  %5430 = vmatpush1.bf16.xpose.msra.mxu0 0
  %5431 = vmatprep.subr.bf16.mxu0 0
  %5432 = vmatpush1.bf16.xpose.msra.mxu0 0
  %5433 = vmatprep.subr.bf16.mxu0 0
  %5434 = vmatpush1.bf16.xpose.msra.mxu0 0
  %5435 = vmatprep.subr.bf16.mxu0 0
  %5436 = vmatpush1.bf16.xpose.msra.mxu0 0
  %5437 = vmatprep.subr.bf16.mxu0 0
  %5438 = vmatpush1.bf16.xpose.msra.mxu0 0
  %5439 = vmatprep.subr.bf16.mxu0 0
  %5440 = vmatpush1.bf16.xpose.msra.mxu0 0
  %5441 = vmatprep.mubr.bf16.mxu0 %v2539
  %5442 = vmatmul.mubr.bf16.gmra.mrb[0].mxu0 %v2538
  %v5443 = vpop.f32.mrb[0].mxu0
  %v5444 = vadd.f32 0.0, %v5443
  %v5445 = vpop.f32.mrb[0].mxu0
  %v5446 = vpop.f32.mrb[0].mxu0
  %v5447 = vadd.f32 0.0, %v5446
  %v5448 = vpop.f32.mrb[0].mxu0
  %5449 = vmatprep.mubr.bf16.mxu0 %v2543
  %5450 = vmatmul.mubr.bf16.gmra.mrb[0].mxu0 %v2542
  %v5451 = vpop.f32.mrb[0].mxu0
  %v5452 = vadd.f32 0.0, %v5451
  %v5453 = vpop.f32.mrb[0].mxu0
  %v5454 = vpop.f32.mrb[0].mxu0
  %v5455 = vadd.f32 0.0, %v5454
  %v5456 = vpop.f32.mrb[0].mxu0
  %5457 = vmatprep.mubr.bf16.mxu0 %v2547
  %5458 = vmatmul.mubr.bf16.gmra.mrb[0].mxu0 %v2546
  %v5459 = vpop.f32.mrb[0].mxu0
  %v5460 = vadd.f32 0.0, %v5459
  %v5461 = vpop.f32.mrb[0].mxu0
  %v5462 = vpop.f32.mrb[0].mxu0
  %v5463 = vadd.f32 0.0, %v5462
  %v5464 = vpop.f32.mrb[0].mxu0
  %5465 = vmatprep.mubr.bf16.mxu0 %v2551
  %5466 = vmatmul.mubr.bf16.gmra.mrb[0].mxu0 %v2550
  %v5467 = vpop.f32.mrb[0].mxu0
  %v5468 = vadd.f32 0.0, %v5467
  %v5469 = vpop.f32.mrb[0].mxu0
  %v5470 = vpop.f32.mrb[0].mxu0
  %v5471 = vadd.f32 0.0, %v5470
  %v5472 = vpop.f32.mrb[0].mxu0
  %5473 = vmatprep.mubr.bf16.mxu0 %v2555
  %5474 = vmatmul.mubr.bf16.gmra.mrb[0].mxu0 %v2554
  %v5475 = vpop.f32.mrb[0].mxu0
  %v5476 = vadd.f32 0.0, %v5475
  %v5477 = vpop.f32.mrb[0].mxu0
  %v5478 = vpop.f32.mrb[0].mxu0
  %v5479 = vadd.f32 0.0, %v5478
  %v5480 = vpop.f32.mrb[0].mxu0
  %5481 = vmatprep.mubr.bf16.mxu0 %v2559
  %5482 = vmatmul.mubr.bf16.gmra.mrb[0].mxu0 %v2558
  %v5483 = vpop.f32.mrb[0].mxu0
  %v5484 = vadd.f32 0.0, %v5483
  %v5485 = vpop.f32.mrb[0].mxu0
  %v5486 = vpop.f32.mrb[0].mxu0
  %v5487 = vadd.f32 0.0, %v5486
  %v5488 = vpop.f32.mrb[0].mxu0
  %5489 = vmatprep.mubr.bf16.mxu0 %v2563
  %5490 = vmatmul.mubr.bf16.gmra.mrb[0].mxu0 %v2562
  %v5491 = vpop.f32.mrb[0].mxu0
  %v5492 = vadd.f32 0.0, %v5491
  %v5493 = vpop.f32.mrb[0].mxu0
  %v5494 = vpop.f32.mrb[0].mxu0
  %v5495 = vadd.f32 0.0, %v5494
  %v5496 = vpop.f32.mrb[0].mxu0
  %5497 = vmatprep.mubr.bf16.mxu0 %v2567
  %5498 = vmatmul.mubr.bf16.gmra.mrb[0].mxu0 %v2566
  %v5499 = vpop.f32.mrb[0].mxu0
  %v5500 = vadd.f32 0.0, %v5499
  %v5501 = vpop.f32.mrb[0].mxu0
  %v5502 = vpop.f32.mrb[0].mxu0
  %v5503 = vadd.f32 0.0, %v5502
  %v5504 = vpop.f32.mrb[0].mxu0
  %5505 = vdwg.mxu0
  %5506 = vmatprep.subr.bf16.mxu0 %v3718
  %5507 = vmatpush1.bf16.xpose.msra.mxu0 %v3717
  %5508 = vmatprep.subr.bf16.mxu0 %v3722
  %5509 = vmatpush1.bf16.xpose.msra.mxu0 %v3721
  %5510 = vmatprep.subr.bf16.mxu0 %v3726
  %5511 = vmatpush1.bf16.xpose.msra.mxu0 %v3725
  %5512 = vmatprep.subr.bf16.mxu0 %v3730
  %5513 = vmatpush1.bf16.xpose.msra.mxu0 %v3729
  %5514 = vmatprep.subr.bf16.mxu0 0
  %5515 = vmatpush1.bf16.xpose.msra.mxu0 0
  %5516 = vmatprep.subr.bf16.mxu0 0
  %5517 = vmatpush1.bf16.xpose.msra.mxu0 0
  %5518 = vmatprep.subr.bf16.mxu0 0
  %5519 = vmatpush1.bf16.xpose.msra.mxu0 0
  %5520 = vmatprep.subr.bf16.mxu0 0
  %5521 = vmatpush1.bf16.xpose.msra.mxu0 0
  %5522 = vmatprep.subr.bf16.mxu0 0
  %5523 = vmatpush1.bf16.xpose.msra.mxu0 0
  %5524 = vmatprep.subr.bf16.mxu0 0
  %5525 = vmatpush1.bf16.xpose.msra.mxu0 0
  %5526 = vmatprep.subr.bf16.mxu0 0
  %5527 = vmatpush1.bf16.xpose.msra.mxu0 0
  %5528 = vmatprep.subr.bf16.mxu0 0
  %5529 = vmatpush1.bf16.xpose.msra.mxu0 0
  %5530 = vmatprep.subr.bf16.mxu0 0
  %5531 = vmatpush1.bf16.xpose.msra.mxu0 0
  %5532 = vmatprep.subr.bf16.mxu0 0
  %5533 = vmatpush1.bf16.xpose.msra.mxu0 0
  %5534 = vmatprep.subr.bf16.mxu0 0
  %5535 = vmatpush1.bf16.xpose.msra.mxu0 0
  %5536 = vmatprep.subr.bf16.mxu0 0
  %5537 = vmatpush1.bf16.xpose.msra.mxu0 0
  %5538 = vmatprep.mubr.bf16.mxu0 %v2541
  %5539 = vmatmul.mubr.bf16.gmra.mrb[0].mxu0 %v2540
  %v5540 = vpop.f32.mrb[0].mxu0
  %v5541 = vadd.f32 %v5444, %v5540
  %v5542 = vpop.f32.mrb[0].mxu0
  %v5543 = vpop.f32.mrb[0].mxu0
  %v5544 = vadd.f32 %v5447, %v5543
  %v5545 = vpop.f32.mrb[0].mxu0
  %5546 = vmatprep.mubr.bf16.mxu0 %v2545
  %5547 = vmatmul.mubr.bf16.gmra.mrb[0].mxu0 %v2544
  %v5548 = vpop.f32.mrb[0].mxu0
  %v5549 = vadd.f32 %v5452, %v5548
  %v5550 = vpop.f32.mrb[0].mxu0
  %v5551 = vpop.f32.mrb[0].mxu0
  %v5552 = vadd.f32 %v5455, %v5551
  %v5553 = vpop.f32.mrb[0].mxu0
  %5554 = vmatprep.mubr.bf16.mxu0 %v2549
  %5555 = vmatmul.mubr.bf16.gmra.mrb[0].mxu0 %v2548
  %v5556 = vpop.f32.mrb[0].mxu0
  %v5557 = vadd.f32 %v5460, %v5556
  %v5558 = vpop.f32.mrb[0].mxu0
  %v5559 = vpop.f32.mrb[0].mxu0
  %v5560 = vadd.f32 %v5463, %v5559
  %v5561 = vpop.f32.mrb[0].mxu0
  %5562 = vmatprep.mubr.bf16.mxu0 %v2553
  %5563 = vmatmul.mubr.bf16.gmra.mrb[0].mxu0 %v2552
  %v5564 = vpop.f32.mrb[0].mxu0
  %v5565 = vadd.f32 %v5468, %v5564
  %v5566 = vpop.f32.mrb[0].mxu0
  %v5567 = vpop.f32.mrb[0].mxu0
  %v5568 = vadd.f32 %v5471, %v5567
  %v5569 = vpop.f32.mrb[0].mxu0
  %5570 = vmatprep.mubr.bf16.mxu0 %v2557
  %5571 = vmatmul.mubr.bf16.gmra.mrb[0].mxu0 %v2556
  %v5572 = vpop.f32.mrb[0].mxu0
  %v5573 = vadd.f32 %v5476, %v5572
  %v5574 = vpop.f32.mrb[0].mxu0
  %v5575 = vpop.f32.mrb[0].mxu0
  %v5576 = vadd.f32 %v5479, %v5575
  %v5577 = vpop.f32.mrb[0].mxu0
  %5578 = vmatprep.mubr.bf16.mxu0 %v2561
  %5579 = vmatmul.mubr.bf16.gmra.mrb[0].mxu0 %v2560
  %v5580 = vpop.f32.mrb[0].mxu0
  %v5581 = vadd.f32 %v5484, %v5580
  %v5582 = vpop.f32.mrb[0].mxu0
  %v5583 = vpop.f32.mrb[0].mxu0
  %v5584 = vadd.f32 %v5487, %v5583
  %v5585 = vpop.f32.mrb[0].mxu0
  %5586 = vmatprep.mubr.bf16.mxu0 %v2565
  %5587 = vmatmul.mubr.bf16.gmra.mrb[0].mxu0 %v2564
  %v5588 = vpop.f32.mrb[0].mxu0
  %v5589 = vadd.f32 %v5492, %v5588
  %v5590 = vpop.f32.mrb[0].mxu0
  %v5591 = vpop.f32.mrb[0].mxu0
  %v5592 = vadd.f32 %v5495, %v5591
  %v5593 = vpop.f32.mrb[0].mxu0
  %5594 = vmatprep.mubr.bf16.mxu0 %v2569
  %5595 = vmatmul.mubr.bf16.gmra.mrb[0].mxu0 %v2568
  %v5596 = vpop.f32.mrb[0].mxu0
  %v5597 = vadd.f32 %v5500, %v5596
  %v5598 = vpop.f32.mrb[0].mxu0
  %v5599 = vpop.f32.mrb[0].mxu0
  %v5600 = vadd.f32 %v5503, %v5599
  %v5601 = vpop.f32.mrb[0].mxu0
  %5602 = vdwg.mxu0
  %vm5603 = vcmask 523264
  %v5604 = vsel %vm5603, %v4959, -inf
  %5605 = vmax.xlane.f32.xlu0 %v5604
  %v5606 = vpop.xlane.xlu0 %5605
  %v5607 = vsel %vm5603, %v4962, -inf
  %5608 = vmax.xlane.f32.xlu0 %v5607
  %v5609 = vpop.xlane.xlu0 %5608
  %v5610 = vsel %vm5603, %v4967, -inf
  %5611 = vmax.xlane.f32.xlu0 %v5610
  %v5612 = vpop.xlane.xlu0 %5611
  %v5613 = vsel %vm5603, %v4970, -inf
  %5614 = vmax.xlane.f32.xlu0 %v5613
  %v5615 = vpop.xlane.xlu0 %5614
  %v5616 = vsel %vm5603, %v4975, -inf
  %5617 = vmax.xlane.f32.xlu0 %v5616
  %v5618 = vpop.xlane.xlu0 %5617
  %v5619 = vsel %vm5603, %v4978, -inf
  %5620 = vmax.xlane.f32.xlu0 %v5619
  %v5621 = vpop.xlane.xlu0 %5620
  %v5622 = vsel %vm5603, %v4983, -inf
  %5623 = vmax.xlane.f32.xlu0 %v5622
  %v5624 = vpop.xlane.xlu0 %5623
  %v5625 = vsel %vm5603, %v4986, -inf
  %5626 = vmax.xlane.f32.xlu0 %v5625
  %v5627 = vpop.xlane.xlu0 %5626
  %v5628 = vsel %vm5603, %v4991, -inf
  %5629 = vmax.xlane.f32.xlu0 %v5628
  %v5630 = vpop.xlane.xlu0 %5629
  %v5631 = vsel %vm5603, %v4994, -inf
  %5632 = vmax.xlane.f32.xlu0 %v5631
  %v5633 = vpop.xlane.xlu0 %5632
  %v5634 = vsel %vm5603, %v4999, -inf
  %5635 = vmax.xlane.f32.xlu0 %v5634
  %v5636 = vpop.xlane.xlu0 %5635
  %v5637 = vsel %vm5603, %v5002, -inf
  %5638 = vmax.xlane.f32.xlu0 %v5637
  %v5639 = vpop.xlane.xlu0 %5638
  %v5640 = vsel %vm5603, %v5007, -inf
  %5641 = vmax.xlane.f32.xlu0 %v5640
  %v5642 = vpop.xlane.xlu0 %5641
  %v5643 = vsel %vm5603, %v5010, -inf
  %5644 = vmax.xlane.f32.xlu0 %v5643
  %v5645 = vpop.xlane.xlu0 %5644
  %v5646 = vsel %vm5603, %v5015, -inf
  %5647 = vmax.xlane.f32.xlu0 %v5646
  %v5648 = vpop.xlane.xlu0 %5647
  %v5649 = vsel %vm5603, %v5018, -inf
  %5650 = vmax.xlane.f32.xlu0 %v5649
  %v5651 = vpop.xlane.xlu0 %5650
  %v5652 = vsel %vm5603, %v5153, -inf
  %5653 = vmax.xlane.f32.xlu0 %v5652
  %v5654 = vpop.xlane.xlu0 %5653
  %v5655 = vsel %vm5603, %v5156, -inf
  %5656 = vmax.xlane.f32.xlu0 %v5655
  %v5657 = vpop.xlane.xlu0 %5656
  %v5658 = vsel %vm5603, %v5161, -inf
  %5659 = vmax.xlane.f32.xlu0 %v5658
  %v5660 = vpop.xlane.xlu0 %5659
  %v5661 = vsel %vm5603, %v5164, -inf
  %5662 = vmax.xlane.f32.xlu0 %v5661
  %v5663 = vpop.xlane.xlu0 %5662
  %v5664 = vsel %vm5603, %v5169, -inf
  %5665 = vmax.xlane.f32.xlu0 %v5664
  %v5666 = vpop.xlane.xlu0 %5665
  %v5667 = vsel %vm5603, %v5172, -inf
  %5668 = vmax.xlane.f32.xlu0 %v5667
  %v5669 = vpop.xlane.xlu0 %5668
  %v5670 = vsel %vm5603, %v5177, -inf
  %5671 = vmax.xlane.f32.xlu0 %v5670
  %v5672 = vpop.xlane.xlu0 %5671
  %v5673 = vsel %vm5603, %v5180, -inf
  %5674 = vmax.xlane.f32.xlu0 %v5673
  %v5675 = vpop.xlane.xlu0 %5674
  %v5676 = vsel %vm5603, %v5185, -inf
  %5677 = vmax.xlane.f32.xlu0 %v5676
  %v5678 = vpop.xlane.xlu0 %5677
  %v5679 = vsel %vm5603, %v5188, -inf
  %5680 = vmax.xlane.f32.xlu0 %v5679
  %v5681 = vpop.xlane.xlu0 %5680
  %v5682 = vsel %vm5603, %v5193, -inf
  %5683 = vmax.xlane.f32.xlu0 %v5682
  %v5684 = vpop.xlane.xlu0 %5683
  %v5685 = vsel %vm5603, %v5196, -inf
  %5686 = vmax.xlane.f32.xlu0 %v5685
  %v5687 = vpop.xlane.xlu0 %5686
  %v5688 = vsel %vm5603, %v5201, -inf
  %5689 = vmax.xlane.f32.xlu0 %v5688
  %v5690 = vpop.xlane.xlu0 %5689
  %v5691 = vsel %vm5603, %v5204, -inf
  %5692 = vmax.xlane.f32.xlu0 %v5691
  %v5693 = vpop.xlane.xlu0 %5692
  %v5694 = vsel %vm5603, %v5209, -inf
  %5695 = vmax.xlane.f32.xlu0 %v5694
  %v5696 = vpop.xlane.xlu0 %5695
  %v5697 = vsel %vm5603, %v5212, -inf
  %5698 = vmax.xlane.f32.xlu0 %v5697
  %v5699 = vpop.xlane.xlu0 %5698
  %v5700 = vsel %vm5603, %v5347, -inf
  %5701 = vmax.xlane.f32.xlu0 %v5700
  %v5702 = vpop.xlane.xlu0 %5701
  %v5703 = vsel %vm5603, %v5350, -inf
  %5704 = vmax.xlane.f32.xlu0 %v5703
  %v5705 = vpop.xlane.xlu0 %5704
  %v5706 = vsel %vm5603, %v5355, -inf
  %5707 = vmax.xlane.f32.xlu0 %v5706
  %v5708 = vpop.xlane.xlu0 %5707
  %v5709 = vsel %vm5603, %v5358, -inf
  %5710 = vmax.xlane.f32.xlu0 %v5709
  %v5711 = vpop.xlane.xlu0 %5710
  %v5712 = vsel %vm5603, %v5363, -inf
  %5713 = vmax.xlane.f32.xlu0 %v5712
  %v5714 = vpop.xlane.xlu0 %5713
  %v5715 = vsel %vm5603, %v5366, -inf
  %5716 = vmax.xlane.f32.xlu0 %v5715
  %v5717 = vpop.xlane.xlu0 %5716
  %v5718 = vsel %vm5603, %v5371, -inf
  %5719 = vmax.xlane.f32.xlu0 %v5718
  %v5720 = vpop.xlane.xlu0 %5719
  %v5721 = vsel %vm5603, %v5374, -inf
  %5722 = vmax.xlane.f32.xlu0 %v5721
  %v5723 = vpop.xlane.xlu0 %5722
  %v5724 = vsel %vm5603, %v5379, -inf
  %5725 = vmax.xlane.f32.xlu0 %v5724
  %v5726 = vpop.xlane.xlu0 %5725
  %v5727 = vsel %vm5603, %v5382, -inf
  %5728 = vmax.xlane.f32.xlu0 %v5727
  %v5729 = vpop.xlane.xlu0 %5728
  %v5730 = vsel %vm5603, %v5387, -inf
  %5731 = vmax.xlane.f32.xlu0 %v5730
  %v5732 = vpop.xlane.xlu0 %5731
  %v5733 = vsel %vm5603, %v5390, -inf
  %5734 = vmax.xlane.f32.xlu0 %v5733
  %v5735 = vpop.xlane.xlu0 %5734
  %v5736 = vsel %vm5603, %v5395, -inf
  %5737 = vmax.xlane.f32.xlu0 %v5736
  %v5738 = vpop.xlane.xlu0 %5737
  %v5739 = vsel %vm5603, %v5398, -inf
  %5740 = vmax.xlane.f32.xlu0 %v5739
  %v5741 = vpop.xlane.xlu0 %5740
  %v5742 = vsel %vm5603, %v5403, -inf
  %5743 = vmax.xlane.f32.xlu0 %v5742
  %v5744 = vpop.xlane.xlu0 %5743
  %v5745 = vsel %vm5603, %v5406, -inf
  %5746 = vmax.xlane.f32.xlu0 %v5745
  %v5747 = vpop.xlane.xlu0 %5746
  %v5748 = vsel %vm5603, %v5541, -inf
  %5749 = vmax.xlane.f32.xlu0 %v5748
  %v5750 = vpop.xlane.xlu0 %5749
  %v5751 = vsel %vm5603, %v5544, -inf
  %5752 = vmax.xlane.f32.xlu0 %v5751
  %v5753 = vpop.xlane.xlu0 %5752
  %v5754 = vsel %vm5603, %v5549, -inf
  %5755 = vmax.xlane.f32.xlu0 %v5754
  %v5756 = vpop.xlane.xlu0 %5755
  %v5757 = vsel %vm5603, %v5552, -inf
  %5758 = vmax.xlane.f32.xlu0 %v5757
  %v5759 = vpop.xlane.xlu0 %5758
  %v5760 = vsel %vm5603, %v5557, -inf
  %5761 = vmax.xlane.f32.xlu0 %v5760
  %v5762 = vpop.xlane.xlu0 %5761
  %v5763 = vsel %vm5603, %v5560, -inf
  %5764 = vmax.xlane.f32.xlu0 %v5763
  %v5765 = vpop.xlane.xlu0 %5764
  %v5766 = vsel %vm5603, %v5565, -inf
  %5767 = vmax.xlane.f32.xlu0 %v5766
  %v5768 = vpop.xlane.xlu0 %5767
  %v5769 = vsel %vm5603, %v5568, -inf
  %5770 = vmax.xlane.f32.xlu0 %v5769
  %v5771 = vpop.xlane.xlu0 %5770
  %v5772 = vsel %vm5603, %v5573, -inf
  %5773 = vmax.xlane.f32.xlu0 %v5772
  %v5774 = vpop.xlane.xlu0 %5773
  %v5775 = vsel %vm5603, %v5576, -inf
  %5776 = vmax.xlane.f32.xlu0 %v5775
  %v5777 = vpop.xlane.xlu0 %5776
  %v5778 = vsel %vm5603, %v5581, -inf
  %5779 = vmax.xlane.f32.xlu0 %v5778
  %v5780 = vpop.xlane.xlu0 %5779
  %v5781 = vsel %vm5603, %v5584, -inf
  %5782 = vmax.xlane.f32.xlu0 %v5781
  %v5783 = vpop.xlane.xlu0 %5782
  %v5784 = vsel %vm5603, %v5589, -inf
  %5785 = vmax.xlane.f32.xlu0 %v5784
  %v5786 = vpop.xlane.xlu0 %5785
  %v5787 = vsel %vm5603, %v5592, -inf
  %5788 = vmax.xlane.f32.xlu0 %v5787
  %v5789 = vpop.xlane.xlu0 %5788
  %v5790 = vsel %vm5603, %v5597, -inf
  %5791 = vmax.xlane.f32.xlu0 %v5790
  %v5792 = vpop.xlane.xlu0 %5791
  %v5793 = vsel %vm5603, %v5600, -inf
  %5794 = vmax.xlane.f32.xlu0 %v5793
  %v5795 = vpop.xlane.xlu0 %5794
  %v5796 = vsub.f32 %v4959, %v5606
  %v5797 = vsub.f32 %v4962, %v5609
  %v5798 = vsub.f32 %v4967, %v5612
  %v5799 = vsub.f32 %v4970, %v5615
  %v5800 = vsub.f32 %v4975, %v5618
  %v5801 = vsub.f32 %v4978, %v5621
  %v5802 = vsub.f32 %v4983, %v5624
  %v5803 = vsub.f32 %v4986, %v5627
  %v5804 = vsub.f32 %v4991, %v5630
  %v5805 = vsub.f32 %v4994, %v5633
  %v5806 = vsub.f32 %v4999, %v5636
  %v5807 = vsub.f32 %v5002, %v5639
  %v5808 = vsub.f32 %v5007, %v5642
  %v5809 = vsub.f32 %v5010, %v5645
  %v5810 = vsub.f32 %v5015, %v5648
  %v5811 = vsub.f32 %v5018, %v5651
  %v5812 = vsub.f32 %v5153, %v5654
  %v5813 = vsub.f32 %v5156, %v5657
  %v5814 = vsub.f32 %v5161, %v5660
  %v5815 = vsub.f32 %v5164, %v5663
  %v5816 = vsub.f32 %v5169, %v5666
  %v5817 = vsub.f32 %v5172, %v5669
  %v5818 = vsub.f32 %v5177, %v5672
  %v5819 = vsub.f32 %v5180, %v5675
  %v5820 = vsub.f32 %v5185, %v5678
  %v5821 = vsub.f32 %v5188, %v5681
  %v5822 = vsub.f32 %v5193, %v5684
  %v5823 = vsub.f32 %v5196, %v5687
  %v5824 = vsub.f32 %v5201, %v5690
  %v5825 = vsub.f32 %v5204, %v5693
  %v5826 = vsub.f32 %v5209, %v5696
  %v5827 = vsub.f32 %v5212, %v5699
  %v5828 = vsub.f32 %v5347, %v5702
  %v5829 = vsub.f32 %v5350, %v5705
  %v5830 = vsub.f32 %v5355, %v5708
  %v5831 = vsub.f32 %v5358, %v5711
  %v5832 = vsub.f32 %v5363, %v5714
  %v5833 = vsub.f32 %v5366, %v5717
  %v5834 = vsub.f32 %v5371, %v5720
  %v5835 = vsub.f32 %v5374, %v5723
  %v5836 = vsub.f32 %v5379, %v5726
  %v5837 = vsub.f32 %v5382, %v5729
  %v5838 = vsub.f32 %v5387, %v5732
  %v5839 = vsub.f32 %v5390, %v5735
  %v5840 = vsub.f32 %v5395, %v5738
  %v5841 = vsub.f32 %v5398, %v5741
  %v5842 = vsub.f32 %v5403, %v5744
  %v5843 = vsub.f32 %v5406, %v5747
  %v5844 = vsub.f32 %v5541, %v5750
  %v5845 = vsub.f32 %v5544, %v5753
  %v5846 = vsub.f32 %v5549, %v5756
  %v5847 = vsub.f32 %v5552, %v5759
  %v5848 = vsub.f32 %v5557, %v5762
  %v5849 = vsub.f32 %v5560, %v5765
  %v5850 = vsub.f32 %v5565, %v5768
  %v5851 = vsub.f32 %v5568, %v5771
  %v5852 = vsub.f32 %v5573, %v5774
  %v5853 = vsub.f32 %v5576, %v5777
  %v5854 = vsub.f32 %v5581, %v5780
  %v5855 = vsub.f32 %v5584, %v5783
  %v5856 = vsub.f32 %v5589, %v5786
  %v5857 = vsub.f32 %v5592, %v5789
  %v5858 = vsub.f32 %v5597, %v5792
  %v5859 = vsub.f32 %v5600, %v5795
  %v5860 = vmul.f32 %v5796, 1.442695
  %v5861 = vpow.pop %v5860
  %v5862 = vmul.f32 %v5797, 1.442695
  %v5863 = vpow.pop %v5862
  %v5864 = vmul.f32 %v5798, 1.442695
  %v5865 = vpow.pop %v5864
  %v5866 = vmul.f32 %v5799, 1.442695
  %v5867 = vpow.pop %v5866
  %v5868 = vmul.f32 %v5800, 1.442695
  %v5869 = vpow.pop %v5868
  %v5870 = vmul.f32 %v5801, 1.442695
  %v5871 = vpow.pop %v5870
  %v5872 = vmul.f32 %v5802, 1.442695
  %v5873 = vpow.pop %v5872
  %v5874 = vmul.f32 %v5803, 1.442695
  %v5875 = vpow.pop %v5874
  %v5876 = vmul.f32 %v5804, 1.442695
  %v5877 = vpow.pop %v5876
  %v5878 = vmul.f32 %v5805, 1.442695
  %v5879 = vpow.pop %v5878
  %v5880 = vmul.f32 %v5806, 1.442695
  %v5881 = vpow.pop %v5880
  %v5882 = vmul.f32 %v5807, 1.442695
  %v5883 = vpow.pop %v5882
  %v5884 = vmul.f32 %v5808, 1.442695
  %v5885 = vpow.pop %v5884
  %v5886 = vmul.f32 %v5809, 1.442695
  %v5887 = vpow.pop %v5886
  %v5888 = vmul.f32 %v5810, 1.442695
  %v5889 = vpow.pop %v5888
  %v5890 = vmul.f32 %v5811, 1.442695
  %v5891 = vpow.pop %v5890
  %v5892 = vmul.f32 %v5812, 1.442695
  %v5893 = vpow.pop %v5892
  %v5894 = vmul.f32 %v5813, 1.442695
  %v5895 = vpow.pop %v5894
  %v5896 = vmul.f32 %v5814, 1.442695
  %v5897 = vpow.pop %v5896
  %v5898 = vmul.f32 %v5815, 1.442695
  %v5899 = vpow.pop %v5898
  %v5900 = vmul.f32 %v5816, 1.442695
  %v5901 = vpow.pop %v5900
  %v5902 = vmul.f32 %v5817, 1.442695
  %v5903 = vpow.pop %v5902
  %v5904 = vmul.f32 %v5818, 1.442695
  %v5905 = vpow.pop %v5904
  %v5906 = vmul.f32 %v5819, 1.442695
  %v5907 = vpow.pop %v5906
  %v5908 = vmul.f32 %v5820, 1.442695
  %v5909 = vpow.pop %v5908
  %v5910 = vmul.f32 %v5821, 1.442695
  %v5911 = vpow.pop %v5910
  %v5912 = vmul.f32 %v5822, 1.442695
  %v5913 = vpow.pop %v5912
  %v5914 = vmul.f32 %v5823, 1.442695
  %v5915 = vpow.pop %v5914
  %v5916 = vmul.f32 %v5824, 1.442695
  %v5917 = vpow.pop %v5916
  %v5918 = vmul.f32 %v5825, 1.442695
  %v5919 = vpow.pop %v5918
  %v5920 = vmul.f32 %v5826, 1.442695
  %v5921 = vpow.pop %v5920
  %v5922 = vmul.f32 %v5827, 1.442695
  %v5923 = vpow.pop %v5922
  %v5924 = vmul.f32 %v5828, 1.442695
  %v5925 = vpow.pop %v5924
  %v5926 = vmul.f32 %v5829, 1.442695
  %v5927 = vpow.pop %v5926
  %v5928 = vmul.f32 %v5830, 1.442695
  %v5929 = vpow.pop %v5928
  %v5930 = vmul.f32 %v5831, 1.442695
  %v5931 = vpow.pop %v5930
  %v5932 = vmul.f32 %v5832, 1.442695
  %v5933 = vpow.pop %v5932
  %v5934 = vmul.f32 %v5833, 1.442695
  %v5935 = vpow.pop %v5934
  %v5936 = vmul.f32 %v5834, 1.442695
  %v5937 = vpow.pop %v5936
  %v5938 = vmul.f32 %v5835, 1.442695
  %v5939 = vpow.pop %v5938
  %v5940 = vmul.f32 %v5836, 1.442695
  %v5941 = vpow.pop %v5940
  %v5942 = vmul.f32 %v5837, 1.442695
  %v5943 = vpow.pop %v5942
  %v5944 = vmul.f32 %v5838, 1.442695
  %v5945 = vpow.pop %v5944
  %v5946 = vmul.f32 %v5839, 1.442695
  %v5947 = vpow.pop %v5946
  %v5948 = vmul.f32 %v5840, 1.442695
  %v5949 = vpow.pop %v5948
  %v5950 = vmul.f32 %v5841, 1.442695
  %v5951 = vpow.pop %v5950
  %v5952 = vmul.f32 %v5842, 1.442695
  %v5953 = vpow.pop %v5952
  %v5954 = vmul.f32 %v5843, 1.442695
  %v5955 = vpow.pop %v5954
  %v5956 = vmul.f32 %v5844, 1.442695
  %v5957 = vpow.pop %v5956
  %v5958 = vmul.f32 %v5845, 1.442695
  %v5959 = vpow.pop %v5958
  %v5960 = vmul.f32 %v5846, 1.442695
  %v5961 = vpow.pop %v5960
  %v5962 = vmul.f32 %v5847, 1.442695
  %v5963 = vpow.pop %v5962
  %v5964 = vmul.f32 %v5848, 1.442695
  %v5965 = vpow.pop %v5964
  %v5966 = vmul.f32 %v5849, 1.442695
  %v5967 = vpow.pop %v5966
  %v5968 = vmul.f32 %v5850, 1.442695
  %v5969 = vpow.pop %v5968
  %v5970 = vmul.f32 %v5851, 1.442695
  %v5971 = vpow.pop %v5970
  %v5972 = vmul.f32 %v5852, 1.442695
  %v5973 = vpow.pop %v5972
  %v5974 = vmul.f32 %v5853, 1.442695
  %v5975 = vpow.pop %v5974
  %v5976 = vmul.f32 %v5854, 1.442695
  %v5977 = vpow.pop %v5976
  %v5978 = vmul.f32 %v5855, 1.442695
  %v5979 = vpow.pop %v5978
  %v5980 = vmul.f32 %v5856, 1.442695
  %v5981 = vpow.pop %v5980
  %v5982 = vmul.f32 %v5857, 1.442695
  %v5983 = vpow.pop %v5982
  %v5984 = vmul.f32 %v5858, 1.442695
  %v5985 = vpow.pop %v5984
  %v5986 = vmul.f32 %v5859, 1.442695
  %v5987 = vpow.pop %v5986
  %v5988 = vld [vmem:[%s16] sm:$0xff]
  %v5989 = vld [vmem:[%s16 + $0x8] sm:$0xff]
  %v5990 = vld [vmem:[%s16 + $0x10] sm:$0xff]
  %v5991 = vld [vmem:[%s16 + $0x18] sm:$0xff]
  %v5992 = vld [vmem:[%s16 + $0x20] sm:$0xff]
  %v5993 = vld [vmem:[%s16 + $0x28] sm:$0xff]
  %v5994 = vld [vmem:[%s16 + $0x30] sm:$0xff]
  %v5995 = vld [vmem:[%s16 + $0x38] sm:$0xff]
  %v5997 = vsel %vm5603, %v5861, 0
  %v6000 = vsel %vm5603, %v5863, 0
  %v6003 = vsel %vm5603, %v5865, 0
  %v6006 = vsel %vm5603, %v5867, 0
  %v6009 = vsel %vm5603, %v5869, 0
  %v6012 = vsel %vm5603, %v5871, 0
  %v6015 = vsel %vm5603, %v5873, 0
  %v6018 = vsel %vm5603, %v5875, 0
  %v6021 = vsel %vm5603, %v5877, 0
  %v6024 = vsel %vm5603, %v5879, 0
  %v6027 = vsel %vm5603, %v5881, 0
  %v6030 = vsel %vm5603, %v5883, 0
  %v6033 = vsel %vm5603, %v5885, 0
  %v6036 = vsel %vm5603, %v5887, 0
  %v6039 = vsel %vm5603, %v5889, 0
  %v6042 = vsel %vm5603, %v5891, 0
  %v6045 = vsel %vm5603, %v5893, 0
  %v6048 = vsel %vm5603, %v5895, 0
  %v6051 = vsel %vm5603, %v5897, 0
  %v6054 = vsel %vm5603, %v5899, 0
  %v6057 = vsel %vm5603, %v5901, 0
  %v6060 = vsel %vm5603, %v5903, 0
  %v6063 = vsel %vm5603, %v5905, 0
  %v6066 = vsel %vm5603, %v5907, 0
  %v6069 = vsel %vm5603, %v5909, 0
  %v6072 = vsel %vm5603, %v5911, 0
  %v6075 = vsel %vm5603, %v5913, 0
  %v6078 = vsel %vm5603, %v5915, 0
  %v6081 = vsel %vm5603, %v5917, 0
  %v6084 = vsel %vm5603, %v5919, 0
  %v6087 = vsel %vm5603, %v5921, 0
  %v6090 = vsel %vm5603, %v5923, 0
  %v6093 = vsel %vm5603, %v5925, 0
  %v6096 = vsel %vm5603, %v5927, 0
  %v6099 = vsel %vm5603, %v5929, 0
  %v6102 = vsel %vm5603, %v5931, 0
  %v6105 = vsel %vm5603, %v5933, 0
  %v6108 = vsel %vm5603, %v5935, 0
  %v6111 = vsel %vm5603, %v5937, 0
  %v6114 = vsel %vm5603, %v5939, 0
  %v6117 = vsel %vm5603, %v5941, 0
  %v6120 = vsel %vm5603, %v5943, 0
  %v6123 = vsel %vm5603, %v5945, 0
  %v6126 = vsel %vm5603, %v5947, 0
  %v6129 = vsel %vm5603, %v5949, 0
  %v6132 = vsel %vm5603, %v5951, 0
  %v6135 = vsel %vm5603, %v5953, 0
  %v6138 = vsel %vm5603, %v5955, 0
  %v6141 = vsel %vm5603, %v5957, 0
  %v6144 = vsel %vm5603, %v5959, 0
  %v6147 = vsel %vm5603, %v5961, 0
  %v6150 = vsel %vm5603, %v5963, 0
  %v6153 = vsel %vm5603, %v5965, 0
  %v6156 = vsel %vm5603, %v5967, 0
  %v6159 = vsel %vm5603, %v5969, 0
  %v6162 = vsel %vm5603, %v5971, 0
  %v6165 = vsel %vm5603, %v5973, 0
  %v6168 = vsel %vm5603, %v5975, 0
  %v6171 = vsel %vm5603, %v5977, 0
  %v6174 = vsel %vm5603, %v5979, 0
  %v6177 = vsel %vm5603, %v5981, 0
  %v6180 = vsel %vm5603, %v5983, 0
  %v6183 = vsel %vm5603, %v5985, 0
  %v6186 = vsel %vm5603, %v5987, 0
  %6188 = vmatprep.subr.mxu0 0.0
  %6189 = vmatpush1.msra.mxu0 %v5988
  %6190 = vmatprep.subr.mxu0 0.0
  %6191 = vmatpush1.msra.mxu0 %v5989
  %6192 = vmatprep.subr.mxu0 0.0
  %6193 = vmatpush1.msra.mxu0 %v5990
  %6194 = vmatprep.subr.mxu0 0.0
  %6195 = vmatpush1.msra.mxu0 %v5991
  %6196 = vmatprep.subr.mxu0 0.0
  %6197 = vmatpush1.msra.mxu0 %v5992
  %6198 = vmatprep.subr.mxu0 0.0
  %6199 = vmatpush1.msra.mxu0 %v5993
  %6200 = vmatprep.subr.mxu0 0.0
  %6201 = vmatpush1.msra.mxu0 %v5994
  %6202 = vmatprep.subr.mxu0 0.0
  %6203 = vmatpush1.msra.mxu0 %v5995
  %6204 = vmatprep.subr.mxu0 0.0
  %6205 = vmatpush1.msra.mxu0 0.0
  %6206 = vmatprep.subr.mxu0 0.0
  %6207 = vmatpush1.msra.mxu0 0.0
  %6208 = vmatprep.subr.mxu0 0.0
  %6209 = vmatpush1.msra.mxu0 0.0
  %6210 = vmatprep.subr.mxu0 0.0
  %6211 = vmatpush1.msra.mxu0 0.0
  %6212 = vmatprep.subr.mxu0 0.0
  %6213 = vmatpush1.msra.mxu0 0.0
  %6214 = vmatprep.subr.mxu0 0.0
  %6215 = vmatpush1.msra.mxu0 0.0
  %6216 = vmatprep.subr.mxu0 0.0
  %6217 = vmatpush1.msra.mxu0 0.0
  %6218 = vmatprep.subr.mxu0 0.0
  %6219 = vmatpush1.msra.mxu0 0.0
  %6220 = vmatprep.subr.mxu0 0.0
  %6221 = vmatpush1.msra.mxu0 0.0
  %6222 = vmatprep.subr.mxu0 0.0
  %6223 = vmatpush1.msra.mxu0 0.0
  %6224 = vmatprep.subr.mxu0 0.0
  %6225 = vmatpush1.msra.mxu0 0.0
  %6226 = vmatprep.subr.mxu0 0.0
  %6227 = vmatpush1.msra.mxu0 0.0
  %6228 = vmatprep.subr.mxu0 0.0
  %6229 = vmatpush1.msra.mxu0 0.0
  %6230 = vmatprep.subr.mxu0 0.0
  %6231 = vmatpush1.msra.mxu0 0.0
  %6232 = vmatprep.subr.mxu0 0.0
  %6233 = vmatpush1.msra.mxu0 0.0
  %6234 = vmatprep.subr.mxu0 0.0
  %6235 = vmatpush1.msra.mxu0 0.0
  %6236 = vmatprep.subr.mxu0 0.0
  %6237 = vmatpush1.msra.mxu0 0.0
  %6238 = vmatprep.subr.mxu0 0.0
  %6239 = vmatpush1.msra.mxu0 0.0
  %6240 = vmatprep.subr.mxu0 0.0
  %6241 = vmatpush1.msra.mxu0 0.0
  %6242 = vmatprep.subr.mxu0 0.0
  %6243 = vmatpush1.msra.mxu0 0.0
  %6244 = vmatprep.subr.mxu0 0.0
  %6245 = vmatpush1.msra.mxu0 0.0
  %6246 = vmatprep.subr.mxu0 0.0
  %6247 = vmatpush1.msra.mxu0 0.0
  %6248 = vmatprep.subr.mxu0 0.0
  %6249 = vmatpush1.msra.mxu0 0.0
  %6250 = vmatprep.subr.mxu0 0.0
  %6251 = vmatpush1.msra.mxu0 0.0
  %6252 = vmatprep.mubr.f32.mxu0 0.0
  %6253 = vmatmul.mubr.f32.gmra.mrb[0].mxu0 %v5997
  %v6254 = vpop.f32.mrb[0].mxu0
  %v6255 = vadd.f32 0.0, %v6254
  %v6256 = vpop.f32.mrb[0].mxu0
  %6257 = vmatprep.mubr.f32.mxu0 0.0
  %6258 = vmatmul.mubr.f32.gmra.mrb[0].mxu0 %v6000
  %v6259 = vpop.f32.mrb[0].mxu0
  %v6260 = vadd.f32 0.0, %v6259
  %v6261 = vpop.f32.mrb[0].mxu0
  %6262 = vmatprep.mubr.f32.mxu0 0.0
  %6263 = vmatmul.mubr.f32.gmra.mrb[0].mxu0 %v6003
  %v6264 = vpop.f32.mrb[0].mxu0
  %v6265 = vadd.f32 0.0, %v6264
  %v6266 = vpop.f32.mrb[0].mxu0
  %6267 = vmatprep.mubr.f32.mxu0 0.0
  %6268 = vmatmul.mubr.f32.gmra.mrb[0].mxu0 %v6006
  %v6269 = vpop.f32.mrb[0].mxu0
  %v6270 = vadd.f32 0.0, %v6269
  %v6271 = vpop.f32.mrb[0].mxu0
  %6272 = vmatprep.mubr.f32.mxu0 0.0
  %6273 = vmatmul.mubr.f32.gmra.mrb[0].mxu0 %v6009
  %v6274 = vpop.f32.mrb[0].mxu0
  %v6275 = vadd.f32 0.0, %v6274
  %v6276 = vpop.f32.mrb[0].mxu0
  %6277 = vmatprep.mubr.f32.mxu0 0.0
  %6278 = vmatmul.mubr.f32.gmra.mrb[0].mxu0 %v6012
  %v6279 = vpop.f32.mrb[0].mxu0
  %v6280 = vadd.f32 0.0, %v6279
  %v6281 = vpop.f32.mrb[0].mxu0
  %6282 = vmatprep.mubr.f32.mxu0 0.0
  %6283 = vmatmul.mubr.f32.gmra.mrb[0].mxu0 %v6015
  %v6284 = vpop.f32.mrb[0].mxu0
  %v6285 = vadd.f32 0.0, %v6284
  %v6286 = vpop.f32.mrb[0].mxu0
  %6287 = vmatprep.mubr.f32.mxu0 0.0
  %6288 = vmatmul.mubr.f32.gmra.mrb[0].mxu0 %v6018
  %v6289 = vpop.f32.mrb[0].mxu0
  %v6290 = vadd.f32 0.0, %v6289
  %v6291 = vpop.f32.mrb[0].mxu0
  %6292 = vmatprep.mubr.f32.mxu0 0.0
  %6293 = vmatmul.mubr.f32.gmra.mrb[0].mxu0 %v6021
  %v6294 = vpop.f32.mrb[0].mxu0
  %v6295 = vadd.f32 0.0, %v6294
  %v6296 = vpop.f32.mrb[0].mxu0
  %6297 = vmatprep.mubr.f32.mxu0 0.0
  %6298 = vmatmul.mubr.f32.gmra.mrb[0].mxu0 %v6024
  %v6299 = vpop.f32.mrb[0].mxu0
  %v6300 = vadd.f32 0.0, %v6299
  %v6301 = vpop.f32.mrb[0].mxu0
  %6302 = vmatprep.mubr.f32.mxu0 0.0
  %6303 = vmatmul.mubr.f32.gmra.mrb[0].mxu0 %v6027
  %v6304 = vpop.f32.mrb[0].mxu0
  %v6305 = vadd.f32 0.0, %v6304
  %v6306 = vpop.f32.mrb[0].mxu0
  %6307 = vmatprep.mubr.f32.mxu0 0.0
  %6308 = vmatmul.mubr.f32.gmra.mrb[0].mxu0 %v6030
  %v6309 = vpop.f32.mrb[0].mxu0
  %v6310 = vadd.f32 0.0, %v6309
  %v6311 = vpop.f32.mrb[0].mxu0
  %6312 = vmatprep.mubr.f32.mxu0 0.0
  %6313 = vmatmul.mubr.f32.gmra.mrb[0].mxu0 %v6033
  %v6314 = vpop.f32.mrb[0].mxu0
  %v6315 = vadd.f32 0.0, %v6314
  %v6316 = vpop.f32.mrb[0].mxu0
  %6317 = vmatprep.mubr.f32.mxu0 0.0
  %6318 = vmatmul.mubr.f32.gmra.mrb[0].mxu0 %v6036
  %v6319 = vpop.f32.mrb[0].mxu0
  %v6320 = vadd.f32 0.0, %v6319
  %v6321 = vpop.f32.mrb[0].mxu0
  %6322 = vmatprep.mubr.f32.mxu0 0.0
  %6323 = vmatmul.mubr.f32.gmra.mrb[0].mxu0 %v6039
  %v6324 = vpop.f32.mrb[0].mxu0
  %v6325 = vadd.f32 0.0, %v6324
  %v6326 = vpop.f32.mrb[0].mxu0
  %6327 = vmatprep.mubr.f32.mxu0 0.0
  %6328 = vmatmul.mubr.f32.gmra.mrb[0].mxu0 %v6042
  %v6329 = vpop.f32.mrb[0].mxu0
  %v6330 = vadd.f32 0.0, %v6329
  %v6331 = vpop.f32.mrb[0].mxu0
  %6332 = vmatprep.mubr.f32.mxu0 0.0
  %6333 = vmatmul.mubr.f32.gmra.mrb[0].mxu0 %v6045
  %v6334 = vpop.f32.mrb[0].mxu0
  %v6335 = vadd.f32 0.0, %v6334
  %v6336 = vpop.f32.mrb[0].mxu0
  %6337 = vmatprep.mubr.f32.mxu0 0.0
  %6338 = vmatmul.mubr.f32.gmra.mrb[0].mxu0 %v6048
  %v6339 = vpop.f32.mrb[0].mxu0
  %v6340 = vadd.f32 0.0, %v6339
  %v6341 = vpop.f32.mrb[0].mxu0
  %6342 = vmatprep.mubr.f32.mxu0 0.0
  %6343 = vmatmul.mubr.f32.gmra.mrb[0].mxu0 %v6051
  %v6344 = vpop.f32.mrb[0].mxu0
  %v6345 = vadd.f32 0.0, %v6344
  %v6346 = vpop.f32.mrb[0].mxu0
  %6347 = vmatprep.mubr.f32.mxu0 0.0
  %6348 = vmatmul.mubr.f32.gmra.mrb[0].mxu0 %v6054
  %v6349 = vpop.f32.mrb[0].mxu0
  %v6350 = vadd.f32 0.0, %v6349
  %v6351 = vpop.f32.mrb[0].mxu0
  %6352 = vmatprep.mubr.f32.mxu0 0.0
  %6353 = vmatmul.mubr.f32.gmra.mrb[0].mxu0 %v6057
  %v6354 = vpop.f32.mrb[0].mxu0
  %v6355 = vadd.f32 0.0, %v6354
  %v6356 = vpop.f32.mrb[0].mxu0
  %6357 = vmatprep.mubr.f32.mxu0 0.0
  %6358 = vmatmul.mubr.f32.gmra.mrb[0].mxu0 %v6060
  %v6359 = vpop.f32.mrb[0].mxu0
  %v6360 = vadd.f32 0.0, %v6359
  %v6361 = vpop.f32.mrb[0].mxu0
  %6362 = vmatprep.mubr.f32.mxu0 0.0
  %6363 = vmatmul.mubr.f32.gmra.mrb[0].mxu0 %v6063
  %v6364 = vpop.f32.mrb[0].mxu0
  %v6365 = vadd.f32 0.0, %v6364
  %v6366 = vpop.f32.mrb[0].mxu0
  %6367 = vmatprep.mubr.f32.mxu0 0.0
  %6368 = vmatmul.mubr.f32.gmra.mrb[0].mxu0 %v6066
  %v6369 = vpop.f32.mrb[0].mxu0
  %v6370 = vadd.f32 0.0, %v6369
  %v6371 = vpop.f32.mrb[0].mxu0
  %6372 = vmatprep.mubr.f32.mxu0 0.0
  %6373 = vmatmul.mubr.f32.gmra.mrb[0].mxu0 %v6069
  %v6374 = vpop.f32.mrb[0].mxu0
  %v6375 = vadd.f32 0.0, %v6374
  %v6376 = vpop.f32.mrb[0].mxu0
  %6377 = vmatprep.mubr.f32.mxu0 0.0
  %6378 = vmatmul.mubr.f32.gmra.mrb[0].mxu0 %v6072
  %v6379 = vpop.f32.mrb[0].mxu0
  %v6380 = vadd.f32 0.0, %v6379
  %v6381 = vpop.f32.mrb[0].mxu0
  %6382 = vmatprep.mubr.f32.mxu0 0.0
  %6383 = vmatmul.mubr.f32.gmra.mrb[0].mxu0 %v6075
  %v6384 = vpop.f32.mrb[0].mxu0
  %v6385 = vadd.f32 0.0, %v6384
  %v6386 = vpop.f32.mrb[0].mxu0
  %6387 = vmatprep.mubr.f32.mxu0 0.0
  %6388 = vmatmul.mubr.f32.gmra.mrb[0].mxu0 %v6078
  %v6389 = vpop.f32.mrb[0].mxu0
  %v6390 = vadd.f32 0.0, %v6389
  %v6391 = vpop.f32.mrb[0].mxu0
  %6392 = vmatprep.mubr.f32.mxu0 0.0
  %6393 = vmatmul.mubr.f32.gmra.mrb[0].mxu0 %v6081
  %v6394 = vpop.f32.mrb[0].mxu0
  %v6395 = vadd.f32 0.0, %v6394
  %v6396 = vpop.f32.mrb[0].mxu0
  %6397 = vmatprep.mubr.f32.mxu0 0.0
  %6398 = vmatmul.mubr.f32.gmra.mrb[0].mxu0 %v6084
  %v6399 = vpop.f32.mrb[0].mxu0
  %v6400 = vadd.f32 0.0, %v6399
  %v6401 = vpop.f32.mrb[0].mxu0
  %6402 = vmatprep.mubr.f32.mxu0 0.0
  %6403 = vmatmul.mubr.f32.gmra.mrb[0].mxu0 %v6087
  %v6404 = vpop.f32.mrb[0].mxu0
  %v6405 = vadd.f32 0.0, %v6404
  %v6406 = vpop.f32.mrb[0].mxu0
  %6407 = vmatprep.mubr.f32.mxu0 0.0
  %6408 = vmatmul.mubr.f32.gmra.mrb[0].mxu0 %v6090
  %v6409 = vpop.f32.mrb[0].mxu0
  %v6410 = vadd.f32 0.0, %v6409
  %v6411 = vpop.f32.mrb[0].mxu0
  %6412 = vmatprep.mubr.f32.mxu0 0.0
  %6413 = vmatmul.mubr.f32.gmra.mrb[0].mxu0 %v6093
  %v6414 = vpop.f32.mrb[0].mxu0
  %v6415 = vadd.f32 0.0, %v6414
  %v6416 = vpop.f32.mrb[0].mxu0
  %6417 = vmatprep.mubr.f32.mxu0 0.0
  %6418 = vmatmul.mubr.f32.gmra.mrb[0].mxu0 %v6096
  %v6419 = vpop.f32.mrb[0].mxu0
  %v6420 = vadd.f32 0.0, %v6419
  %v6421 = vpop.f32.mrb[0].mxu0
  %6422 = vmatprep.mubr.f32.mxu0 0.0
  %6423 = vmatmul.mubr.f32.gmra.mrb[0].mxu0 %v6099
  %v6424 = vpop.f32.mrb[0].mxu0
  %v6425 = vadd.f32 0.0, %v6424
  %v6426 = vpop.f32.mrb[0].mxu0
  %6427 = vmatprep.mubr.f32.mxu0 0.0
  %6428 = vmatmul.mubr.f32.gmra.mrb[0].mxu0 %v6102
  %v6429 = vpop.f32.mrb[0].mxu0
  %v6430 = vadd.f32 0.0, %v6429
  %v6431 = vpop.f32.mrb[0].mxu0
  %6432 = vmatprep.mubr.f32.mxu0 0.0
  %6433 = vmatmul.mubr.f32.gmra.mrb[0].mxu0 %v6105
  %v6434 = vpop.f32.mrb[0].mxu0
  %v6435 = vadd.f32 0.0, %v6434
  %v6436 = vpop.f32.mrb[0].mxu0
  %6437 = vmatprep.mubr.f32.mxu0 0.0
  %6438 = vmatmul.mubr.f32.gmra.mrb[0].mxu0 %v6108
  %v6439 = vpop.f32.mrb[0].mxu0
  %v6440 = vadd.f32 0.0, %v6439
  %v6441 = vpop.f32.mrb[0].mxu0
  %6442 = vmatprep.mubr.f32.mxu0 0.0
  %6443 = vmatmul.mubr.f32.gmra.mrb[0].mxu0 %v6111
  %v6444 = vpop.f32.mrb[0].mxu0
  %v6445 = vadd.f32 0.0, %v6444
  %v6446 = vpop.f32.mrb[0].mxu0
  %6447 = vmatprep.mubr.f32.mxu0 0.0
  %6448 = vmatmul.mubr.f32.gmra.mrb[0].mxu0 %v6114
  %v6449 = vpop.f32.mrb[0].mxu0
  %v6450 = vadd.f32 0.0, %v6449
  %v6451 = vpop.f32.mrb[0].mxu0
  %6452 = vmatprep.mubr.f32.mxu0 0.0
  %6453 = vmatmul.mubr.f32.gmra.mrb[0].mxu0 %v6117
  %v6454 = vpop.f32.mrb[0].mxu0
  %v6455 = vadd.f32 0.0, %v6454
  %v6456 = vpop.f32.mrb[0].mxu0
  %6457 = vmatprep.mubr.f32.mxu0 0.0
  %6458 = vmatmul.mubr.f32.gmra.mrb[0].mxu0 %v6120
  %v6459 = vpop.f32.mrb[0].mxu0
  %v6460 = vadd.f32 0.0, %v6459
  %v6461 = vpop.f32.mrb[0].mxu0
  %6462 = vmatprep.mubr.f32.mxu0 0.0
  %6463 = vmatmul.mubr.f32.gmra.mrb[0].mxu0 %v6123
  %v6464 = vpop.f32.mrb[0].mxu0
  %v6465 = vadd.f32 0.0, %v6464
  %v6466 = vpop.f32.mrb[0].mxu0
  %6467 = vmatprep.mubr.f32.mxu0 0.0
  %6468 = vmatmul.mubr.f32.gmra.mrb[0].mxu0 %v6126
  %v6469 = vpop.f32.mrb[0].mxu0
  %v6470 = vadd.f32 0.0, %v6469
  %v6471 = vpop.f32.mrb[0].mxu0
  %6472 = vmatprep.mubr.f32.mxu0 0.0
  %6473 = vmatmul.mubr.f32.gmra.mrb[0].mxu0 %v6129
  %v6474 = vpop.f32.mrb[0].mxu0
  %v6475 = vadd.f32 0.0, %v6474
  %v6476 = vpop.f32.mrb[0].mxu0
  %6477 = vmatprep.mubr.f32.mxu0 0.0
  %6478 = vmatmul.mubr.f32.gmra.mrb[0].mxu0 %v6132
  %v6479 = vpop.f32.mrb[0].mxu0
  %v6480 = vadd.f32 0.0, %v6479
  %v6481 = vpop.f32.mrb[0].mxu0
  %6482 = vmatprep.mubr.f32.mxu0 0.0
  %6483 = vmatmul.mubr.f32.gmra.mrb[0].mxu0 %v6135
  %v6484 = vpop.f32.mrb[0].mxu0
  %v6485 = vadd.f32 0.0, %v6484
  %v6486 = vpop.f32.mrb[0].mxu0
  %6487 = vmatprep.mubr.f32.mxu0 0.0
  %6488 = vmatmul.mubr.f32.gmra.mrb[0].mxu0 %v6138
  %v6489 = vpop.f32.mrb[0].mxu0
  %v6490 = vadd.f32 0.0, %v6489
  %v6491 = vpop.f32.mrb[0].mxu0
  %6492 = vmatprep.mubr.f32.mxu0 0.0
  %6493 = vmatmul.mubr.f32.gmra.mrb[0].mxu0 %v6141
  %v6494 = vpop.f32.mrb[0].mxu0
  %v6495 = vadd.f32 0.0, %v6494
  %v6496 = vpop.f32.mrb[0].mxu0
  %6497 = vmatprep.mubr.f32.mxu0 0.0
  %6498 = vmatmul.mubr.f32.gmra.mrb[0].mxu0 %v6144
  %v6499 = vpop.f32.mrb[0].mxu0
  %v6500 = vadd.f32 0.0, %v6499
  %v6501 = vpop.f32.mrb[0].mxu0
  %6502 = vmatprep.mubr.f32.mxu0 0.0
  %6503 = vmatmul.mubr.f32.gmra.mrb[0].mxu0 %v6147
  %v6504 = vpop.f32.mrb[0].mxu0
  %v6505 = vadd.f32 0.0, %v6504
  %v6506 = vpop.f32.mrb[0].mxu0
  %6507 = vmatprep.mubr.f32.mxu0 0.0
  %6508 = vmatmul.mubr.f32.gmra.mrb[0].mxu0 %v6150
  %v6509 = vpop.f32.mrb[0].mxu0
  %v6510 = vadd.f32 0.0, %v6509
  %v6511 = vpop.f32.mrb[0].mxu0
  %6512 = vmatprep.mubr.f32.mxu0 0.0
  %6513 = vmatmul.mubr.f32.gmra.mrb[0].mxu0 %v6153
  %v6514 = vpop.f32.mrb[0].mxu0
  %v6515 = vadd.f32 0.0, %v6514
  %v6516 = vpop.f32.mrb[0].mxu0
  %6517 = vmatprep.mubr.f32.mxu0 0.0
  %6518 = vmatmul.mubr.f32.gmra.mrb[0].mxu0 %v6156
  %v6519 = vpop.f32.mrb[0].mxu0
  %v6520 = vadd.f32 0.0, %v6519
  %v6521 = vpop.f32.mrb[0].mxu0
  %6522 = vmatprep.mubr.f32.mxu0 0.0
  %6523 = vmatmul.mubr.f32.gmra.mrb[0].mxu0 %v6159
  %v6524 = vpop.f32.mrb[0].mxu0
  %v6525 = vadd.f32 0.0, %v6524
  %v6526 = vpop.f32.mrb[0].mxu0
  %6527 = vmatprep.mubr.f32.mxu0 0.0
  %6528 = vmatmul.mubr.f32.gmra.mrb[0].mxu0 %v6162
  %v6529 = vpop.f32.mrb[0].mxu0
  %v6530 = vadd.f32 0.0, %v6529
  %v6531 = vpop.f32.mrb[0].mxu0
  %6532 = vmatprep.mubr.f32.mxu0 0.0
  %6533 = vmatmul.mubr.f32.gmra.mrb[0].mxu0 %v6165
  %v6534 = vpop.f32.mrb[0].mxu0
  %v6535 = vadd.f32 0.0, %v6534
  %v6536 = vpop.f32.mrb[0].mxu0
  %6537 = vmatprep.mubr.f32.mxu0 0.0
  %6538 = vmatmul.mubr.f32.gmra.mrb[0].mxu0 %v6168
  %v6539 = vpop.f32.mrb[0].mxu0
  %v6540 = vadd.f32 0.0, %v6539
  %v6541 = vpop.f32.mrb[0].mxu0
  %6542 = vmatprep.mubr.f32.mxu0 0.0
  %6543 = vmatmul.mubr.f32.gmra.mrb[0].mxu0 %v6171
  %v6544 = vpop.f32.mrb[0].mxu0
  %v6545 = vadd.f32 0.0, %v6544
  %v6546 = vpop.f32.mrb[0].mxu0
  %6547 = vmatprep.mubr.f32.mxu0 0.0
  %6548 = vmatmul.mubr.f32.gmra.mrb[0].mxu0 %v6174
  %v6549 = vpop.f32.mrb[0].mxu0
  %v6550 = vadd.f32 0.0, %v6549
  %v6551 = vpop.f32.mrb[0].mxu0
  %6552 = vmatprep.mubr.f32.mxu0 0.0
  %6553 = vmatmul.mubr.f32.gmra.mrb[0].mxu0 %v6177
  %v6554 = vpop.f32.mrb[0].mxu0
  %v6555 = vadd.f32 0.0, %v6554
  %v6556 = vpop.f32.mrb[0].mxu0
  %6557 = vmatprep.mubr.f32.mxu0 0.0
  %6558 = vmatmul.mubr.f32.gmra.mrb[0].mxu0 %v6180
  %v6559 = vpop.f32.mrb[0].mxu0
  %v6560 = vadd.f32 0.0, %v6559
  %v6561 = vpop.f32.mrb[0].mxu0
  %6562 = vmatprep.mubr.f32.mxu0 0.0
  %6563 = vmatmul.mubr.f32.gmra.mrb[0].mxu0 %v6183
  %v6564 = vpop.f32.mrb[0].mxu0
  %v6565 = vadd.f32 0.0, %v6564
  %v6566 = vpop.f32.mrb[0].mxu0
  %6567 = vmatprep.mubr.f32.mxu0 0.0
  %6568 = vmatmul.mubr.f32.gmra.mrb[0].mxu0 %v6186
  %v6569 = vpop.f32.mrb[0].mxu0
  %v6570 = vadd.f32 0.0, %v6569
  %v6571 = vpop.f32.mrb[0].mxu0
  %6572 = vdwg.mxu0
  %v6573 = vrcp.pop %v6255
  %v6574 = vrcp.pop %v6260
  %v6575 = vrcp.pop %v6265
  %v6576 = vrcp.pop %v6270
  %v6577 = vrcp.pop %v6275
  %v6578 = vrcp.pop %v6280
  %v6579 = vrcp.pop %v6285
  %v6580 = vrcp.pop %v6290
  %v6581 = vrcp.pop %v6295
  %v6582 = vrcp.pop %v6300
  %v6583 = vrcp.pop %v6305
  %v6584 = vrcp.pop %v6310
  %v6585 = vrcp.pop %v6315
  %v6586 = vrcp.pop %v6320
  %v6587 = vrcp.pop %v6325
  %v6588 = vrcp.pop %v6330
  %v6589 = vrcp.pop %v6335
  %v6590 = vrcp.pop %v6340
  %v6591 = vrcp.pop %v6345
  %v6592 = vrcp.pop %v6350
  %v6593 = vrcp.pop %v6355
  %v6594 = vrcp.pop %v6360
  %v6595 = vrcp.pop %v6365
  %v6596 = vrcp.pop %v6370
  %v6597 = vrcp.pop %v6375
  %v6598 = vrcp.pop %v6380
  %v6599 = vrcp.pop %v6385
  %v6600 = vrcp.pop %v6390
  %v6601 = vrcp.pop %v6395
  %v6602 = vrcp.pop %v6400
  %v6603 = vrcp.pop %v6405
  %v6604 = vrcp.pop %v6410
  %v6605 = vrcp.pop %v6415
  %v6606 = vrcp.pop %v6420
  %v6607 = vrcp.pop %v6425
  %v6608 = vrcp.pop %v6430
  %v6609 = vrcp.pop %v6435
  %v6610 = vrcp.pop %v6440
  %v6611 = vrcp.pop %v6445
  %v6612 = vrcp.pop %v6450
  %v6613 = vrcp.pop %v6455
  %v6614 = vrcp.pop %v6460
  %v6615 = vrcp.pop %v6465
  %v6616 = vrcp.pop %v6470
  %v6617 = vrcp.pop %v6475
  %v6618 = vrcp.pop %v6480
  %v6619 = vrcp.pop %v6485
  %v6620 = vrcp.pop %v6490
  %v6621 = vrcp.pop %v6495
  %v6622 = vrcp.pop %v6500
  %v6623 = vrcp.pop %v6505
  %v6624 = vrcp.pop %v6510
  %v6625 = vrcp.pop %v6515
  %v6626 = vrcp.pop %v6520
  %v6627 = vrcp.pop %v6525
  %v6628 = vrcp.pop %v6530
  %v6629 = vrcp.pop %v6535
  %v6630 = vrcp.pop %v6540
  %v6631 = vrcp.pop %v6545
  %v6632 = vrcp.pop %v6550
  %v6633 = vrcp.pop %v6555
  %v6634 = vrcp.pop %v6560
  %v6635 = vrcp.pop %v6565
  %v6636 = vrcp.pop %v6570
  %v6637 = vmul.f32 %v5861, %v6573
  %v6638 = vmul.f32 %v5863, %v6574
  %v6639 = vmul.f32 %v5865, %v6575
  %v6640 = vmul.f32 %v5867, %v6576
  %v6641 = vmul.f32 %v5869, %v6577
  %v6642 = vmul.f32 %v5871, %v6578
  %v6643 = vmul.f32 %v5873, %v6579
  %v6644 = vmul.f32 %v5875, %v6580
  %v6645 = vmul.f32 %v5877, %v6581
  %v6646 = vmul.f32 %v5879, %v6582
  %v6647 = vmul.f32 %v5881, %v6583
  %v6648 = vmul.f32 %v5883, %v6584
  %v6649 = vmul.f32 %v5885, %v6585
  %v6650 = vmul.f32 %v5887, %v6586
  %v6651 = vmul.f32 %v5889, %v6587
  %v6652 = vmul.f32 %v5891, %v6588
  %v6653 = vmul.f32 %v5893, %v6589
  %v6654 = vmul.f32 %v5895, %v6590
  %v6655 = vmul.f32 %v5897, %v6591
  %v6656 = vmul.f32 %v5899, %v6592
  %v6657 = vmul.f32 %v5901, %v6593
  %v6658 = vmul.f32 %v5903, %v6594
  %v6659 = vmul.f32 %v5905, %v6595
  %v6660 = vmul.f32 %v5907, %v6596
  %v6661 = vmul.f32 %v5909, %v6597
  %v6662 = vmul.f32 %v5911, %v6598
  %v6663 = vmul.f32 %v5913, %v6599
  %v6664 = vmul.f32 %v5915, %v6600
  %v6665 = vmul.f32 %v5917, %v6601
  %v6666 = vmul.f32 %v5919, %v6602
  %v6667 = vmul.f32 %v5921, %v6603
  %v6668 = vmul.f32 %v5923, %v6604
  %v6669 = vmul.f32 %v5925, %v6605
  %v6670 = vmul.f32 %v5927, %v6606
  %v6671 = vmul.f32 %v5929, %v6607
  %v6672 = vmul.f32 %v5931, %v6608
  %v6673 = vmul.f32 %v5933, %v6609
  %v6674 = vmul.f32 %v5935, %v6610
  %v6675 = vmul.f32 %v5937, %v6611
  %v6676 = vmul.f32 %v5939, %v6612
  %v6677 = vmul.f32 %v5941, %v6613
  %v6678 = vmul.f32 %v5943, %v6614
  %v6679 = vmul.f32 %v5945, %v6615
  %v6680 = vmul.f32 %v5947, %v6616
  %v6681 = vmul.f32 %v5949, %v6617
  %v6682 = vmul.f32 %v5951, %v6618
  %v6683 = vmul.f32 %v5953, %v6619
  %v6684 = vmul.f32 %v5955, %v6620
  %v6685 = vmul.f32 %v5957, %v6621
  %v6686 = vmul.f32 %v5959, %v6622
  %v6687 = vmul.f32 %v5961, %v6623
  %v6688 = vmul.f32 %v5963, %v6624
  %v6689 = vmul.f32 %v5965, %v6625
  %v6690 = vmul.f32 %v5967, %v6626
  %v6691 = vmul.f32 %v5969, %v6627
  %v6692 = vmul.f32 %v5971, %v6628
  %v6693 = vmul.f32 %v5973, %v6629
  %v6694 = vmul.f32 %v5975, %v6630
  %v6695 = vmul.f32 %v5977, %v6631
  %v6696 = vmul.f32 %v5979, %v6632
  %v6697 = vmul.f32 %v5981, %v6633
  %v6698 = vmul.f32 %v5983, %v6634
  %v6699 = vmul.f32 %v5985, %v6635
  %v6700 = vmul.f32 %v5987, %v6636
  %v6701 = vpack.c.bf16 %v6638, %v6637
  %v6702 = vpack.c.bf16 %v6640, %v6639
  %v6703 = vpack.c.bf16 %v6642, %v6641
  %v6704 = vpack.c.bf16 %v6644, %v6643
  %v6705 = vpack.c.bf16 %v6646, %v6645
  %v6706 = vpack.c.bf16 %v6648, %v6647
  %v6707 = vpack.c.bf16 %v6650, %v6649
  %v6708 = vpack.c.bf16 %v6652, %v6651
  %v6709 = vpack.c.bf16 %v6654, %v6653
  %v6710 = vpack.c.bf16 %v6656, %v6655
  %v6711 = vpack.c.bf16 %v6658, %v6657
  %v6712 = vpack.c.bf16 %v6660, %v6659
  %v6713 = vpack.c.bf16 %v6662, %v6661
  %v6714 = vpack.c.bf16 %v6664, %v6663
  %v6715 = vpack.c.bf16 %v6666, %v6665
  %v6716 = vpack.c.bf16 %v6668, %v6667
  %v6717 = vpack.c.bf16 %v6670, %v6669
  %v6718 = vpack.c.bf16 %v6672, %v6671
  %v6719 = vpack.c.bf16 %v6674, %v6673
  %v6720 = vpack.c.bf16 %v6676, %v6675
  %v6721 = vpack.c.bf16 %v6678, %v6677
  %v6722 = vpack.c.bf16 %v6680, %v6679
  %v6723 = vpack.c.bf16 %v6682, %v6681
  %v6724 = vpack.c.bf16 %v6684, %v6683
  %v6725 = vpack.c.bf16 %v6686, %v6685
  %v6726 = vpack.c.bf16 %v6688, %v6687
  %v6727 = vpack.c.bf16 %v6690, %v6689
  %v6728 = vpack.c.bf16 %v6692, %v6691
  %v6729 = vpack.c.bf16 %v6694, %v6693
  %v6730 = vpack.c.bf16 %v6696, %v6695
  %v6731 = vpack.c.bf16 %v6698, %v6697
  %v6732 = vpack.c.bf16 %v6700, %v6699
  %v6734 = vsel %vm5603, %v6701, 0
  %v6737 = vsel %vm5603, %v6702, 0
  %v6740 = vsel %vm5603, %v6703, 0
  %v6743 = vsel %vm5603, %v6704, 0
  %v6746 = vsel %vm5603, %v6705, 0
  %v6749 = vsel %vm5603, %v6706, 0
  %v6752 = vsel %vm5603, %v6707, 0
  %v6755 = vsel %vm5603, %v6708, 0
  %6757 = vmatprep.subr.bf16.mxu0 %v4764
  %6758 = vmatpush1.bf16.msra.mxu0 %v4763
  %6759 = vmatprep.subr.bf16.mxu0 %v4768
  %6760 = vmatpush1.bf16.msra.mxu0 %v4767
  %6761 = vmatprep.subr.bf16.mxu0 %v4772
  %6762 = vmatpush1.bf16.msra.mxu0 %v4771
  %6763 = vmatprep.subr.bf16.mxu0 %v4776
  %6764 = vmatpush1.bf16.msra.mxu0 %v4775
  %6765 = vmatprep.subr.bf16.mxu0 0
  %6766 = vmatpush1.bf16.msra.mxu0 0
  %6767 = vmatprep.subr.bf16.mxu0 0
  %6768 = vmatpush1.bf16.msra.mxu0 0
  %6769 = vmatprep.subr.bf16.mxu0 0
  %6770 = vmatpush1.bf16.msra.mxu0 0
  %6771 = vmatprep.subr.bf16.mxu0 0
  %6772 = vmatpush1.bf16.msra.mxu0 0
  %6773 = vmatprep.subr.bf16.mxu0 0
  %6774 = vmatpush1.bf16.msra.mxu0 0
  %6775 = vmatprep.subr.bf16.mxu0 0
  %6776 = vmatpush1.bf16.msra.mxu0 0
  %6777 = vmatprep.subr.bf16.mxu0 0
  %6778 = vmatpush1.bf16.msra.mxu0 0
  %6779 = vmatprep.subr.bf16.mxu0 0
  %6780 = vmatpush1.bf16.msra.mxu0 0
  %6781 = vmatprep.subr.bf16.mxu0 0
  %6782 = vmatpush1.bf16.msra.mxu0 0
  %6783 = vmatprep.subr.bf16.mxu0 0
  %6784 = vmatpush1.bf16.msra.mxu0 0
  %6785 = vmatprep.subr.bf16.mxu0 0
  %6786 = vmatpush1.bf16.msra.mxu0 0
  %6787 = vmatprep.subr.bf16.mxu0 0
  %6788 = vmatpush1.bf16.msra.mxu0 0
  %6789 = vmatprep.mubr.bf16.mxu0 0
  %6790 = vmatmul.mubr.bf16.gmra.mrb[0].mxu0 %v6734
  %v6791 = vpop.f32.mrb[0].mxu0
  %v6792 = vadd.f32 0.0, %v6791
  %v6793 = vpop.f32.mrb[0].mxu0
  %v6794 = vadd.f32 0.0, %v6793
  %v6795 = vpop.f32.mrb[0].mxu0
  %v6796 = vadd.f32 0.0, %v6795
  %v6797 = vpop.f32.mrb[0].mxu0
  %v6798 = vadd.f32 0.0, %v6797
  %6799 = vmatprep.mubr.bf16.mxu0 0
  %6800 = vmatmul.mubr.bf16.gmra.mrb[0].mxu0 %v6737
  %v6801 = vpop.f32.mrb[0].mxu0
  %v6802 = vadd.f32 0.0, %v6801
  %v6803 = vpop.f32.mrb[0].mxu0
  %v6804 = vadd.f32 0.0, %v6803
  %v6805 = vpop.f32.mrb[0].mxu0
  %v6806 = vadd.f32 0.0, %v6805
  %v6807 = vpop.f32.mrb[0].mxu0
  %v6808 = vadd.f32 0.0, %v6807
  %6809 = vmatprep.mubr.bf16.mxu0 0
  %6810 = vmatmul.mubr.bf16.gmra.mrb[0].mxu0 %v6740
  %v6811 = vpop.f32.mrb[0].mxu0
  %v6812 = vadd.f32 0.0, %v6811
  %v6813 = vpop.f32.mrb[0].mxu0
  %v6814 = vadd.f32 0.0, %v6813
  %v6815 = vpop.f32.mrb[0].mxu0
  %v6816 = vadd.f32 0.0, %v6815
  %v6817 = vpop.f32.mrb[0].mxu0
  %v6818 = vadd.f32 0.0, %v6817
  %6819 = vmatprep.mubr.bf16.mxu0 0
  %6820 = vmatmul.mubr.bf16.gmra.mrb[0].mxu0 %v6743
  %v6821 = vpop.f32.mrb[0].mxu0
  %v6822 = vadd.f32 0.0, %v6821
  %v6823 = vpop.f32.mrb[0].mxu0
  %v6824 = vadd.f32 0.0, %v6823
  %v6825 = vpop.f32.mrb[0].mxu0
  %v6826 = vadd.f32 0.0, %v6825
  %v6827 = vpop.f32.mrb[0].mxu0
  %v6828 = vadd.f32 0.0, %v6827
  %6829 = vmatprep.mubr.bf16.mxu0 0
  %6830 = vmatmul.mubr.bf16.gmra.mrb[0].mxu0 %v6746
  %v6831 = vpop.f32.mrb[0].mxu0
  %v6832 = vadd.f32 0.0, %v6831
  %v6833 = vpop.f32.mrb[0].mxu0
  %v6834 = vadd.f32 0.0, %v6833
  %v6835 = vpop.f32.mrb[0].mxu0
  %v6836 = vadd.f32 0.0, %v6835
  %v6837 = vpop.f32.mrb[0].mxu0
  %v6838 = vadd.f32 0.0, %v6837
  %6839 = vmatprep.mubr.bf16.mxu0 0
  %6840 = vmatmul.mubr.bf16.gmra.mrb[0].mxu0 %v6749
  %v6841 = vpop.f32.mrb[0].mxu0
  %v6842 = vadd.f32 0.0, %v6841
  %v6843 = vpop.f32.mrb[0].mxu0
  %v6844 = vadd.f32 0.0, %v6843
  %v6845 = vpop.f32.mrb[0].mxu0
  %v6846 = vadd.f32 0.0, %v6845
  %v6847 = vpop.f32.mrb[0].mxu0
  %v6848 = vadd.f32 0.0, %v6847
  %6849 = vmatprep.mubr.bf16.mxu0 0
  %6850 = vmatmul.mubr.bf16.gmra.mrb[0].mxu0 %v6752
  %v6851 = vpop.f32.mrb[0].mxu0
  %v6852 = vadd.f32 0.0, %v6851
  %v6853 = vpop.f32.mrb[0].mxu0
  %v6854 = vadd.f32 0.0, %v6853
  %v6855 = vpop.f32.mrb[0].mxu0
  %v6856 = vadd.f32 0.0, %v6855
  %v6857 = vpop.f32.mrb[0].mxu0
  %v6858 = vadd.f32 0.0, %v6857
  %6859 = vmatprep.mubr.bf16.mxu0 0
  %6860 = vmatmul.mubr.bf16.gmra.mrb[0].mxu0 %v6755
  %v6861 = vpop.f32.mrb[0].mxu0
  %v6862 = vadd.f32 0.0, %v6861
  %v6863 = vpop.f32.mrb[0].mxu0
  %v6864 = vadd.f32 0.0, %v6863
  %v6865 = vpop.f32.mrb[0].mxu0
  %v6866 = vadd.f32 0.0, %v6865
  %v6867 = vpop.f32.mrb[0].mxu0
  %v6868 = vadd.f32 0.0, %v6867
  %6869 = vdwg.mxu0
  %6870 = vmatprep.subr.bf16.mxu0 %v4766
  %6871 = vmatpush1.bf16.msra.mxu0 %v4765
  %6872 = vmatprep.subr.bf16.mxu0 %v4770
  %6873 = vmatpush1.bf16.msra.mxu0 %v4769
  %6874 = vmatprep.subr.bf16.mxu0 %v4774
  %6875 = vmatpush1.bf16.msra.mxu0 %v4773
  %6876 = vmatprep.subr.bf16.mxu0 %v4778
  %6877 = vmatpush1.bf16.msra.mxu0 %v4777
  %6878 = vmatprep.subr.bf16.mxu0 0
  %6879 = vmatpush1.bf16.msra.mxu0 0
  %6880 = vmatprep.subr.bf16.mxu0 0
  %6881 = vmatpush1.bf16.msra.mxu0 0
  %6882 = vmatprep.subr.bf16.mxu0 0
  %6883 = vmatpush1.bf16.msra.mxu0 0
  %6884 = vmatprep.subr.bf16.mxu0 0
  %6885 = vmatpush1.bf16.msra.mxu0 0
  %6886 = vmatprep.subr.bf16.mxu0 0
  %6887 = vmatpush1.bf16.msra.mxu0 0
  %6888 = vmatprep.subr.bf16.mxu0 0
  %6889 = vmatpush1.bf16.msra.mxu0 0
  %6890 = vmatprep.subr.bf16.mxu0 0
  %6891 = vmatpush1.bf16.msra.mxu0 0
  %6892 = vmatprep.subr.bf16.mxu0 0
  %6893 = vmatpush1.bf16.msra.mxu0 0
  %6894 = vmatprep.subr.bf16.mxu0 0
  %6895 = vmatpush1.bf16.msra.mxu0 0
  %6896 = vmatprep.subr.bf16.mxu0 0
  %6897 = vmatpush1.bf16.msra.mxu0 0
  %6898 = vmatprep.subr.bf16.mxu0 0
  %6899 = vmatpush1.bf16.msra.mxu0 0
  %6900 = vmatprep.subr.bf16.mxu0 0
  %6901 = vmatpush1.bf16.msra.mxu0 0
  %6902 = vmatprep.mubr.bf16.mxu0 0
  %6903 = vmatmul.mubr.bf16.gmra.mrb[0].mxu0 %v6734
  %v6904 = vpop.f32.mrb[0].mxu0
  %v6905 = vadd.f32 0.0, %v6904
  %v6906 = vpop.f32.mrb[0].mxu0
  %v6907 = vadd.f32 0.0, %v6906
  %v6908 = vpop.f32.mrb[0].mxu0
  %v6909 = vadd.f32 0.0, %v6908
  %v6910 = vpop.f32.mrb[0].mxu0
  %v6911 = vadd.f32 0.0, %v6910
  %6912 = vmatprep.mubr.bf16.mxu0 0
  %6913 = vmatmul.mubr.bf16.gmra.mrb[0].mxu0 %v6737
  %v6914 = vpop.f32.mrb[0].mxu0
  %v6915 = vadd.f32 0.0, %v6914
  %v6916 = vpop.f32.mrb[0].mxu0
  %v6917 = vadd.f32 0.0, %v6916
  %v6918 = vpop.f32.mrb[0].mxu0
  %v6919 = vadd.f32 0.0, %v6918
  %v6920 = vpop.f32.mrb[0].mxu0
  %v6921 = vadd.f32 0.0, %v6920
  %6922 = vmatprep.mubr.bf16.mxu0 0
  %6923 = vmatmul.mubr.bf16.gmra.mrb[0].mxu0 %v6740
  %v6924 = vpop.f32.mrb[0].mxu0
  %v6925 = vadd.f32 0.0, %v6924
  %v6926 = vpop.f32.mrb[0].mxu0
  %v6927 = vadd.f32 0.0, %v6926
  %v6928 = vpop.f32.mrb[0].mxu0
  %v6929 = vadd.f32 0.0, %v6928
  %v6930 = vpop.f32.mrb[0].mxu0
  %v6931 = vadd.f32 0.0, %v6930
  %6932 = vmatprep.mubr.bf16.mxu0 0
  %6933 = vmatmul.mubr.bf16.gmra.mrb[0].mxu0 %v6743
  %v6934 = vpop.f32.mrb[0].mxu0
  %v6935 = vadd.f32 0.0, %v6934
  %v6936 = vpop.f32.mrb[0].mxu0
  %v6937 = vadd.f32 0.0, %v6936
  %v6938 = vpop.f32.mrb[0].mxu0
  %v6939 = vadd.f32 0.0, %v6938
  %v6940 = vpop.f32.mrb[0].mxu0
  %v6941 = vadd.f32 0.0, %v6940
  %6942 = vmatprep.mubr.bf16.mxu0 0
  %6943 = vmatmul.mubr.bf16.gmra.mrb[0].mxu0 %v6746
  %v6944 = vpop.f32.mrb[0].mxu0
  %v6945 = vadd.f32 0.0, %v6944
  %v6946 = vpop.f32.mrb[0].mxu0
  %v6947 = vadd.f32 0.0, %v6946
  %v6948 = vpop.f32.mrb[0].mxu0
  %v6949 = vadd.f32 0.0, %v6948
  %v6950 = vpop.f32.mrb[0].mxu0
  %v6951 = vadd.f32 0.0, %v6950
  %6952 = vmatprep.mubr.bf16.mxu0 0
  %6953 = vmatmul.mubr.bf16.gmra.mrb[0].mxu0 %v6749
  %v6954 = vpop.f32.mrb[0].mxu0
  %v6955 = vadd.f32 0.0, %v6954
  %v6956 = vpop.f32.mrb[0].mxu0
  %v6957 = vadd.f32 0.0, %v6956
  %v6958 = vpop.f32.mrb[0].mxu0
  %v6959 = vadd.f32 0.0, %v6958
  %v6960 = vpop.f32.mrb[0].mxu0
  %v6961 = vadd.f32 0.0, %v6960
  %6962 = vmatprep.mubr.bf16.mxu0 0
  %6963 = vmatmul.mubr.bf16.gmra.mrb[0].mxu0 %v6752
  %v6964 = vpop.f32.mrb[0].mxu0
  %v6965 = vadd.f32 0.0, %v6964
  %v6966 = vpop.f32.mrb[0].mxu0
  %v6967 = vadd.f32 0.0, %v6966
  %v6968 = vpop.f32.mrb[0].mxu0
  %v6969 = vadd.f32 0.0, %v6968
  %v6970 = vpop.f32.mrb[0].mxu0
  %v6971 = vadd.f32 0.0, %v6970
  %6972 = vmatprep.mubr.bf16.mxu0 0
  %6973 = vmatmul.mubr.bf16.gmra.mrb[0].mxu0 %v6755
  %v6974 = vpop.f32.mrb[0].mxu0
  %v6975 = vadd.f32 0.0, %v6974
  %v6976 = vpop.f32.mrb[0].mxu0
  %v6977 = vadd.f32 0.0, %v6976
  %v6978 = vpop.f32.mrb[0].mxu0
  %v6979 = vadd.f32 0.0, %v6978
  %v6980 = vpop.f32.mrb[0].mxu0
  %v6981 = vadd.f32 0.0, %v6980
  %6982 = vdwg.mxu0
  %v6984 = vsel %vm5603, %v6709, 0
  %v6987 = vsel %vm5603, %v6710, 0
  %v6990 = vsel %vm5603, %v6711, 0
  %v6993 = vsel %vm5603, %v6712, 0
  %v6996 = vsel %vm5603, %v6713, 0
  %v6999 = vsel %vm5603, %v6714, 0
  %v7002 = vsel %vm5603, %v6715, 0
  %v7005 = vsel %vm5603, %v6716, 0
  %7007 = vmatprep.subr.bf16.mxu0 %v4780
  %7008 = vmatpush1.bf16.msra.mxu0 %v4779
  %7009 = vmatprep.subr.bf16.mxu0 %v4784
  %7010 = vmatpush1.bf16.msra.mxu0 %v4783
  %7011 = vmatprep.subr.bf16.mxu0 %v4788
  %7012 = vmatpush1.bf16.msra.mxu0 %v4787
  %7013 = vmatprep.subr.bf16.mxu0 %v4792
  %7014 = vmatpush1.bf16.msra.mxu0 %v4791
  %7015 = vmatprep.subr.bf16.mxu0 0
  %7016 = vmatpush1.bf16.msra.mxu0 0
  %7017 = vmatprep.subr.bf16.mxu0 0
  %7018 = vmatpush1.bf16.msra.mxu0 0
  %7019 = vmatprep.subr.bf16.mxu0 0
  %7020 = vmatpush1.bf16.msra.mxu0 0
  %7021 = vmatprep.subr.bf16.mxu0 0
  %7022 = vmatpush1.bf16.msra.mxu0 0
  %7023 = vmatprep.subr.bf16.mxu0 0
  %7024 = vmatpush1.bf16.msra.mxu0 0
  %7025 = vmatprep.subr.bf16.mxu0 0
  %7026 = vmatpush1.bf16.msra.mxu0 0
  %7027 = vmatprep.subr.bf16.mxu0 0
  %7028 = vmatpush1.bf16.msra.mxu0 0
  %7029 = vmatprep.subr.bf16.mxu0 0
  %7030 = vmatpush1.bf16.msra.mxu0 0
  %7031 = vmatprep.subr.bf16.mxu0 0
  %7032 = vmatpush1.bf16.msra.mxu0 0
  %7033 = vmatprep.subr.bf16.mxu0 0
  %7034 = vmatpush1.bf16.msra.mxu0 0
  %7035 = vmatprep.subr.bf16.mxu0 0
  %7036 = vmatpush1.bf16.msra.mxu0 0
  %7037 = vmatprep.subr.bf16.mxu0 0
  %7038 = vmatpush1.bf16.msra.mxu0 0
  %7039 = vmatprep.mubr.bf16.mxu0 0
  %7040 = vmatmul.mubr.bf16.gmra.mrb[0].mxu0 %v6984
  %v7041 = vpop.f32.mrb[0].mxu0
  %v7042 = vadd.f32 0.0, %v7041
  %v7043 = vpop.f32.mrb[0].mxu0
  %v7044 = vadd.f32 0.0, %v7043
  %v7045 = vpop.f32.mrb[0].mxu0
  %v7046 = vadd.f32 0.0, %v7045
  %v7047 = vpop.f32.mrb[0].mxu0
  %v7048 = vadd.f32 0.0, %v7047
  %7049 = vmatprep.mubr.bf16.mxu0 0
  %7050 = vmatmul.mubr.bf16.gmra.mrb[0].mxu0 %v6987
  %v7051 = vpop.f32.mrb[0].mxu0
  %v7052 = vadd.f32 0.0, %v7051
  %v7053 = vpop.f32.mrb[0].mxu0
  %v7054 = vadd.f32 0.0, %v7053
  %v7055 = vpop.f32.mrb[0].mxu0
  %v7056 = vadd.f32 0.0, %v7055
  %v7057 = vpop.f32.mrb[0].mxu0
  %v7058 = vadd.f32 0.0, %v7057
  %7059 = vmatprep.mubr.bf16.mxu0 0
  %7060 = vmatmul.mubr.bf16.gmra.mrb[0].mxu0 %v6990
  %v7061 = vpop.f32.mrb[0].mxu0
  %v7062 = vadd.f32 0.0, %v7061
  %v7063 = vpop.f32.mrb[0].mxu0
  %v7064 = vadd.f32 0.0, %v7063
  %v7065 = vpop.f32.mrb[0].mxu0
  %v7066 = vadd.f32 0.0, %v7065
  %v7067 = vpop.f32.mrb[0].mxu0
  %v7068 = vadd.f32 0.0, %v7067
  %7069 = vmatprep.mubr.bf16.mxu0 0
  %7070 = vmatmul.mubr.bf16.gmra.mrb[0].mxu0 %v6993
  %v7071 = vpop.f32.mrb[0].mxu0
  %v7072 = vadd.f32 0.0, %v7071
  %v7073 = vpop.f32.mrb[0].mxu0
  %v7074 = vadd.f32 0.0, %v7073
  %v7075 = vpop.f32.mrb[0].mxu0
  %v7076 = vadd.f32 0.0, %v7075
  %v7077 = vpop.f32.mrb[0].mxu0
  %v7078 = vadd.f32 0.0, %v7077
  %7079 = vmatprep.mubr.bf16.mxu0 0
  %7080 = vmatmul.mubr.bf16.gmra.mrb[0].mxu0 %v6996
  %v7081 = vpop.f32.mrb[0].mxu0
  %v7082 = vadd.f32 0.0, %v7081
  %v7083 = vpop.f32.mrb[0].mxu0
  %v7084 = vadd.f32 0.0, %v7083
  %v7085 = vpop.f32.mrb[0].mxu0
  %v7086 = vadd.f32 0.0, %v7085
  %v7087 = vpop.f32.mrb[0].mxu0
  %v7088 = vadd.f32 0.0, %v7087
  %7089 = vmatprep.mubr.bf16.mxu0 0
  %7090 = vmatmul.mubr.bf16.gmra.mrb[0].mxu0 %v6999
  %v7091 = vpop.f32.mrb[0].mxu0
  %v7092 = vadd.f32 0.0, %v7091
  %v7093 = vpop.f32.mrb[0].mxu0
  %v7094 = vadd.f32 0.0, %v7093
  %v7095 = vpop.f32.mrb[0].mxu0
  %v7096 = vadd.f32 0.0, %v7095
  %v7097 = vpop.f32.mrb[0].mxu0
  %v7098 = vadd.f32 0.0, %v7097
  %7099 = vmatprep.mubr.bf16.mxu0 0
  %7100 = vmatmul.mubr.bf16.gmra.mrb[0].mxu0 %v7002
  %v7101 = vpop.f32.mrb[0].mxu0
  %v7102 = vadd.f32 0.0, %v7101
  %v7103 = vpop.f32.mrb[0].mxu0
  %v7104 = vadd.f32 0.0, %v7103
  %v7105 = vpop.f32.mrb[0].mxu0
  %v7106 = vadd.f32 0.0, %v7105
  %v7107 = vpop.f32.mrb[0].mxu0
  %v7108 = vadd.f32 0.0, %v7107
  %7109 = vmatprep.mubr.bf16.mxu0 0
  %7110 = vmatmul.mubr.bf16.gmra.mrb[0].mxu0 %v7005
  %v7111 = vpop.f32.mrb[0].mxu0
  %v7112 = vadd.f32 0.0, %v7111
  %v7113 = vpop.f32.mrb[0].mxu0
  %v7114 = vadd.f32 0.0, %v7113
  %v7115 = vpop.f32.mrb[0].mxu0
  %v7116 = vadd.f32 0.0, %v7115
  %v7117 = vpop.f32.mrb[0].mxu0
  %v7118 = vadd.f32 0.0, %v7117
  %7119 = vdwg.mxu0
  %7120 = vmatprep.subr.bf16.mxu0 %v4782
  %7121 = vmatpush1.bf16.msra.mxu0 %v4781
  %7122 = vmatprep.subr.bf16.mxu0 %v4786
  %7123 = vmatpush1.bf16.msra.mxu0 %v4785
  %7124 = vmatprep.subr.bf16.mxu0 %v4790
  %7125 = vmatpush1.bf16.msra.mxu0 %v4789
  %7126 = vmatprep.subr.bf16.mxu0 %v4794
  %7127 = vmatpush1.bf16.msra.mxu0 %v4793
  %7128 = vmatprep.subr.bf16.mxu0 0
  %7129 = vmatpush1.bf16.msra.mxu0 0
  %7130 = vmatprep.subr.bf16.mxu0 0
  %7131 = vmatpush1.bf16.msra.mxu0 0
  %7132 = vmatprep.subr.bf16.mxu0 0
  %7133 = vmatpush1.bf16.msra.mxu0 0
  %7134 = vmatprep.subr.bf16.mxu0 0
  %7135 = vmatpush1.bf16.msra.mxu0 0
  %7136 = vmatprep.subr.bf16.mxu0 0
  %7137 = vmatpush1.bf16.msra.mxu0 0
  %7138 = vmatprep.subr.bf16.mxu0 0
  %7139 = vmatpush1.bf16.msra.mxu0 0
  %7140 = vmatprep.subr.bf16.mxu0 0
  %7141 = vmatpush1.bf16.msra.mxu0 0
  %7142 = vmatprep.subr.bf16.mxu0 0
  %7143 = vmatpush1.bf16.msra.mxu0 0
  %7144 = vmatprep.subr.bf16.mxu0 0
  %7145 = vmatpush1.bf16.msra.mxu0 0
  %7146 = vmatprep.subr.bf16.mxu0 0
  %7147 = vmatpush1.bf16.msra.mxu0 0
  %7148 = vmatprep.subr.bf16.mxu0 0
  %7149 = vmatpush1.bf16.msra.mxu0 0
  %7150 = vmatprep.subr.bf16.mxu0 0
  %7151 = vmatpush1.bf16.msra.mxu0 0
  %7152 = vmatprep.mubr.bf16.mxu0 0
  %7153 = vmatmul.mubr.bf16.gmra.mrb[0].mxu0 %v6984
  %v7154 = vpop.f32.mrb[0].mxu0
  %v7155 = vadd.f32 0.0, %v7154
  %v7156 = vpop.f32.mrb[0].mxu0
  %v7157 = vadd.f32 0.0, %v7156
  %v7158 = vpop.f32.mrb[0].mxu0
  %v7159 = vadd.f32 0.0, %v7158
  %v7160 = vpop.f32.mrb[0].mxu0
  %v7161 = vadd.f32 0.0, %v7160
  %7162 = vmatprep.mubr.bf16.mxu0 0
  %7163 = vmatmul.mubr.bf16.gmra.mrb[0].mxu0 %v6987
  %v7164 = vpop.f32.mrb[0].mxu0
  %v7165 = vadd.f32 0.0, %v7164
  %v7166 = vpop.f32.mrb[0].mxu0
  %v7167 = vadd.f32 0.0, %v7166
  %v7168 = vpop.f32.mrb[0].mxu0
  %v7169 = vadd.f32 0.0, %v7168
  %v7170 = vpop.f32.mrb[0].mxu0
  %v7171 = vadd.f32 0.0, %v7170
  %7172 = vmatprep.mubr.bf16.mxu0 0
  %7173 = vmatmul.mubr.bf16.gmra.mrb[0].mxu0 %v6990
  %v7174 = vpop.f32.mrb[0].mxu0
  %v7175 = vadd.f32 0.0, %v7174
  %v7176 = vpop.f32.mrb[0].mxu0
  %v7177 = vadd.f32 0.0, %v7176
  %v7178 = vpop.f32.mrb[0].mxu0
  %v7179 = vadd.f32 0.0, %v7178
  %v7180 = vpop.f32.mrb[0].mxu0
  %v7181 = vadd.f32 0.0, %v7180
  %7182 = vmatprep.mubr.bf16.mxu0 0
  %7183 = vmatmul.mubr.bf16.gmra.mrb[0].mxu0 %v6993
  %v7184 = vpop.f32.mrb[0].mxu0
  %v7185 = vadd.f32 0.0, %v7184
  %v7186 = vpop.f32.mrb[0].mxu0
  %v7187 = vadd.f32 0.0, %v7186
  %v7188 = vpop.f32.mrb[0].mxu0
  %v7189 = vadd.f32 0.0, %v7188
  %v7190 = vpop.f32.mrb[0].mxu0
  %v7191 = vadd.f32 0.0, %v7190
  %7192 = vmatprep.mubr.bf16.mxu0 0
  %7193 = vmatmul.mubr.bf16.gmra.mrb[0].mxu0 %v6996
  %v7194 = vpop.f32.mrb[0].mxu0
  %v7195 = vadd.f32 0.0, %v7194
  %v7196 = vpop.f32.mrb[0].mxu0
  %v7197 = vadd.f32 0.0, %v7196
  %v7198 = vpop.f32.mrb[0].mxu0
  %v7199 = vadd.f32 0.0, %v7198
  %v7200 = vpop.f32.mrb[0].mxu0
  %v7201 = vadd.f32 0.0, %v7200
  %7202 = vmatprep.mubr.bf16.mxu0 0
  %7203 = vmatmul.mubr.bf16.gmra.mrb[0].mxu0 %v6999
  %v7204 = vpop.f32.mrb[0].mxu0
  %v7205 = vadd.f32 0.0, %v7204
  %v7206 = vpop.f32.mrb[0].mxu0
  %v7207 = vadd.f32 0.0, %v7206
  %v7208 = vpop.f32.mrb[0].mxu0
  %v7209 = vadd.f32 0.0, %v7208
  %v7210 = vpop.f32.mrb[0].mxu0
  %v7211 = vadd.f32 0.0, %v7210
  %7212 = vmatprep.mubr.bf16.mxu0 0
  %7213 = vmatmul.mubr.bf16.gmra.mrb[0].mxu0 %v7002
  %v7214 = vpop.f32.mrb[0].mxu0
  %v7215 = vadd.f32 0.0, %v7214
  %v7216 = vpop.f32.mrb[0].mxu0
  %v7217 = vadd.f32 0.0, %v7216
  %v7218 = vpop.f32.mrb[0].mxu0
  %v7219 = vadd.f32 0.0, %v7218
  %v7220 = vpop.f32.mrb[0].mxu0
  %v7221 = vadd.f32 0.0, %v7220
  %7222 = vmatprep.mubr.bf16.mxu0 0
  %7223 = vmatmul.mubr.bf16.gmra.mrb[0].mxu0 %v7005
  %v7224 = vpop.f32.mrb[0].mxu0
  %v7225 = vadd.f32 0.0, %v7224
  %v7226 = vpop.f32.mrb[0].mxu0
  %v7227 = vadd.f32 0.0, %v7226
  %v7228 = vpop.f32.mrb[0].mxu0
  %v7229 = vadd.f32 0.0, %v7228
  %v7230 = vpop.f32.mrb[0].mxu0
  %v7231 = vadd.f32 0.0, %v7230
  %7232 = vdwg.mxu0
  %v7234 = vsel %vm5603, %v6717, 0
  %v7237 = vsel %vm5603, %v6718, 0
  %v7240 = vsel %vm5603, %v6719, 0
  %v7243 = vsel %vm5603, %v6720, 0
  %v7246 = vsel %vm5603, %v6721, 0
  %v7249 = vsel %vm5603, %v6722, 0
  %v7252 = vsel %vm5603, %v6723, 0
  %v7255 = vsel %vm5603, %v6724, 0
  %7257 = vmatprep.subr.bf16.mxu0 %v4796
  %7258 = vmatpush1.bf16.msra.mxu0 %v4795
  %7259 = vmatprep.subr.bf16.mxu0 %v4800
  %7260 = vmatpush1.bf16.msra.mxu0 %v4799
  %7261 = vmatprep.subr.bf16.mxu0 %v4804
  %7262 = vmatpush1.bf16.msra.mxu0 %v4803
  %7263 = vmatprep.subr.bf16.mxu0 %v4808
  %7264 = vmatpush1.bf16.msra.mxu0 %v4807
  %7265 = vmatprep.subr.bf16.mxu0 0
  %7266 = vmatpush1.bf16.msra.mxu0 0
  %7267 = vmatprep.subr.bf16.mxu0 0
  %7268 = vmatpush1.bf16.msra.mxu0 0
  %7269 = vmatprep.subr.bf16.mxu0 0
  %7270 = vmatpush1.bf16.msra.mxu0 0
  %7271 = vmatprep.subr.bf16.mxu0 0
  %7272 = vmatpush1.bf16.msra.mxu0 0
  %7273 = vmatprep.subr.bf16.mxu0 0
  %7274 = vmatpush1.bf16.msra.mxu0 0
  %7275 = vmatprep.subr.bf16.mxu0 0
  %7276 = vmatpush1.bf16.msra.mxu0 0
  %7277 = vmatprep.subr.bf16.mxu0 0
  %7278 = vmatpush1.bf16.msra.mxu0 0
  %7279 = vmatprep.subr.bf16.mxu0 0
  %7280 = vmatpush1.bf16.msra.mxu0 0
  %7281 = vmatprep.subr.bf16.mxu0 0
  %7282 = vmatpush1.bf16.msra.mxu0 0
  %7283 = vmatprep.subr.bf16.mxu0 0
  %7284 = vmatpush1.bf16.msra.mxu0 0
  %7285 = vmatprep.subr.bf16.mxu0 0
  %7286 = vmatpush1.bf16.msra.mxu0 0
  %7287 = vmatprep.subr.bf16.mxu0 0
  %7288 = vmatpush1.bf16.msra.mxu0 0
  %7289 = vmatprep.mubr.bf16.mxu0 0
  %7290 = vmatmul.mubr.bf16.gmra.mrb[0].mxu0 %v7234
  %v7291 = vpop.f32.mrb[0].mxu0
  %v7292 = vadd.f32 0.0, %v7291
  %v7293 = vpop.f32.mrb[0].mxu0
  %v7294 = vadd.f32 0.0, %v7293
  %v7295 = vpop.f32.mrb[0].mxu0
  %v7296 = vadd.f32 0.0, %v7295
  %v7297 = vpop.f32.mrb[0].mxu0
  %v7298 = vadd.f32 0.0, %v7297
  %7299 = vmatprep.mubr.bf16.mxu0 0
  %7300 = vmatmul.mubr.bf16.gmra.mrb[0].mxu0 %v7237
  %v7301 = vpop.f32.mrb[0].mxu0
  %v7302 = vadd.f32 0.0, %v7301
  %v7303 = vpop.f32.mrb[0].mxu0
  %v7304 = vadd.f32 0.0, %v7303
  %v7305 = vpop.f32.mrb[0].mxu0
  %v7306 = vadd.f32 0.0, %v7305
  %v7307 = vpop.f32.mrb[0].mxu0
  %v7308 = vadd.f32 0.0, %v7307
  %7309 = vmatprep.mubr.bf16.mxu0 0
  %7310 = vmatmul.mubr.bf16.gmra.mrb[0].mxu0 %v7240
  %v7311 = vpop.f32.mrb[0].mxu0
  %v7312 = vadd.f32 0.0, %v7311
  %v7313 = vpop.f32.mrb[0].mxu0
  %v7314 = vadd.f32 0.0, %v7313
  %v7315 = vpop.f32.mrb[0].mxu0
  %v7316 = vadd.f32 0.0, %v7315
  %v7317 = vpop.f32.mrb[0].mxu0
  %v7318 = vadd.f32 0.0, %v7317
  %7319 = vmatprep.mubr.bf16.mxu0 0
  %7320 = vmatmul.mubr.bf16.gmra.mrb[0].mxu0 %v7243
  %v7321 = vpop.f32.mrb[0].mxu0
  %v7322 = vadd.f32 0.0, %v7321
  %v7323 = vpop.f32.mrb[0].mxu0
  %v7324 = vadd.f32 0.0, %v7323
  %v7325 = vpop.f32.mrb[0].mxu0
  %v7326 = vadd.f32 0.0, %v7325
  %v7327 = vpop.f32.mrb[0].mxu0
  %v7328 = vadd.f32 0.0, %v7327
  %7329 = vmatprep.mubr.bf16.mxu0 0
  %7330 = vmatmul.mubr.bf16.gmra.mrb[0].mxu0 %v7246
  %v7331 = vpop.f32.mrb[0].mxu0
  %v7332 = vadd.f32 0.0, %v7331
  %v7333 = vpop.f32.mrb[0].mxu0
  %v7334 = vadd.f32 0.0, %v7333
  %v7335 = vpop.f32.mrb[0].mxu0
  %v7336 = vadd.f32 0.0, %v7335
  %v7337 = vpop.f32.mrb[0].mxu0
  %v7338 = vadd.f32 0.0, %v7337
  %7339 = vmatprep.mubr.bf16.mxu0 0
  %7340 = vmatmul.mubr.bf16.gmra.mrb[0].mxu0 %v7249
  %v7341 = vpop.f32.mrb[0].mxu0
  %v7342 = vadd.f32 0.0, %v7341
  %v7343 = vpop.f32.mrb[0].mxu0
  %v7344 = vadd.f32 0.0, %v7343
  %v7345 = vpop.f32.mrb[0].mxu0
  %v7346 = vadd.f32 0.0, %v7345
  %v7347 = vpop.f32.mrb[0].mxu0
  %v7348 = vadd.f32 0.0, %v7347
  %7349 = vmatprep.mubr.bf16.mxu0 0
  %7350 = vmatmul.mubr.bf16.gmra.mrb[0].mxu0 %v7252
  %v7351 = vpop.f32.mrb[0].mxu0
  %v7352 = vadd.f32 0.0, %v7351
  %v7353 = vpop.f32.mrb[0].mxu0
  %v7354 = vadd.f32 0.0, %v7353
  %v7355 = vpop.f32.mrb[0].mxu0
  %v7356 = vadd.f32 0.0, %v7355
  %v7357 = vpop.f32.mrb[0].mxu0
  %v7358 = vadd.f32 0.0, %v7357
  %7359 = vmatprep.mubr.bf16.mxu0 0
  %7360 = vmatmul.mubr.bf16.gmra.mrb[0].mxu0 %v7255
  %v7361 = vpop.f32.mrb[0].mxu0
  %v7362 = vadd.f32 0.0, %v7361
  %v7363 = vpop.f32.mrb[0].mxu0
  %v7364 = vadd.f32 0.0, %v7363
  %v7365 = vpop.f32.mrb[0].mxu0
  %v7366 = vadd.f32 0.0, %v7365
  %v7367 = vpop.f32.mrb[0].mxu0
  %v7368 = vadd.f32 0.0, %v7367
  %7369 = vdwg.mxu0
  %7370 = vmatprep.subr.bf16.mxu0 %v4798
  %7371 = vmatpush1.bf16.msra.mxu0 %v4797
  %7372 = vmatprep.subr.bf16.mxu0 %v4802
  %7373 = vmatpush1.bf16.msra.mxu0 %v4801
  %7374 = vmatprep.subr.bf16.mxu0 %v4806
  %7375 = vmatpush1.bf16.msra.mxu0 %v4805
  %7376 = vmatprep.subr.bf16.mxu0 %v4810
  %7377 = vmatpush1.bf16.msra.mxu0 %v4809
  %7378 = vmatprep.subr.bf16.mxu0 0
  %7379 = vmatpush1.bf16.msra.mxu0 0
  %7380 = vmatprep.subr.bf16.mxu0 0
  %7381 = vmatpush1.bf16.msra.mxu0 0
  %7382 = vmatprep.subr.bf16.mxu0 0
  %7383 = vmatpush1.bf16.msra.mxu0 0
  %7384 = vmatprep.subr.bf16.mxu0 0
  %7385 = vmatpush1.bf16.msra.mxu0 0
  %7386 = vmatprep.subr.bf16.mxu0 0
  %7387 = vmatpush1.bf16.msra.mxu0 0
  %7388 = vmatprep.subr.bf16.mxu0 0
  %7389 = vmatpush1.bf16.msra.mxu0 0
  %7390 = vmatprep.subr.bf16.mxu0 0
  %7391 = vmatpush1.bf16.msra.mxu0 0
  %7392 = vmatprep.subr.bf16.mxu0 0
  %7393 = vmatpush1.bf16.msra.mxu0 0
  %7394 = vmatprep.subr.bf16.mxu0 0
  %7395 = vmatpush1.bf16.msra.mxu0 0
  %7396 = vmatprep.subr.bf16.mxu0 0
  %7397 = vmatpush1.bf16.msra.mxu0 0
  %7398 = vmatprep.subr.bf16.mxu0 0
  %7399 = vmatpush1.bf16.msra.mxu0 0
  %7400 = vmatprep.subr.bf16.mxu0 0
  %7401 = vmatpush1.bf16.msra.mxu0 0
  %7402 = vmatprep.mubr.bf16.mxu0 0
  %7403 = vmatmul.mubr.bf16.gmra.mrb[0].mxu0 %v7234
  %v7404 = vpop.f32.mrb[0].mxu0
  %v7405 = vadd.f32 0.0, %v7404
  %v7406 = vpop.f32.mrb[0].mxu0
  %v7407 = vadd.f32 0.0, %v7406
  %v7408 = vpop.f32.mrb[0].mxu0
  %v7409 = vadd.f32 0.0, %v7408
  %v7410 = vpop.f32.mrb[0].mxu0
  %v7411 = vadd.f32 0.0, %v7410
  %7412 = vmatprep.mubr.bf16.mxu0 0
  %7413 = vmatmul.mubr.bf16.gmra.mrb[0].mxu0 %v7237
  %v7414 = vpop.f32.mrb[0].mxu0
  %v7415 = vadd.f32 0.0, %v7414
  %v7416 = vpop.f32.mrb[0].mxu0
  %v7417 = vadd.f32 0.0, %v7416
  %v7418 = vpop.f32.mrb[0].mxu0
  %v7419 = vadd.f32 0.0, %v7418
  %v7420 = vpop.f32.mrb[0].mxu0
  %v7421 = vadd.f32 0.0, %v7420
  %7422 = vmatprep.mubr.bf16.mxu0 0
  %7423 = vmatmul.mubr.bf16.gmra.mrb[0].mxu0 %v7240
  %v7424 = vpop.f32.mrb[0].mxu0
  %v7425 = vadd.f32 0.0, %v7424
  %v7426 = vpop.f32.mrb[0].mxu0
  %v7427 = vadd.f32 0.0, %v7426
  %v7428 = vpop.f32.mrb[0].mxu0
  %v7429 = vadd.f32 0.0, %v7428
  %v7430 = vpop.f32.mrb[0].mxu0
  %v7431 = vadd.f32 0.0, %v7430
  %7432 = vmatprep.mubr.bf16.mxu0 0
  %7433 = vmatmul.mubr.bf16.gmra.mrb[0].mxu0 %v7243
  %v7434 = vpop.f32.mrb[0].mxu0
  %v7435 = vadd.f32 0.0, %v7434
  %v7436 = vpop.f32.mrb[0].mxu0
  %v7437 = vadd.f32 0.0, %v7436
  %v7438 = vpop.f32.mrb[0].mxu0
  %v7439 = vadd.f32 0.0, %v7438
  %v7440 = vpop.f32.mrb[0].mxu0
  %v7441 = vadd.f32 0.0, %v7440
  %7442 = vmatprep.mubr.bf16.mxu0 0
  %7443 = vmatmul.mubr.bf16.gmra.mrb[0].mxu0 %v7246
  %v7444 = vpop.f32.mrb[0].mxu0
  %v7445 = vadd.f32 0.0, %v7444
  %v7446 = vpop.f32.mrb[0].mxu0
  %v7447 = vadd.f32 0.0, %v7446
  %v7448 = vpop.f32.mrb[0].mxu0
  %v7449 = vadd.f32 0.0, %v7448
  %v7450 = vpop.f32.mrb[0].mxu0
  %v7451 = vadd.f32 0.0, %v7450
  %7452 = vmatprep.mubr.bf16.mxu0 0
  %7453 = vmatmul.mubr.bf16.gmra.mrb[0].mxu0 %v7249
  %v7454 = vpop.f32.mrb[0].mxu0
  %v7455 = vadd.f32 0.0, %v7454
  %v7456 = vpop.f32.mrb[0].mxu0
  %v7457 = vadd.f32 0.0, %v7456
  %v7458 = vpop.f32.mrb[0].mxu0
  %v7459 = vadd.f32 0.0, %v7458
  %v7460 = vpop.f32.mrb[0].mxu0
  %v7461 = vadd.f32 0.0, %v7460
  %7462 = vmatprep.mubr.bf16.mxu0 0
  %7463 = vmatmul.mubr.bf16.gmra.mrb[0].mxu0 %v7252
  %v7464 = vpop.f32.mrb[0].mxu0
  %v7465 = vadd.f32 0.0, %v7464
  %v7466 = vpop.f32.mrb[0].mxu0
  %v7467 = vadd.f32 0.0, %v7466
  %v7468 = vpop.f32.mrb[0].mxu0
  %v7469 = vadd.f32 0.0, %v7468
  %v7470 = vpop.f32.mrb[0].mxu0
  %v7471 = vadd.f32 0.0, %v7470
  %7472 = vmatprep.mubr.bf16.mxu0 0
  %7473 = vmatmul.mubr.bf16.gmra.mrb[0].mxu0 %v7255
  %v7474 = vpop.f32.mrb[0].mxu0
  %v7475 = vadd.f32 0.0, %v7474
  %v7476 = vpop.f32.mrb[0].mxu0
  %v7477 = vadd.f32 0.0, %v7476
  %v7478 = vpop.f32.mrb[0].mxu0
  %v7479 = vadd.f32 0.0, %v7478
  %v7480 = vpop.f32.mrb[0].mxu0
  %v7481 = vadd.f32 0.0, %v7480
  %7482 = vdwg.mxu0
  %v7484 = vsel %vm5603, %v6725, 0
  %v7487 = vsel %vm5603, %v6726, 0
  %v7490 = vsel %vm5603, %v6727, 0
  %v7493 = vsel %vm5603, %v6728, 0
  %v7496 = vsel %vm5603, %v6729, 0
  %v7499 = vsel %vm5603, %v6730, 0
  %v7502 = vsel %vm5603, %v6731, 0
  %v7505 = vsel %vm5603, %v6732, 0
  %7507 = vmatprep.subr.bf16.mxu0 %v4812
  %7508 = vmatpush1.bf16.msra.mxu0 %v4811
  %7509 = vmatprep.subr.bf16.mxu0 %v4816
  %7510 = vmatpush1.bf16.msra.mxu0 %v4815
  %7511 = vmatprep.subr.bf16.mxu0 %v4820
  %7512 = vmatpush1.bf16.msra.mxu0 %v4819
  %7513 = vmatprep.subr.bf16.mxu0 %v4824
  %7514 = vmatpush1.bf16.msra.mxu0 %v4823
  %7515 = vmatprep.subr.bf16.mxu0 0
  %7516 = vmatpush1.bf16.msra.mxu0 0
  %7517 = vmatprep.subr.bf16.mxu0 0
  %7518 = vmatpush1.bf16.msra.mxu0 0
  %7519 = vmatprep.subr.bf16.mxu0 0
  %7520 = vmatpush1.bf16.msra.mxu0 0
  %7521 = vmatprep.subr.bf16.mxu0 0
  %7522 = vmatpush1.bf16.msra.mxu0 0
  %7523 = vmatprep.subr.bf16.mxu0 0
  %7524 = vmatpush1.bf16.msra.mxu0 0
  %7525 = vmatprep.subr.bf16.mxu0 0
  %7526 = vmatpush1.bf16.msra.mxu0 0
  %7527 = vmatprep.subr.bf16.mxu0 0
  %7528 = vmatpush1.bf16.msra.mxu0 0
  %7529 = vmatprep.subr.bf16.mxu0 0
  %7530 = vmatpush1.bf16.msra.mxu0 0
  %7531 = vmatprep.subr.bf16.mxu0 0
  %7532 = vmatpush1.bf16.msra.mxu0 0
  %7533 = vmatprep.subr.bf16.mxu0 0
  %7534 = vmatpush1.bf16.msra.mxu0 0
  %7535 = vmatprep.subr.bf16.mxu0 0
  %7536 = vmatpush1.bf16.msra.mxu0 0
  %7537 = vmatprep.subr.bf16.mxu0 0
  %7538 = vmatpush1.bf16.msra.mxu0 0
  %7539 = vmatprep.mubr.bf16.mxu0 0
  %7540 = vmatmul.mubr.bf16.gmra.mrb[0].mxu0 %v7484
  %v7541 = vpop.f32.mrb[0].mxu0
  %v7542 = vadd.f32 0.0, %v7541
  %v7543 = vpop.f32.mrb[0].mxu0
  %v7544 = vadd.f32 0.0, %v7543
  %v7545 = vpop.f32.mrb[0].mxu0
  %v7546 = vadd.f32 0.0, %v7545
  %v7547 = vpop.f32.mrb[0].mxu0
  %v7548 = vadd.f32 0.0, %v7547
  %7549 = vmatprep.mubr.bf16.mxu0 0
  %7550 = vmatmul.mubr.bf16.gmra.mrb[0].mxu0 %v7487
  %v7551 = vpop.f32.mrb[0].mxu0
  %v7552 = vadd.f32 0.0, %v7551
  %v7553 = vpop.f32.mrb[0].mxu0
  %v7554 = vadd.f32 0.0, %v7553
  %v7555 = vpop.f32.mrb[0].mxu0
  %v7556 = vadd.f32 0.0, %v7555
  %v7557 = vpop.f32.mrb[0].mxu0
  %v7558 = vadd.f32 0.0, %v7557
  %7559 = vmatprep.mubr.bf16.mxu0 0
  %7560 = vmatmul.mubr.bf16.gmra.mrb[0].mxu0 %v7490
  %v7561 = vpop.f32.mrb[0].mxu0
  %v7562 = vadd.f32 0.0, %v7561
  %v7563 = vpop.f32.mrb[0].mxu0
  %v7564 = vadd.f32 0.0, %v7563
  %v7565 = vpop.f32.mrb[0].mxu0
  %v7566 = vadd.f32 0.0, %v7565
  %v7567 = vpop.f32.mrb[0].mxu0
  %v7568 = vadd.f32 0.0, %v7567
  %7569 = vmatprep.mubr.bf16.mxu0 0
  %7570 = vmatmul.mubr.bf16.gmra.mrb[0].mxu0 %v7493
  %v7571 = vpop.f32.mrb[0].mxu0
  %v7572 = vadd.f32 0.0, %v7571
  %v7573 = vpop.f32.mrb[0].mxu0
  %v7574 = vadd.f32 0.0, %v7573
  %v7575 = vpop.f32.mrb[0].mxu0
  %v7576 = vadd.f32 0.0, %v7575
  %v7577 = vpop.f32.mrb[0].mxu0
  %v7578 = vadd.f32 0.0, %v7577
  %7579 = vmatprep.mubr.bf16.mxu0 0
  %7580 = vmatmul.mubr.bf16.gmra.mrb[0].mxu0 %v7496
  %v7581 = vpop.f32.mrb[0].mxu0
  %v7582 = vadd.f32 0.0, %v7581
  %v7583 = vpop.f32.mrb[0].mxu0
  %v7584 = vadd.f32 0.0, %v7583
  %v7585 = vpop.f32.mrb[0].mxu0
  %v7586 = vadd.f32 0.0, %v7585
  %v7587 = vpop.f32.mrb[0].mxu0
  %v7588 = vadd.f32 0.0, %v7587
  %7589 = vmatprep.mubr.bf16.mxu0 0
  %7590 = vmatmul.mubr.bf16.gmra.mrb[0].mxu0 %v7499
  %v7591 = vpop.f32.mrb[0].mxu0
  %v7592 = vadd.f32 0.0, %v7591
  %v7593 = vpop.f32.mrb[0].mxu0
  %v7594 = vadd.f32 0.0, %v7593
  %v7595 = vpop.f32.mrb[0].mxu0
  %v7596 = vadd.f32 0.0, %v7595
  %v7597 = vpop.f32.mrb[0].mxu0
  %v7598 = vadd.f32 0.0, %v7597
  %7599 = vmatprep.mubr.bf16.mxu0 0
  %7600 = vmatmul.mubr.bf16.gmra.mrb[0].mxu0 %v7502
  %v7601 = vpop.f32.mrb[0].mxu0
  %v7602 = vadd.f32 0.0, %v7601
  %v7603 = vpop.f32.mrb[0].mxu0
  %v7604 = vadd.f32 0.0, %v7603
  %v7605 = vpop.f32.mrb[0].mxu0
  %v7606 = vadd.f32 0.0, %v7605
  %v7607 = vpop.f32.mrb[0].mxu0
  %v7608 = vadd.f32 0.0, %v7607
  %7609 = vmatprep.mubr.bf16.mxu0 0
  %7610 = vmatmul.mubr.bf16.gmra.mrb[0].mxu0 %v7505
  %v7611 = vpop.f32.mrb[0].mxu0
  %v7612 = vadd.f32 0.0, %v7611
  %v7613 = vpop.f32.mrb[0].mxu0
  %v7614 = vadd.f32 0.0, %v7613
  %v7615 = vpop.f32.mrb[0].mxu0
  %v7616 = vadd.f32 0.0, %v7615
  %v7617 = vpop.f32.mrb[0].mxu0
  %v7618 = vadd.f32 0.0, %v7617
  %7619 = vdwg.mxu0
  %7620 = vmatprep.subr.bf16.mxu0 %v4814
  %7621 = vmatpush1.bf16.msra.mxu0 %v4813
  %7622 = vmatprep.subr.bf16.mxu0 %v4818
  %7623 = vmatpush1.bf16.msra.mxu0 %v4817
  %7624 = vmatprep.subr.bf16.mxu0 %v4822
  %7625 = vmatpush1.bf16.msra.mxu0 %v4821
  %7626 = vmatprep.subr.bf16.mxu0 %v4826
  %7627 = vmatpush1.bf16.msra.mxu0 %v4825
  %7628 = vmatprep.subr.bf16.mxu0 0
  %7629 = vmatpush1.bf16.msra.mxu0 0
  %7630 = vmatprep.subr.bf16.mxu0 0
  %7631 = vmatpush1.bf16.msra.mxu0 0
  %7632 = vmatprep.subr.bf16.mxu0 0
  %7633 = vmatpush1.bf16.msra.mxu0 0
  %7634 = vmatprep.subr.bf16.mxu0 0
  %7635 = vmatpush1.bf16.msra.mxu0 0
  %7636 = vmatprep.subr.bf16.mxu0 0
  %7637 = vmatpush1.bf16.msra.mxu0 0
  %7638 = vmatprep.subr.bf16.mxu0 0
  %7639 = vmatpush1.bf16.msra.mxu0 0
  %7640 = vmatprep.subr.bf16.mxu0 0
  %7641 = vmatpush1.bf16.msra.mxu0 0
  %7642 = vmatprep.subr.bf16.mxu0 0
  %7643 = vmatpush1.bf16.msra.mxu0 0
  %7644 = vmatprep.subr.bf16.mxu0 0
  %7645 = vmatpush1.bf16.msra.mxu0 0
  %7646 = vmatprep.subr.bf16.mxu0 0
  %7647 = vmatpush1.bf16.msra.mxu0 0
  %7648 = vmatprep.subr.bf16.mxu0 0
  %7649 = vmatpush1.bf16.msra.mxu0 0
  %7650 = vmatprep.subr.bf16.mxu0 0
  %7651 = vmatpush1.bf16.msra.mxu0 0
  %7652 = vmatprep.mubr.bf16.mxu0 0
  %7653 = vmatmul.mubr.bf16.gmra.mrb[0].mxu0 %v7484
  %v7654 = vpop.f32.mrb[0].mxu0
  %v7655 = vadd.f32 0.0, %v7654
  %v7656 = vpop.f32.mrb[0].mxu0
  %v7657 = vadd.f32 0.0, %v7656
  %v7658 = vpop.f32.mrb[0].mxu0
  %v7659 = vadd.f32 0.0, %v7658
  %v7660 = vpop.f32.mrb[0].mxu0
  %v7661 = vadd.f32 0.0, %v7660
  %7662 = vmatprep.mubr.bf16.mxu0 0
  %7663 = vmatmul.mubr.bf16.gmra.mrb[0].mxu0 %v7487
  %v7664 = vpop.f32.mrb[0].mxu0
  %v7665 = vadd.f32 0.0, %v7664
  %v7666 = vpop.f32.mrb[0].mxu0
  %v7667 = vadd.f32 0.0, %v7666
  %v7668 = vpop.f32.mrb[0].mxu0
  %v7669 = vadd.f32 0.0, %v7668
  %v7670 = vpop.f32.mrb[0].mxu0
  %v7671 = vadd.f32 0.0, %v7670
  %7672 = vmatprep.mubr.bf16.mxu0 0
  %7673 = vmatmul.mubr.bf16.gmra.mrb[0].mxu0 %v7490
  %v7674 = vpop.f32.mrb[0].mxu0
  %v7675 = vadd.f32 0.0, %v7674
  %v7676 = vpop.f32.mrb[0].mxu0
  %v7677 = vadd.f32 0.0, %v7676
  %v7678 = vpop.f32.mrb[0].mxu0
  %v7679 = vadd.f32 0.0, %v7678
  %v7680 = vpop.f32.mrb[0].mxu0
  %v7681 = vadd.f32 0.0, %v7680
  %7682 = vmatprep.mubr.bf16.mxu0 0
  %7683 = vmatmul.mubr.bf16.gmra.mrb[0].mxu0 %v7493
  %v7684 = vpop.f32.mrb[0].mxu0
  %v7685 = vadd.f32 0.0, %v7684
  %v7686 = vpop.f32.mrb[0].mxu0
  %v7687 = vadd.f32 0.0, %v7686
  %v7688 = vpop.f32.mrb[0].mxu0
  %v7689 = vadd.f32 0.0, %v7688
  %v7690 = vpop.f32.mrb[0].mxu0
  %v7691 = vadd.f32 0.0, %v7690
  %7692 = vmatprep.mubr.bf16.mxu0 0
  %7693 = vmatmul.mubr.bf16.gmra.mrb[0].mxu0 %v7496
  %v7694 = vpop.f32.mrb[0].mxu0
  %v7695 = vadd.f32 0.0, %v7694
  %v7696 = vpop.f32.mrb[0].mxu0
  %v7697 = vadd.f32 0.0, %v7696
  %v7698 = vpop.f32.mrb[0].mxu0
  %v7699 = vadd.f32 0.0, %v7698
  %v7700 = vpop.f32.mrb[0].mxu0
  %v7701 = vadd.f32 0.0, %v7700
  %7702 = vmatprep.mubr.bf16.mxu0 0
  %7703 = vmatmul.mubr.bf16.gmra.mrb[0].mxu0 %v7499
  %v7704 = vpop.f32.mrb[0].mxu0
  %v7705 = vadd.f32 0.0, %v7704
  %v7706 = vpop.f32.mrb[0].mxu0
  %v7707 = vadd.f32 0.0, %v7706
  %v7708 = vpop.f32.mrb[0].mxu0
  %v7709 = vadd.f32 0.0, %v7708
  %v7710 = vpop.f32.mrb[0].mxu0
  %v7711 = vadd.f32 0.0, %v7710
  %7712 = vmatprep.mubr.bf16.mxu0 0
  %7713 = vmatmul.mubr.bf16.gmra.mrb[0].mxu0 %v7502
  %v7714 = vpop.f32.mrb[0].mxu0
  %v7715 = vadd.f32 0.0, %v7714
  %v7716 = vpop.f32.mrb[0].mxu0
  %v7717 = vadd.f32 0.0, %v7716
  %v7718 = vpop.f32.mrb[0].mxu0
  %v7719 = vadd.f32 0.0, %v7718
  %v7720 = vpop.f32.mrb[0].mxu0
  %v7721 = vadd.f32 0.0, %v7720
  %7722 = vmatprep.mubr.bf16.mxu0 0
  %7723 = vmatmul.mubr.bf16.gmra.mrb[0].mxu0 %v7505
  %v7724 = vpop.f32.mrb[0].mxu0
  %v7725 = vadd.f32 0.0, %v7724
  %v7726 = vpop.f32.mrb[0].mxu0
  %v7727 = vadd.f32 0.0, %v7726
  %v7728 = vpop.f32.mrb[0].mxu0
  %v7729 = vadd.f32 0.0, %v7728
  %v7730 = vpop.f32.mrb[0].mxu0
  %v7731 = vadd.f32 0.0, %v7730
  %7732 = vdwg.mxu0
  %v7733 = vpack.c.bf16 %v6796, %v6792
  %v7734 = vpack.c.bf16 %v6798, %v6794
  %v7735 = vpack.c.bf16 %v6909, %v6905
  %v7736 = vpack.c.bf16 %v6911, %v6907
  %v7737 = vpack.c.bf16 %v6806, %v6802
  %v7738 = vpack.c.bf16 %v6808, %v6804
  %v7739 = vpack.c.bf16 %v6919, %v6915
  %v7740 = vpack.c.bf16 %v6921, %v6917
  %v7741 = vpack.c.bf16 %v6816, %v6812
  %v7742 = vpack.c.bf16 %v6818, %v6814
  %v7743 = vpack.c.bf16 %v6929, %v6925
  %v7744 = vpack.c.bf16 %v6931, %v6927
  %v7745 = vpack.c.bf16 %v6826, %v6822
  %v7746 = vpack.c.bf16 %v6828, %v6824
  %v7747 = vpack.c.bf16 %v6939, %v6935
  %v7748 = vpack.c.bf16 %v6941, %v6937
  %v7749 = vpack.c.bf16 %v6836, %v6832
  %v7750 = vpack.c.bf16 %v6838, %v6834
  %v7751 = vpack.c.bf16 %v6949, %v6945
  %v7752 = vpack.c.bf16 %v6951, %v6947
  %v7753 = vpack.c.bf16 %v6846, %v6842
  %v7754 = vpack.c.bf16 %v6848, %v6844
  %v7755 = vpack.c.bf16 %v6959, %v6955
  %v7756 = vpack.c.bf16 %v6961, %v6957
  %v7757 = vpack.c.bf16 %v6856, %v6852
  %v7758 = vpack.c.bf16 %v6858, %v6854
  %v7759 = vpack.c.bf16 %v6969, %v6965
  %v7760 = vpack.c.bf16 %v6971, %v6967
  %v7761 = vpack.c.bf16 %v6866, %v6862
  %v7762 = vpack.c.bf16 %v6868, %v6864
  %v7763 = vpack.c.bf16 %v6979, %v6975
  %v7764 = vpack.c.bf16 %v6981, %v6977
  %v7765 = vpack.c.bf16 %v7046, %v7042
  %v7766 = vpack.c.bf16 %v7048, %v7044
  %v7767 = vpack.c.bf16 %v7159, %v7155
  %v7768 = vpack.c.bf16 %v7161, %v7157
  %v7769 = vpack.c.bf16 %v7056, %v7052
  %v7770 = vpack.c.bf16 %v7058, %v7054
  %v7771 = vpack.c.bf16 %v7169, %v7165
  %v7772 = vpack.c.bf16 %v7171, %v7167
  %v7773 = vpack.c.bf16 %v7066, %v7062
  %v7774 = vpack.c.bf16 %v7068, %v7064
  %v7775 = vpack.c.bf16 %v7179, %v7175
  %v7776 = vpack.c.bf16 %v7181, %v7177
  %v7777 = vpack.c.bf16 %v7076, %v7072
  %v7778 = vpack.c.bf16 %v7078, %v7074
  %v7779 = vpack.c.bf16 %v7189, %v7185
  %v7780 = vpack.c.bf16 %v7191, %v7187
  %v7781 = vpack.c.bf16 %v7086, %v7082
  %v7782 = vpack.c.bf16 %v7088, %v7084
  %v7783 = vpack.c.bf16 %v7199, %v7195
  %v7784 = vpack.c.bf16 %v7201, %v7197
  %v7785 = vpack.c.bf16 %v7096, %v7092
  %v7786 = vpack.c.bf16 %v7098, %v7094
  %v7787 = vpack.c.bf16 %v7209, %v7205
  %v7788 = vpack.c.bf16 %v7211, %v7207
  %v7789 = vpack.c.bf16 %v7106, %v7102
  %v7790 = vpack.c.bf16 %v7108, %v7104
  %v7791 = vpack.c.bf16 %v7219, %v7215
  %v7792 = vpack.c.bf16 %v7221, %v7217
  %v7793 = vpack.c.bf16 %v7116, %v7112
  %v7794 = vpack.c.bf16 %v7118, %v7114
  %v7795 = vpack.c.bf16 %v7229, %v7225
  %v7796 = vpack.c.bf16 %v7231, %v7227
  %v7797 = vpack.c.bf16 %v7296, %v7292
  %v7798 = vpack.c.bf16 %v7298, %v7294
  %v7799 = vpack.c.bf16 %v7409, %v7405
  %v7800 = vpack.c.bf16 %v7411, %v7407
  %v7801 = vpack.c.bf16 %v7306, %v7302
  %v7802 = vpack.c.bf16 %v7308, %v7304
  %v7803 = vpack.c.bf16 %v7419, %v7415
  %v7804 = vpack.c.bf16 %v7421, %v7417
  %v7805 = vpack.c.bf16 %v7316, %v7312
  %v7806 = vpack.c.bf16 %v7318, %v7314
  %v7807 = vpack.c.bf16 %v7429, %v7425
  %v7808 = vpack.c.bf16 %v7431, %v7427
  %v7809 = vpack.c.bf16 %v7326, %v7322
  %v7810 = vpack.c.bf16 %v7328, %v7324
  %v7811 = vpack.c.bf16 %v7439, %v7435
  %v7812 = vpack.c.bf16 %v7441, %v7437
  %v7813 = vpack.c.bf16 %v7336, %v7332
  %v7814 = vpack.c.bf16 %v7338, %v7334
  %v7815 = vpack.c.bf16 %v7449, %v7445
  %v7816 = vpack.c.bf16 %v7451, %v7447
  %v7817 = vpack.c.bf16 %v7346, %v7342
  %v7818 = vpack.c.bf16 %v7348, %v7344
  %v7819 = vpack.c.bf16 %v7459, %v7455
  %v7820 = vpack.c.bf16 %v7461, %v7457
  %v7821 = vpack.c.bf16 %v7356, %v7352
  %v7822 = vpack.c.bf16 %v7358, %v7354
  %v7823 = vpack.c.bf16 %v7469, %v7465
  %v7824 = vpack.c.bf16 %v7471, %v7467
  %v7825 = vpack.c.bf16 %v7366, %v7362
  %v7826 = vpack.c.bf16 %v7368, %v7364
  %v7827 = vpack.c.bf16 %v7479, %v7475
  %v7828 = vpack.c.bf16 %v7481, %v7477
  %v7829 = vpack.c.bf16 %v7546, %v7542
  %v7830 = vpack.c.bf16 %v7548, %v7544
  %v7831 = vpack.c.bf16 %v7659, %v7655
  %v7832 = vpack.c.bf16 %v7661, %v7657
  %v7833 = vpack.c.bf16 %v7556, %v7552
  %v7834 = vpack.c.bf16 %v7558, %v7554
  %v7835 = vpack.c.bf16 %v7669, %v7665
  %v7836 = vpack.c.bf16 %v7671, %v7667
  %v7837 = vpack.c.bf16 %v7566, %v7562
  %v7838 = vpack.c.bf16 %v7568, %v7564
  %v7839 = vpack.c.bf16 %v7679, %v7675
  %v7840 = vpack.c.bf16 %v7681, %v7677
  %v7841 = vpack.c.bf16 %v7576, %v7572
  %v7842 = vpack.c.bf16 %v7578, %v7574
  %v7843 = vpack.c.bf16 %v7689, %v7685
  %v7844 = vpack.c.bf16 %v7691, %v7687
  %v7845 = vpack.c.bf16 %v7586, %v7582
  %v7846 = vpack.c.bf16 %v7588, %v7584
  %v7847 = vpack.c.bf16 %v7699, %v7695
  %v7848 = vpack.c.bf16 %v7701, %v7697
  %v7849 = vpack.c.bf16 %v7596, %v7592
  %v7850 = vpack.c.bf16 %v7598, %v7594
  %v7851 = vpack.c.bf16 %v7709, %v7705
  %v7852 = vpack.c.bf16 %v7711, %v7707
  %v7853 = vpack.c.bf16 %v7606, %v7602
  %v7854 = vpack.c.bf16 %v7608, %v7604
  %v7855 = vpack.c.bf16 %v7719, %v7715
  %v7856 = vpack.c.bf16 %v7721, %v7717
  %v7857 = vpack.c.bf16 %v7616, %v7612
  %v7858 = vpack.c.bf16 %v7618, %v7614
  %v7859 = vpack.c.bf16 %v7729, %v7725
  %v7860 = vpack.c.bf16 %v7731, %v7727
  %v7861 = vld [vmem:[%s6] sm:$0xf]
  %v7862 = vld [vmem:[%s6 + $0x4] sm:$0xf]
  %v7863 = vld [vmem:[%s6 + $0x8] sm:$0xf]
  %v7864 = vld [vmem:[%s6 + $0xc] sm:$0xf]
  %v7865 = vld [vmem:[%s6 + $0x10] sm:$0xf]
  %v7866 = vld [vmem:[%s6 + $0x14] sm:$0xf]
  %v7867 = vld [vmem:[%s6 + $0x18] sm:$0xf]
  %v7868 = vld [vmem:[%s6 + $0x1c] sm:$0xf]
  %v7869 = vld [vmem:[%s6 + $0x20] sm:$0xf]
  %v7870 = vld [vmem:[%s6 + $0x24] sm:$0xf]
  %v7871 = vld [vmem:[%s6 + $0x28] sm:$0xf]
  %v7872 = vld [vmem:[%s6 + $0x2c] sm:$0xf]
  %v7873 = vld [vmem:[%s6 + $0x30] sm:$0xf]
  %v7874 = vld [vmem:[%s6 + $0x34] sm:$0xf]
  %v7875 = vld [vmem:[%s6 + $0x38] sm:$0xf]
  %v7876 = vld [vmem:[%s6 + $0x3c] sm:$0xf]
  %v7877 = vld [vmem:[%s6 + $0x40] sm:$0xf]
  %v7878 = vld [vmem:[%s6 + $0x44] sm:$0xf]
  %v7879 = vld [vmem:[%s6 + $0x48] sm:$0xf]
  %v7880 = vld [vmem:[%s6 + $0x4c] sm:$0xf]
  %v7881 = vld [vmem:[%s6 + $0x50] sm:$0xf]
  %v7882 = vld [vmem:[%s6 + $0x54] sm:$0xf]
  %v7883 = vld [vmem:[%s6 + $0x58] sm:$0xf]
  %v7884 = vld [vmem:[%s6 + $0x5c] sm:$0xf]
  %v7885 = vld [vmem:[%s6 + $0x60] sm:$0xf]
  %v7886 = vld [vmem:[%s6 + $0x64] sm:$0xf]
  %v7887 = vld [vmem:[%s6 + $0x68] sm:$0xf]
  %v7888 = vld [vmem:[%s6 + $0x6c] sm:$0xf]
  %v7889 = vld [vmem:[%s6 + $0x70] sm:$0xf]
  %v7890 = vld [vmem:[%s6 + $0x74] sm:$0xf]
  %v7891 = vld [vmem:[%s6 + $0x78] sm:$0xf]
  %v7892 = vld [vmem:[%s6 + $0x7c] sm:$0xf]
  %v7893 = vld [vmem:[%s6 + $0x80] sm:$0xf]
  %v7894 = vld [vmem:[%s6 + $0x84] sm:$0xf]
  %v7895 = vld [vmem:[%s6 + $0x88] sm:$0xf]
  %v7896 = vld [vmem:[%s6 + $0x8c] sm:$0xf]
  %v7897 = vld [vmem:[%s6 + $0x90] sm:$0xf]
  %v7898 = vld [vmem:[%s6 + $0x94] sm:$0xf]
  %v7899 = vld [vmem:[%s6 + $0x98] sm:$0xf]
  %v7900 = vld [vmem:[%s6 + $0x9c] sm:$0xf]
  %v7901 = vld [vmem:[%s6 + $0xa0] sm:$0xf]
  %v7902 = vld [vmem:[%s6 + $0xa4] sm:$0xf]
  %v7903 = vld [vmem:[%s6 + $0xa8] sm:$0xf]
  %v7904 = vld [vmem:[%s6 + $0xac] sm:$0xf]
  %v7905 = vld [vmem:[%s6 + $0xb0] sm:$0xf]
  %v7906 = vld [vmem:[%s6 + $0xb4] sm:$0xf]
  %v7907 = vld [vmem:[%s6 + $0xb8] sm:$0xf]
  %v7908 = vld [vmem:[%s6 + $0xbc] sm:$0xf]
  %v7909 = vld [vmem:[%s6 + $0xc0] sm:$0xf]
  %v7910 = vld [vmem:[%s6 + $0xc4] sm:$0xf]
  %v7911 = vld [vmem:[%s6 + $0xc8] sm:$0xf]
  %v7912 = vld [vmem:[%s6 + $0xcc] sm:$0xf]
  %v7913 = vld [vmem:[%s6 + $0xd0] sm:$0xf]
  %v7914 = vld [vmem:[%s6 + $0xd4] sm:$0xf]
  %v7915 = vld [vmem:[%s6 + $0xd8] sm:$0xf]
  %v7916 = vld [vmem:[%s6 + $0xdc] sm:$0xf]
  %v7917 = vld [vmem:[%s6 + $0xe0] sm:$0xf]
  %v7918 = vld [vmem:[%s6 + $0xe4] sm:$0xf]
  %v7919 = vld [vmem:[%s6 + $0xe8] sm:$0xf]
  %v7920 = vld [vmem:[%s6 + $0xec] sm:$0xf]
  %v7921 = vld [vmem:[%s6 + $0xf0] sm:$0xf]
  %v7922 = vld [vmem:[%s6 + $0xf4] sm:$0xf]
  %v7923 = vld [vmem:[%s6 + $0xf8] sm:$0xf]
  %v7924 = vld [vmem:[%s6 + $0xfc] sm:$0xf]
  %v7989 = vunpack.c.l.b16 %v7861
  %v7990 = vunpack.c.l.b16 %v7862
  %v7991 = vunpack.c.l.b16 %v7863
  %v7992 = vunpack.c.l.b16 %v7864
  %v7993 = vunpack.c.l.b16 %v7865
  %v7994 = vunpack.c.l.b16 %v7866
  %v7995 = vunpack.c.l.b16 %v7867
  %v7996 = vunpack.c.l.b16 %v7868
  %v7997 = vunpack.c.l.b16 %v7869
  %v7998 = vunpack.c.l.b16 %v7870
  %v7999 = vunpack.c.l.b16 %v7871
  %v8000 = vunpack.c.l.b16 %v7872
  %v8001 = vunpack.c.l.b16 %v7873
  %v8002 = vunpack.c.l.b16 %v7874
  %v8003 = vunpack.c.l.b16 %v7875
  %v8004 = vunpack.c.l.b16 %v7876
  %v8005 = vunpack.c.l.b16 %v7877
  %v8006 = vunpack.c.l.b16 %v7878
  %v8007 = vunpack.c.l.b16 %v7879
  %v8008 = vunpack.c.l.b16 %v7880
  %v8009 = vunpack.c.l.b16 %v7881
  %v8010 = vunpack.c.l.b16 %v7882
  %v8011 = vunpack.c.l.b16 %v7883
  %v8012 = vunpack.c.l.b16 %v7884
  %v8013 = vunpack.c.l.b16 %v7885
  %v8014 = vunpack.c.l.b16 %v7886
  %v8015 = vunpack.c.l.b16 %v7887
  %v8016 = vunpack.c.l.b16 %v7888
  %v8017 = vunpack.c.l.b16 %v7889
  %v8018 = vunpack.c.l.b16 %v7890
  %v8019 = vunpack.c.l.b16 %v7891
  %v8020 = vunpack.c.l.b16 %v7892
  %v8021 = vunpack.c.l.b16 %v7893
  %v8022 = vunpack.c.l.b16 %v7894
  %v8023 = vunpack.c.l.b16 %v7895
  %v8024 = vunpack.c.l.b16 %v7896
  %v8025 = vunpack.c.l.b16 %v7897
  %v8026 = vunpack.c.l.b16 %v7898
  %v8027 = vunpack.c.l.b16 %v7899
  %v8028 = vunpack.c.l.b16 %v7900
  %v8029 = vunpack.c.l.b16 %v7901
  %v8030 = vunpack.c.l.b16 %v7902
  %v8031 = vunpack.c.l.b16 %v7903
  %v8032 = vunpack.c.l.b16 %v7904
  %v8033 = vunpack.c.l.b16 %v7905
  %v8034 = vunpack.c.l.b16 %v7906
  %v8035 = vunpack.c.l.b16 %v7907
  %v8036 = vunpack.c.l.b16 %v7908
  %v8037 = vunpack.c.l.b16 %v7909
  %v8038 = vunpack.c.l.b16 %v7910
  %v8039 = vunpack.c.l.b16 %v7911
  %v8040 = vunpack.c.l.b16 %v7912
  %v8041 = vunpack.c.l.b16 %v7913
  %v8042 = vunpack.c.l.b16 %v7914
  %v8043 = vunpack.c.l.b16 %v7915
  %v8044 = vunpack.c.l.b16 %v7916
  %v8045 = vunpack.c.l.b16 %v7917
  %v8046 = vunpack.c.l.b16 %v7918
  %v8047 = vunpack.c.l.b16 %v7919
  %v8048 = vunpack.c.l.b16 %v7920
  %v8049 = vunpack.c.l.b16 %v7921
  %v8050 = vunpack.c.l.b16 %v7922
  %v8051 = vunpack.c.l.b16 %v7923
  %v8052 = vunpack.c.l.b16 %v7924
  %v8053 = vpack.c.b16 %v7990, %v7989
  %v8054 = vpack.c.b16 %v7992, %v7991
  %v8055 = vpack.c.b16 %v7994, %v7993
  %v8056 = vpack.c.b16 %v7996, %v7995
  %v8057 = vpack.c.b16 %v7998, %v7997
  %v8058 = vpack.c.b16 %v8000, %v7999
  %v8059 = vpack.c.b16 %v8002, %v8001
  %v8060 = vpack.c.b16 %v8004, %v8003
  %v8061 = vpack.c.b16 %v8006, %v8005
  %v8062 = vpack.c.b16 %v8008, %v8007
  %v8063 = vpack.c.b16 %v8010, %v8009
  %v8064 = vpack.c.b16 %v8012, %v8011
  %v8065 = vpack.c.b16 %v8014, %v8013
  %v8066 = vpack.c.b16 %v8016, %v8015
  %v8067 = vpack.c.b16 %v8018, %v8017
  %v8068 = vpack.c.b16 %v8020, %v8019
  %v8069 = vpack.c.b16 %v8022, %v8021
  %v8070 = vpack.c.b16 %v8024, %v8023
  %v8071 = vpack.c.b16 %v8026, %v8025
  %v8072 = vpack.c.b16 %v8028, %v8027
  %v8073 = vpack.c.b16 %v8030, %v8029
  %v8074 = vpack.c.b16 %v8032, %v8031
  %v8075 = vpack.c.b16 %v8034, %v8033
  %v8076 = vpack.c.b16 %v8036, %v8035
  %v8077 = vpack.c.b16 %v8038, %v8037
  %v8078 = vpack.c.b16 %v8040, %v8039
  %v8079 = vpack.c.b16 %v8042, %v8041
  %v8080 = vpack.c.b16 %v8044, %v8043
  %v8081 = vpack.c.b16 %v8046, %v8045
  %v8082 = vpack.c.b16 %v8048, %v8047
  %v8083 = vpack.c.b16 %v8050, %v8049
  %v8084 = vpack.c.b16 %v8052, %v8051
  %8117 = vmatprep.subr.bf16.mxu0 0
  %8118 = vmatpush1.bf16.msra.mxu0 %v8053
  %8119 = vmatprep.subr.bf16.mxu0 0
  %8120 = vmatpush1.bf16.msra.mxu0 %v8054
  %8121 = vmatprep.subr.bf16.mxu0 0
  %8122 = vmatpush1.bf16.msra.mxu0 %v8055
  %8123 = vmatprep.subr.bf16.mxu0 0
  %8124 = vmatpush1.bf16.msra.mxu0 %v8056
  %8125 = vmatprep.subr.bf16.mxu0 0
  %8126 = vmatpush1.bf16.msra.mxu0 %v8057
  %8127 = vmatprep.subr.bf16.mxu0 0
  %8128 = vmatpush1.bf16.msra.mxu0 %v8058
  %8129 = vmatprep.subr.bf16.mxu0 0
  %8130 = vmatpush1.bf16.msra.mxu0 %v8059
  %8131 = vmatprep.subr.bf16.mxu0 0
  %8132 = vmatpush1.bf16.msra.mxu0 %v8060
  %8133 = vmatprep.subr.bf16.mxu0 0
  %8134 = vmatpush1.bf16.msra.mxu0 %v8061
  %8135 = vmatprep.subr.bf16.mxu0 0
  %8136 = vmatpush1.bf16.msra.mxu0 %v8062
  %8137 = vmatprep.subr.bf16.mxu0 0
  %8138 = vmatpush1.bf16.msra.mxu0 %v8063
  %8139 = vmatprep.subr.bf16.mxu0 0
  %8140 = vmatpush1.bf16.msra.mxu0 %v8064
  %8141 = vmatprep.subr.bf16.mxu0 0
  %8142 = vmatpush1.bf16.msra.mxu0 %v8065
  %8143 = vmatprep.subr.bf16.mxu0 0
  %8144 = vmatpush1.bf16.msra.mxu0 %v8066
  %8145 = vmatprep.subr.bf16.mxu0 0
  %8146 = vmatpush1.bf16.msra.mxu0 %v8067
  %8147 = vmatprep.subr.bf16.mxu0 0
  %8148 = vmatpush1.bf16.msra.mxu0 %v8068
  %8149 = vmatprep.mubr.bf16.mxu0 %v7734
  %8150 = vmatmul.mubr.bf16.gmra.mrb[0].mxu0 %v7733
  %v8151 = vpop.f32.mrb[0].mxu0
  %v8152 = vadd.f32 0.0, %v8151
  %v8153 = vpop.f32.mrb[0].mxu0
  %v8154 = vpop.f32.mrb[0].mxu0
  %v8155 = vadd.f32 0.0, %v8154
  %v8156 = vpop.f32.mrb[0].mxu0
  %8157 = vmatprep.mubr.bf16.mxu0 %v7738
  %8158 = vmatmul.mubr.bf16.gmra.mrb[0].mxu0 %v7737
  %v8159 = vpop.f32.mrb[0].mxu0
  %v8160 = vadd.f32 0.0, %v8159
  %v8161 = vpop.f32.mrb[0].mxu0
  %v8162 = vpop.f32.mrb[0].mxu0
  %v8163 = vadd.f32 0.0, %v8162
  %v8164 = vpop.f32.mrb[0].mxu0
  %8165 = vmatprep.mubr.bf16.mxu0 %v7742
  %8166 = vmatmul.mubr.bf16.gmra.mrb[0].mxu0 %v7741
  %v8167 = vpop.f32.mrb[0].mxu0
  %v8168 = vadd.f32 0.0, %v8167
  %v8169 = vpop.f32.mrb[0].mxu0
  %v8170 = vpop.f32.mrb[0].mxu0
  %v8171 = vadd.f32 0.0, %v8170
  %v8172 = vpop.f32.mrb[0].mxu0
  %8173 = vmatprep.mubr.bf16.mxu0 %v7746
  %8174 = vmatmul.mubr.bf16.gmra.mrb[0].mxu0 %v7745
  %v8175 = vpop.f32.mrb[0].mxu0
  %v8176 = vadd.f32 0.0, %v8175
  %v8177 = vpop.f32.mrb[0].mxu0
  %v8178 = vpop.f32.mrb[0].mxu0
  %v8179 = vadd.f32 0.0, %v8178
  %v8180 = vpop.f32.mrb[0].mxu0
  %8181 = vmatprep.mubr.bf16.mxu0 %v7750
  %8182 = vmatmul.mubr.bf16.gmra.mrb[0].mxu0 %v7749
  %v8183 = vpop.f32.mrb[0].mxu0
  %v8184 = vadd.f32 0.0, %v8183
  %v8185 = vpop.f32.mrb[0].mxu0
  %v8186 = vpop.f32.mrb[0].mxu0
  %v8187 = vadd.f32 0.0, %v8186
  %v8188 = vpop.f32.mrb[0].mxu0
  %8189 = vmatprep.mubr.bf16.mxu0 %v7754
  %8190 = vmatmul.mubr.bf16.gmra.mrb[0].mxu0 %v7753
  %v8191 = vpop.f32.mrb[0].mxu0
  %v8192 = vadd.f32 0.0, %v8191
  %v8193 = vpop.f32.mrb[0].mxu0
  %v8194 = vpop.f32.mrb[0].mxu0
  %v8195 = vadd.f32 0.0, %v8194
  %v8196 = vpop.f32.mrb[0].mxu0
  %8197 = vmatprep.mubr.bf16.mxu0 %v7758
  %8198 = vmatmul.mubr.bf16.gmra.mrb[0].mxu0 %v7757
  %v8199 = vpop.f32.mrb[0].mxu0
  %v8200 = vadd.f32 0.0, %v8199
  %v8201 = vpop.f32.mrb[0].mxu0
  %v8202 = vpop.f32.mrb[0].mxu0
  %v8203 = vadd.f32 0.0, %v8202
  %v8204 = vpop.f32.mrb[0].mxu0
  %8205 = vmatprep.mubr.bf16.mxu0 %v7762
  %8206 = vmatmul.mubr.bf16.gmra.mrb[0].mxu0 %v7761
  %v8207 = vpop.f32.mrb[0].mxu0
  %v8208 = vadd.f32 0.0, %v8207
  %v8209 = vpop.f32.mrb[0].mxu0
  %v8210 = vpop.f32.mrb[0].mxu0
  %v8211 = vadd.f32 0.0, %v8210
  %v8212 = vpop.f32.mrb[0].mxu0
  %8213 = vmatprep.mubr.bf16.mxu0 %v7766
  %8214 = vmatmul.mubr.bf16.gmra.mrb[0].mxu0 %v7765
  %v8215 = vpop.f32.mrb[0].mxu0
  %v8216 = vadd.f32 0.0, %v8215
  %v8217 = vpop.f32.mrb[0].mxu0
  %v8218 = vpop.f32.mrb[0].mxu0
  %v8219 = vadd.f32 0.0, %v8218
  %v8220 = vpop.f32.mrb[0].mxu0
  %8221 = vmatprep.mubr.bf16.mxu0 %v7770
  %8222 = vmatmul.mubr.bf16.gmra.mrb[0].mxu0 %v7769
  %v8223 = vpop.f32.mrb[0].mxu0
  %v8224 = vadd.f32 0.0, %v8223
  %v8225 = vpop.f32.mrb[0].mxu0
  %v8226 = vpop.f32.mrb[0].mxu0
  %v8227 = vadd.f32 0.0, %v8226
  %v8228 = vpop.f32.mrb[0].mxu0
  %8229 = vmatprep.mubr.bf16.mxu0 %v7774
  %8230 = vmatmul.mubr.bf16.gmra.mrb[0].mxu0 %v7773
  %v8231 = vpop.f32.mrb[0].mxu0
  %v8232 = vadd.f32 0.0, %v8231
  %v8233 = vpop.f32.mrb[0].mxu0
  %v8234 = vpop.f32.mrb[0].mxu0
  %v8235 = vadd.f32 0.0, %v8234
  %v8236 = vpop.f32.mrb[0].mxu0
  %8237 = vmatprep.mubr.bf16.mxu0 %v7778
  %8238 = vmatmul.mubr.bf16.gmra.mrb[0].mxu0 %v7777
  %v8239 = vpop.f32.mrb[0].mxu0
  %v8240 = vadd.f32 0.0, %v8239
  %v8241 = vpop.f32.mrb[0].mxu0
  %v8242 = vpop.f32.mrb[0].mxu0
  %v8243 = vadd.f32 0.0, %v8242
  %v8244 = vpop.f32.mrb[0].mxu0
  %8245 = vmatprep.mubr.bf16.mxu0 %v7782
  %8246 = vmatmul.mubr.bf16.gmra.mrb[0].mxu0 %v7781
  %v8247 = vpop.f32.mrb[0].mxu0
  %v8248 = vadd.f32 0.0, %v8247
  %v8249 = vpop.f32.mrb[0].mxu0
  %v8250 = vpop.f32.mrb[0].mxu0
  %v8251 = vadd.f32 0.0, %v8250
  %v8252 = vpop.f32.mrb[0].mxu0
  %8253 = vmatprep.mubr.bf16.mxu0 %v7786
  %8254 = vmatmul.mubr.bf16.gmra.mrb[0].mxu0 %v7785
  %v8255 = vpop.f32.mrb[0].mxu0
  %v8256 = vadd.f32 0.0, %v8255
  %v8257 = vpop.f32.mrb[0].mxu0
  %v8258 = vpop.f32.mrb[0].mxu0
  %v8259 = vadd.f32 0.0, %v8258
  %v8260 = vpop.f32.mrb[0].mxu0
  %8261 = vmatprep.mubr.bf16.mxu0 %v7790
  %8262 = vmatmul.mubr.bf16.gmra.mrb[0].mxu0 %v7789
  %v8263 = vpop.f32.mrb[0].mxu0
  %v8264 = vadd.f32 0.0, %v8263
  %v8265 = vpop.f32.mrb[0].mxu0
  %v8266 = vpop.f32.mrb[0].mxu0
  %v8267 = vadd.f32 0.0, %v8266
  %v8268 = vpop.f32.mrb[0].mxu0
  %8269 = vmatprep.mubr.bf16.mxu0 %v7794
  %8270 = vmatmul.mubr.bf16.gmra.mrb[0].mxu0 %v7793
  %v8271 = vpop.f32.mrb[0].mxu0
  %v8272 = vadd.f32 0.0, %v8271
  %v8273 = vpop.f32.mrb[0].mxu0
  %v8274 = vpop.f32.mrb[0].mxu0
  %v8275 = vadd.f32 0.0, %v8274
  %v8276 = vpop.f32.mrb[0].mxu0
  %8277 = vmatprep.mubr.bf16.mxu0 %v7798
  %8278 = vmatmul.mubr.bf16.gmra.mrb[0].mxu0 %v7797
  %v8279 = vpop.f32.mrb[0].mxu0
  %v8280 = vadd.f32 0.0, %v8279
  %v8281 = vpop.f32.mrb[0].mxu0
  %v8282 = vpop.f32.mrb[0].mxu0
  %v8283 = vadd.f32 0.0, %v8282
  %v8284 = vpop.f32.mrb[0].mxu0
  %8285 = vmatprep.mubr.bf16.mxu0 %v7802
  %8286 = vmatmul.mubr.bf16.gmra.mrb[0].mxu0 %v7801
  %v8287 = vpop.f32.mrb[0].mxu0
  %v8288 = vadd.f32 0.0, %v8287
  %v8289 = vpop.f32.mrb[0].mxu0
  %v8290 = vpop.f32.mrb[0].mxu0
  %v8291 = vadd.f32 0.0, %v8290
  %v8292 = vpop.f32.mrb[0].mxu0
  %8293 = vmatprep.mubr.bf16.mxu0 %v7806
  %8294 = vmatmul.mubr.bf16.gmra.mrb[0].mxu0 %v7805
  %v8295 = vpop.f32.mrb[0].mxu0
  %v8296 = vadd.f32 0.0, %v8295
  %v8297 = vpop.f32.mrb[0].mxu0
  %v8298 = vpop.f32.mrb[0].mxu0
  %v8299 = vadd.f32 0.0, %v8298
  %v8300 = vpop.f32.mrb[0].mxu0
  %8301 = vmatprep.mubr.bf16.mxu0 %v7810
  %8302 = vmatmul.mubr.bf16.gmra.mrb[0].mxu0 %v7809
  %v8303 = vpop.f32.mrb[0].mxu0
  %v8304 = vadd.f32 0.0, %v8303
  %v8305 = vpop.f32.mrb[0].mxu0
  %v8306 = vpop.f32.mrb[0].mxu0
  %v8307 = vadd.f32 0.0, %v8306
  %v8308 = vpop.f32.mrb[0].mxu0
  %8309 = vmatprep.mubr.bf16.mxu0 %v7814
  %8310 = vmatmul.mubr.bf16.gmra.mrb[0].mxu0 %v7813
  %v8311 = vpop.f32.mrb[0].mxu0
  %v8312 = vadd.f32 0.0, %v8311
  %v8313 = vpop.f32.mrb[0].mxu0
  %v8314 = vpop.f32.mrb[0].mxu0
  %v8315 = vadd.f32 0.0, %v8314
  %v8316 = vpop.f32.mrb[0].mxu0
  %8317 = vmatprep.mubr.bf16.mxu0 %v7818
  %8318 = vmatmul.mubr.bf16.gmra.mrb[0].mxu0 %v7817
  %v8319 = vpop.f32.mrb[0].mxu0
  %v8320 = vadd.f32 0.0, %v8319
  %v8321 = vpop.f32.mrb[0].mxu0
  %v8322 = vpop.f32.mrb[0].mxu0
  %v8323 = vadd.f32 0.0, %v8322
  %v8324 = vpop.f32.mrb[0].mxu0
  %8325 = vmatprep.mubr.bf16.mxu0 %v7822
  %8326 = vmatmul.mubr.bf16.gmra.mrb[0].mxu0 %v7821
  %v8327 = vpop.f32.mrb[0].mxu0
  %v8328 = vadd.f32 0.0, %v8327
  %v8329 = vpop.f32.mrb[0].mxu0
  %v8330 = vpop.f32.mrb[0].mxu0
  %v8331 = vadd.f32 0.0, %v8330
  %v8332 = vpop.f32.mrb[0].mxu0
  %8333 = vmatprep.mubr.bf16.mxu0 %v7826
  %8334 = vmatmul.mubr.bf16.gmra.mrb[0].mxu0 %v7825
  %v8335 = vpop.f32.mrb[0].mxu0
  %v8336 = vadd.f32 0.0, %v8335
  %v8337 = vpop.f32.mrb[0].mxu0
  %v8338 = vpop.f32.mrb[0].mxu0
  %v8339 = vadd.f32 0.0, %v8338
  %v8340 = vpop.f32.mrb[0].mxu0
  %8341 = vmatprep.mubr.bf16.mxu0 %v7830
  %8342 = vmatmul.mubr.bf16.gmra.mrb[0].mxu0 %v7829
  %v8343 = vpop.f32.mrb[0].mxu0
  %v8344 = vadd.f32 0.0, %v8343
  %v8345 = vpop.f32.mrb[0].mxu0
  %v8346 = vpop.f32.mrb[0].mxu0
  %v8347 = vadd.f32 0.0, %v8346
  %v8348 = vpop.f32.mrb[0].mxu0
  %8349 = vmatprep.mubr.bf16.mxu0 %v7834
  %8350 = vmatmul.mubr.bf16.gmra.mrb[0].mxu0 %v7833
  %v8351 = vpop.f32.mrb[0].mxu0
  %v8352 = vadd.f32 0.0, %v8351
  %v8353 = vpop.f32.mrb[0].mxu0
  %v8354 = vpop.f32.mrb[0].mxu0
  %v8355 = vadd.f32 0.0, %v8354
  %v8356 = vpop.f32.mrb[0].mxu0
  %8357 = vmatprep.mubr.bf16.mxu0 %v7838
  %8358 = vmatmul.mubr.bf16.gmra.mrb[0].mxu0 %v7837
  %v8359 = vpop.f32.mrb[0].mxu0
  %v8360 = vadd.f32 0.0, %v8359
  %v8361 = vpop.f32.mrb[0].mxu0
  %v8362 = vpop.f32.mrb[0].mxu0
  %v8363 = vadd.f32 0.0, %v8362
  %v8364 = vpop.f32.mrb[0].mxu0
  %8365 = vmatprep.mubr.bf16.mxu0 %v7842
  %8366 = vmatmul.mubr.bf16.gmra.mrb[0].mxu0 %v7841
  %v8367 = vpop.f32.mrb[0].mxu0
  %v8368 = vadd.f32 0.0, %v8367
  %v8369 = vpop.f32.mrb[0].mxu0
  %v8370 = vpop.f32.mrb[0].mxu0
  %v8371 = vadd.f32 0.0, %v8370
  %v8372 = vpop.f32.mrb[0].mxu0
  %8373 = vmatprep.mubr.bf16.mxu0 %v7846
  %8374 = vmatmul.mubr.bf16.gmra.mrb[0].mxu0 %v7845
  %v8375 = vpop.f32.mrb[0].mxu0
  %v8376 = vadd.f32 0.0, %v8375
  %v8377 = vpop.f32.mrb[0].mxu0
  %v8378 = vpop.f32.mrb[0].mxu0
  %v8379 = vadd.f32 0.0, %v8378
  %v8380 = vpop.f32.mrb[0].mxu0
  %8381 = vmatprep.mubr.bf16.mxu0 %v7850
  %8382 = vmatmul.mubr.bf16.gmra.mrb[0].mxu0 %v7849
  %v8383 = vpop.f32.mrb[0].mxu0
  %v8384 = vadd.f32 0.0, %v8383
  %v8385 = vpop.f32.mrb[0].mxu0
  %v8386 = vpop.f32.mrb[0].mxu0
  %v8387 = vadd.f32 0.0, %v8386
  %v8388 = vpop.f32.mrb[0].mxu0
  %8389 = vmatprep.mubr.bf16.mxu0 %v7854
  %8390 = vmatmul.mubr.bf16.gmra.mrb[0].mxu0 %v7853
  %v8391 = vpop.f32.mrb[0].mxu0
  %v8392 = vadd.f32 0.0, %v8391
  %v8393 = vpop.f32.mrb[0].mxu0
  %v8394 = vpop.f32.mrb[0].mxu0
  %v8395 = vadd.f32 0.0, %v8394
  %v8396 = vpop.f32.mrb[0].mxu0
  %8397 = vmatprep.mubr.bf16.mxu0 %v7858
  %8398 = vmatmul.mubr.bf16.gmra.mrb[0].mxu0 %v7857
  %v8399 = vpop.f32.mrb[0].mxu0
  %v8400 = vadd.f32 0.0, %v8399
  %v8401 = vpop.f32.mrb[0].mxu0
  %v8402 = vpop.f32.mrb[0].mxu0
  %v8403 = vadd.f32 0.0, %v8402
  %v8404 = vpop.f32.mrb[0].mxu0
  %8405 = vdwg.mxu0
  %8406 = vmatprep.subr.bf16.mxu0 0
  %8407 = vmatpush1.bf16.msra.mxu0 %v8069
  %8408 = vmatprep.subr.bf16.mxu0 0
  %8409 = vmatpush1.bf16.msra.mxu0 %v8070
  %8410 = vmatprep.subr.bf16.mxu0 0
  %8411 = vmatpush1.bf16.msra.mxu0 %v8071
  %8412 = vmatprep.subr.bf16.mxu0 0
  %8413 = vmatpush1.bf16.msra.mxu0 %v8072
  %8414 = vmatprep.subr.bf16.mxu0 0
  %8415 = vmatpush1.bf16.msra.mxu0 %v8073
  %8416 = vmatprep.subr.bf16.mxu0 0
  %8417 = vmatpush1.bf16.msra.mxu0 %v8074
  %8418 = vmatprep.subr.bf16.mxu0 0
  %8419 = vmatpush1.bf16.msra.mxu0 %v8075
  %8420 = vmatprep.subr.bf16.mxu0 0
  %8421 = vmatpush1.bf16.msra.mxu0 %v8076
  %8422 = vmatprep.subr.bf16.mxu0 0
  %8423 = vmatpush1.bf16.msra.mxu0 %v8077
  %8424 = vmatprep.subr.bf16.mxu0 0
  %8425 = vmatpush1.bf16.msra.mxu0 %v8078
  %8426 = vmatprep.subr.bf16.mxu0 0
  %8427 = vmatpush1.bf16.msra.mxu0 %v8079
  %8428 = vmatprep.subr.bf16.mxu0 0
  %8429 = vmatpush1.bf16.msra.mxu0 %v8080
  %8430 = vmatprep.subr.bf16.mxu0 0
  %8431 = vmatpush1.bf16.msra.mxu0 %v8081
  %8432 = vmatprep.subr.bf16.mxu0 0
  %8433 = vmatpush1.bf16.msra.mxu0 %v8082
  %8434 = vmatprep.subr.bf16.mxu0 0
  %8435 = vmatpush1.bf16.msra.mxu0 %v8083
  %8436 = vmatprep.subr.bf16.mxu0 0
  %8437 = vmatpush1.bf16.msra.mxu0 %v8084
  %8438 = vmatprep.mubr.bf16.mxu0 %v7736
  %8439 = vmatmul.mubr.bf16.gmra.mrb[0].mxu0 %v7735
  %v8440 = vpop.f32.mrb[0].mxu0
  %v8441 = vadd.f32 %v8152, %v8440
  %v8442 = vpop.f32.mrb[0].mxu0
  %v8443 = vpop.f32.mrb[0].mxu0
  %v8444 = vadd.f32 %v8155, %v8443
  %v8445 = vpop.f32.mrb[0].mxu0
  %8446 = vmatprep.mubr.bf16.mxu0 %v7740
  %8447 = vmatmul.mubr.bf16.gmra.mrb[0].mxu0 %v7739
  %v8448 = vpop.f32.mrb[0].mxu0
  %v8449 = vadd.f32 %v8160, %v8448
  %v8450 = vpop.f32.mrb[0].mxu0
  %v8451 = vpop.f32.mrb[0].mxu0
  %v8452 = vadd.f32 %v8163, %v8451
  %v8453 = vpop.f32.mrb[0].mxu0
  %8454 = vmatprep.mubr.bf16.mxu0 %v7744
  %8455 = vmatmul.mubr.bf16.gmra.mrb[0].mxu0 %v7743
  %v8456 = vpop.f32.mrb[0].mxu0
  %v8457 = vadd.f32 %v8168, %v8456
  %v8458 = vpop.f32.mrb[0].mxu0
  %v8459 = vpop.f32.mrb[0].mxu0
  %v8460 = vadd.f32 %v8171, %v8459
  %v8461 = vpop.f32.mrb[0].mxu0
  %8462 = vmatprep.mubr.bf16.mxu0 %v7748
  %8463 = vmatmul.mubr.bf16.gmra.mrb[0].mxu0 %v7747
  %v8464 = vpop.f32.mrb[0].mxu0
  %v8465 = vadd.f32 %v8176, %v8464
  %v8466 = vpop.f32.mrb[0].mxu0
  %v8467 = vpop.f32.mrb[0].mxu0
  %v8468 = vadd.f32 %v8179, %v8467
  %v8469 = vpop.f32.mrb[0].mxu0
  %8470 = vmatprep.mubr.bf16.mxu0 %v7752
  %8471 = vmatmul.mubr.bf16.gmra.mrb[0].mxu0 %v7751
  %v8472 = vpop.f32.mrb[0].mxu0
  %v8473 = vadd.f32 %v8184, %v8472
  %v8474 = vpop.f32.mrb[0].mxu0
  %v8475 = vpop.f32.mrb[0].mxu0
  %v8476 = vadd.f32 %v8187, %v8475
  %v8477 = vpop.f32.mrb[0].mxu0
  %8478 = vmatprep.mubr.bf16.mxu0 %v7756
  %8479 = vmatmul.mubr.bf16.gmra.mrb[0].mxu0 %v7755
  %v8480 = vpop.f32.mrb[0].mxu0
  %v8481 = vadd.f32 %v8192, %v8480
  %v8482 = vpop.f32.mrb[0].mxu0
  %v8483 = vpop.f32.mrb[0].mxu0
  %v8484 = vadd.f32 %v8195, %v8483
  %v8485 = vpop.f32.mrb[0].mxu0
  %8486 = vmatprep.mubr.bf16.mxu0 %v7760
  %8487 = vmatmul.mubr.bf16.gmra.mrb[0].mxu0 %v7759
  %v8488 = vpop.f32.mrb[0].mxu0
  %v8489 = vadd.f32 %v8200, %v8488
  %v8490 = vpop.f32.mrb[0].mxu0
  %v8491 = vpop.f32.mrb[0].mxu0
  %v8492 = vadd.f32 %v8203, %v8491
  %v8493 = vpop.f32.mrb[0].mxu0
  %8494 = vmatprep.mubr.bf16.mxu0 %v7764
  %8495 = vmatmul.mubr.bf16.gmra.mrb[0].mxu0 %v7763
  %v8496 = vpop.f32.mrb[0].mxu0
  %v8497 = vadd.f32 %v8208, %v8496
  %v8498 = vpop.f32.mrb[0].mxu0
  %v8499 = vpop.f32.mrb[0].mxu0
  %v8500 = vadd.f32 %v8211, %v8499
  %v8501 = vpop.f32.mrb[0].mxu0
  %8502 = vmatprep.mubr.bf16.mxu0 %v7768
  %8503 = vmatmul.mubr.bf16.gmra.mrb[0].mxu0 %v7767
  %v8504 = vpop.f32.mrb[0].mxu0
  %v8505 = vadd.f32 %v8216, %v8504
  %v8506 = vpop.f32.mrb[0].mxu0
  %v8507 = vpop.f32.mrb[0].mxu0
  %v8508 = vadd.f32 %v8219, %v8507
  %v8509 = vpop.f32.mrb[0].mxu0
  %8510 = vmatprep.mubr.bf16.mxu0 %v7772
  %8511 = vmatmul.mubr.bf16.gmra.mrb[0].mxu0 %v7771
  %v8512 = vpop.f32.mrb[0].mxu0
  %v8513 = vadd.f32 %v8224, %v8512
  %v8514 = vpop.f32.mrb[0].mxu0
  %v8515 = vpop.f32.mrb[0].mxu0
  %v8516 = vadd.f32 %v8227, %v8515
  %v8517 = vpop.f32.mrb[0].mxu0
  %8518 = vmatprep.mubr.bf16.mxu0 %v7776
  %8519 = vmatmul.mubr.bf16.gmra.mrb[0].mxu0 %v7775
  %v8520 = vpop.f32.mrb[0].mxu0
  %v8521 = vadd.f32 %v8232, %v8520
  %v8522 = vpop.f32.mrb[0].mxu0
  %v8523 = vpop.f32.mrb[0].mxu0
  %v8524 = vadd.f32 %v8235, %v8523
  %v8525 = vpop.f32.mrb[0].mxu0
  %8526 = vmatprep.mubr.bf16.mxu0 %v7780
  %8527 = vmatmul.mubr.bf16.gmra.mrb[0].mxu0 %v7779
  %v8528 = vpop.f32.mrb[0].mxu0
  %v8529 = vadd.f32 %v8240, %v8528
  %v8530 = vpop.f32.mrb[0].mxu0
  %v8531 = vpop.f32.mrb[0].mxu0
  %v8532 = vadd.f32 %v8243, %v8531
  %v8533 = vpop.f32.mrb[0].mxu0
  %8534 = vmatprep.mubr.bf16.mxu0 %v7784
  %8535 = vmatmul.mubr.bf16.gmra.mrb[0].mxu0 %v7783
  %v8536 = vpop.f32.mrb[0].mxu0
  %v8537 = vadd.f32 %v8248, %v8536
  %v8538 = vpop.f32.mrb[0].mxu0
  %v8539 = vpop.f32.mrb[0].mxu0
  %v8540 = vadd.f32 %v8251, %v8539
  %v8541 = vpop.f32.mrb[0].mxu0
  %8542 = vmatprep.mubr.bf16.mxu0 %v7788
  %8543 = vmatmul.mubr.bf16.gmra.mrb[0].mxu0 %v7787
  %v8544 = vpop.f32.mrb[0].mxu0
  %v8545 = vadd.f32 %v8256, %v8544
  %v8546 = vpop.f32.mrb[0].mxu0
  %v8547 = vpop.f32.mrb[0].mxu0
  %v8548 = vadd.f32 %v8259, %v8547
  %v8549 = vpop.f32.mrb[0].mxu0
  %8550 = vmatprep.mubr.bf16.mxu0 %v7792
  %8551 = vmatmul.mubr.bf16.gmra.mrb[0].mxu0 %v7791
  %v8552 = vpop.f32.mrb[0].mxu0
  %v8553 = vadd.f32 %v8264, %v8552
  %v8554 = vpop.f32.mrb[0].mxu0
  %v8555 = vpop.f32.mrb[0].mxu0
  %v8556 = vadd.f32 %v8267, %v8555
  %v8557 = vpop.f32.mrb[0].mxu0
  %8558 = vmatprep.mubr.bf16.mxu0 %v7796
  %8559 = vmatmul.mubr.bf16.gmra.mrb[0].mxu0 %v7795
  %v8560 = vpop.f32.mrb[0].mxu0
  %v8561 = vadd.f32 %v8272, %v8560
  %v8562 = vpop.f32.mrb[0].mxu0
  %v8563 = vpop.f32.mrb[0].mxu0
  %v8564 = vadd.f32 %v8275, %v8563
  %v8565 = vpop.f32.mrb[0].mxu0
  %8566 = vmatprep.mubr.bf16.mxu0 %v7800
  %8567 = vmatmul.mubr.bf16.gmra.mrb[0].mxu0 %v7799
  %v8568 = vpop.f32.mrb[0].mxu0
  %v8569 = vadd.f32 %v8280, %v8568
  %v8570 = vpop.f32.mrb[0].mxu0
  %v8571 = vpop.f32.mrb[0].mxu0
  %v8572 = vadd.f32 %v8283, %v8571
  %v8573 = vpop.f32.mrb[0].mxu0
  %8574 = vmatprep.mubr.bf16.mxu0 %v7804
  %8575 = vmatmul.mubr.bf16.gmra.mrb[0].mxu0 %v7803
  %v8576 = vpop.f32.mrb[0].mxu0
  %v8577 = vadd.f32 %v8288, %v8576
  %v8578 = vpop.f32.mrb[0].mxu0
  %v8579 = vpop.f32.mrb[0].mxu0
  %v8580 = vadd.f32 %v8291, %v8579
  %v8581 = vpop.f32.mrb[0].mxu0
  %8582 = vmatprep.mubr.bf16.mxu0 %v7808
  %8583 = vmatmul.mubr.bf16.gmra.mrb[0].mxu0 %v7807
  %v8584 = vpop.f32.mrb[0].mxu0
  %v8585 = vadd.f32 %v8296, %v8584
  %v8586 = vpop.f32.mrb[0].mxu0
  %v8587 = vpop.f32.mrb[0].mxu0
  %v8588 = vadd.f32 %v8299, %v8587
  %v8589 = vpop.f32.mrb[0].mxu0
  %8590 = vmatprep.mubr.bf16.mxu0 %v7812
  %8591 = vmatmul.mubr.bf16.gmra.mrb[0].mxu0 %v7811
  %v8592 = vpop.f32.mrb[0].mxu0
  %v8593 = vadd.f32 %v8304, %v8592
  %v8594 = vpop.f32.mrb[0].mxu0
  %v8595 = vpop.f32.mrb[0].mxu0
  %v8596 = vadd.f32 %v8307, %v8595
  %v8597 = vpop.f32.mrb[0].mxu0
  %8598 = vmatprep.mubr.bf16.mxu0 %v7816
  %8599 = vmatmul.mubr.bf16.gmra.mrb[0].mxu0 %v7815
  %v8600 = vpop.f32.mrb[0].mxu0
  %v8601 = vadd.f32 %v8312, %v8600
  %v8602 = vpop.f32.mrb[0].mxu0
  %v8603 = vpop.f32.mrb[0].mxu0
  %v8604 = vadd.f32 %v8315, %v8603
  %v8605 = vpop.f32.mrb[0].mxu0
  %8606 = vmatprep.mubr.bf16.mxu0 %v7820
  %8607 = vmatmul.mubr.bf16.gmra.mrb[0].mxu0 %v7819
  %v8608 = vpop.f32.mrb[0].mxu0
  %v8609 = vadd.f32 %v8320, %v8608
  %v8610 = vpop.f32.mrb[0].mxu0
  %v8611 = vpop.f32.mrb[0].mxu0
  %v8612 = vadd.f32 %v8323, %v8611
  %v8613 = vpop.f32.mrb[0].mxu0
  %8614 = vmatprep.mubr.bf16.mxu0 %v7824
  %8615 = vmatmul.mubr.bf16.gmra.mrb[0].mxu0 %v7823
  %v8616 = vpop.f32.mrb[0].mxu0
  %v8617 = vadd.f32 %v8328, %v8616
  %v8618 = vpop.f32.mrb[0].mxu0
  %v8619 = vpop.f32.mrb[0].mxu0
  %v8620 = vadd.f32 %v8331, %v8619
  %v8621 = vpop.f32.mrb[0].mxu0
  %8622 = vmatprep.mubr.bf16.mxu0 %v7828
  %8623 = vmatmul.mubr.bf16.gmra.mrb[0].mxu0 %v7827
  %v8624 = vpop.f32.mrb[0].mxu0
  %v8625 = vadd.f32 %v8336, %v8624
  %v8626 = vpop.f32.mrb[0].mxu0
  %v8627 = vpop.f32.mrb[0].mxu0
  %v8628 = vadd.f32 %v8339, %v8627
  %v8629 = vpop.f32.mrb[0].mxu0
  %8630 = vmatprep.mubr.bf16.mxu0 %v7832
  %8631 = vmatmul.mubr.bf16.gmra.mrb[0].mxu0 %v7831
  %v8632 = vpop.f32.mrb[0].mxu0
  %v8633 = vadd.f32 %v8344, %v8632
  %v8634 = vpop.f32.mrb[0].mxu0
  %v8635 = vpop.f32.mrb[0].mxu0
  %v8636 = vadd.f32 %v8347, %v8635
  %v8637 = vpop.f32.mrb[0].mxu0
  %8638 = vmatprep.mubr.bf16.mxu0 %v7836
  %8639 = vmatmul.mubr.bf16.gmra.mrb[0].mxu0 %v7835
  %v8640 = vpop.f32.mrb[0].mxu0
  %v8641 = vadd.f32 %v8352, %v8640
  %v8642 = vpop.f32.mrb[0].mxu0
  %v8643 = vpop.f32.mrb[0].mxu0
  %v8644 = vadd.f32 %v8355, %v8643
  %v8645 = vpop.f32.mrb[0].mxu0
  %8646 = vmatprep.mubr.bf16.mxu0 %v7840
  %8647 = vmatmul.mubr.bf16.gmra.mrb[0].mxu0 %v7839
  %v8648 = vpop.f32.mrb[0].mxu0
  %v8649 = vadd.f32 %v8360, %v8648
  %v8650 = vpop.f32.mrb[0].mxu0
  %v8651 = vpop.f32.mrb[0].mxu0
  %v8652 = vadd.f32 %v8363, %v8651
  %v8653 = vpop.f32.mrb[0].mxu0
  %8654 = vmatprep.mubr.bf16.mxu0 %v7844
  %8655 = vmatmul.mubr.bf16.gmra.mrb[0].mxu0 %v7843
  %v8656 = vpop.f32.mrb[0].mxu0
  %v8657 = vadd.f32 %v8368, %v8656
  %v8658 = vpop.f32.mrb[0].mxu0
  %v8659 = vpop.f32.mrb[0].mxu0
  %v8660 = vadd.f32 %v8371, %v8659
  %v8661 = vpop.f32.mrb[0].mxu0
  %8662 = vmatprep.mubr.bf16.mxu0 %v7848
  %8663 = vmatmul.mubr.bf16.gmra.mrb[0].mxu0 %v7847
  %v8664 = vpop.f32.mrb[0].mxu0
  %v8665 = vadd.f32 %v8376, %v8664
  %v8666 = vpop.f32.mrb[0].mxu0
  %v8667 = vpop.f32.mrb[0].mxu0
  %v8668 = vadd.f32 %v8379, %v8667
  %v8669 = vpop.f32.mrb[0].mxu0
  %8670 = vmatprep.mubr.bf16.mxu0 %v7852
  %8671 = vmatmul.mubr.bf16.gmra.mrb[0].mxu0 %v7851
  %v8672 = vpop.f32.mrb[0].mxu0
  %v8673 = vadd.f32 %v8384, %v8672
  %v8674 = vpop.f32.mrb[0].mxu0
  %v8675 = vpop.f32.mrb[0].mxu0
  %v8676 = vadd.f32 %v8387, %v8675
  %v8677 = vpop.f32.mrb[0].mxu0
  %8678 = vmatprep.mubr.bf16.mxu0 %v7856
  %8679 = vmatmul.mubr.bf16.gmra.mrb[0].mxu0 %v7855
  %v8680 = vpop.f32.mrb[0].mxu0
  %v8681 = vadd.f32 %v8392, %v8680
  %v8682 = vpop.f32.mrb[0].mxu0
  %v8683 = vpop.f32.mrb[0].mxu0
  %v8684 = vadd.f32 %v8395, %v8683
  %v8685 = vpop.f32.mrb[0].mxu0
  %8686 = vmatprep.mubr.bf16.mxu0 %v7860
  %8687 = vmatmul.mubr.bf16.gmra.mrb[0].mxu0 %v7859
  %v8688 = vpop.f32.mrb[0].mxu0
  %v8689 = vadd.f32 %v8400, %v8688
  %v8690 = vpop.f32.mrb[0].mxu0
  %v8691 = vpop.f32.mrb[0].mxu0
  %v8692 = vadd.f32 %v8403, %v8691
  %v8693 = vpop.f32.mrb[0].mxu0
  %8694 = vdwg.mxu0
  %v8695 = vadd.f32 %v77, %v8441
  %v8696 = vadd.f32 %v78, %v8444
  %v8697 = vadd.f32 %v79, %v8449
  %v8698 = vadd.f32 %v80, %v8452
  %v8699 = vadd.f32 %v81, %v8457
  %v8700 = vadd.f32 %v82, %v8460
  %v8701 = vadd.f32 %v83, %v8465
  %v8702 = vadd.f32 %v84, %v8468
  %v8703 = vadd.f32 %v85, %v8473
  %v8704 = vadd.f32 %v86, %v8476
  %v8705 = vadd.f32 %v87, %v8481
  %v8706 = vadd.f32 %v88, %v8484
  %v8707 = vadd.f32 %v89, %v8489
  %v8708 = vadd.f32 %v90, %v8492
  %v8709 = vadd.f32 %v91, %v8497
  %v8710 = vadd.f32 %v92, %v8500
  %v8711 = vadd.f32 %v114, %v8505
  %v8712 = vadd.f32 %v115, %v8508
  %v8713 = vadd.f32 %v116, %v8513
  %v8714 = vadd.f32 %v117, %v8516
  %v8715 = vadd.f32 %v118, %v8521
  %v8716 = vadd.f32 %v119, %v8524
  %v8717 = vadd.f32 %v120, %v8529
  %v8718 = vadd.f32 %v121, %v8532
  %v8719 = vadd.f32 %v122, %v8537
  %v8720 = vadd.f32 %v123, %v8540
  %v8721 = vadd.f32 %v124, %v8545
  %v8722 = vadd.f32 %v125, %v8548
  %v8723 = vadd.f32 %v126, %v8553
  %v8724 = vadd.f32 %v127, %v8556
  %v8725 = vadd.f32 %v128, %v8561
  %v8726 = vadd.f32 %v129, %v8564
  %v8727 = vadd.f32 %v151, %v8569
  %v8728 = vadd.f32 %v152, %v8572
  %v8729 = vadd.f32 %v153, %v8577
  %v8730 = vadd.f32 %v154, %v8580
  %v8731 = vadd.f32 %v155, %v8585
  %v8732 = vadd.f32 %v156, %v8588
  %v8733 = vadd.f32 %v157, %v8593
  %v8734 = vadd.f32 %v158, %v8596
  %v8735 = vadd.f32 %v159, %v8601
  %v8736 = vadd.f32 %v160, %v8604
  %v8737 = vadd.f32 %v161, %v8609
  %v8738 = vadd.f32 %v162, %v8612
  %v8739 = vadd.f32 %v163, %v8617
  %v8740 = vadd.f32 %v164, %v8620
  %v8741 = vadd.f32 %v165, %v8625
  %v8742 = vadd.f32 %v166, %v8628
  %v8743 = vadd.f32 %v188, %v8633
  %v8744 = vadd.f32 %v189, %v8636
  %v8745 = vadd.f32 %v190, %v8641
  %v8746 = vadd.f32 %v191, %v8644
  %v8747 = vadd.f32 %v192, %v8649
  %v8748 = vadd.f32 %v193, %v8652
  %v8749 = vadd.f32 %v194, %v8657
  %v8750 = vadd.f32 %v195, %v8660
  %v8751 = vadd.f32 %v196, %v8665
  %v8752 = vadd.f32 %v197, %v8668
  %v8753 = vadd.f32 %v198, %v8673
  %v8754 = vadd.f32 %v199, %v8676
  %v8755 = vadd.f32 %v200, %v8681
  %v8756 = vadd.f32 %v201, %v8684
  %v8757 = vadd.f32 %v202, %v8689
  %v8758 = vadd.f32 %v203, %v8692
  %v8759 = vld [vmem:[%s7] sm:$0x1]
  %v8761 = vlaneseq
  %v8762 = vshrl.u32 %v8761, 7
  %v8763 = vsub.s32 0, %v8762
  %v8764 = vrot.slane %v8759, %v8763
  %v8766 = vadd.f32 %v8695, %v8764
  %v8767 = vadd.f32 %v8696, %v8764
  %v8768 = vadd.f32 %v8697, %v8764
  %v8769 = vadd.f32 %v8698, %v8764
  %v8770 = vadd.f32 %v8699, %v8764
  %v8771 = vadd.f32 %v8700, %v8764
  %v8772 = vadd.f32 %v8701, %v8764
  %v8773 = vadd.f32 %v8702, %v8764
  %v8774 = vadd.f32 %v8703, %v8764
  %v8775 = vadd.f32 %v8704, %v8764
  %v8776 = vadd.f32 %v8705, %v8764
  %v8777 = vadd.f32 %v8706, %v8764
  %v8778 = vadd.f32 %v8707, %v8764
  %v8779 = vadd.f32 %v8708, %v8764
  %v8780 = vadd.f32 %v8709, %v8764
  %v8781 = vadd.f32 %v8710, %v8764
  %v8782 = vadd.f32 %v8711, %v8764
  %v8783 = vadd.f32 %v8712, %v8764
  %v8784 = vadd.f32 %v8713, %v8764
  %v8785 = vadd.f32 %v8714, %v8764
  %v8786 = vadd.f32 %v8715, %v8764
  %v8787 = vadd.f32 %v8716, %v8764
  %v8788 = vadd.f32 %v8717, %v8764
  %v8789 = vadd.f32 %v8718, %v8764
  %v8790 = vadd.f32 %v8719, %v8764
  %v8791 = vadd.f32 %v8720, %v8764
  %v8792 = vadd.f32 %v8721, %v8764
  %v8793 = vadd.f32 %v8722, %v8764
  %v8794 = vadd.f32 %v8723, %v8764
  %v8795 = vadd.f32 %v8724, %v8764
  %v8796 = vadd.f32 %v8725, %v8764
  %v8797 = vadd.f32 %v8726, %v8764
  %v8798 = vadd.f32 %v8727, %v8764
  %v8799 = vadd.f32 %v8728, %v8764
  %v8800 = vadd.f32 %v8729, %v8764
  %v8801 = vadd.f32 %v8730, %v8764
  %v8802 = vadd.f32 %v8731, %v8764
  %v8803 = vadd.f32 %v8732, %v8764
  %v8804 = vadd.f32 %v8733, %v8764
  %v8805 = vadd.f32 %v8734, %v8764
  %v8806 = vadd.f32 %v8735, %v8764
  %v8807 = vadd.f32 %v8736, %v8764
  %v8808 = vadd.f32 %v8737, %v8764
  %v8809 = vadd.f32 %v8738, %v8764
  %v8810 = vadd.f32 %v8739, %v8764
  %v8811 = vadd.f32 %v8740, %v8764
  %v8812 = vadd.f32 %v8741, %v8764
  %v8813 = vadd.f32 %v8742, %v8764
  %v8814 = vadd.f32 %v8743, %v8764
  %v8815 = vadd.f32 %v8744, %v8764
  %v8816 = vadd.f32 %v8745, %v8764
  %v8817 = vadd.f32 %v8746, %v8764
  %v8818 = vadd.f32 %v8747, %v8764
  %v8819 = vadd.f32 %v8748, %v8764
  %v8820 = vadd.f32 %v8749, %v8764
  %v8821 = vadd.f32 %v8750, %v8764
  %v8822 = vadd.f32 %v8751, %v8764
  %v8823 = vadd.f32 %v8752, %v8764
  %v8824 = vadd.f32 %v8753, %v8764
  %v8825 = vadd.f32 %v8754, %v8764
  %v8826 = vadd.f32 %v8755, %v8764
  %v8827 = vadd.f32 %v8756, %v8764
  %v8828 = vadd.f32 %v8757, %v8764
  %v8829 = vadd.f32 %v8758, %v8764
  %v8830 = vld [vmem:[%s8] sm:$0x1]
  %v8831 = vld [vmem:[%s9] sm:$0x1]
  %v8832 = vsel %vm210, %v8766, 0.0
  %8833 = vadd.xlane.f32.xlu0 %v8832
  %v8834 = vpop.xlane.xlu0 %8833
  %v8835 = vsel %vm210, %v8767, 0.0
  %8836 = vadd.xlane.f32.xlu0 %v8835
  %v8837 = vpop.xlane.xlu0 %8836
  %v8838 = vsel %vm210, %v8768, 0.0
  %8839 = vadd.xlane.f32.xlu0 %v8838
  %v8840 = vpop.xlane.xlu0 %8839
  %v8841 = vsel %vm210, %v8769, 0.0
  %8842 = vadd.xlane.f32.xlu0 %v8841
  %v8843 = vpop.xlane.xlu0 %8842
  %v8844 = vsel %vm210, %v8770, 0.0
  %8845 = vadd.xlane.f32.xlu0 %v8844
  %v8846 = vpop.xlane.xlu0 %8845
  %v8847 = vsel %vm210, %v8771, 0.0
  %8848 = vadd.xlane.f32.xlu0 %v8847
  %v8849 = vpop.xlane.xlu0 %8848
  %v8850 = vsel %vm210, %v8772, 0.0
  %8851 = vadd.xlane.f32.xlu0 %v8850
  %v8852 = vpop.xlane.xlu0 %8851
  %v8853 = vsel %vm210, %v8773, 0.0
  %8854 = vadd.xlane.f32.xlu0 %v8853
  %v8855 = vpop.xlane.xlu0 %8854
  %v8856 = vsel %vm210, %v8774, 0.0
  %8857 = vadd.xlane.f32.xlu0 %v8856
  %v8858 = vpop.xlane.xlu0 %8857
  %v8859 = vsel %vm210, %v8775, 0.0
  %8860 = vadd.xlane.f32.xlu0 %v8859
  %v8861 = vpop.xlane.xlu0 %8860
  %v8862 = vsel %vm210, %v8776, 0.0
  %8863 = vadd.xlane.f32.xlu0 %v8862
  %v8864 = vpop.xlane.xlu0 %8863
  %v8865 = vsel %vm210, %v8777, 0.0
  %8866 = vadd.xlane.f32.xlu0 %v8865
  %v8867 = vpop.xlane.xlu0 %8866
  %v8868 = vsel %vm210, %v8778, 0.0
  %8869 = vadd.xlane.f32.xlu0 %v8868
  %v8870 = vpop.xlane.xlu0 %8869
  %v8871 = vsel %vm210, %v8779, 0.0
  %8872 = vadd.xlane.f32.xlu0 %v8871
  %v8873 = vpop.xlane.xlu0 %8872
  %v8874 = vsel %vm210, %v8780, 0.0
  %8875 = vadd.xlane.f32.xlu0 %v8874
  %v8876 = vpop.xlane.xlu0 %8875
  %v8877 = vsel %vm210, %v8781, 0.0
  %8878 = vadd.xlane.f32.xlu0 %v8877
  %v8879 = vpop.xlane.xlu0 %8878
  %v8880 = vsel %vm210, %v8782, 0.0
  %8881 = vadd.xlane.f32.xlu0 %v8880
  %v8882 = vpop.xlane.xlu0 %8881
  %v8883 = vsel %vm210, %v8783, 0.0
  %8884 = vadd.xlane.f32.xlu0 %v8883
  %v8885 = vpop.xlane.xlu0 %8884
  %v8886 = vsel %vm210, %v8784, 0.0
  %8887 = vadd.xlane.f32.xlu0 %v8886
  %v8888 = vpop.xlane.xlu0 %8887
  %v8889 = vsel %vm210, %v8785, 0.0
  %8890 = vadd.xlane.f32.xlu0 %v8889
  %v8891 = vpop.xlane.xlu0 %8890
  %v8892 = vsel %vm210, %v8786, 0.0
  %8893 = vadd.xlane.f32.xlu0 %v8892
  %v8894 = vpop.xlane.xlu0 %8893
  %v8895 = vsel %vm210, %v8787, 0.0
  %8896 = vadd.xlane.f32.xlu0 %v8895
  %v8897 = vpop.xlane.xlu0 %8896
  %v8898 = vsel %vm210, %v8788, 0.0
  %8899 = vadd.xlane.f32.xlu0 %v8898
  %v8900 = vpop.xlane.xlu0 %8899
  %v8901 = vsel %vm210, %v8789, 0.0
  %8902 = vadd.xlane.f32.xlu0 %v8901
  %v8903 = vpop.xlane.xlu0 %8902
  %v8904 = vsel %vm210, %v8790, 0.0
  %8905 = vadd.xlane.f32.xlu0 %v8904
  %v8906 = vpop.xlane.xlu0 %8905
  %v8907 = vsel %vm210, %v8791, 0.0
  %8908 = vadd.xlane.f32.xlu0 %v8907
  %v8909 = vpop.xlane.xlu0 %8908
  %v8910 = vsel %vm210, %v8792, 0.0
  %8911 = vadd.xlane.f32.xlu0 %v8910
  %v8912 = vpop.xlane.xlu0 %8911
  %v8913 = vsel %vm210, %v8793, 0.0
  %8914 = vadd.xlane.f32.xlu0 %v8913
  %v8915 = vpop.xlane.xlu0 %8914
  %v8916 = vsel %vm210, %v8794, 0.0
  %8917 = vadd.xlane.f32.xlu0 %v8916
  %v8918 = vpop.xlane.xlu0 %8917
  %v8919 = vsel %vm210, %v8795, 0.0
  %8920 = vadd.xlane.f32.xlu0 %v8919
  %v8921 = vpop.xlane.xlu0 %8920
  %v8922 = vsel %vm210, %v8796, 0.0
  %8923 = vadd.xlane.f32.xlu0 %v8922
  %v8924 = vpop.xlane.xlu0 %8923
  %v8925 = vsel %vm210, %v8797, 0.0
  %8926 = vadd.xlane.f32.xlu0 %v8925
  %v8927 = vpop.xlane.xlu0 %8926
  %v8928 = vsel %vm210, %v8798, 0.0
  %8929 = vadd.xlane.f32.xlu0 %v8928
  %v8930 = vpop.xlane.xlu0 %8929
  %v8931 = vsel %vm210, %v8799, 0.0
  %8932 = vadd.xlane.f32.xlu0 %v8931
  %v8933 = vpop.xlane.xlu0 %8932
  %v8934 = vsel %vm210, %v8800, 0.0
  %8935 = vadd.xlane.f32.xlu0 %v8934
  %v8936 = vpop.xlane.xlu0 %8935
  %v8937 = vsel %vm210, %v8801, 0.0
  %8938 = vadd.xlane.f32.xlu0 %v8937
  %v8939 = vpop.xlane.xlu0 %8938
  %v8940 = vsel %vm210, %v8802, 0.0
  %8941 = vadd.xlane.f32.xlu0 %v8940
  %v8942 = vpop.xlane.xlu0 %8941
  %v8943 = vsel %vm210, %v8803, 0.0
  %8944 = vadd.xlane.f32.xlu0 %v8943
  %v8945 = vpop.xlane.xlu0 %8944
  %v8946 = vsel %vm210, %v8804, 0.0
  %8947 = vadd.xlane.f32.xlu0 %v8946
  %v8948 = vpop.xlane.xlu0 %8947
  %v8949 = vsel %vm210, %v8805, 0.0
  %8950 = vadd.xlane.f32.xlu0 %v8949
  %v8951 = vpop.xlane.xlu0 %8950
  %v8952 = vsel %vm210, %v8806, 0.0
  %8953 = vadd.xlane.f32.xlu0 %v8952
  %v8954 = vpop.xlane.xlu0 %8953
  %v8955 = vsel %vm210, %v8807, 0.0
  %8956 = vadd.xlane.f32.xlu0 %v8955
  %v8957 = vpop.xlane.xlu0 %8956
  %v8958 = vsel %vm210, %v8808, 0.0
  %8959 = vadd.xlane.f32.xlu0 %v8958
  %v8960 = vpop.xlane.xlu0 %8959
  %v8961 = vsel %vm210, %v8809, 0.0
  %8962 = vadd.xlane.f32.xlu0 %v8961
  %v8963 = vpop.xlane.xlu0 %8962
  %v8964 = vsel %vm210, %v8810, 0.0
  %8965 = vadd.xlane.f32.xlu0 %v8964
  %v8966 = vpop.xlane.xlu0 %8965
  %v8967 = vsel %vm210, %v8811, 0.0
  %8968 = vadd.xlane.f32.xlu0 %v8967
  %v8969 = vpop.xlane.xlu0 %8968
  %v8970 = vsel %vm210, %v8812, 0.0
  %8971 = vadd.xlane.f32.xlu0 %v8970
  %v8972 = vpop.xlane.xlu0 %8971
  %v8973 = vsel %vm210, %v8813, 0.0
  %8974 = vadd.xlane.f32.xlu0 %v8973
  %v8975 = vpop.xlane.xlu0 %8974
  %v8976 = vsel %vm210, %v8814, 0.0
  %8977 = vadd.xlane.f32.xlu0 %v8976
  %v8978 = vpop.xlane.xlu0 %8977
  %v8979 = vsel %vm210, %v8815, 0.0
  %8980 = vadd.xlane.f32.xlu0 %v8979
  %v8981 = vpop.xlane.xlu0 %8980
  %v8982 = vsel %vm210, %v8816, 0.0
  %8983 = vadd.xlane.f32.xlu0 %v8982
  %v8984 = vpop.xlane.xlu0 %8983
  %v8985 = vsel %vm210, %v8817, 0.0
  %8986 = vadd.xlane.f32.xlu0 %v8985
  %v8987 = vpop.xlane.xlu0 %8986
  %v8988 = vsel %vm210, %v8818, 0.0
  %8989 = vadd.xlane.f32.xlu0 %v8988
  %v8990 = vpop.xlane.xlu0 %8989
  %v8991 = vsel %vm210, %v8819, 0.0
  %8992 = vadd.xlane.f32.xlu0 %v8991
  %v8993 = vpop.xlane.xlu0 %8992
  %v8994 = vsel %vm210, %v8820, 0.0
  %8995 = vadd.xlane.f32.xlu0 %v8994
  %v8996 = vpop.xlane.xlu0 %8995
  %v8997 = vsel %vm210, %v8821, 0.0
  %8998 = vadd.xlane.f32.xlu0 %v8997
  %v8999 = vpop.xlane.xlu0 %8998
  %v9000 = vsel %vm210, %v8822, 0.0
  %9001 = vadd.xlane.f32.xlu0 %v9000
  %v9002 = vpop.xlane.xlu0 %9001
  %v9003 = vsel %vm210, %v8823, 0.0
  %9004 = vadd.xlane.f32.xlu0 %v9003
  %v9005 = vpop.xlane.xlu0 %9004
  %v9006 = vsel %vm210, %v8824, 0.0
  %9007 = vadd.xlane.f32.xlu0 %v9006
  %v9008 = vpop.xlane.xlu0 %9007
  %v9009 = vsel %vm210, %v8825, 0.0
  %9010 = vadd.xlane.f32.xlu0 %v9009
  %v9011 = vpop.xlane.xlu0 %9010
  %v9012 = vsel %vm210, %v8826, 0.0
  %9013 = vadd.xlane.f32.xlu0 %v9012
  %v9014 = vpop.xlane.xlu0 %9013
  %v9015 = vsel %vm210, %v8827, 0.0
  %9016 = vadd.xlane.f32.xlu0 %v9015
  %v9017 = vpop.xlane.xlu0 %9016
  %v9018 = vsel %vm210, %v8828, 0.0
  %9019 = vadd.xlane.f32.xlu0 %v9018
  %v9020 = vpop.xlane.xlu0 %9019
  %v9021 = vsel %vm210, %v8829, 0.0
  %9022 = vadd.xlane.f32.xlu0 %v9021
  %v9023 = vpop.xlane.xlu0 %9022
  %v9024 = vmul.f32 %v8834, %v403
  %v9025 = vmul.f32 %v8837, %v403
  %v9026 = vmul.f32 %v8840, %v403
  %v9027 = vmul.f32 %v8843, %v403
  %v9028 = vmul.f32 %v8846, %v403
  %v9029 = vmul.f32 %v8849, %v403
  %v9030 = vmul.f32 %v8852, %v403
  %v9031 = vmul.f32 %v8855, %v403
  %v9032 = vmul.f32 %v8858, %v403
  %v9033 = vmul.f32 %v8861, %v403
  %v9034 = vmul.f32 %v8864, %v403
  %v9035 = vmul.f32 %v8867, %v403
  %v9036 = vmul.f32 %v8870, %v403
  %v9037 = vmul.f32 %v8873, %v403
  %v9038 = vmul.f32 %v8876, %v403
  %v9039 = vmul.f32 %v8879, %v403
  %v9040 = vmul.f32 %v8882, %v403
  %v9041 = vmul.f32 %v8885, %v403
  %v9042 = vmul.f32 %v8888, %v403
  %v9043 = vmul.f32 %v8891, %v403
  %v9044 = vmul.f32 %v8894, %v403
  %v9045 = vmul.f32 %v8897, %v403
  %v9046 = vmul.f32 %v8900, %v403
  %v9047 = vmul.f32 %v8903, %v403
  %v9048 = vmul.f32 %v8906, %v403
  %v9049 = vmul.f32 %v8909, %v403
  %v9050 = vmul.f32 %v8912, %v403
  %v9051 = vmul.f32 %v8915, %v403
  %v9052 = vmul.f32 %v8918, %v403
  %v9053 = vmul.f32 %v8921, %v403
  %v9054 = vmul.f32 %v8924, %v403
  %v9055 = vmul.f32 %v8927, %v403
  %v9056 = vmul.f32 %v8930, %v403
  %v9057 = vmul.f32 %v8933, %v403
  %v9058 = vmul.f32 %v8936, %v403
  %v9059 = vmul.f32 %v8939, %v403
  %v9060 = vmul.f32 %v8942, %v403
  %v9061 = vmul.f32 %v8945, %v403
  %v9062 = vmul.f32 %v8948, %v403
  %v9063 = vmul.f32 %v8951, %v403
  %v9064 = vmul.f32 %v8954, %v403
  %v9065 = vmul.f32 %v8957, %v403
  %v9066 = vmul.f32 %v8960, %v403
  %v9067 = vmul.f32 %v8963, %v403
  %v9068 = vmul.f32 %v8966, %v403
  %v9069 = vmul.f32 %v8969, %v403
  %v9070 = vmul.f32 %v8972, %v403
  %v9071 = vmul.f32 %v8975, %v403
  %v9072 = vmul.f32 %v8978, %v403
  %v9073 = vmul.f32 %v8981, %v403
  %v9074 = vmul.f32 %v8984, %v403
  %v9075 = vmul.f32 %v8987, %v403
  %v9076 = vmul.f32 %v8990, %v403
  %v9077 = vmul.f32 %v8993, %v403
  %v9078 = vmul.f32 %v8996, %v403
  %v9079 = vmul.f32 %v8999, %v403
  %v9080 = vmul.f32 %v9002, %v403
  %v9081 = vmul.f32 %v9005, %v403
  %v9082 = vmul.f32 %v9008, %v403
  %v9083 = vmul.f32 %v9011, %v403
  %v9084 = vmul.f32 %v9014, %v403
  %v9085 = vmul.f32 %v9017, %v403
  %v9086 = vmul.f32 %v9020, %v403
  %v9087 = vmul.f32 %v9023, %v403
  %v9088 = vsub.f32 %v8766, %v9024
  %v9089 = vsub.f32 %v8767, %v9025
  %v9090 = vsub.f32 %v8768, %v9026
  %v9091 = vsub.f32 %v8769, %v9027
  %v9092 = vsub.f32 %v8770, %v9028
  %v9093 = vsub.f32 %v8771, %v9029
  %v9094 = vsub.f32 %v8772, %v9030
  %v9095 = vsub.f32 %v8773, %v9031
  %v9096 = vsub.f32 %v8774, %v9032
  %v9097 = vsub.f32 %v8775, %v9033
  %v9098 = vsub.f32 %v8776, %v9034
  %v9099 = vsub.f32 %v8777, %v9035
  %v9100 = vsub.f32 %v8778, %v9036
  %v9101 = vsub.f32 %v8779, %v9037
  %v9102 = vsub.f32 %v8780, %v9038
  %v9103 = vsub.f32 %v8781, %v9039
  %v9104 = vsub.f32 %v8782, %v9040
  %v9105 = vsub.f32 %v8783, %v9041
  %v9106 = vsub.f32 %v8784, %v9042
  %v9107 = vsub.f32 %v8785, %v9043
  %v9108 = vsub.f32 %v8786, %v9044
  %v9109 = vsub.f32 %v8787, %v9045
  %v9110 = vsub.f32 %v8788, %v9046
  %v9111 = vsub.f32 %v8789, %v9047
  %v9112 = vsub.f32 %v8790, %v9048
  %v9113 = vsub.f32 %v8791, %v9049
  %v9114 = vsub.f32 %v8792, %v9050
  %v9115 = vsub.f32 %v8793, %v9051
  %v9116 = vsub.f32 %v8794, %v9052
  %v9117 = vsub.f32 %v8795, %v9053
  %v9118 = vsub.f32 %v8796, %v9054
  %v9119 = vsub.f32 %v8797, %v9055
  %v9120 = vsub.f32 %v8798, %v9056
  %v9121 = vsub.f32 %v8799, %v9057
  %v9122 = vsub.f32 %v8800, %v9058
  %v9123 = vsub.f32 %v8801, %v9059
  %v9124 = vsub.f32 %v8802, %v9060
  %v9125 = vsub.f32 %v8803, %v9061
  %v9126 = vsub.f32 %v8804, %v9062
  %v9127 = vsub.f32 %v8805, %v9063
  %v9128 = vsub.f32 %v8806, %v9064
  %v9129 = vsub.f32 %v8807, %v9065
  %v9130 = vsub.f32 %v8808, %v9066
  %v9131 = vsub.f32 %v8809, %v9067
  %v9132 = vsub.f32 %v8810, %v9068
  %v9133 = vsub.f32 %v8811, %v9069
  %v9134 = vsub.f32 %v8812, %v9070
  %v9135 = vsub.f32 %v8813, %v9071
  %v9136 = vsub.f32 %v8814, %v9072
  %v9137 = vsub.f32 %v8815, %v9073
  %v9138 = vsub.f32 %v8816, %v9074
  %v9139 = vsub.f32 %v8817, %v9075
  %v9140 = vsub.f32 %v8818, %v9076
  %v9141 = vsub.f32 %v8819, %v9077
  %v9142 = vsub.f32 %v8820, %v9078
  %v9143 = vsub.f32 %v8821, %v9079
  %v9144 = vsub.f32 %v8822, %v9080
  %v9145 = vsub.f32 %v8823, %v9081
  %v9146 = vsub.f32 %v8824, %v9082
  %v9147 = vsub.f32 %v8825, %v9083
  %v9148 = vsub.f32 %v8826, %v9084
  %v9149 = vsub.f32 %v8827, %v9085
  %v9150 = vsub.f32 %v8828, %v9086
  %v9151 = vsub.f32 %v8829, %v9087
  %v9152 = vmul.f32 %v9088, %v9088
  %v9153 = vmul.f32 %v9089, %v9089
  %v9154 = vmul.f32 %v9090, %v9090
  %v9155 = vmul.f32 %v9091, %v9091
  %v9156 = vmul.f32 %v9092, %v9092
  %v9157 = vmul.f32 %v9093, %v9093
  %v9158 = vmul.f32 %v9094, %v9094
  %v9159 = vmul.f32 %v9095, %v9095
  %v9160 = vmul.f32 %v9096, %v9096
  %v9161 = vmul.f32 %v9097, %v9097
  %v9162 = vmul.f32 %v9098, %v9098
  %v9163 = vmul.f32 %v9099, %v9099
  %v9164 = vmul.f32 %v9100, %v9100
  %v9165 = vmul.f32 %v9101, %v9101
  %v9166 = vmul.f32 %v9102, %v9102
  %v9167 = vmul.f32 %v9103, %v9103
  %v9168 = vmul.f32 %v9104, %v9104
  %v9169 = vmul.f32 %v9105, %v9105
  %v9170 = vmul.f32 %v9106, %v9106
  %v9171 = vmul.f32 %v9107, %v9107
  %v9172 = vmul.f32 %v9108, %v9108
  %v9173 = vmul.f32 %v9109, %v9109
  %v9174 = vmul.f32 %v9110, %v9110
  %v9175 = vmul.f32 %v9111, %v9111
  %v9176 = vmul.f32 %v9112, %v9112
  %v9177 = vmul.f32 %v9113, %v9113
  %v9178 = vmul.f32 %v9114, %v9114
  %v9179 = vmul.f32 %v9115, %v9115
  %v9180 = vmul.f32 %v9116, %v9116
  %v9181 = vmul.f32 %v9117, %v9117
  %v9182 = vmul.f32 %v9118, %v9118
  %v9183 = vmul.f32 %v9119, %v9119
  %v9184 = vmul.f32 %v9120, %v9120
  %v9185 = vmul.f32 %v9121, %v9121
  %v9186 = vmul.f32 %v9122, %v9122
  %v9187 = vmul.f32 %v9123, %v9123
  %v9188 = vmul.f32 %v9124, %v9124
  %v9189 = vmul.f32 %v9125, %v9125
  %v9190 = vmul.f32 %v9126, %v9126
  %v9191 = vmul.f32 %v9127, %v9127
  %v9192 = vmul.f32 %v9128, %v9128
  %v9193 = vmul.f32 %v9129, %v9129
  %v9194 = vmul.f32 %v9130, %v9130
  %v9195 = vmul.f32 %v9131, %v9131
  %v9196 = vmul.f32 %v9132, %v9132
  %v9197 = vmul.f32 %v9133, %v9133
  %v9198 = vmul.f32 %v9134, %v9134
  %v9199 = vmul.f32 %v9135, %v9135
  %v9200 = vmul.f32 %v9136, %v9136
  %v9201 = vmul.f32 %v9137, %v9137
  %v9202 = vmul.f32 %v9138, %v9138
  %v9203 = vmul.f32 %v9139, %v9139
  %v9204 = vmul.f32 %v9140, %v9140
  %v9205 = vmul.f32 %v9141, %v9141
  %v9206 = vmul.f32 %v9142, %v9142
  %v9207 = vmul.f32 %v9143, %v9143
  %v9208 = vmul.f32 %v9144, %v9144
  %v9209 = vmul.f32 %v9145, %v9145
  %v9210 = vmul.f32 %v9146, %v9146
  %v9211 = vmul.f32 %v9147, %v9147
  %v9212 = vmul.f32 %v9148, %v9148
  %v9213 = vmul.f32 %v9149, %v9149
  %v9214 = vmul.f32 %v9150, %v9150
  %v9215 = vmul.f32 %v9151, %v9151
  %v9216 = vsel %vm210, %v9152, 0.0
  %9217 = vadd.xlane.f32.xlu0 %v9216
  %v9218 = vpop.xlane.xlu0 %9217
  %v9219 = vsel %vm210, %v9153, 0.0
  %9220 = vadd.xlane.f32.xlu0 %v9219
  %v9221 = vpop.xlane.xlu0 %9220
  %v9222 = vsel %vm210, %v9154, 0.0
  %9223 = vadd.xlane.f32.xlu0 %v9222
  %v9224 = vpop.xlane.xlu0 %9223
  %v9225 = vsel %vm210, %v9155, 0.0
  %9226 = vadd.xlane.f32.xlu0 %v9225
  %v9227 = vpop.xlane.xlu0 %9226
  %v9228 = vsel %vm210, %v9156, 0.0
  %9229 = vadd.xlane.f32.xlu0 %v9228
  %v9230 = vpop.xlane.xlu0 %9229
  %v9231 = vsel %vm210, %v9157, 0.0
  %9232 = vadd.xlane.f32.xlu0 %v9231
  %v9233 = vpop.xlane.xlu0 %9232
  %v9234 = vsel %vm210, %v9158, 0.0
  %9235 = vadd.xlane.f32.xlu0 %v9234
  %v9236 = vpop.xlane.xlu0 %9235
  %v9237 = vsel %vm210, %v9159, 0.0
  %9238 = vadd.xlane.f32.xlu0 %v9237
  %v9239 = vpop.xlane.xlu0 %9238
  %v9240 = vsel %vm210, %v9160, 0.0
  %9241 = vadd.xlane.f32.xlu0 %v9240
  %v9242 = vpop.xlane.xlu0 %9241
  %v9243 = vsel %vm210, %v9161, 0.0
  %9244 = vadd.xlane.f32.xlu0 %v9243
  %v9245 = vpop.xlane.xlu0 %9244
  %v9246 = vsel %vm210, %v9162, 0.0
  %9247 = vadd.xlane.f32.xlu0 %v9246
  %v9248 = vpop.xlane.xlu0 %9247
  %v9249 = vsel %vm210, %v9163, 0.0
  %9250 = vadd.xlane.f32.xlu0 %v9249
  %v9251 = vpop.xlane.xlu0 %9250
  %v9252 = vsel %vm210, %v9164, 0.0
  %9253 = vadd.xlane.f32.xlu0 %v9252
  %v9254 = vpop.xlane.xlu0 %9253
  %v9255 = vsel %vm210, %v9165, 0.0
  %9256 = vadd.xlane.f32.xlu0 %v9255
  %v9257 = vpop.xlane.xlu0 %9256
  %v9258 = vsel %vm210, %v9166, 0.0
  %9259 = vadd.xlane.f32.xlu0 %v9258
  %v9260 = vpop.xlane.xlu0 %9259
  %v9261 = vsel %vm210, %v9167, 0.0
  %9262 = vadd.xlane.f32.xlu0 %v9261
  %v9263 = vpop.xlane.xlu0 %9262
  %v9264 = vsel %vm210, %v9168, 0.0
  %9265 = vadd.xlane.f32.xlu0 %v9264
  %v9266 = vpop.xlane.xlu0 %9265
  %v9267 = vsel %vm210, %v9169, 0.0
  %9268 = vadd.xlane.f32.xlu0 %v9267
  %v9269 = vpop.xlane.xlu0 %9268
  %v9270 = vsel %vm210, %v9170, 0.0
  %9271 = vadd.xlane.f32.xlu0 %v9270
  %v9272 = vpop.xlane.xlu0 %9271
  %v9273 = vsel %vm210, %v9171, 0.0
  %9274 = vadd.xlane.f32.xlu0 %v9273
  %v9275 = vpop.xlane.xlu0 %9274
  %v9276 = vsel %vm210, %v9172, 0.0
  %9277 = vadd.xlane.f32.xlu0 %v9276
  %v9278 = vpop.xlane.xlu0 %9277
  %v9279 = vsel %vm210, %v9173, 0.0
  %9280 = vadd.xlane.f32.xlu0 %v9279
  %v9281 = vpop.xlane.xlu0 %9280
  %v9282 = vsel %vm210, %v9174, 0.0
  %9283 = vadd.xlane.f32.xlu0 %v9282
  %v9284 = vpop.xlane.xlu0 %9283
  %v9285 = vsel %vm210, %v9175, 0.0
  %9286 = vadd.xlane.f32.xlu0 %v9285
  %v9287 = vpop.xlane.xlu0 %9286
  %v9288 = vsel %vm210, %v9176, 0.0
  %9289 = vadd.xlane.f32.xlu0 %v9288
  %v9290 = vpop.xlane.xlu0 %9289
  %v9291 = vsel %vm210, %v9177, 0.0
  %9292 = vadd.xlane.f32.xlu0 %v9291
  %v9293 = vpop.xlane.xlu0 %9292
  %v9294 = vsel %vm210, %v9178, 0.0
  %9295 = vadd.xlane.f32.xlu0 %v9294
  %v9296 = vpop.xlane.xlu0 %9295
  %v9297 = vsel %vm210, %v9179, 0.0
  %9298 = vadd.xlane.f32.xlu0 %v9297
  %v9299 = vpop.xlane.xlu0 %9298
  %v9300 = vsel %vm210, %v9180, 0.0
  %9301 = vadd.xlane.f32.xlu0 %v9300
  %v9302 = vpop.xlane.xlu0 %9301
  %v9303 = vsel %vm210, %v9181, 0.0
  %9304 = vadd.xlane.f32.xlu0 %v9303
  %v9305 = vpop.xlane.xlu0 %9304
  %v9306 = vsel %vm210, %v9182, 0.0
  %9307 = vadd.xlane.f32.xlu0 %v9306
  %v9308 = vpop.xlane.xlu0 %9307
  %v9309 = vsel %vm210, %v9183, 0.0
  %9310 = vadd.xlane.f32.xlu0 %v9309
  %v9311 = vpop.xlane.xlu0 %9310
  %v9312 = vsel %vm210, %v9184, 0.0
  %9313 = vadd.xlane.f32.xlu0 %v9312
  %v9314 = vpop.xlane.xlu0 %9313
  %v9315 = vsel %vm210, %v9185, 0.0
  %9316 = vadd.xlane.f32.xlu0 %v9315
  %v9317 = vpop.xlane.xlu0 %9316
  %v9318 = vsel %vm210, %v9186, 0.0
  %9319 = vadd.xlane.f32.xlu0 %v9318
  %v9320 = vpop.xlane.xlu0 %9319
  %v9321 = vsel %vm210, %v9187, 0.0
  %9322 = vadd.xlane.f32.xlu0 %v9321
  %v9323 = vpop.xlane.xlu0 %9322
  %v9324 = vsel %vm210, %v9188, 0.0
  %9325 = vadd.xlane.f32.xlu0 %v9324
  %v9326 = vpop.xlane.xlu0 %9325
  %v9327 = vsel %vm210, %v9189, 0.0
  %9328 = vadd.xlane.f32.xlu0 %v9327
  %v9329 = vpop.xlane.xlu0 %9328
  %v9330 = vsel %vm210, %v9190, 0.0
  %9331 = vadd.xlane.f32.xlu0 %v9330
  %v9332 = vpop.xlane.xlu0 %9331
  %v9333 = vsel %vm210, %v9191, 0.0
  %9334 = vadd.xlane.f32.xlu0 %v9333
  %v9335 = vpop.xlane.xlu0 %9334
  %v9336 = vsel %vm210, %v9192, 0.0
  %9337 = vadd.xlane.f32.xlu0 %v9336
  %v9338 = vpop.xlane.xlu0 %9337
  %v9339 = vsel %vm210, %v9193, 0.0
  %9340 = vadd.xlane.f32.xlu0 %v9339
  %v9341 = vpop.xlane.xlu0 %9340
  %v9342 = vsel %vm210, %v9194, 0.0
  %9343 = vadd.xlane.f32.xlu0 %v9342
  %v9344 = vpop.xlane.xlu0 %9343
  %v9345 = vsel %vm210, %v9195, 0.0
  %9346 = vadd.xlane.f32.xlu0 %v9345
  %v9347 = vpop.xlane.xlu0 %9346
  %v9348 = vsel %vm210, %v9196, 0.0
  %9349 = vadd.xlane.f32.xlu0 %v9348
  %v9350 = vpop.xlane.xlu0 %9349
  %v9351 = vsel %vm210, %v9197, 0.0
  %9352 = vadd.xlane.f32.xlu0 %v9351
  %v9353 = vpop.xlane.xlu0 %9352
  %v9354 = vsel %vm210, %v9198, 0.0
  %9355 = vadd.xlane.f32.xlu0 %v9354
  %v9356 = vpop.xlane.xlu0 %9355
  %v9357 = vsel %vm210, %v9199, 0.0
  %9358 = vadd.xlane.f32.xlu0 %v9357
  %v9359 = vpop.xlane.xlu0 %9358
  %v9360 = vsel %vm210, %v9200, 0.0
  %9361 = vadd.xlane.f32.xlu0 %v9360
  %v9362 = vpop.xlane.xlu0 %9361
  %v9363 = vsel %vm210, %v9201, 0.0
  %9364 = vadd.xlane.f32.xlu0 %v9363
  %v9365 = vpop.xlane.xlu0 %9364
  %v9366 = vsel %vm210, %v9202, 0.0
  %9367 = vadd.xlane.f32.xlu0 %v9366
  %v9368 = vpop.xlane.xlu0 %9367
  %v9369 = vsel %vm210, %v9203, 0.0
  %9370 = vadd.xlane.f32.xlu0 %v9369
  %v9371 = vpop.xlane.xlu0 %9370
  %v9372 = vsel %vm210, %v9204, 0.0
  %9373 = vadd.xlane.f32.xlu0 %v9372
  %v9374 = vpop.xlane.xlu0 %9373
  %v9375 = vsel %vm210, %v9205, 0.0
  %9376 = vadd.xlane.f32.xlu0 %v9375
  %v9377 = vpop.xlane.xlu0 %9376
  %v9378 = vsel %vm210, %v9206, 0.0
  %9379 = vadd.xlane.f32.xlu0 %v9378
  %v9380 = vpop.xlane.xlu0 %9379
  %v9381 = vsel %vm210, %v9207, 0.0
  %9382 = vadd.xlane.f32.xlu0 %v9381
  %v9383 = vpop.xlane.xlu0 %9382
  %v9384 = vsel %vm210, %v9208, 0.0
  %9385 = vadd.xlane.f32.xlu0 %v9384
  %v9386 = vpop.xlane.xlu0 %9385
  %v9387 = vsel %vm210, %v9209, 0.0
  %9388 = vadd.xlane.f32.xlu0 %v9387
  %v9389 = vpop.xlane.xlu0 %9388
  %v9390 = vsel %vm210, %v9210, 0.0
  %9391 = vadd.xlane.f32.xlu0 %v9390
  %v9392 = vpop.xlane.xlu0 %9391
  %v9393 = vsel %vm210, %v9211, 0.0
  %9394 = vadd.xlane.f32.xlu0 %v9393
  %v9395 = vpop.xlane.xlu0 %9394
  %v9396 = vsel %vm210, %v9212, 0.0
  %9397 = vadd.xlane.f32.xlu0 %v9396
  %v9398 = vpop.xlane.xlu0 %9397
  %v9399 = vsel %vm210, %v9213, 0.0
  %9400 = vadd.xlane.f32.xlu0 %v9399
  %v9401 = vpop.xlane.xlu0 %9400
  %v9402 = vsel %vm210, %v9214, 0.0
  %9403 = vadd.xlane.f32.xlu0 %v9402
  %v9404 = vpop.xlane.xlu0 %9403
  %v9405 = vsel %vm210, %v9215, 0.0
  %9406 = vadd.xlane.f32.xlu0 %v9405
  %v9407 = vpop.xlane.xlu0 %9406
  %v9408 = vmul.f32 %v9218, %v403
  %v9409 = vmul.f32 %v9221, %v403
  %v9410 = vmul.f32 %v9224, %v403
  %v9411 = vmul.f32 %v9227, %v403
  %v9412 = vmul.f32 %v9230, %v403
  %v9413 = vmul.f32 %v9233, %v403
  %v9414 = vmul.f32 %v9236, %v403
  %v9415 = vmul.f32 %v9239, %v403
  %v9416 = vmul.f32 %v9242, %v403
  %v9417 = vmul.f32 %v9245, %v403
  %v9418 = vmul.f32 %v9248, %v403
  %v9419 = vmul.f32 %v9251, %v403
  %v9420 = vmul.f32 %v9254, %v403
  %v9421 = vmul.f32 %v9257, %v403
  %v9422 = vmul.f32 %v9260, %v403
  %v9423 = vmul.f32 %v9263, %v403
  %v9424 = vmul.f32 %v9266, %v403
  %v9425 = vmul.f32 %v9269, %v403
  %v9426 = vmul.f32 %v9272, %v403
  %v9427 = vmul.f32 %v9275, %v403
  %v9428 = vmul.f32 %v9278, %v403
  %v9429 = vmul.f32 %v9281, %v403
  %v9430 = vmul.f32 %v9284, %v403
  %v9431 = vmul.f32 %v9287, %v403
  %v9432 = vmul.f32 %v9290, %v403
  %v9433 = vmul.f32 %v9293, %v403
  %v9434 = vmul.f32 %v9296, %v403
  %v9435 = vmul.f32 %v9299, %v403
  %v9436 = vmul.f32 %v9302, %v403
  %v9437 = vmul.f32 %v9305, %v403
  %v9438 = vmul.f32 %v9308, %v403
  %v9439 = vmul.f32 %v9311, %v403
  %v9440 = vmul.f32 %v9314, %v403
  %v9441 = vmul.f32 %v9317, %v403
  %v9442 = vmul.f32 %v9320, %v403
  %v9443 = vmul.f32 %v9323, %v403
  %v9444 = vmul.f32 %v9326, %v403
  %v9445 = vmul.f32 %v9329, %v403
  %v9446 = vmul.f32 %v9332, %v403
  %v9447 = vmul.f32 %v9335, %v403
  %v9448 = vmul.f32 %v9338, %v403
  %v9449 = vmul.f32 %v9341, %v403
  %v9450 = vmul.f32 %v9344, %v403
  %v9451 = vmul.f32 %v9347, %v403
  %v9452 = vmul.f32 %v9350, %v403
  %v9453 = vmul.f32 %v9353, %v403
  %v9454 = vmul.f32 %v9356, %v403
  %v9455 = vmul.f32 %v9359, %v403
  %v9456 = vmul.f32 %v9362, %v403
  %v9457 = vmul.f32 %v9365, %v403
  %v9458 = vmul.f32 %v9368, %v403
  %v9459 = vmul.f32 %v9371, %v403
  %v9460 = vmul.f32 %v9374, %v403
  %v9461 = vmul.f32 %v9377, %v403
  %v9462 = vmul.f32 %v9380, %v403
  %v9463 = vmul.f32 %v9383, %v403
  %v9464 = vmul.f32 %v9386, %v403
  %v9465 = vmul.f32 %v9389, %v403
  %v9466 = vmul.f32 %v9392, %v403
  %v9467 = vmul.f32 %v9395, %v403
  %v9468 = vmul.f32 %v9398, %v403
  %v9469 = vmul.f32 %v9401, %v403
  %v9470 = vmul.f32 %v9404, %v403
  %v9471 = vmul.f32 %v9407, %v403
  %v9472 = vadd.f32 %v9408, 1e-05
  %v9473 = vadd.f32 %v9409, 1e-05
  %v9474 = vadd.f32 %v9410, 1e-05
  %v9475 = vadd.f32 %v9411, 1e-05
  %v9476 = vadd.f32 %v9412, 1e-05
  %v9477 = vadd.f32 %v9413, 1e-05
  %v9478 = vadd.f32 %v9414, 1e-05
  %v9479 = vadd.f32 %v9415, 1e-05
  %v9480 = vadd.f32 %v9416, 1e-05
  %v9481 = vadd.f32 %v9417, 1e-05
  %v9482 = vadd.f32 %v9418, 1e-05
  %v9483 = vadd.f32 %v9419, 1e-05
  %v9484 = vadd.f32 %v9420, 1e-05
  %v9485 = vadd.f32 %v9421, 1e-05
  %v9486 = vadd.f32 %v9422, 1e-05
  %v9487 = vadd.f32 %v9423, 1e-05
  %v9488 = vadd.f32 %v9424, 1e-05
  %v9489 = vadd.f32 %v9425, 1e-05
  %v9490 = vadd.f32 %v9426, 1e-05
  %v9491 = vadd.f32 %v9427, 1e-05
  %v9492 = vadd.f32 %v9428, 1e-05
  %v9493 = vadd.f32 %v9429, 1e-05
  %v9494 = vadd.f32 %v9430, 1e-05
  %v9495 = vadd.f32 %v9431, 1e-05
  %v9496 = vadd.f32 %v9432, 1e-05
  %v9497 = vadd.f32 %v9433, 1e-05
  %v9498 = vadd.f32 %v9434, 1e-05
  %v9499 = vadd.f32 %v9435, 1e-05
  %v9500 = vadd.f32 %v9436, 1e-05
  %v9501 = vadd.f32 %v9437, 1e-05
  %v9502 = vadd.f32 %v9438, 1e-05
  %v9503 = vadd.f32 %v9439, 1e-05
  %v9504 = vadd.f32 %v9440, 1e-05
  %v9505 = vadd.f32 %v9441, 1e-05
  %v9506 = vadd.f32 %v9442, 1e-05
  %v9507 = vadd.f32 %v9443, 1e-05
  %v9508 = vadd.f32 %v9444, 1e-05
  %v9509 = vadd.f32 %v9445, 1e-05
  %v9510 = vadd.f32 %v9446, 1e-05
  %v9511 = vadd.f32 %v9447, 1e-05
  %v9512 = vadd.f32 %v9448, 1e-05
  %v9513 = vadd.f32 %v9449, 1e-05
  %v9514 = vadd.f32 %v9450, 1e-05
  %v9515 = vadd.f32 %v9451, 1e-05
  %v9516 = vadd.f32 %v9452, 1e-05
  %v9517 = vadd.f32 %v9453, 1e-05
  %v9518 = vadd.f32 %v9454, 1e-05
  %v9519 = vadd.f32 %v9455, 1e-05
  %v9520 = vadd.f32 %v9456, 1e-05
  %v9521 = vadd.f32 %v9457, 1e-05
  %v9522 = vadd.f32 %v9458, 1e-05
  %v9523 = vadd.f32 %v9459, 1e-05
  %v9524 = vadd.f32 %v9460, 1e-05
  %v9525 = vadd.f32 %v9461, 1e-05
  %v9526 = vadd.f32 %v9462, 1e-05
  %v9527 = vadd.f32 %v9463, 1e-05
  %v9528 = vadd.f32 %v9464, 1e-05
  %v9529 = vadd.f32 %v9465, 1e-05
  %v9530 = vadd.f32 %v9466, 1e-05
  %v9531 = vadd.f32 %v9467, 1e-05
  %v9532 = vadd.f32 %v9468, 1e-05
  %v9533 = vadd.f32 %v9469, 1e-05
  %v9534 = vadd.f32 %v9470, 1e-05
  %v9535 = vadd.f32 %v9471, 1e-05
  %v9536 = vrsqrt.pop %v9472
  %v9537 = vrsqrt.pop %v9473
  %v9538 = vrsqrt.pop %v9474
  %v9539 = vrsqrt.pop %v9475
  %v9540 = vrsqrt.pop %v9476
  %v9541 = vrsqrt.pop %v9477
  %v9542 = vrsqrt.pop %v9478
  %v9543 = vrsqrt.pop %v9479
  %v9544 = vrsqrt.pop %v9480
  %v9545 = vrsqrt.pop %v9481
  %v9546 = vrsqrt.pop %v9482
  %v9547 = vrsqrt.pop %v9483
  %v9548 = vrsqrt.pop %v9484
  %v9549 = vrsqrt.pop %v9485
  %v9550 = vrsqrt.pop %v9486
  %v9551 = vrsqrt.pop %v9487
  %v9552 = vrsqrt.pop %v9488
  %v9553 = vrsqrt.pop %v9489
  %v9554 = vrsqrt.pop %v9490
  %v9555 = vrsqrt.pop %v9491
  %v9556 = vrsqrt.pop %v9492
  %v9557 = vrsqrt.pop %v9493
  %v9558 = vrsqrt.pop %v9494
  %v9559 = vrsqrt.pop %v9495
  %v9560 = vrsqrt.pop %v9496
  %v9561 = vrsqrt.pop %v9497
  %v9562 = vrsqrt.pop %v9498
  %v9563 = vrsqrt.pop %v9499
  %v9564 = vrsqrt.pop %v9500
  %v9565 = vrsqrt.pop %v9501
  %v9566 = vrsqrt.pop %v9502
  %v9567 = vrsqrt.pop %v9503
  %v9568 = vrsqrt.pop %v9504
  %v9569 = vrsqrt.pop %v9505
  %v9570 = vrsqrt.pop %v9506
  %v9571 = vrsqrt.pop %v9507
  %v9572 = vrsqrt.pop %v9508
  %v9573 = vrsqrt.pop %v9509
  %v9574 = vrsqrt.pop %v9510
  %v9575 = vrsqrt.pop %v9511
  %v9576 = vrsqrt.pop %v9512
  %v9577 = vrsqrt.pop %v9513
  %v9578 = vrsqrt.pop %v9514
  %v9579 = vrsqrt.pop %v9515
  %v9580 = vrsqrt.pop %v9516
  %v9581 = vrsqrt.pop %v9517
  %v9582 = vrsqrt.pop %v9518
  %v9583 = vrsqrt.pop %v9519
  %v9584 = vrsqrt.pop %v9520
  %v9585 = vrsqrt.pop %v9521
  %v9586 = vrsqrt.pop %v9522
  %v9587 = vrsqrt.pop %v9523
  %v9588 = vrsqrt.pop %v9524
  %v9589 = vrsqrt.pop %v9525
  %v9590 = vrsqrt.pop %v9526
  %v9591 = vrsqrt.pop %v9527
  %v9592 = vrsqrt.pop %v9528
  %v9593 = vrsqrt.pop %v9529
  %v9594 = vrsqrt.pop %v9530
  %v9595 = vrsqrt.pop %v9531
  %v9596 = vrsqrt.pop %v9532
  %v9597 = vrsqrt.pop %v9533
  %v9598 = vrsqrt.pop %v9534
  %v9599 = vrsqrt.pop %v9535
  %v9600 = vmul.f32 %v9088, %v9536
  %v9601 = vmul.f32 %v9089, %v9537
  %v9602 = vmul.f32 %v9090, %v9538
  %v9603 = vmul.f32 %v9091, %v9539
  %v9604 = vmul.f32 %v9092, %v9540
  %v9605 = vmul.f32 %v9093, %v9541
  %v9606 = vmul.f32 %v9094, %v9542
  %v9607 = vmul.f32 %v9095, %v9543
  %v9608 = vmul.f32 %v9096, %v9544
  %v9609 = vmul.f32 %v9097, %v9545
  %v9610 = vmul.f32 %v9098, %v9546
  %v9611 = vmul.f32 %v9099, %v9547
  %v9612 = vmul.f32 %v9100, %v9548
  %v9613 = vmul.f32 %v9101, %v9549
  %v9614 = vmul.f32 %v9102, %v9550
  %v9615 = vmul.f32 %v9103, %v9551
  %v9616 = vmul.f32 %v9104, %v9552
  %v9617 = vmul.f32 %v9105, %v9553
  %v9618 = vmul.f32 %v9106, %v9554
  %v9619 = vmul.f32 %v9107, %v9555
  %v9620 = vmul.f32 %v9108, %v9556
  %v9621 = vmul.f32 %v9109, %v9557
  %v9622 = vmul.f32 %v9110, %v9558
  %v9623 = vmul.f32 %v9111, %v9559
  %v9624 = vmul.f32 %v9112, %v9560
  %v9625 = vmul.f32 %v9113, %v9561
  %v9626 = vmul.f32 %v9114, %v9562
  %v9627 = vmul.f32 %v9115, %v9563
  %v9628 = vmul.f32 %v9116, %v9564
  %v9629 = vmul.f32 %v9117, %v9565
  %v9630 = vmul.f32 %v9118, %v9566
  %v9631 = vmul.f32 %v9119, %v9567
  %v9632 = vmul.f32 %v9120, %v9568
  %v9633 = vmul.f32 %v9121, %v9569
  %v9634 = vmul.f32 %v9122, %v9570
  %v9635 = vmul.f32 %v9123, %v9571
  %v9636 = vmul.f32 %v9124, %v9572
  %v9637 = vmul.f32 %v9125, %v9573
  %v9638 = vmul.f32 %v9126, %v9574
  %v9639 = vmul.f32 %v9127, %v9575
  %v9640 = vmul.f32 %v9128, %v9576
  %v9641 = vmul.f32 %v9129, %v9577
  %v9642 = vmul.f32 %v9130, %v9578
  %v9643 = vmul.f32 %v9131, %v9579
  %v9644 = vmul.f32 %v9132, %v9580
  %v9645 = vmul.f32 %v9133, %v9581
  %v9646 = vmul.f32 %v9134, %v9582
  %v9647 = vmul.f32 %v9135, %v9583
  %v9648 = vmul.f32 %v9136, %v9584
  %v9649 = vmul.f32 %v9137, %v9585
  %v9650 = vmul.f32 %v9138, %v9586
  %v9651 = vmul.f32 %v9139, %v9587
  %v9652 = vmul.f32 %v9140, %v9588
  %v9653 = vmul.f32 %v9141, %v9589
  %v9654 = vmul.f32 %v9142, %v9590
  %v9655 = vmul.f32 %v9143, %v9591
  %v9656 = vmul.f32 %v9144, %v9592
  %v9657 = vmul.f32 %v9145, %v9593
  %v9658 = vmul.f32 %v9146, %v9594
  %v9659 = vmul.f32 %v9147, %v9595
  %v9660 = vmul.f32 %v9148, %v9596
  %v9661 = vmul.f32 %v9149, %v9597
  %v9662 = vmul.f32 %v9150, %v9598
  %v9663 = vmul.f32 %v9151, %v9599
  %v9665 = vlaneseq
  %v9666 = vshrl.u32 %v9665, 7
  %v9667 = vsub.s32 0, %v9666
  %v9668 = vrot.slane %v8830, %v9667
  %v9670 = vmul.f32 %v9600, %v9668
  %v9671 = vmul.f32 %v9601, %v9668
  %v9672 = vmul.f32 %v9602, %v9668
  %v9673 = vmul.f32 %v9603, %v9668
  %v9674 = vmul.f32 %v9604, %v9668
  %v9675 = vmul.f32 %v9605, %v9668
  %v9676 = vmul.f32 %v9606, %v9668
  %v9677 = vmul.f32 %v9607, %v9668
  %v9678 = vmul.f32 %v9608, %v9668
  %v9679 = vmul.f32 %v9609, %v9668
  %v9680 = vmul.f32 %v9610, %v9668
  %v9681 = vmul.f32 %v9611, %v9668
  %v9682 = vmul.f32 %v9612, %v9668
  %v9683 = vmul.f32 %v9613, %v9668
  %v9684 = vmul.f32 %v9614, %v9668
  %v9685 = vmul.f32 %v9615, %v9668
  %v9686 = vmul.f32 %v9616, %v9668
  %v9687 = vmul.f32 %v9617, %v9668
  %v9688 = vmul.f32 %v9618, %v9668
  %v9689 = vmul.f32 %v9619, %v9668
  %v9690 = vmul.f32 %v9620, %v9668
  %v9691 = vmul.f32 %v9621, %v9668
  %v9692 = vmul.f32 %v9622, %v9668
  %v9693 = vmul.f32 %v9623, %v9668
  %v9694 = vmul.f32 %v9624, %v9668
  %v9695 = vmul.f32 %v9625, %v9668
  %v9696 = vmul.f32 %v9626, %v9668
  %v9697 = vmul.f32 %v9627, %v9668
  %v9698 = vmul.f32 %v9628, %v9668
  %v9699 = vmul.f32 %v9629, %v9668
  %v9700 = vmul.f32 %v9630, %v9668
  %v9701 = vmul.f32 %v9631, %v9668
  %v9702 = vmul.f32 %v9632, %v9668
  %v9703 = vmul.f32 %v9633, %v9668
  %v9704 = vmul.f32 %v9634, %v9668
  %v9705 = vmul.f32 %v9635, %v9668
  %v9706 = vmul.f32 %v9636, %v9668
  %v9707 = vmul.f32 %v9637, %v9668
  %v9708 = vmul.f32 %v9638, %v9668
  %v9709 = vmul.f32 %v9639, %v9668
  %v9710 = vmul.f32 %v9640, %v9668
  %v9711 = vmul.f32 %v9641, %v9668
  %v9712 = vmul.f32 %v9642, %v9668
  %v9713 = vmul.f32 %v9643, %v9668
  %v9714 = vmul.f32 %v9644, %v9668
  %v9715 = vmul.f32 %v9645, %v9668
  %v9716 = vmul.f32 %v9646, %v9668
  %v9717 = vmul.f32 %v9647, %v9668
  %v9718 = vmul.f32 %v9648, %v9668
  %v9719 = vmul.f32 %v9649, %v9668
  %v9720 = vmul.f32 %v9650, %v9668
  %v9721 = vmul.f32 %v9651, %v9668
  %v9722 = vmul.f32 %v9652, %v9668
  %v9723 = vmul.f32 %v9653, %v9668
  %v9724 = vmul.f32 %v9654, %v9668
  %v9725 = vmul.f32 %v9655, %v9668
  %v9726 = vmul.f32 %v9656, %v9668
  %v9727 = vmul.f32 %v9657, %v9668
  %v9728 = vmul.f32 %v9658, %v9668
  %v9729 = vmul.f32 %v9659, %v9668
  %v9730 = vmul.f32 %v9660, %v9668
  %v9731 = vmul.f32 %v9661, %v9668
  %v9732 = vmul.f32 %v9662, %v9668
  %v9733 = vmul.f32 %v9663, %v9668
  %v9735 = vlaneseq
  %v9736 = vshrl.u32 %v9735, 7
  %v9737 = vsub.s32 0, %v9736
  %v9738 = vrot.slane %v8831, %v9737
  %v9740 = vadd.f32 %v9670, %v9738
  %v9741 = vadd.f32 %v9671, %v9738
  %v9742 = vadd.f32 %v9672, %v9738
  %v9743 = vadd.f32 %v9673, %v9738
  %v9744 = vadd.f32 %v9674, %v9738
  %v9745 = vadd.f32 %v9675, %v9738
  %v9746 = vadd.f32 %v9676, %v9738
  %v9747 = vadd.f32 %v9677, %v9738
  %v9748 = vadd.f32 %v9678, %v9738
  %v9749 = vadd.f32 %v9679, %v9738
  %v9750 = vadd.f32 %v9680, %v9738
  %v9751 = vadd.f32 %v9681, %v9738
  %v9752 = vadd.f32 %v9682, %v9738
  %v9753 = vadd.f32 %v9683, %v9738
  %v9754 = vadd.f32 %v9684, %v9738
  %v9755 = vadd.f32 %v9685, %v9738
  %v9756 = vadd.f32 %v9686, %v9738
  %v9757 = vadd.f32 %v9687, %v9738
  %v9758 = vadd.f32 %v9688, %v9738
  %v9759 = vadd.f32 %v9689, %v9738
  %v9760 = vadd.f32 %v9690, %v9738
  %v9761 = vadd.f32 %v9691, %v9738
  %v9762 = vadd.f32 %v9692, %v9738
  %v9763 = vadd.f32 %v9693, %v9738
  %v9764 = vadd.f32 %v9694, %v9738
  %v9765 = vadd.f32 %v9695, %v9738
  %v9766 = vadd.f32 %v9696, %v9738
  %v9767 = vadd.f32 %v9697, %v9738
  %v9768 = vadd.f32 %v9698, %v9738
  %v9769 = vadd.f32 %v9699, %v9738
  %v9770 = vadd.f32 %v9700, %v9738
  %v9771 = vadd.f32 %v9701, %v9738
  %v9772 = vadd.f32 %v9702, %v9738
  %v9773 = vadd.f32 %v9703, %v9738
  %v9774 = vadd.f32 %v9704, %v9738
  %v9775 = vadd.f32 %v9705, %v9738
  %v9776 = vadd.f32 %v9706, %v9738
  %v9777 = vadd.f32 %v9707, %v9738
  %v9778 = vadd.f32 %v9708, %v9738
  %v9779 = vadd.f32 %v9709, %v9738
  %v9780 = vadd.f32 %v9710, %v9738
  %v9781 = vadd.f32 %v9711, %v9738
  %v9782 = vadd.f32 %v9712, %v9738
  %v9783 = vadd.f32 %v9713, %v9738
  %v9784 = vadd.f32 %v9714, %v9738
  %v9785 = vadd.f32 %v9715, %v9738
  %v9786 = vadd.f32 %v9716, %v9738
  %v9787 = vadd.f32 %v9717, %v9738
  %v9788 = vadd.f32 %v9718, %v9738
  %v9789 = vadd.f32 %v9719, %v9738
  %v9790 = vadd.f32 %v9720, %v9738
  %v9791 = vadd.f32 %v9721, %v9738
  %v9792 = vadd.f32 %v9722, %v9738
  %v9793 = vadd.f32 %v9723, %v9738
  %v9794 = vadd.f32 %v9724, %v9738
  %v9795 = vadd.f32 %v9725, %v9738
  %v9796 = vadd.f32 %v9726, %v9738
  %v9797 = vadd.f32 %v9727, %v9738
  %v9798 = vadd.f32 %v9728, %v9738
  %v9799 = vadd.f32 %v9729, %v9738
  %v9800 = vadd.f32 %v9730, %v9738
  %v9801 = vadd.f32 %v9731, %v9738
  %v9802 = vadd.f32 %v9732, %v9738
  %v9803 = vadd.f32 %v9733, %v9738
  %v9804 = vpack.c.bf16 %v9741, %v9740
  %v9805 = vpack.c.bf16 %v9743, %v9742
  %v9806 = vpack.c.bf16 %v9745, %v9744
  %v9807 = vpack.c.bf16 %v9747, %v9746
  %v9808 = vpack.c.bf16 %v9749, %v9748
  %v9809 = vpack.c.bf16 %v9751, %v9750
  %v9810 = vpack.c.bf16 %v9753, %v9752
  %v9811 = vpack.c.bf16 %v9755, %v9754
  %v9812 = vpack.c.bf16 %v9757, %v9756
  %v9813 = vpack.c.bf16 %v9759, %v9758
  %v9814 = vpack.c.bf16 %v9761, %v9760
  %v9815 = vpack.c.bf16 %v9763, %v9762
  %v9816 = vpack.c.bf16 %v9765, %v9764
  %v9817 = vpack.c.bf16 %v9767, %v9766
  %v9818 = vpack.c.bf16 %v9769, %v9768
  %v9819 = vpack.c.bf16 %v9771, %v9770
  %v9820 = vpack.c.bf16 %v9773, %v9772
  %v9821 = vpack.c.bf16 %v9775, %v9774
  %v9822 = vpack.c.bf16 %v9777, %v9776
  %v9823 = vpack.c.bf16 %v9779, %v9778
  %v9824 = vpack.c.bf16 %v9781, %v9780
  %v9825 = vpack.c.bf16 %v9783, %v9782
  %v9826 = vpack.c.bf16 %v9785, %v9784
  %v9827 = vpack.c.bf16 %v9787, %v9786
  %v9828 = vpack.c.bf16 %v9789, %v9788
  %v9829 = vpack.c.bf16 %v9791, %v9790
  %v9830 = vpack.c.bf16 %v9793, %v9792
  %v9831 = vpack.c.bf16 %v9795, %v9794
  %v9832 = vpack.c.bf16 %v9797, %v9796
  %v9833 = vpack.c.bf16 %v9799, %v9798
  %v9834 = vpack.c.bf16 %v9801, %v9800
  %v9835 = vpack.c.bf16 %v9803, %v9802
  %v9836 = vld [vmem:[%s10] sm:$0xf]
  %v9837 = vld [vmem:[%s10 + $0x4] sm:$0xf]
  %v9838 = vld [vmem:[%s10 + $0x8] sm:$0xf]
  %v9839 = vld [vmem:[%s10 + $0xc] sm:$0xf]
  %v9840 = vld [vmem:[%s11] sm:$0x1]
  %v9842 = vlaneseq
  %v9843 = vshrl.u32 %v9842, 7
  %v9844 = vsub.s32 0, %v9843
  %v9845 = vrot.slane %v9840, %v9844
  %v9851 = vunpack.c.l.b16 %v9836
  %v9852 = vunpack.c.l.b16 %v9837
  %v9853 = vunpack.c.l.b16 %v9838
  %v9854 = vunpack.c.l.b16 %v9839
  %v9855 = vpack.c.b16 %v9852, %v9851
  %v9856 = vpack.c.b16 %v9854, %v9853
  %v9860 = vsel %vm210, %v9804, 0
  %v9863 = vsel %vm210, %v9805, 0
  %v9866 = vsel %vm210, %v9806, 0
  %v9869 = vsel %vm210, %v9807, 0
  %v9872 = vsel %vm210, %v9808, 0
  %v9875 = vsel %vm210, %v9809, 0
  %v9878 = vsel %vm210, %v9810, 0
  %v9881 = vsel %vm210, %v9811, 0
  %v9884 = vsel %vm210, %v9812, 0
  %v9887 = vsel %vm210, %v9813, 0
  %v9890 = vsel %vm210, %v9814, 0
  %v9893 = vsel %vm210, %v9815, 0
  %v9896 = vsel %vm210, %v9816, 0
  %v9899 = vsel %vm210, %v9817, 0
  %v9902 = vsel %vm210, %v9818, 0
  %v9905 = vsel %vm210, %v9819, 0
  %v9908 = vsel %vm210, %v9820, 0
  %v9911 = vsel %vm210, %v9821, 0
  %v9914 = vsel %vm210, %v9822, 0
  %v9917 = vsel %vm210, %v9823, 0
  %v9920 = vsel %vm210, %v9824, 0
  %v9923 = vsel %vm210, %v9825, 0
  %v9926 = vsel %vm210, %v9826, 0
  %v9929 = vsel %vm210, %v9827, 0
  %v9932 = vsel %vm210, %v9828, 0
  %v9935 = vsel %vm210, %v9829, 0
  %v9938 = vsel %vm210, %v9830, 0
  %v9941 = vsel %vm210, %v9831, 0
  %v9944 = vsel %vm210, %v9832, 0
  %v9947 = vsel %vm210, %v9833, 0
  %v9950 = vsel %vm210, %v9834, 0
  %v9953 = vsel %vm210, %v9835, 0
  %9955 = vmatprep.subr.bf16.mxu0 0
  %9956 = vmatpush1.bf16.msra.mxu0 %v9855
  %9957 = vmatprep.subr.bf16.mxu0 0
  %9958 = vmatpush1.bf16.msra.mxu0 %v9856
  %9959 = vmatprep.subr.bf16.mxu0 0
  %9960 = vmatpush1.bf16.msra.mxu0 0
  %9961 = vmatprep.subr.bf16.mxu0 0
  %9962 = vmatpush1.bf16.msra.mxu0 0
  %9963 = vmatprep.subr.bf16.mxu0 0
  %9964 = vmatpush1.bf16.msra.mxu0 0
  %9965 = vmatprep.subr.bf16.mxu0 0
  %9966 = vmatpush1.bf16.msra.mxu0 0
  %9967 = vmatprep.subr.bf16.mxu0 0
  %9968 = vmatpush1.bf16.msra.mxu0 0
  %9969 = vmatprep.subr.bf16.mxu0 0
  %9970 = vmatpush1.bf16.msra.mxu0 0
  %9971 = vmatprep.subr.bf16.mxu0 0
  %9972 = vmatpush1.bf16.msra.mxu0 0
  %9973 = vmatprep.subr.bf16.mxu0 0
  %9974 = vmatpush1.bf16.msra.mxu0 0
  %9975 = vmatprep.subr.bf16.mxu0 0
  %9976 = vmatpush1.bf16.msra.mxu0 0
  %9977 = vmatprep.subr.bf16.mxu0 0
  %9978 = vmatpush1.bf16.msra.mxu0 0
  %9979 = vmatprep.subr.bf16.mxu0 0
  %9980 = vmatpush1.bf16.msra.mxu0 0
  %9981 = vmatprep.subr.bf16.mxu0 0
  %9982 = vmatpush1.bf16.msra.mxu0 0
  %9983 = vmatprep.subr.bf16.mxu0 0
  %9984 = vmatpush1.bf16.msra.mxu0 0
  %9985 = vmatprep.subr.bf16.mxu0 0
  %9986 = vmatpush1.bf16.msra.mxu0 0
  %9987 = vmatprep.mubr.bf16.mxu0 0
  %9988 = vmatmul.mubr.bf16.gmra.mrb[0].mxu0 %v9860
  %v9989 = vpop.f32.mrb[0].mxu0
  %v9990 = vadd.f32 %v9845, %v9989
  %v9991 = vpop.f32.mrb[0].mxu0
  %v9992 = vpop.f32.mrb[0].mxu0
  %v9993 = vadd.f32 %v9845, %v9992
  %v9994 = vpop.f32.mrb[0].mxu0
  %9995 = vmatprep.mubr.bf16.mxu0 0
  %9996 = vmatmul.mubr.bf16.gmra.mrb[0].mxu0 %v9863
  %v9997 = vpop.f32.mrb[0].mxu0
  %v9998 = vadd.f32 %v9845, %v9997
  %v9999 = vpop.f32.mrb[0].mxu0
  %v10000 = vpop.f32.mrb[0].mxu0
  %v10001 = vadd.f32 %v9845, %v10000
  %v10002 = vpop.f32.mrb[0].mxu0
  %10003 = vmatprep.mubr.bf16.mxu0 0
  %10004 = vmatmul.mubr.bf16.gmra.mrb[0].mxu0 %v9866
  %v10005 = vpop.f32.mrb[0].mxu0
  %v10006 = vadd.f32 %v9845, %v10005
  %v10007 = vpop.f32.mrb[0].mxu0
  %v10008 = vpop.f32.mrb[0].mxu0
  %v10009 = vadd.f32 %v9845, %v10008
  %v10010 = vpop.f32.mrb[0].mxu0
  %10011 = vmatprep.mubr.bf16.mxu0 0
  %10012 = vmatmul.mubr.bf16.gmra.mrb[0].mxu0 %v9869
  %v10013 = vpop.f32.mrb[0].mxu0
  %v10014 = vadd.f32 %v9845, %v10013
  %v10015 = vpop.f32.mrb[0].mxu0
  %v10016 = vpop.f32.mrb[0].mxu0
  %v10017 = vadd.f32 %v9845, %v10016
  %v10018 = vpop.f32.mrb[0].mxu0
  %10019 = vmatprep.mubr.bf16.mxu0 0
  %10020 = vmatmul.mubr.bf16.gmra.mrb[0].mxu0 %v9872
  %v10021 = vpop.f32.mrb[0].mxu0
  %v10022 = vadd.f32 %v9845, %v10021
  %v10023 = vpop.f32.mrb[0].mxu0
  %v10024 = vpop.f32.mrb[0].mxu0
  %v10025 = vadd.f32 %v9845, %v10024
  %v10026 = vpop.f32.mrb[0].mxu0
  %10027 = vmatprep.mubr.bf16.mxu0 0
  %10028 = vmatmul.mubr.bf16.gmra.mrb[0].mxu0 %v9875
  %v10029 = vpop.f32.mrb[0].mxu0
  %v10030 = vadd.f32 %v9845, %v10029
  %v10031 = vpop.f32.mrb[0].mxu0
  %v10032 = vpop.f32.mrb[0].mxu0
  %v10033 = vadd.f32 %v9845, %v10032
  %v10034 = vpop.f32.mrb[0].mxu0
  %10035 = vmatprep.mubr.bf16.mxu0 0
  %10036 = vmatmul.mubr.bf16.gmra.mrb[0].mxu0 %v9878
  %v10037 = vpop.f32.mrb[0].mxu0
  %v10038 = vadd.f32 %v9845, %v10037
  %v10039 = vpop.f32.mrb[0].mxu0
  %v10040 = vpop.f32.mrb[0].mxu0
  %v10041 = vadd.f32 %v9845, %v10040
  %v10042 = vpop.f32.mrb[0].mxu0
  %10043 = vmatprep.mubr.bf16.mxu0 0
  %10044 = vmatmul.mubr.bf16.gmra.mrb[0].mxu0 %v9881
  %v10045 = vpop.f32.mrb[0].mxu0
  %v10046 = vadd.f32 %v9845, %v10045
  %v10047 = vpop.f32.mrb[0].mxu0
  %v10048 = vpop.f32.mrb[0].mxu0
  %v10049 = vadd.f32 %v9845, %v10048
  %v10050 = vpop.f32.mrb[0].mxu0
  %10051 = vmatprep.mubr.bf16.mxu0 0
  %10052 = vmatmul.mubr.bf16.gmra.mrb[0].mxu0 %v9884
  %v10053 = vpop.f32.mrb[0].mxu0
  %v10054 = vadd.f32 %v9845, %v10053
  %v10055 = vpop.f32.mrb[0].mxu0
  %v10056 = vpop.f32.mrb[0].mxu0
  %v10057 = vadd.f32 %v9845, %v10056
  %v10058 = vpop.f32.mrb[0].mxu0
  %10059 = vmatprep.mubr.bf16.mxu0 0
  %10060 = vmatmul.mubr.bf16.gmra.mrb[0].mxu0 %v9887
  %v10061 = vpop.f32.mrb[0].mxu0
  %v10062 = vadd.f32 %v9845, %v10061
  %v10063 = vpop.f32.mrb[0].mxu0
  %v10064 = vpop.f32.mrb[0].mxu0
  %v10065 = vadd.f32 %v9845, %v10064
  %v10066 = vpop.f32.mrb[0].mxu0
  %10067 = vmatprep.mubr.bf16.mxu0 0
  %10068 = vmatmul.mubr.bf16.gmra.mrb[0].mxu0 %v9890
  %v10069 = vpop.f32.mrb[0].mxu0
  %v10070 = vadd.f32 %v9845, %v10069
  %v10071 = vpop.f32.mrb[0].mxu0
  %v10072 = vpop.f32.mrb[0].mxu0
  %v10073 = vadd.f32 %v9845, %v10072
  %v10074 = vpop.f32.mrb[0].mxu0
  %10075 = vmatprep.mubr.bf16.mxu0 0
  %10076 = vmatmul.mubr.bf16.gmra.mrb[0].mxu0 %v9893
  %v10077 = vpop.f32.mrb[0].mxu0
  %v10078 = vadd.f32 %v9845, %v10077
  %v10079 = vpop.f32.mrb[0].mxu0
  %v10080 = vpop.f32.mrb[0].mxu0
  %v10081 = vadd.f32 %v9845, %v10080
  %v10082 = vpop.f32.mrb[0].mxu0
  %10083 = vmatprep.mubr.bf16.mxu0 0
  %10084 = vmatmul.mubr.bf16.gmra.mrb[0].mxu0 %v9896
  %v10085 = vpop.f32.mrb[0].mxu0
  %v10086 = vadd.f32 %v9845, %v10085
  %v10087 = vpop.f32.mrb[0].mxu0
  %v10088 = vpop.f32.mrb[0].mxu0
  %v10089 = vadd.f32 %v9845, %v10088
  %v10090 = vpop.f32.mrb[0].mxu0
  %10091 = vmatprep.mubr.bf16.mxu0 0
  %10092 = vmatmul.mubr.bf16.gmra.mrb[0].mxu0 %v9899
  %v10093 = vpop.f32.mrb[0].mxu0
  %v10094 = vadd.f32 %v9845, %v10093
  %v10095 = vpop.f32.mrb[0].mxu0
  %v10096 = vpop.f32.mrb[0].mxu0
  %v10097 = vadd.f32 %v9845, %v10096
  %v10098 = vpop.f32.mrb[0].mxu0
  %10099 = vmatprep.mubr.bf16.mxu0 0
  %10100 = vmatmul.mubr.bf16.gmra.mrb[0].mxu0 %v9902
  %v10101 = vpop.f32.mrb[0].mxu0
  %v10102 = vadd.f32 %v9845, %v10101
  %v10103 = vpop.f32.mrb[0].mxu0
  %v10104 = vpop.f32.mrb[0].mxu0
  %v10105 = vadd.f32 %v9845, %v10104
  %v10106 = vpop.f32.mrb[0].mxu0
  %10107 = vmatprep.mubr.bf16.mxu0 0
  %10108 = vmatmul.mubr.bf16.gmra.mrb[0].mxu0 %v9905
  %v10109 = vpop.f32.mrb[0].mxu0
  %v10110 = vadd.f32 %v9845, %v10109
  %v10111 = vpop.f32.mrb[0].mxu0
  %v10112 = vpop.f32.mrb[0].mxu0
  %v10113 = vadd.f32 %v9845, %v10112
  %v10114 = vpop.f32.mrb[0].mxu0
  %10115 = vmatprep.mubr.bf16.mxu0 0
  %10116 = vmatmul.mubr.bf16.gmra.mrb[0].mxu0 %v9908
  %v10117 = vpop.f32.mrb[0].mxu0
  %v10118 = vadd.f32 %v9845, %v10117
  %v10119 = vpop.f32.mrb[0].mxu0
  %v10120 = vpop.f32.mrb[0].mxu0
  %v10121 = vadd.f32 %v9845, %v10120
  %v10122 = vpop.f32.mrb[0].mxu0
  %10123 = vmatprep.mubr.bf16.mxu0 0
  %10124 = vmatmul.mubr.bf16.gmra.mrb[0].mxu0 %v9911
  %v10125 = vpop.f32.mrb[0].mxu0
  %v10126 = vadd.f32 %v9845, %v10125
  %v10127 = vpop.f32.mrb[0].mxu0
  %v10128 = vpop.f32.mrb[0].mxu0
  %v10129 = vadd.f32 %v9845, %v10128
  %v10130 = vpop.f32.mrb[0].mxu0
  %10131 = vmatprep.mubr.bf16.mxu0 0
  %10132 = vmatmul.mubr.bf16.gmra.mrb[0].mxu0 %v9914
  %v10133 = vpop.f32.mrb[0].mxu0
  %v10134 = vadd.f32 %v9845, %v10133
  %v10135 = vpop.f32.mrb[0].mxu0
  %v10136 = vpop.f32.mrb[0].mxu0
  %v10137 = vadd.f32 %v9845, %v10136
  %v10138 = vpop.f32.mrb[0].mxu0
  %10139 = vmatprep.mubr.bf16.mxu0 0
  %10140 = vmatmul.mubr.bf16.gmra.mrb[0].mxu0 %v9917
  %v10141 = vpop.f32.mrb[0].mxu0
  %v10142 = vadd.f32 %v9845, %v10141
  %v10143 = vpop.f32.mrb[0].mxu0
  %v10144 = vpop.f32.mrb[0].mxu0
  %v10145 = vadd.f32 %v9845, %v10144
  %v10146 = vpop.f32.mrb[0].mxu0
  %10147 = vmatprep.mubr.bf16.mxu0 0
  %10148 = vmatmul.mubr.bf16.gmra.mrb[0].mxu0 %v9920
  %v10149 = vpop.f32.mrb[0].mxu0
  %v10150 = vadd.f32 %v9845, %v10149
  %v10151 = vpop.f32.mrb[0].mxu0
  %v10152 = vpop.f32.mrb[0].mxu0
  %v10153 = vadd.f32 %v9845, %v10152
  %v10154 = vpop.f32.mrb[0].mxu0
  %10155 = vmatprep.mubr.bf16.mxu0 0
  %10156 = vmatmul.mubr.bf16.gmra.mrb[0].mxu0 %v9923
  %v10157 = vpop.f32.mrb[0].mxu0
  %v10158 = vadd.f32 %v9845, %v10157
  %v10159 = vpop.f32.mrb[0].mxu0
  %v10160 = vpop.f32.mrb[0].mxu0
  %v10161 = vadd.f32 %v9845, %v10160
  %v10162 = vpop.f32.mrb[0].mxu0
  %10163 = vmatprep.mubr.bf16.mxu0 0
  %10164 = vmatmul.mubr.bf16.gmra.mrb[0].mxu0 %v9926
  %v10165 = vpop.f32.mrb[0].mxu0
  %v10166 = vadd.f32 %v9845, %v10165
  %v10167 = vpop.f32.mrb[0].mxu0
  %v10168 = vpop.f32.mrb[0].mxu0
  %v10169 = vadd.f32 %v9845, %v10168
  %v10170 = vpop.f32.mrb[0].mxu0
  %10171 = vmatprep.mubr.bf16.mxu0 0
  %10172 = vmatmul.mubr.bf16.gmra.mrb[0].mxu0 %v9929
  %v10173 = vpop.f32.mrb[0].mxu0
  %v10174 = vadd.f32 %v9845, %v10173
  %v10175 = vpop.f32.mrb[0].mxu0
  %v10176 = vpop.f32.mrb[0].mxu0
  %v10177 = vadd.f32 %v9845, %v10176
  %v10178 = vpop.f32.mrb[0].mxu0
  %10179 = vmatprep.mubr.bf16.mxu0 0
  %10180 = vmatmul.mubr.bf16.gmra.mrb[0].mxu0 %v9932
  %v10181 = vpop.f32.mrb[0].mxu0
  %v10182 = vadd.f32 %v9845, %v10181
  %v10183 = vpop.f32.mrb[0].mxu0
  %v10184 = vpop.f32.mrb[0].mxu0
  %v10185 = vadd.f32 %v9845, %v10184
  %v10186 = vpop.f32.mrb[0].mxu0
  %10187 = vmatprep.mubr.bf16.mxu0 0
  %10188 = vmatmul.mubr.bf16.gmra.mrb[0].mxu0 %v9935
  %v10189 = vpop.f32.mrb[0].mxu0
  %v10190 = vadd.f32 %v9845, %v10189
  %v10191 = vpop.f32.mrb[0].mxu0
  %v10192 = vpop.f32.mrb[0].mxu0
  %v10193 = vadd.f32 %v9845, %v10192
  %v10194 = vpop.f32.mrb[0].mxu0
  %10195 = vmatprep.mubr.bf16.mxu0 0
  %10196 = vmatmul.mubr.bf16.gmra.mrb[0].mxu0 %v9938
  %v10197 = vpop.f32.mrb[0].mxu0
  %v10198 = vadd.f32 %v9845, %v10197
  %v10199 = vpop.f32.mrb[0].mxu0
  %v10200 = vpop.f32.mrb[0].mxu0
  %v10201 = vadd.f32 %v9845, %v10200
  %v10202 = vpop.f32.mrb[0].mxu0
  %10203 = vmatprep.mubr.bf16.mxu0 0
  %10204 = vmatmul.mubr.bf16.gmra.mrb[0].mxu0 %v9941
  %v10205 = vpop.f32.mrb[0].mxu0
  %v10206 = vadd.f32 %v9845, %v10205
  %v10207 = vpop.f32.mrb[0].mxu0
  %v10208 = vpop.f32.mrb[0].mxu0
  %v10209 = vadd.f32 %v9845, %v10208
  %v10210 = vpop.f32.mrb[0].mxu0
  %10211 = vmatprep.mubr.bf16.mxu0 0
  %10212 = vmatmul.mubr.bf16.gmra.mrb[0].mxu0 %v9944
  %v10213 = vpop.f32.mrb[0].mxu0
  %v10214 = vadd.f32 %v9845, %v10213
  %v10215 = vpop.f32.mrb[0].mxu0
  %v10216 = vpop.f32.mrb[0].mxu0
  %v10217 = vadd.f32 %v9845, %v10216
  %v10218 = vpop.f32.mrb[0].mxu0
  %10219 = vmatprep.mubr.bf16.mxu0 0
  %10220 = vmatmul.mubr.bf16.gmra.mrb[0].mxu0 %v9947
  %v10221 = vpop.f32.mrb[0].mxu0
  %v10222 = vadd.f32 %v9845, %v10221
  %v10223 = vpop.f32.mrb[0].mxu0
  %v10224 = vpop.f32.mrb[0].mxu0
  %v10225 = vadd.f32 %v9845, %v10224
  %v10226 = vpop.f32.mrb[0].mxu0
  %10227 = vmatprep.mubr.bf16.mxu0 0
  %10228 = vmatmul.mubr.bf16.gmra.mrb[0].mxu0 %v9950
  %v10229 = vpop.f32.mrb[0].mxu0
  %v10230 = vadd.f32 %v9845, %v10229
  %v10231 = vpop.f32.mrb[0].mxu0
  %v10232 = vpop.f32.mrb[0].mxu0
  %v10233 = vadd.f32 %v9845, %v10232
  %v10234 = vpop.f32.mrb[0].mxu0
  %10235 = vmatprep.mubr.bf16.mxu0 0
  %10236 = vmatmul.mubr.bf16.gmra.mrb[0].mxu0 %v9953
  %v10237 = vpop.f32.mrb[0].mxu0
  %v10238 = vadd.f32 %v9845, %v10237
  %v10239 = vpop.f32.mrb[0].mxu0
  %v10240 = vpop.f32.mrb[0].mxu0
  %v10241 = vadd.f32 %v9845, %v10240
  %v10242 = vpop.f32.mrb[0].mxu0
  %10243 = vdwg.mxu0
  %v10244 = vmul.f32 %v9990, 0.5
  %v10245 = vmul.f32 %v9993, 0.5
  %v10246 = vmul.f32 %v9998, 0.5
  %v10247 = vmul.f32 %v10001, 0.5
  %v10248 = vmul.f32 %v10006, 0.5
  %v10249 = vmul.f32 %v10009, 0.5
  %v10250 = vmul.f32 %v10014, 0.5
  %v10251 = vmul.f32 %v10017, 0.5
  %v10252 = vmul.f32 %v10022, 0.5
  %v10253 = vmul.f32 %v10025, 0.5
  %v10254 = vmul.f32 %v10030, 0.5
  %v10255 = vmul.f32 %v10033, 0.5
  %v10256 = vmul.f32 %v10038, 0.5
  %v10257 = vmul.f32 %v10041, 0.5
  %v10258 = vmul.f32 %v10046, 0.5
  %v10259 = vmul.f32 %v10049, 0.5
  %v10260 = vmul.f32 %v10054, 0.5
  %v10261 = vmul.f32 %v10057, 0.5
  %v10262 = vmul.f32 %v10062, 0.5
  %v10263 = vmul.f32 %v10065, 0.5
  %v10264 = vmul.f32 %v10070, 0.5
  %v10265 = vmul.f32 %v10073, 0.5
  %v10266 = vmul.f32 %v10078, 0.5
  %v10267 = vmul.f32 %v10081, 0.5
  %v10268 = vmul.f32 %v10086, 0.5
  %v10269 = vmul.f32 %v10089, 0.5
  %v10270 = vmul.f32 %v10094, 0.5
  %v10271 = vmul.f32 %v10097, 0.5
  %v10272 = vmul.f32 %v10102, 0.5
  %v10273 = vmul.f32 %v10105, 0.5
  %v10274 = vmul.f32 %v10110, 0.5
  %v10275 = vmul.f32 %v10113, 0.5
  %v10276 = vmul.f32 %v10118, 0.5
  %v10277 = vmul.f32 %v10121, 0.5
  %v10278 = vmul.f32 %v10126, 0.5
  %v10279 = vmul.f32 %v10129, 0.5
  %v10280 = vmul.f32 %v10134, 0.5
  %v10281 = vmul.f32 %v10137, 0.5
  %v10282 = vmul.f32 %v10142, 0.5
  %v10283 = vmul.f32 %v10145, 0.5
  %v10284 = vmul.f32 %v10150, 0.5
  %v10285 = vmul.f32 %v10153, 0.5
  %v10286 = vmul.f32 %v10158, 0.5
  %v10287 = vmul.f32 %v10161, 0.5
  %v10288 = vmul.f32 %v10166, 0.5
  %v10289 = vmul.f32 %v10169, 0.5
  %v10290 = vmul.f32 %v10174, 0.5
  %v10291 = vmul.f32 %v10177, 0.5
  %v10292 = vmul.f32 %v10182, 0.5
  %v10293 = vmul.f32 %v10185, 0.5
  %v10294 = vmul.f32 %v10190, 0.5
  %v10295 = vmul.f32 %v10193, 0.5
  %v10296 = vmul.f32 %v10198, 0.5
  %v10297 = vmul.f32 %v10201, 0.5
  %v10298 = vmul.f32 %v10206, 0.5
  %v10299 = vmul.f32 %v10209, 0.5
  %v10300 = vmul.f32 %v10214, 0.5
  %v10301 = vmul.f32 %v10217, 0.5
  %v10302 = vmul.f32 %v10222, 0.5
  %v10303 = vmul.f32 %v10225, 0.5
  %v10304 = vmul.f32 %v10230, 0.5
  %v10305 = vmul.f32 %v10233, 0.5
  %v10306 = vmul.f32 %v10238, 0.5
  %v10307 = vmul.f32 %v10241, 0.5
  %v10308 = vmul.f32 %v9990, 0.70710677
  %v10309 = vmul.f32 %v9993, 0.70710677
  %v10310 = vmul.f32 %v9998, 0.70710677
  %v10311 = vmul.f32 %v10001, 0.70710677
  %v10312 = vmul.f32 %v10006, 0.70710677
  %v10313 = vmul.f32 %v10009, 0.70710677
  %v10314 = vmul.f32 %v10014, 0.70710677
  %v10315 = vmul.f32 %v10017, 0.70710677
  %v10316 = vmul.f32 %v10022, 0.70710677
  %v10317 = vmul.f32 %v10025, 0.70710677
  %v10318 = vmul.f32 %v10030, 0.70710677
  %v10319 = vmul.f32 %v10033, 0.70710677
  %v10320 = vmul.f32 %v10038, 0.70710677
  %v10321 = vmul.f32 %v10041, 0.70710677
  %v10322 = vmul.f32 %v10046, 0.70710677
  %v10323 = vmul.f32 %v10049, 0.70710677
  %v10324 = vmul.f32 %v10054, 0.70710677
  %v10325 = vmul.f32 %v10057, 0.70710677
  %v10326 = vmul.f32 %v10062, 0.70710677
  %v10327 = vmul.f32 %v10065, 0.70710677
  %v10328 = vmul.f32 %v10070, 0.70710677
  %v10329 = vmul.f32 %v10073, 0.70710677
  %v10330 = vmul.f32 %v10078, 0.70710677
  %v10331 = vmul.f32 %v10081, 0.70710677
  %v10332 = vmul.f32 %v10086, 0.70710677
  %v10333 = vmul.f32 %v10089, 0.70710677
  %v10334 = vmul.f32 %v10094, 0.70710677
  %v10335 = vmul.f32 %v10097, 0.70710677
  %v10336 = vmul.f32 %v10102, 0.70710677
  %v10337 = vmul.f32 %v10105, 0.70710677
  %v10338 = vmul.f32 %v10110, 0.70710677
  %v10339 = vmul.f32 %v10113, 0.70710677
  %v10340 = vmul.f32 %v10118, 0.70710677
  %v10341 = vmul.f32 %v10121, 0.70710677
  %v10342 = vmul.f32 %v10126, 0.70710677
  %v10343 = vmul.f32 %v10129, 0.70710677
  %v10344 = vmul.f32 %v10134, 0.70710677
  %v10345 = vmul.f32 %v10137, 0.70710677
  %v10346 = vmul.f32 %v10142, 0.70710677
  %v10347 = vmul.f32 %v10145, 0.70710677
  %v10348 = vmul.f32 %v10150, 0.70710677
  %v10349 = vmul.f32 %v10153, 0.70710677
  %v10350 = vmul.f32 %v10158, 0.70710677
  %v10351 = vmul.f32 %v10161, 0.70710677
  %v10352 = vmul.f32 %v10166, 0.70710677
  %v10353 = vmul.f32 %v10169, 0.70710677
  %v10354 = vmul.f32 %v10174, 0.70710677
  %v10355 = vmul.f32 %v10177, 0.70710677
  %v10356 = vmul.f32 %v10182, 0.70710677
  %v10357 = vmul.f32 %v10185, 0.70710677
  %v10358 = vmul.f32 %v10190, 0.70710677
  %v10359 = vmul.f32 %v10193, 0.70710677
  %v10360 = vmul.f32 %v10198, 0.70710677
  %v10361 = vmul.f32 %v10201, 0.70710677
  %v10362 = vmul.f32 %v10206, 0.70710677
  %v10363 = vmul.f32 %v10209, 0.70710677
  %v10364 = vmul.f32 %v10214, 0.70710677
  %v10365 = vmul.f32 %v10217, 0.70710677
  %v10366 = vmul.f32 %v10222, 0.70710677
  %v10367 = vmul.f32 %v10225, 0.70710677
  %v10368 = vmul.f32 %v10230, 0.70710677
  %v10369 = vmul.f32 %v10233, 0.70710677
  %v10370 = vmul.f32 %v10238, 0.70710677
  %v10371 = vmul.f32 %v10241, 0.70710677
  %v10372 = verf.f32.pop %v10308
  %v10373 = verf.f32.pop %v10309
  %v10374 = verf.f32.pop %v10310
  %v10375 = verf.f32.pop %v10311
  %v10376 = verf.f32.pop %v10312
  %v10377 = verf.f32.pop %v10313
  %v10378 = verf.f32.pop %v10314
  %v10379 = verf.f32.pop %v10315
  %v10380 = verf.f32.pop %v10316
  %v10381 = verf.f32.pop %v10317
  %v10382 = verf.f32.pop %v10318
  %v10383 = verf.f32.pop %v10319
  %v10384 = verf.f32.pop %v10320
  %v10385 = verf.f32.pop %v10321
  %v10386 = verf.f32.pop %v10322
  %v10387 = verf.f32.pop %v10323
  %v10388 = verf.f32.pop %v10324
  %v10389 = verf.f32.pop %v10325
  %v10390 = verf.f32.pop %v10326
  %v10391 = verf.f32.pop %v10327
  %v10392 = verf.f32.pop %v10328
  %v10393 = verf.f32.pop %v10329
  %v10394 = verf.f32.pop %v10330
  %v10395 = verf.f32.pop %v10331
  %v10396 = verf.f32.pop %v10332
  %v10397 = verf.f32.pop %v10333
  %v10398 = verf.f32.pop %v10334
  %v10399 = verf.f32.pop %v10335
  %v10400 = verf.f32.pop %v10336
  %v10401 = verf.f32.pop %v10337
  %v10402 = verf.f32.pop %v10338
  %v10403 = verf.f32.pop %v10339
  %v10404 = verf.f32.pop %v10340
  %v10405 = verf.f32.pop %v10341
  %v10406 = verf.f32.pop %v10342
  %v10407 = verf.f32.pop %v10343
  %v10408 = verf.f32.pop %v10344
  %v10409 = verf.f32.pop %v10345
  %v10410 = verf.f32.pop %v10346
  %v10411 = verf.f32.pop %v10347
  %v10412 = verf.f32.pop %v10348
  %v10413 = verf.f32.pop %v10349
  %v10414 = verf.f32.pop %v10350
  %v10415 = verf.f32.pop %v10351
  %v10416 = verf.f32.pop %v10352
  %v10417 = verf.f32.pop %v10353
  %v10418 = verf.f32.pop %v10354
  %v10419 = verf.f32.pop %v10355
  %v10420 = verf.f32.pop %v10356
  %v10421 = verf.f32.pop %v10357
  %v10422 = verf.f32.pop %v10358
  %v10423 = verf.f32.pop %v10359
  %v10424 = verf.f32.pop %v10360
  %v10425 = verf.f32.pop %v10361
  %v10426 = verf.f32.pop %v10362
  %v10427 = verf.f32.pop %v10363
  %v10428 = verf.f32.pop %v10364
  %v10429 = verf.f32.pop %v10365
  %v10430 = verf.f32.pop %v10366
  %v10431 = verf.f32.pop %v10367
  %v10432 = verf.f32.pop %v10368
  %v10433 = verf.f32.pop %v10369
  %v10434 = verf.f32.pop %v10370
  %v10435 = verf.f32.pop %v10371
  %v10436 = vadd.f32 %v10372, 1.0
  %v10437 = vadd.f32 %v10373, 1.0
  %v10438 = vadd.f32 %v10374, 1.0
  %v10439 = vadd.f32 %v10375, 1.0
  %v10440 = vadd.f32 %v10376, 1.0
  %v10441 = vadd.f32 %v10377, 1.0
  %v10442 = vadd.f32 %v10378, 1.0
  %v10443 = vadd.f32 %v10379, 1.0
  %v10444 = vadd.f32 %v10380, 1.0
  %v10445 = vadd.f32 %v10381, 1.0
  %v10446 = vadd.f32 %v10382, 1.0
  %v10447 = vadd.f32 %v10383, 1.0
  %v10448 = vadd.f32 %v10384, 1.0
  %v10449 = vadd.f32 %v10385, 1.0
  %v10450 = vadd.f32 %v10386, 1.0
  %v10451 = vadd.f32 %v10387, 1.0
  %v10452 = vadd.f32 %v10388, 1.0
  %v10453 = vadd.f32 %v10389, 1.0
  %v10454 = vadd.f32 %v10390, 1.0
  %v10455 = vadd.f32 %v10391, 1.0
  %v10456 = vadd.f32 %v10392, 1.0
  %v10457 = vadd.f32 %v10393, 1.0
  %v10458 = vadd.f32 %v10394, 1.0
  %v10459 = vadd.f32 %v10395, 1.0
  %v10460 = vadd.f32 %v10396, 1.0
  %v10461 = vadd.f32 %v10397, 1.0
  %v10462 = vadd.f32 %v10398, 1.0
  %v10463 = vadd.f32 %v10399, 1.0
  %v10464 = vadd.f32 %v10400, 1.0
  %v10465 = vadd.f32 %v10401, 1.0
  %v10466 = vadd.f32 %v10402, 1.0
  %v10467 = vadd.f32 %v10403, 1.0
  %v10468 = vadd.f32 %v10404, 1.0
  %v10469 = vadd.f32 %v10405, 1.0
  %v10470 = vadd.f32 %v10406, 1.0
  %v10471 = vadd.f32 %v10407, 1.0
  %v10472 = vadd.f32 %v10408, 1.0
  %v10473 = vadd.f32 %v10409, 1.0
  %v10474 = vadd.f32 %v10410, 1.0
  %v10475 = vadd.f32 %v10411, 1.0
  %v10476 = vadd.f32 %v10412, 1.0
  %v10477 = vadd.f32 %v10413, 1.0
  %v10478 = vadd.f32 %v10414, 1.0
  %v10479 = vadd.f32 %v10415, 1.0
  %v10480 = vadd.f32 %v10416, 1.0
  %v10481 = vadd.f32 %v10417, 1.0
  %v10482 = vadd.f32 %v10418, 1.0
  %v10483 = vadd.f32 %v10419, 1.0
  %v10484 = vadd.f32 %v10420, 1.0
  %v10485 = vadd.f32 %v10421, 1.0
  %v10486 = vadd.f32 %v10422, 1.0
  %v10487 = vadd.f32 %v10423, 1.0
  %v10488 = vadd.f32 %v10424, 1.0
  %v10489 = vadd.f32 %v10425, 1.0
  %v10490 = vadd.f32 %v10426, 1.0
  %v10491 = vadd.f32 %v10427, 1.0
  %v10492 = vadd.f32 %v10428, 1.0
  %v10493 = vadd.f32 %v10429, 1.0
  %v10494 = vadd.f32 %v10430, 1.0
  %v10495 = vadd.f32 %v10431, 1.0
  %v10496 = vadd.f32 %v10432, 1.0
  %v10497 = vadd.f32 %v10433, 1.0
  %v10498 = vadd.f32 %v10434, 1.0
  %v10499 = vadd.f32 %v10435, 1.0
  %v10500 = vmul.f32 %v10244, %v10436
  %v10501 = vmul.f32 %v10245, %v10437
  %v10502 = vmul.f32 %v10246, %v10438
  %v10503 = vmul.f32 %v10247, %v10439
  %v10504 = vmul.f32 %v10248, %v10440
  %v10505 = vmul.f32 %v10249, %v10441
  %v10506 = vmul.f32 %v10250, %v10442
  %v10507 = vmul.f32 %v10251, %v10443
  %v10508 = vmul.f32 %v10252, %v10444
  %v10509 = vmul.f32 %v10253, %v10445
  %v10510 = vmul.f32 %v10254, %v10446
  %v10511 = vmul.f32 %v10255, %v10447
  %v10512 = vmul.f32 %v10256, %v10448
  %v10513 = vmul.f32 %v10257, %v10449
  %v10514 = vmul.f32 %v10258, %v10450
  %v10515 = vmul.f32 %v10259, %v10451
  %v10516 = vmul.f32 %v10260, %v10452
  %v10517 = vmul.f32 %v10261, %v10453
  %v10518 = vmul.f32 %v10262, %v10454
  %v10519 = vmul.f32 %v10263, %v10455
  %v10520 = vmul.f32 %v10264, %v10456
  %v10521 = vmul.f32 %v10265, %v10457
  %v10522 = vmul.f32 %v10266, %v10458
  %v10523 = vmul.f32 %v10267, %v10459
  %v10524 = vmul.f32 %v10268, %v10460
  %v10525 = vmul.f32 %v10269, %v10461
  %v10526 = vmul.f32 %v10270, %v10462
  %v10527 = vmul.f32 %v10271, %v10463
  %v10528 = vmul.f32 %v10272, %v10464
  %v10529 = vmul.f32 %v10273, %v10465
  %v10530 = vmul.f32 %v10274, %v10466
  %v10531 = vmul.f32 %v10275, %v10467
  %v10532 = vmul.f32 %v10276, %v10468
  %v10533 = vmul.f32 %v10277, %v10469
  %v10534 = vmul.f32 %v10278, %v10470
  %v10535 = vmul.f32 %v10279, %v10471
  %v10536 = vmul.f32 %v10280, %v10472
  %v10537 = vmul.f32 %v10281, %v10473
  %v10538 = vmul.f32 %v10282, %v10474
  %v10539 = vmul.f32 %v10283, %v10475
  %v10540 = vmul.f32 %v10284, %v10476
  %v10541 = vmul.f32 %v10285, %v10477
  %v10542 = vmul.f32 %v10286, %v10478
  %v10543 = vmul.f32 %v10287, %v10479
  %v10544 = vmul.f32 %v10288, %v10480
  %v10545 = vmul.f32 %v10289, %v10481
  %v10546 = vmul.f32 %v10290, %v10482
  %v10547 = vmul.f32 %v10291, %v10483
  %v10548 = vmul.f32 %v10292, %v10484
  %v10549 = vmul.f32 %v10293, %v10485
  %v10550 = vmul.f32 %v10294, %v10486
  %v10551 = vmul.f32 %v10295, %v10487
  %v10552 = vmul.f32 %v10296, %v10488
  %v10553 = vmul.f32 %v10297, %v10489
  %v10554 = vmul.f32 %v10298, %v10490
  %v10555 = vmul.f32 %v10299, %v10491
  %v10556 = vmul.f32 %v10300, %v10492
  %v10557 = vmul.f32 %v10301, %v10493
  %v10558 = vmul.f32 %v10302, %v10494
  %v10559 = vmul.f32 %v10303, %v10495
  %v10560 = vmul.f32 %v10304, %v10496
  %v10561 = vmul.f32 %v10305, %v10497
  %v10562 = vmul.f32 %v10306, %v10498
  %v10563 = vmul.f32 %v10307, %v10499
  %v10564 = vpack.c.bf16 %v10501, %v10500
  %v10565 = vpack.c.bf16 %v10503, %v10502
  %v10566 = vpack.c.bf16 %v10505, %v10504
  %v10567 = vpack.c.bf16 %v10507, %v10506
  %v10568 = vpack.c.bf16 %v10509, %v10508
  %v10569 = vpack.c.bf16 %v10511, %v10510
  %v10570 = vpack.c.bf16 %v10513, %v10512
  %v10571 = vpack.c.bf16 %v10515, %v10514
  %v10572 = vpack.c.bf16 %v10517, %v10516
  %v10573 = vpack.c.bf16 %v10519, %v10518
  %v10574 = vpack.c.bf16 %v10521, %v10520
  %v10575 = vpack.c.bf16 %v10523, %v10522
  %v10576 = vpack.c.bf16 %v10525, %v10524
  %v10577 = vpack.c.bf16 %v10527, %v10526
  %v10578 = vpack.c.bf16 %v10529, %v10528
  %v10579 = vpack.c.bf16 %v10531, %v10530
  %v10580 = vpack.c.bf16 %v10533, %v10532
  %v10581 = vpack.c.bf16 %v10535, %v10534
  %v10582 = vpack.c.bf16 %v10537, %v10536
  %v10583 = vpack.c.bf16 %v10539, %v10538
  %v10584 = vpack.c.bf16 %v10541, %v10540
  %v10585 = vpack.c.bf16 %v10543, %v10542
  %v10586 = vpack.c.bf16 %v10545, %v10544
  %v10587 = vpack.c.bf16 %v10547, %v10546
  %v10588 = vpack.c.bf16 %v10549, %v10548
  %v10589 = vpack.c.bf16 %v10551, %v10550
  %v10590 = vpack.c.bf16 %v10553, %v10552
  %v10591 = vpack.c.bf16 %v10555, %v10554
  %v10592 = vpack.c.bf16 %v10557, %v10556
  %v10593 = vpack.c.bf16 %v10559, %v10558
  %v10594 = vpack.c.bf16 %v10561, %v10560
  %v10595 = vpack.c.bf16 %v10563, %v10562
  %v10596 = vld [vmem:[%s12] sm:$0xf]
  %v10597 = vld [vmem:[%s12 + $0x4] sm:$0xf]
  %v10598 = vld [vmem:[%s12 + $0x8] sm:$0xf]
  %v10599 = vld [vmem:[%s12 + $0xc] sm:$0xf]
  %v10600 = vld [vmem:[%s13] sm:$0x1]
  %v10602 = vlaneseq
  %v10603 = vshrl.u32 %v10602, 7
  %v10604 = vsub.s32 0, %v10603
  %v10605 = vrot.slane %v10600, %v10604
  %v10611 = vunpack.c.l.b16 %v10596
  %v10612 = vunpack.c.l.b16 %v10597
  %v10613 = vunpack.c.l.b16 %v10598
  %v10614 = vunpack.c.l.b16 %v10599
  %v10615 = vpack.c.b16 %v10612, %v10611
  %v10616 = vpack.c.b16 %v10614, %v10613
  %v10620 = vsel %vm210, %v10564, 0
  %v10623 = vsel %vm210, %v10565, 0
  %v10626 = vsel %vm210, %v10566, 0
  %v10629 = vsel %vm210, %v10567, 0
  %v10632 = vsel %vm210, %v10568, 0
  %v10635 = vsel %vm210, %v10569, 0
  %v10638 = vsel %vm210, %v10570, 0
  %v10641 = vsel %vm210, %v10571, 0
  %v10644 = vsel %vm210, %v10572, 0
  %v10647 = vsel %vm210, %v10573, 0
  %v10650 = vsel %vm210, %v10574, 0
  %v10653 = vsel %vm210, %v10575, 0
  %v10656 = vsel %vm210, %v10576, 0
  %v10659 = vsel %vm210, %v10577, 0
  %v10662 = vsel %vm210, %v10578, 0
  %v10665 = vsel %vm210, %v10579, 0
  %v10668 = vsel %vm210, %v10580, 0
  %v10671 = vsel %vm210, %v10581, 0
  %v10674 = vsel %vm210, %v10582, 0
  %v10677 = vsel %vm210, %v10583, 0
  %v10680 = vsel %vm210, %v10584, 0
  %v10683 = vsel %vm210, %v10585, 0
  %v10686 = vsel %vm210, %v10586, 0
  %v10689 = vsel %vm210, %v10587, 0
  %v10692 = vsel %vm210, %v10588, 0
  %v10695 = vsel %vm210, %v10589, 0
  %v10698 = vsel %vm210, %v10590, 0
  %v10701 = vsel %vm210, %v10591, 0
  %v10704 = vsel %vm210, %v10592, 0
  %v10707 = vsel %vm210, %v10593, 0
  %v10710 = vsel %vm210, %v10594, 0
  %v10713 = vsel %vm210, %v10595, 0
  %10715 = vmatprep.subr.bf16.mxu0 0
  %10716 = vmatpush1.bf16.msra.mxu0 %v10615
  %10717 = vmatprep.subr.bf16.mxu0 0
  %10718 = vmatpush1.bf16.msra.mxu0 %v10616
  %10719 = vmatprep.subr.bf16.mxu0 0
  %10720 = vmatpush1.bf16.msra.mxu0 0
  %10721 = vmatprep.subr.bf16.mxu0 0
  %10722 = vmatpush1.bf16.msra.mxu0 0
  %10723 = vmatprep.subr.bf16.mxu0 0
  %10724 = vmatpush1.bf16.msra.mxu0 0
  %10725 = vmatprep.subr.bf16.mxu0 0
  %10726 = vmatpush1.bf16.msra.mxu0 0
  %10727 = vmatprep.subr.bf16.mxu0 0
  %10728 = vmatpush1.bf16.msra.mxu0 0
  %10729 = vmatprep.subr.bf16.mxu0 0
  %10730 = vmatpush1.bf16.msra.mxu0 0
  %10731 = vmatprep.subr.bf16.mxu0 0
  %10732 = vmatpush1.bf16.msra.mxu0 0
  %10733 = vmatprep.subr.bf16.mxu0 0
  %10734 = vmatpush1.bf16.msra.mxu0 0
  %10735 = vmatprep.subr.bf16.mxu0 0
  %10736 = vmatpush1.bf16.msra.mxu0 0
  %10737 = vmatprep.subr.bf16.mxu0 0
  %10738 = vmatpush1.bf16.msra.mxu0 0
  %10739 = vmatprep.subr.bf16.mxu0 0
  %10740 = vmatpush1.bf16.msra.mxu0 0
  %10741 = vmatprep.subr.bf16.mxu0 0
  %10742 = vmatpush1.bf16.msra.mxu0 0
  %10743 = vmatprep.subr.bf16.mxu0 0
  %10744 = vmatpush1.bf16.msra.mxu0 0
  %10745 = vmatprep.subr.bf16.mxu0 0
  %10746 = vmatpush1.bf16.msra.mxu0 0
  %10747 = vmatprep.mubr.bf16.mxu0 0
  %10748 = vmatmul.mubr.bf16.gmra.mrb[0].mxu0 %v10620
  %v10749 = vpop.f32.mrb[0].mxu0
  %v10750 = vadd.f32 %v10605, %v10749
  %v10751 = vpop.f32.mrb[0].mxu0
  %v10752 = vpop.f32.mrb[0].mxu0
  %v10753 = vadd.f32 %v10605, %v10752
  %v10754 = vpop.f32.mrb[0].mxu0
  %10755 = vmatprep.mubr.bf16.mxu0 0
  %10756 = vmatmul.mubr.bf16.gmra.mrb[0].mxu0 %v10623
  %v10757 = vpop.f32.mrb[0].mxu0
  %v10758 = vadd.f32 %v10605, %v10757
  %v10759 = vpop.f32.mrb[0].mxu0
  %v10760 = vpop.f32.mrb[0].mxu0
  %v10761 = vadd.f32 %v10605, %v10760
  %v10762 = vpop.f32.mrb[0].mxu0
  %10763 = vmatprep.mubr.bf16.mxu0 0
  %10764 = vmatmul.mubr.bf16.gmra.mrb[0].mxu0 %v10626
  %v10765 = vpop.f32.mrb[0].mxu0
  %v10766 = vadd.f32 %v10605, %v10765
  %v10767 = vpop.f32.mrb[0].mxu0
  %v10768 = vpop.f32.mrb[0].mxu0
  %v10769 = vadd.f32 %v10605, %v10768
  %v10770 = vpop.f32.mrb[0].mxu0
  %10771 = vmatprep.mubr.bf16.mxu0 0
  %10772 = vmatmul.mubr.bf16.gmra.mrb[0].mxu0 %v10629
  %v10773 = vpop.f32.mrb[0].mxu0
  %v10774 = vadd.f32 %v10605, %v10773
  %v10775 = vpop.f32.mrb[0].mxu0
  %v10776 = vpop.f32.mrb[0].mxu0
  %v10777 = vadd.f32 %v10605, %v10776
  %v10778 = vpop.f32.mrb[0].mxu0
  %10779 = vmatprep.mubr.bf16.mxu0 0
  %10780 = vmatmul.mubr.bf16.gmra.mrb[0].mxu0 %v10632
  %v10781 = vpop.f32.mrb[0].mxu0
  %v10782 = vadd.f32 %v10605, %v10781
  %v10783 = vpop.f32.mrb[0].mxu0
  %v10784 = vpop.f32.mrb[0].mxu0
  %v10785 = vadd.f32 %v10605, %v10784
  %v10786 = vpop.f32.mrb[0].mxu0
  %10787 = vmatprep.mubr.bf16.mxu0 0
  %10788 = vmatmul.mubr.bf16.gmra.mrb[0].mxu0 %v10635
  %v10789 = vpop.f32.mrb[0].mxu0
  %v10790 = vadd.f32 %v10605, %v10789
  %v10791 = vpop.f32.mrb[0].mxu0
  %v10792 = vpop.f32.mrb[0].mxu0
  %v10793 = vadd.f32 %v10605, %v10792
  %v10794 = vpop.f32.mrb[0].mxu0
  %10795 = vmatprep.mubr.bf16.mxu0 0
  %10796 = vmatmul.mubr.bf16.gmra.mrb[0].mxu0 %v10638
  %v10797 = vpop.f32.mrb[0].mxu0
  %v10798 = vadd.f32 %v10605, %v10797
  %v10799 = vpop.f32.mrb[0].mxu0
  %v10800 = vpop.f32.mrb[0].mxu0
  %v10801 = vadd.f32 %v10605, %v10800
  %v10802 = vpop.f32.mrb[0].mxu0
  %10803 = vmatprep.mubr.bf16.mxu0 0
  %10804 = vmatmul.mubr.bf16.gmra.mrb[0].mxu0 %v10641
  %v10805 = vpop.f32.mrb[0].mxu0
  %v10806 = vadd.f32 %v10605, %v10805
  %v10807 = vpop.f32.mrb[0].mxu0
  %v10808 = vpop.f32.mrb[0].mxu0
  %v10809 = vadd.f32 %v10605, %v10808
  %v10810 = vpop.f32.mrb[0].mxu0
  %10811 = vmatprep.mubr.bf16.mxu0 0
  %10812 = vmatmul.mubr.bf16.gmra.mrb[0].mxu0 %v10644
  %v10813 = vpop.f32.mrb[0].mxu0
  %v10814 = vadd.f32 %v10605, %v10813
  %v10815 = vpop.f32.mrb[0].mxu0
  %v10816 = vpop.f32.mrb[0].mxu0
  %v10817 = vadd.f32 %v10605, %v10816
  %v10818 = vpop.f32.mrb[0].mxu0
  %10819 = vmatprep.mubr.bf16.mxu0 0
  %10820 = vmatmul.mubr.bf16.gmra.mrb[0].mxu0 %v10647
  %v10821 = vpop.f32.mrb[0].mxu0
  %v10822 = vadd.f32 %v10605, %v10821
  %v10823 = vpop.f32.mrb[0].mxu0
  %v10824 = vpop.f32.mrb[0].mxu0
  %v10825 = vadd.f32 %v10605, %v10824
  %v10826 = vpop.f32.mrb[0].mxu0
  %10827 = vmatprep.mubr.bf16.mxu0 0
  %10828 = vmatmul.mubr.bf16.gmra.mrb[0].mxu0 %v10650
  %v10829 = vpop.f32.mrb[0].mxu0
  %v10830 = vadd.f32 %v10605, %v10829
  %v10831 = vpop.f32.mrb[0].mxu0
  %v10832 = vpop.f32.mrb[0].mxu0
  %v10833 = vadd.f32 %v10605, %v10832
  %v10834 = vpop.f32.mrb[0].mxu0
  %10835 = vmatprep.mubr.bf16.mxu0 0
  %10836 = vmatmul.mubr.bf16.gmra.mrb[0].mxu0 %v10653
  %v10837 = vpop.f32.mrb[0].mxu0
  %v10838 = vadd.f32 %v10605, %v10837
  %v10839 = vpop.f32.mrb[0].mxu0
  %v10840 = vpop.f32.mrb[0].mxu0
  %v10841 = vadd.f32 %v10605, %v10840
  %v10842 = vpop.f32.mrb[0].mxu0
  %10843 = vmatprep.mubr.bf16.mxu0 0
  %10844 = vmatmul.mubr.bf16.gmra.mrb[0].mxu0 %v10656
  %v10845 = vpop.f32.mrb[0].mxu0
  %v10846 = vadd.f32 %v10605, %v10845
  %v10847 = vpop.f32.mrb[0].mxu0
  %v10848 = vpop.f32.mrb[0].mxu0
  %v10849 = vadd.f32 %v10605, %v10848
  %v10850 = vpop.f32.mrb[0].mxu0
  %10851 = vmatprep.mubr.bf16.mxu0 0
  %10852 = vmatmul.mubr.bf16.gmra.mrb[0].mxu0 %v10659
  %v10853 = vpop.f32.mrb[0].mxu0
  %v10854 = vadd.f32 %v10605, %v10853
  %v10855 = vpop.f32.mrb[0].mxu0
  %v10856 = vpop.f32.mrb[0].mxu0
  %v10857 = vadd.f32 %v10605, %v10856
  %v10858 = vpop.f32.mrb[0].mxu0
  %10859 = vmatprep.mubr.bf16.mxu0 0
  %10860 = vmatmul.mubr.bf16.gmra.mrb[0].mxu0 %v10662
  %v10861 = vpop.f32.mrb[0].mxu0
  %v10862 = vadd.f32 %v10605, %v10861
  %v10863 = vpop.f32.mrb[0].mxu0
  %v10864 = vpop.f32.mrb[0].mxu0
  %v10865 = vadd.f32 %v10605, %v10864
  %v10866 = vpop.f32.mrb[0].mxu0
  %10867 = vmatprep.mubr.bf16.mxu0 0
  %10868 = vmatmul.mubr.bf16.gmra.mrb[0].mxu0 %v10665
  %v10869 = vpop.f32.mrb[0].mxu0
  %v10870 = vadd.f32 %v10605, %v10869
  %v10871 = vpop.f32.mrb[0].mxu0
  %v10872 = vpop.f32.mrb[0].mxu0
  %v10873 = vadd.f32 %v10605, %v10872
  %v10874 = vpop.f32.mrb[0].mxu0
  %10875 = vmatprep.mubr.bf16.mxu0 0
  %10876 = vmatmul.mubr.bf16.gmra.mrb[0].mxu0 %v10668
  %v10877 = vpop.f32.mrb[0].mxu0
  %v10878 = vadd.f32 %v10605, %v10877
  %v10879 = vpop.f32.mrb[0].mxu0
  %v10880 = vpop.f32.mrb[0].mxu0
  %v10881 = vadd.f32 %v10605, %v10880
  %v10882 = vpop.f32.mrb[0].mxu0
  %10883 = vmatprep.mubr.bf16.mxu0 0
  %10884 = vmatmul.mubr.bf16.gmra.mrb[0].mxu0 %v10671
  %v10885 = vpop.f32.mrb[0].mxu0
  %v10886 = vadd.f32 %v10605, %v10885
  %v10887 = vpop.f32.mrb[0].mxu0
  %v10888 = vpop.f32.mrb[0].mxu0
  %v10889 = vadd.f32 %v10605, %v10888
  %v10890 = vpop.f32.mrb[0].mxu0
  %10891 = vmatprep.mubr.bf16.mxu0 0
  %10892 = vmatmul.mubr.bf16.gmra.mrb[0].mxu0 %v10674
  %v10893 = vpop.f32.mrb[0].mxu0
  %v10894 = vadd.f32 %v10605, %v10893
  %v10895 = vpop.f32.mrb[0].mxu0
  %v10896 = vpop.f32.mrb[0].mxu0
  %v10897 = vadd.f32 %v10605, %v10896
  %v10898 = vpop.f32.mrb[0].mxu0
  %10899 = vmatprep.mubr.bf16.mxu0 0
  %10900 = vmatmul.mubr.bf16.gmra.mrb[0].mxu0 %v10677
  %v10901 = vpop.f32.mrb[0].mxu0
  %v10902 = vadd.f32 %v10605, %v10901
  %v10903 = vpop.f32.mrb[0].mxu0
  %v10904 = vpop.f32.mrb[0].mxu0
  %v10905 = vadd.f32 %v10605, %v10904
  %v10906 = vpop.f32.mrb[0].mxu0
  %10907 = vmatprep.mubr.bf16.mxu0 0
  %10908 = vmatmul.mubr.bf16.gmra.mrb[0].mxu0 %v10680
  %v10909 = vpop.f32.mrb[0].mxu0
  %v10910 = vadd.f32 %v10605, %v10909
  %v10911 = vpop.f32.mrb[0].mxu0
  %v10912 = vpop.f32.mrb[0].mxu0
  %v10913 = vadd.f32 %v10605, %v10912
  %v10914 = vpop.f32.mrb[0].mxu0
  %10915 = vmatprep.mubr.bf16.mxu0 0
  %10916 = vmatmul.mubr.bf16.gmra.mrb[0].mxu0 %v10683
  %v10917 = vpop.f32.mrb[0].mxu0
  %v10918 = vadd.f32 %v10605, %v10917
  %v10919 = vpop.f32.mrb[0].mxu0
  %v10920 = vpop.f32.mrb[0].mxu0
  %v10921 = vadd.f32 %v10605, %v10920
  %v10922 = vpop.f32.mrb[0].mxu0
  %10923 = vmatprep.mubr.bf16.mxu0 0
  %10924 = vmatmul.mubr.bf16.gmra.mrb[0].mxu0 %v10686
  %v10925 = vpop.f32.mrb[0].mxu0
  %v10926 = vadd.f32 %v10605, %v10925
  %v10927 = vpop.f32.mrb[0].mxu0
  %v10928 = vpop.f32.mrb[0].mxu0
  %v10929 = vadd.f32 %v10605, %v10928
  %v10930 = vpop.f32.mrb[0].mxu0
  %10931 = vmatprep.mubr.bf16.mxu0 0
  %10932 = vmatmul.mubr.bf16.gmra.mrb[0].mxu0 %v10689
  %v10933 = vpop.f32.mrb[0].mxu0
  %v10934 = vadd.f32 %v10605, %v10933
  %v10935 = vpop.f32.mrb[0].mxu0
  %v10936 = vpop.f32.mrb[0].mxu0
  %v10937 = vadd.f32 %v10605, %v10936
  %v10938 = vpop.f32.mrb[0].mxu0
  %10939 = vmatprep.mubr.bf16.mxu0 0
  %10940 = vmatmul.mubr.bf16.gmra.mrb[0].mxu0 %v10692
  %v10941 = vpop.f32.mrb[0].mxu0
  %v10942 = vadd.f32 %v10605, %v10941
  %v10943 = vpop.f32.mrb[0].mxu0
  %v10944 = vpop.f32.mrb[0].mxu0
  %v10945 = vadd.f32 %v10605, %v10944
  %v10946 = vpop.f32.mrb[0].mxu0
  %10947 = vmatprep.mubr.bf16.mxu0 0
  %10948 = vmatmul.mubr.bf16.gmra.mrb[0].mxu0 %v10695
  %v10949 = vpop.f32.mrb[0].mxu0
  %v10950 = vadd.f32 %v10605, %v10949
  %v10951 = vpop.f32.mrb[0].mxu0
  %v10952 = vpop.f32.mrb[0].mxu0
  %v10953 = vadd.f32 %v10605, %v10952
  %v10954 = vpop.f32.mrb[0].mxu0
  %10955 = vmatprep.mubr.bf16.mxu0 0
  %10956 = vmatmul.mubr.bf16.gmra.mrb[0].mxu0 %v10698
  %v10957 = vpop.f32.mrb[0].mxu0
  %v10958 = vadd.f32 %v10605, %v10957
  %v10959 = vpop.f32.mrb[0].mxu0
  %v10960 = vpop.f32.mrb[0].mxu0
  %v10961 = vadd.f32 %v10605, %v10960
  %v10962 = vpop.f32.mrb[0].mxu0
  %10963 = vmatprep.mubr.bf16.mxu0 0
  %10964 = vmatmul.mubr.bf16.gmra.mrb[0].mxu0 %v10701
  %v10965 = vpop.f32.mrb[0].mxu0
  %v10966 = vadd.f32 %v10605, %v10965
  %v10967 = vpop.f32.mrb[0].mxu0
  %v10968 = vpop.f32.mrb[0].mxu0
  %v10969 = vadd.f32 %v10605, %v10968
  %v10970 = vpop.f32.mrb[0].mxu0
  %10971 = vmatprep.mubr.bf16.mxu0 0
  %10972 = vmatmul.mubr.bf16.gmra.mrb[0].mxu0 %v10704
  %v10973 = vpop.f32.mrb[0].mxu0
  %v10974 = vadd.f32 %v10605, %v10973
  %v10975 = vpop.f32.mrb[0].mxu0
  %v10976 = vpop.f32.mrb[0].mxu0
  %v10977 = vadd.f32 %v10605, %v10976
  %v10978 = vpop.f32.mrb[0].mxu0
  %10979 = vmatprep.mubr.bf16.mxu0 0
  %10980 = vmatmul.mubr.bf16.gmra.mrb[0].mxu0 %v10707
  %v10981 = vpop.f32.mrb[0].mxu0
  %v10982 = vadd.f32 %v10605, %v10981
  %v10983 = vpop.f32.mrb[0].mxu0
  %v10984 = vpop.f32.mrb[0].mxu0
  %v10985 = vadd.f32 %v10605, %v10984
  %v10986 = vpop.f32.mrb[0].mxu0
  %10987 = vmatprep.mubr.bf16.mxu0 0
  %10988 = vmatmul.mubr.bf16.gmra.mrb[0].mxu0 %v10710
  %v10989 = vpop.f32.mrb[0].mxu0
  %v10990 = vadd.f32 %v10605, %v10989
  %v10991 = vpop.f32.mrb[0].mxu0
  %v10992 = vpop.f32.mrb[0].mxu0
  %v10993 = vadd.f32 %v10605, %v10992
  %v10994 = vpop.f32.mrb[0].mxu0
  %10995 = vmatprep.mubr.bf16.mxu0 0
  %10996 = vmatmul.mubr.bf16.gmra.mrb[0].mxu0 %v10713
  %v10997 = vpop.f32.mrb[0].mxu0
  %v10998 = vadd.f32 %v10605, %v10997
  %v10999 = vpop.f32.mrb[0].mxu0
  %v11000 = vpop.f32.mrb[0].mxu0
  %v11001 = vadd.f32 %v10605, %v11000
  %v11002 = vpop.f32.mrb[0].mxu0
  %11003 = vdwg.mxu0
  %v11004 = vadd.f32 %v8766, %v10750
  %v11005 = vadd.f32 %v8767, %v10753
  %v11006 = vadd.f32 %v8768, %v10758
  %v11007 = vadd.f32 %v8769, %v10761
  %v11008 = vadd.f32 %v8770, %v10766
  %v11009 = vadd.f32 %v8771, %v10769
  %v11010 = vadd.f32 %v8772, %v10774
  %v11011 = vadd.f32 %v8773, %v10777
  %v11012 = vadd.f32 %v8774, %v10782
  %v11013 = vadd.f32 %v8775, %v10785
  %v11014 = vadd.f32 %v8776, %v10790
  %v11015 = vadd.f32 %v8777, %v10793
  %v11016 = vadd.f32 %v8778, %v10798
  %v11017 = vadd.f32 %v8779, %v10801
  %v11018 = vadd.f32 %v8780, %v10806
  %v11019 = vadd.f32 %v8781, %v10809
  %v11020 = vadd.f32 %v8782, %v10814
  %v11021 = vadd.f32 %v8783, %v10817
  %v11022 = vadd.f32 %v8784, %v10822
  %v11023 = vadd.f32 %v8785, %v10825
  %v11024 = vadd.f32 %v8786, %v10830
  %v11025 = vadd.f32 %v8787, %v10833
  %v11026 = vadd.f32 %v8788, %v10838
  %v11027 = vadd.f32 %v8789, %v10841
  %v11028 = vadd.f32 %v8790, %v10846
  %v11029 = vadd.f32 %v8791, %v10849
  %v11030 = vadd.f32 %v8792, %v10854
  %v11031 = vadd.f32 %v8793, %v10857
  %v11032 = vadd.f32 %v8794, %v10862
  %v11033 = vadd.f32 %v8795, %v10865
  %v11034 = vadd.f32 %v8796, %v10870
  %v11035 = vadd.f32 %v8797, %v10873
  %v11036 = vadd.f32 %v8798, %v10878
  %v11037 = vadd.f32 %v8799, %v10881
  %v11038 = vadd.f32 %v8800, %v10886
  %v11039 = vadd.f32 %v8801, %v10889
  %v11040 = vadd.f32 %v8802, %v10894
  %v11041 = vadd.f32 %v8803, %v10897
  %v11042 = vadd.f32 %v8804, %v10902
  %v11043 = vadd.f32 %v8805, %v10905
  %v11044 = vadd.f32 %v8806, %v10910
  %v11045 = vadd.f32 %v8807, %v10913
  %v11046 = vadd.f32 %v8808, %v10918
  %v11047 = vadd.f32 %v8809, %v10921
  %v11048 = vadd.f32 %v8810, %v10926
  %v11049 = vadd.f32 %v8811, %v10929
  %v11050 = vadd.f32 %v8812, %v10934
  %v11051 = vadd.f32 %v8813, %v10937
  %v11052 = vadd.f32 %v8814, %v10942
  %v11053 = vadd.f32 %v8815, %v10945
  %v11054 = vadd.f32 %v8816, %v10950
  %v11055 = vadd.f32 %v8817, %v10953
  %v11056 = vadd.f32 %v8818, %v10958
  %v11057 = vadd.f32 %v8819, %v10961
  %v11058 = vadd.f32 %v8820, %v10966
  %v11059 = vadd.f32 %v8821, %v10969
  %v11060 = vadd.f32 %v8822, %v10974
  %v11061 = vadd.f32 %v8823, %v10977
  %v11062 = vadd.f32 %v8824, %v10982
  %v11063 = vadd.f32 %v8825, %v10985
  %v11064 = vadd.f32 %v8826, %v10990
  %v11065 = vadd.f32 %v8827, %v10993
  %v11066 = vadd.f32 %v8828, %v10998
  %v11067 = vadd.f32 %v8829, %v11001
  %11068 = vxpose.xlu0.b32.start [1/16] %v11004, 128
  %11069 = vxpose.xlu0.b32.cont [2/16] %v11005, 128
  %11070 = vxpose.xlu0.b32.cont [3/16] %v11006, 128
  %11071 = vxpose.xlu0.b32.cont [4/16] %v11007, 128
  %11072 = vxpose.xlu0.b32.cont [5/16] %v11008, 128
  %11073 = vxpose.xlu0.b32.cont [6/16] %v11009, 128
  %11074 = vxpose.xlu0.b32.cont [7/16] %v11010, 128
  %11075 = vxpose.xlu0.b32.cont [8/16] %v11011, 128
  %11076 = vxpose.xlu0.b32.cont [9/16] %v11012, 128
  %11077 = vxpose.xlu0.b32.cont [10/16] %v11013, 128
  %11078 = vxpose.xlu0.b32.cont [11/16] %v11014, 128
  %11079 = vxpose.xlu0.b32.cont [12/16] %v11015, 128
  %11080 = vxpose.xlu0.b32.cont [13/16] %v11016, 128
  %11081 = vxpose.xlu0.b32.cont [14/16] %v11017, 128
  %11082 = vxpose.xlu0.b32.cont [15/16] %v11018, 128
  %11083 = vxpose.xlu0.b32.end [16/16] %v11019, 128
  %v11084 = vpop.trf.xlu0
  %v11085 = vpop.trf.xlu0
  %v11086 = vpop.trf.xlu0
  %v11087 = vpop.trf.xlu0
  %v11088 = vpop.trf.xlu0
  %v11089 = vpop.trf.xlu0
  %v11090 = vpop.trf.xlu0
  %v11091 = vpop.trf.xlu0
  %v11092 = vpop.trf.xlu0
  %v11093 = vpop.trf.xlu0
  %v11094 = vpop.trf.xlu0
  %v11095 = vpop.trf.xlu0
  %v11096 = vpop.trf.xlu0
  %v11097 = vpop.trf.xlu0
  %v11098 = vpop.trf.xlu0
  %v11099 = vpop.trf.xlu0
  %11100 = vst [vmem:[%s17] sm:$0xff] %v11084
  %11101 = vst [vmem:[%s17 + $0x8] sm:$0xff] %v11085
  %11102 = vst [vmem:[%s17 + $0x10] sm:$0xff] %v11086
  %11103 = vst [vmem:[%s17 + $0x18] sm:$0xff] %v11087
  %11104 = vxpose.xlu0.b32.start [1/16] %v11020, 128
  %11105 = vxpose.xlu0.b32.cont [2/16] %v11021, 128
  %11106 = vxpose.xlu0.b32.cont [3/16] %v11022, 128
  %11107 = vxpose.xlu0.b32.cont [4/16] %v11023, 128
  %11108 = vxpose.xlu0.b32.cont [5/16] %v11024, 128
  %11109 = vxpose.xlu0.b32.cont [6/16] %v11025, 128
  %11110 = vxpose.xlu0.b32.cont [7/16] %v11026, 128
  %11111 = vxpose.xlu0.b32.cont [8/16] %v11027, 128
  %11112 = vxpose.xlu0.b32.cont [9/16] %v11028, 128
  %11113 = vxpose.xlu0.b32.cont [10/16] %v11029, 128
  %11114 = vxpose.xlu0.b32.cont [11/16] %v11030, 128
  %11115 = vxpose.xlu0.b32.cont [12/16] %v11031, 128
  %11116 = vxpose.xlu0.b32.cont [13/16] %v11032, 128
  %11117 = vxpose.xlu0.b32.cont [14/16] %v11033, 128
  %11118 = vxpose.xlu0.b32.cont [15/16] %v11034, 128
  %11119 = vxpose.xlu0.b32.end [16/16] %v11035, 128
  %v11120 = vpop.trf.xlu0
  %v11121 = vpop.trf.xlu0
  %v11122 = vpop.trf.xlu0
  %v11123 = vpop.trf.xlu0
  %v11124 = vpop.trf.xlu0
  %v11125 = vpop.trf.xlu0
  %v11126 = vpop.trf.xlu0
  %v11127 = vpop.trf.xlu0
  %v11128 = vpop.trf.xlu0
  %v11129 = vpop.trf.xlu0
  %v11130 = vpop.trf.xlu0
  %v11131 = vpop.trf.xlu0
  %v11132 = vpop.trf.xlu0
  %v11133 = vpop.trf.xlu0
  %v11134 = vpop.trf.xlu0
  %v11135 = vpop.trf.xlu0
  %s11136 = scalar_lea.vmem %s17, 32
  %11137 = vst [vmem:[%s11136] sm:$0xff] %v11120
  %11138 = vst [vmem:[%s11136 + $0x8] sm:$0xff] %v11121
  %11139 = vst [vmem:[%s11136 + $0x10] sm:$0xff] %v11122
  %11140 = vst [vmem:[%s11136 + $0x18] sm:$0xff] %v11123
  %11141 = vxpose.xlu0.b32.start [1/16] %v11036, 128
  %11142 = vxpose.xlu0.b32.cont [2/16] %v11037, 128
  %11143 = vxpose.xlu0.b32.cont [3/16] %v11038, 128
  %11144 = vxpose.xlu0.b32.cont [4/16] %v11039, 128
  %11145 = vxpose.xlu0.b32.cont [5/16] %v11040, 128
  %11146 = vxpose.xlu0.b32.cont [6/16] %v11041, 128
  %11147 = vxpose.xlu0.b32.cont [7/16] %v11042, 128
  %11148 = vxpose.xlu0.b32.cont [8/16] %v11043, 128
  %11149 = vxpose.xlu0.b32.cont [9/16] %v11044, 128
  %11150 = vxpose.xlu0.b32.cont [10/16] %v11045, 128
  %11151 = vxpose.xlu0.b32.cont [11/16] %v11046, 128
  %11152 = vxpose.xlu0.b32.cont [12/16] %v11047, 128
  %11153 = vxpose.xlu0.b32.cont [13/16] %v11048, 128
  %11154 = vxpose.xlu0.b32.cont [14/16] %v11049, 128
  %11155 = vxpose.xlu0.b32.cont [15/16] %v11050, 128
  %11156 = vxpose.xlu0.b32.end [16/16] %v11051, 128
  %v11157 = vpop.trf.xlu0
  %v11158 = vpop.trf.xlu0
  %v11159 = vpop.trf.xlu0
  %v11160 = vpop.trf.xlu0
  %v11161 = vpop.trf.xlu0
  %v11162 = vpop.trf.xlu0
  %v11163 = vpop.trf.xlu0
  %v11164 = vpop.trf.xlu0
  %v11165 = vpop.trf.xlu0
  %v11166 = vpop.trf.xlu0
  %v11167 = vpop.trf.xlu0
  %v11168 = vpop.trf.xlu0
  %v11169 = vpop.trf.xlu0
  %v11170 = vpop.trf.xlu0
  %v11171 = vpop.trf.xlu0
  %v11172 = vpop.trf.xlu0
  %s11173 = scalar_lea.vmem %s17, 64
  %11174 = vst [vmem:[%s11173] sm:$0xff] %v11157
  %11175 = vst [vmem:[%s11173 + $0x8] sm:$0xff] %v11158
  %11176 = vst [vmem:[%s11173 + $0x10] sm:$0xff] %v11159
  %11177 = vst [vmem:[%s11173 + $0x18] sm:$0xff] %v11160
  %11178 = vxpose.xlu0.b32.start [1/16] %v11052, 128
  %11179 = vxpose.xlu0.b32.cont [2/16] %v11053, 128
  %11180 = vxpose.xlu0.b32.cont [3/16] %v11054, 128
  %11181 = vxpose.xlu0.b32.cont [4/16] %v11055, 128
  %11182 = vxpose.xlu0.b32.cont [5/16] %v11056, 128
  %11183 = vxpose.xlu0.b32.cont [6/16] %v11057, 128
  %11184 = vxpose.xlu0.b32.cont [7/16] %v11058, 128
  %11185 = vxpose.xlu0.b32.cont [8/16] %v11059, 128
  %11186 = vxpose.xlu0.b32.cont [9/16] %v11060, 128
  %11187 = vxpose.xlu0.b32.cont [10/16] %v11061, 128
  %11188 = vxpose.xlu0.b32.cont [11/16] %v11062, 128
  %11189 = vxpose.xlu0.b32.cont [12/16] %v11063, 128
  %11190 = vxpose.xlu0.b32.cont [13/16] %v11064, 128
  %11191 = vxpose.xlu0.b32.cont [14/16] %v11065, 128
  %11192 = vxpose.xlu0.b32.cont [15/16] %v11066, 128
  %11193 = vxpose.xlu0.b32.end [16/16] %v11067, 128
  %v11194 = vpop.trf.xlu0
  %v11195 = vpop.trf.xlu0
  %v11196 = vpop.trf.xlu0
  %v11197 = vpop.trf.xlu0
  %v11198 = vpop.trf.xlu0
  %v11199 = vpop.trf.xlu0
  %v11200 = vpop.trf.xlu0
  %v11201 = vpop.trf.xlu0
  %v11202 = vpop.trf.xlu0
  %v11203 = vpop.trf.xlu0
  %v11204 = vpop.trf.xlu0
  %v11205 = vpop.trf.xlu0
  %v11206 = vpop.trf.xlu0
  %v11207 = vpop.trf.xlu0
  %v11208 = vpop.trf.xlu0
  %v11209 = vpop.trf.xlu0
  %s11210 = scalar_lea.vmem %s17, 96
  %11211 = vst [vmem:[%s11210] sm:$0xff] %v11194
  %11212 = vst [vmem:[%s11210 + $0x8] sm:$0xff] %v11195
  %11213 = vst [vmem:[%s11210 + $0x10] sm:$0xff] %v11196
  %11214 = vst [vmem:[%s11210 + $0x18] sm:$0xff] %v11197
  // Predicated region
  $region70: #{de_model_forward.1} parent=0 // pred_check
    _
  $region71: #{de_model_forward.1} parent=0 // pred_check_branch
    %11216 = sbr.rel (0) target = $region73
  $region72: #{de_model_forward.1} parent=0 // pred_region
    _
  $region73: #{de_model_forward.1} parent=0 // pred_fallthru
    _
  // Predicated region
  $region74: #{de_model_forward.1} parent=0 // pred_check
    _
  $region75: #{de_model_forward.1} parent=0 // pred_check_branch
    %11218 = sbr.rel (0) target = $region77
  $region76: #{de_model_forward.1} parent=0 // pred_region
    _
  $region77: #{de_model_forward.1} parent=0 // pred_fallthru
    _

</llo_original>
